<compile_context>
chip_gen: v5e
topology: v5e:2x2
jax: 0.10.0
libtpu: 0.0.40
codegen_flags: <defaults>
</compile_context>

<pallas_src>
import functools

import jax
import jax.numpy as jnp
from jax import lax
from jax.experimental import pallas as pl
from jax.experimental.pallas import tpu as pltpu


def _round_up(x, m):
    return ((x + m - 1) // m) * m


# --------------------------------------------------------------------------
# Pallas kernels
# --------------------------------------------------------------------------

def _gemm_bias_lrelu_kernel(x_ref, w_ref, b_ref, o_ref, *, negative_slope):
    acc = jnp.dot(x_ref[...], w_ref[...], preferred_element_type=jnp.float32)
    acc = acc + b_ref[...]
    o_ref[...] = jnp.where(acc > 0.0, acc, negative_slope * acc)


def _duel_head_kernel(x_ref, w1_ref, b1_ref, w2_ref, b2_ref, o_ref, *,
                      n_actions, negative_slope):
    # fused adv|val first layer: one matmul instead of two
    h = jnp.dot(x_ref[...], w1_ref[...],
                preferred_element_type=jnp.float32) + b1_ref[...]
    h = jnp.where(h > 0.0, h, negative_slope * h)
    # fused (block-diagonal) second layer; column layout of z:
    #   [0:A]   advantage values
    #   [A]     state value V
    #   [A+1]   mean_a(advantage)   (folded into the matmul as an extra column)
    z = jnp.dot(h, w2_ref[...], preferred_element_type=jnp.float32) + b2_ref[...]
    adv = z[:, :n_actions]
    val = z[:, n_actions:n_actions + 1]
    adv_mean = z[:, n_actions + 1:n_actions + 2]
    o_ref[...] = val + adv - adv_mean


# --------------------------------------------------------------------------
# Pallas wrappers
# --------------------------------------------------------------------------

def gemm_bias_lrelu(x, w, b, *, negative_slope=0.01, tile_m=256):
    """leaky_relu(x @ w + b); grid over rows, weights VMEM-resident."""
    M, K = x.shape
    N = w.shape[1]
    tm = min(tile_m, _round_up(M, 8))
    Mp = _round_up(M, tm)
    if Mp != M:
        x = jnp.pad(x, ((0, Mp - M), (0, 0)))
    kernel = functools.partial(_gemm_bias_lrelu_kernel,
                               negative_slope=negative_slope)
    out = pl.pallas_call(
        kernel,
        out_shape=jax.ShapeDtypeStruct((Mp, N), jnp.float32),
        grid_spec=pltpu.PrefetchScalarGridSpec(
            num_scalar_prefetch=0,
            grid=(Mp // tm,),
            in_specs=[
                pl.BlockSpec((tm, K), lambda i: (i, 0)),   # activations: tiled
                pl.BlockSpec((K, N), lambda i: (0, 0)),    # weight: resident
                pl.BlockSpec((1, N), lambda i: (0, 0)),    # bias: resident
            ],
            out_specs=pl.BlockSpec((tm, N), lambda i: (i, 0)),
        ),
        compiler_params=pltpu.CompilerParams(
            dimension_semantics=("parallel",)),
    )(x, w, b)
    return out[:M]


def duel_head(xf, w1, b1, w2, b2, *, negative_slope=0.01, tile_m=256):
    """Fused dueling head. xf: (B, 3136) -> (B, n_actions)."""
    B, K = xf.shape
    H2 = w1.shape[1]            # 1024 = 512 adv | 512 val
    Nz = w2.shape[1]            # n_actions + 2
    n_actions = Nz - 2
    tm = min(tile_m, _round_up(B, 8))
    Bp = _round_up(B, tm)
    if Bp != B:
        xf = jnp.pad(xf, ((0, Bp - B), (0, 0)))
    kernel = functools.partial(_duel_head_kernel, n_actions=n_actions,
                               negative_slope=negative_slope)
    out = pl.pallas_call(
        kernel,
        out_shape=jax.ShapeDtypeStruct((Bp, n_actions), jnp.float32),
        grid_spec=pltpu.PrefetchScalarGridSpec(
            num_scalar_prefetch=0,
            grid=(Bp // tm,),
            in_specs=[
                pl.BlockSpec((tm, K), lambda i: (i, 0)),
                pl.BlockSpec((K, H2), lambda i: (0, 0)),
                pl.BlockSpec((1, H2), lambda i: (0, 0)),
                pl.BlockSpec((H2, Nz), lambda i: (0, 0)),
                pl.BlockSpec((1, Nz), lambda i: (0, 0)),
            ],
            out_specs=pl.BlockSpec((tm, n_actions), lambda i: (i, 0)),
        ),
        compiler_params=pltpu.CompilerParams(
            dimension_semantics=("parallel",),
            # fused fc1 weight (12.8 MB) x double-buffer > some defaults
            vmem_limit_bytes=40 * 1024 * 1024),
    )(xf, w1, b1, w2, b2)
    return out[:B]


# --------------------------------------------------------------------------
# im2col (wrapper-side layout plumbing; the MACs run in Pallas)
# --------------------------------------------------------------------------

def _im2col(x, k, s):
    # TODO(synk): patch extraction is wrapper-side strided slicing (pure data
    # movement); an in-kernel DMA gather could fuse it but is not needed here.
    B, H, W, C = x.shape
    OH = (H - k) // s + 1
    OW = (W - k) // s + 1
    cols = []
    for kh in range(k):
        for kw in range(k):
            cols.append(x[:, kh:kh + s * (OH - 1) + 1:s,
                          kw:kw + s * (OW - 1) + 1:s, :])
    # feature order (kh, kw, c) matches HWIO weight reshape.
    return jnp.concatenate(cols, axis=-1), OH, OW


# --------------------------------------------------------------------------
# Forward pass
# --------------------------------------------------------------------------

def duelnet_forward(x_nchw, pp):
    x = jnp.transpose(x_nchw, (0, 2, 3, 1)).astype(jnp.float32)   # NHWC
    B = x.shape[0]

    # conv1: 8x8 / stride 4, leaky_relu(0.01)
    pat, oh, ow = _im2col(x, 8, 4)
    h = gemm_bias_lrelu(pat.reshape(B * oh * ow, -1), pp["cw1"], pp["cb1"])
    h = h.reshape(B, oh, ow, pp["cw1"].shape[1])

    # conv2: 4x4 / stride 2
    pat, oh, ow = _im2col(h, 4, 2)
    h = gemm_bias_lrelu(pat.reshape(B * oh * ow, -1), pp["cw2"], pp["cb2"])
    h = h.reshape(B, oh, ow, pp["cw2"].shape[1])

    # conv3: 3x3 / stride 1
    pat, oh, ow = _im2col(h, 3, 1)
    h = gemm_bias_lrelu(pat.reshape(B * oh * ow, -1), pp["cw3"], pp["cb3"])
    h = h.reshape(B, oh * ow * pp["cw3"].shape[1])   # (B, 3136)

    # fused dueling head (adv/val fc1 + block-diag fc2 + mean column)
    return duel_head(h, pp["hw1"], pp["hb1"], pp["hw2"], pp["hb2"])


# --------------------------------------------------------------------------
# Parameters
# --------------------------------------------------------------------------

def init_params(key, n_actions):
    ks = jax.random.split(key, 14)

    def u(k, shape, fan_in):
        b = 1.0 / float(fan_in) ** 0.5
        return jax.random.uniform(k, shape, jnp.float32, -b, b)

    p = {}
    p["conv1_w"] = u(ks[0], (8, 8, 3, 32), 3 * 8 * 8)      # HWIO
    p["conv1_b"] = u(ks[1], (32,), 3 * 8 * 8)
    p["conv2_w"] = u(ks[2], (4, 4, 32, 64), 32 * 4 * 4)
    p["conv2_b"] = u(ks[3], (64,), 32 * 4 * 4)
    p["conv3_w"] = u(ks[4], (3, 3, 64, 64), 64 * 3 * 3)
    p["conv3_b"] = u(ks[5], (64,), 64 * 3 * 3)
    p["adv_fc1_w"] = u(ks[6], (3136, 512), 3136)           # (in, out)
    p["adv_fc1_b"] = u(ks[7], (512,), 3136)
    p["val_fc1_w"] = u(ks[8], (3136, 512), 3136)
    p["val_fc1_b"] = u(ks[9], (512,), 3136)
    p["adv_fc2_w"] = u(ks[10], (512, n_actions), 512)
    p["adv_fc2_b"] = u(ks[11], (n_actions,), 512)
    p["val_fc2_w"] = u(ks[12], (512, 1), 512)
    p["val_fc2_b"] = u(ks[13], (1,), 512)
    return p


def prepare_params(p, n_actions):
    """One-time fusion / reshape of weights into kernel-friendly layout."""
    H = p["adv_fc2_w"].shape[0]                      # 512
    hw1 = jnp.concatenate([p["adv_fc1_w"], p["val_fc1_w"]], axis=1)   # (3136,1024)
    hb1 = jnp.concatenate([p["adv_fc1_b"], p["val_fc1_b"]])[None, :]  # (1,1024)
    # block-diagonal second layer + mean-of-advantage column (real action
    # columns only -- no padded columns enter the mean).
    hw2 = jnp.zeros((2 * H, n_actions + 2), jnp.float32)
    hw2 = hw2.at[:H, :n_actions].set(p["adv_fc2_w"])
    hw2 = hw2.at[H:, n_actions].set(p["val_fc2_w"][:, 0])
    hw2 = hw2.at[:H, n_actions + 1].set(jnp.mean(p["adv_fc2_w"], axis=1))
    hb2 = jnp.zeros((1, n_actions + 2), jnp.float32)
    hb2 = hb2.at[0, :n_actions].set(p["adv_fc2_b"])
    hb2 = hb2.at[0, n_actions].set(p["val_fc2_b"][0])
    hb2 = hb2.at[0, n_actions + 1].set(jnp.mean(p["adv_fc2_b"]))
    return {
        "cw1": p["conv1_w"].reshape(-1, 32), "cb1": p["conv1_b"][None, :],
        "cw2": p["conv2_w"].reshape(-1, 64), "cb2": p["conv2_b"][None, :],
        "cw3": p["conv3_w"].reshape(-1, 64), "cb3": p["conv3_b"][None, :],
        "hw1": hw1, "hb1": hb1, "hw2": hw2, "hb2": hb2,
    }


# --------------------------------------------------------------------------
# Pure-JAX reference (mirrors the PyTorch forward)
# --------------------------------------------------------------------------

def duelnet_reference(x_nchw, p):
    x = jnp.transpose(x_nchw, (0, 2, 3, 1))

    def conv(h, w, b, s):
        y = lax.conv_general_dilated(h, w, (s, s), "VALID",
                                     dimension_numbers=("NHWC", "HWIO", "NHWC"))
        return jax.nn.leaky_relu(y + b, 0.01)

    h = conv(x, p["conv1_w"], p["conv1_b"], 4)
    h = conv(h, p["conv2_w"], p["conv2_b"], 2)
    h = conv(h, p["conv3_w"], p["conv3_b"], 1)
    hf = h.reshape(h.shape[0], -1)
    adv = jax.nn.leaky_relu(hf @ p["adv_fc1_w"] + p["adv_fc1_b"], 0.01)
    val = jax.nn.leaky_relu(hf @ p["val_fc1_w"] + p["val_fc1_b"], 0.01)
    adv = adv @ p["adv_fc2_w"] + p["adv_fc2_b"]
    val = val @ p["val_fc2_w"] + p["val_fc2_b"]
    return val + adv - jnp.mean(adv, axis=1, keepdims=True)


# --------------------------------------------------------------------------

if __name__ == "__main__":
    key = jax.random.PRNGKey(0)
    k_x, k_p = jax.random.split(key)

    B, N_ACTIONS = 2, 6
    x = jax.random.normal(k_x, (B, 3, 84, 84), jnp.float32)   # NCHW, like PyTorch

    raw_params = init_params(k_p, N_ACTIONS)
    prepped = prepare_params(raw_params, N_ACTIONS)

    fwd = jax.jit(duelnet_forward)
    out = jax.block_until_ready(fwd(x, prepped))

    ref = duelnet_reference(x, raw_params)
    assert out.shape == (B, N_ACTIONS)
    max_err = float(jnp.max(jnp.abs(out - ref)))
    assert jnp.allclose(out, ref, atol=2e-2, rtol=2e-2), max_err

    print("KERNEL_OK")
</pallas_src>

<mosaic_0001>
module attributes {stable_mosaic.version = 11 : i64} {
  func.func @_gemm_bias_lrelu_kernel(%arg0: i32, %arg1: memref<256x192xf32, #tpu.memory_space<vmem>>, %arg2: memref<192x32xf32, #tpu.memory_space<vmem>>, %arg3: memref<1x32xf32, #tpu.memory_space<vmem>>, %arg4: memref<256x32xf32, #tpu.memory_space<vmem>>) attributes {dimension_semantics = [#tpu.dimension_semantics<parallel>], iteration_bounds = array<i64: 4>, scalar_prefetch = 0 : i64, scratch_operands = 0 : i64, tpu.core_type = #tpu.core_type<tc>, window_params = [{transform_indices = @transform_0, window_bounds = array<i64: 256, 192>}, {pipeline_mode = #tpu.pipeline_mode<synchronous>, transform_indices = @transform_1, window_bounds = array<i64: 192, 32>}, {pipeline_mode = #tpu.pipeline_mode<synchronous>, transform_indices = @transform_2, window_bounds = array<i64: 1, 32>}, {transform_indices = @transform_3, window_bounds = array<i64: 256, 32>}]} {
    %c0 = arith.constant 0 : index
    %c0_0 = arith.constant 0 : index
    %0 = vector.load %arg1[%c0, %c0_0] : memref<256x192xf32, #tpu.memory_space<vmem>>, vector<256x192xf32>
    %c0_1 = arith.constant 0 : index
    %c0_2 = arith.constant 0 : index
    %1 = vector.load %arg2[%c0_1, %c0_2] : memref<192x32xf32, #tpu.memory_space<vmem>>, vector<192x32xf32>
    %cst = arith.constant dense<0.000000e+00> : vector<256x32xf32>
    %2 = tpu.matmul %0, %1, %cst {dimension_numbers = #tpu.dot_dimension_numbers<[1], [0], [0], [1], [0, 0, 1, 1], [], []>} : vector<256x192xf32>, vector<192x32xf32>, vector<256x32xf32> -> vector<256x32xf32>
    %c0_3 = arith.constant 0 : index
    %c0_4 = arith.constant 0 : index
    %3 = vector.load %arg3[%c0_3, %c0_4] : memref<1x32xf32, #tpu.memory_space<vmem>>, vector<1x32xf32>
    %4 = vector.broadcast %3 : vector<1x32xf32> to vector<256x32xf32>
    %5 = arith.addf %2, %4 : vector<256x32xf32>
    %cst_5 = arith.constant 0.000000e+00 : f32
    %6 = vector.broadcast %cst_5 : f32 to vector<256x32xf32>
    %7 = arith.cmpf ogt, %5, %6 : vector<256x32xf32>
    %cst_6 = arith.constant 0.00999999977 : f32
    %8 = vector.broadcast %cst_6 : f32 to vector<256x32xf32>
    %9 = arith.mulf %8, %5 : vector<256x32xf32>
    %10 = arith.select %7, %5, %9 : vector<256x32xi1>, vector<256x32xf32>
    %c0_7 = arith.constant 0 : index
    %c0_8 = arith.constant 0 : index
    %11 = vector.load %arg4[%c0_7, %c0_8] : memref<256x32xf32, #tpu.memory_space<vmem>>, vector<256x32xf32>
    tpu.vector_store %arg4[%c0_7, %c0_8], %10 {strides = array<i32>} : memref<256x32xf32, #tpu.memory_space<vmem>>, vector<256x32xf32>,
    return
  }
  func.func @transform_0(%arg0: i32) -> (i32, i32) {
    %c0_i32 = arith.constant 0 : i32
    %c0_i32_0 = arith.constant 0 : i32
    return %arg0, %c0_i32 : i32, i32
  }
  func.func @transform_1(%arg0: i32) -> (i32, i32) {
    %c0_i32 = arith.constant 0 : i32
    %c0_i32_0 = arith.constant 0 : i32
    %c0_i32_1 = arith.constant 0 : i32
    return %c0_i32, %c0_i32_0 : i32, i32
  }
  func.func @transform_2(%arg0: i32) -> (i32, i32) {
    %c0_i32 = arith.constant 0 : i32
    %c0_i32_0 = arith.constant 0 : i32
    %c0_i32_1 = arith.constant 0 : i32
    return %c0_i32, %c0_i32_0 : i32, i32
  }
  func.func @transform_3(%arg0: i32) -> (i32, i32) {
    %c0_i32 = arith.constant 0 : i32
    %c0_i32_0 = arith.constant 0 : i32
    return %arg0, %c0_i32 : i32, i32
  }
}

module attributes {stable_mosaic.version = 11 : i64} {
  func.func @_gemm_bias_lrelu_kernel(%arg0: i32, %arg1: memref<168x512xf32, #tpu.memory_space<vmem>>, %arg2: memref<512x64xf32, #tpu.memory_space<vmem>>, %arg3: memref<1x64xf32, #tpu.memory_space<vmem>>, %arg4: memref<168x64xf32, #tpu.memory_space<vmem>>) attributes {dimension_semantics = [#tpu.dimension_semantics<parallel>], iteration_bounds = array<i64: 1>, scalar_prefetch = 0 : i64, scratch_operands = 0 : i64, tpu.core_type = #tpu.core_type<tc>, window_params = [{transform_indices = @transform_0, window_bounds = array<i64: 168, 512>}, {pipeline_mode = #tpu.pipeline_mode<synchronous>, transform_indices = @transform_1, window_bounds = array<i64: 512, 64>}, {pipeline_mode = #tpu.pipeline_mode<synchronous>, transform_indices = @transform_2, window_bounds = array<i64: 1, 64>}, {transform_indices = @transform_3, window_bounds = array<i64: 168, 64>}]} {
    %c0 = arith.constant 0 : index
    %c0_0 = arith.constant 0 : index
    %0 = vector.load %arg1[%c0, %c0_0] : memref<168x512xf32, #tpu.memory_space<vmem>>, vector<168x512xf32>
    %c0_1 = arith.constant 0 : index
    %c0_2 = arith.constant 0 : index
    %1 = vector.load %arg2[%c0_1, %c0_2] : memref<512x64xf32, #tpu.memory_space<vmem>>, vector<512x64xf32>
    %cst = arith.constant dense<0.000000e+00> : vector<168x64xf32>
    %2 = tpu.matmul %0, %1, %cst {dimension_numbers = #tpu.dot_dimension_numbers<[1], [0], [0], [1], [0, 0, 1, 1], [], []>} : vector<168x512xf32>, vector<512x64xf32>, vector<168x64xf32> -> vector<168x64xf32>
    %c0_3 = arith.constant 0 : index
    %c0_4 = arith.constant 0 : index
    %3 = vector.load %arg3[%c0_3, %c0_4] : memref<1x64xf32, #tpu.memory_space<vmem>>, vector<1x64xf32>
    %4 = vector.broadcast %3 : vector<1x64xf32> to vector<168x64xf32>
    %5 = arith.addf %2, %4 : vector<168x64xf32>
    %cst_5 = arith.constant 0.000000e+00 : f32
    %6 = vector.broadcast %cst_5 : f32 to vector<168x64xf32>
    %7 = arith.cmpf ogt, %5, %6 : vector<168x64xf32>
    %cst_6 = arith.constant 0.00999999977 : f32
    %8 = vector.broadcast %cst_6 : f32 to vector<168x64xf32>
    %9 = arith.mulf %8, %5 : vector<168x64xf32>
    %10 = arith.select %7, %5, %9 : vector<168x64xi1>, vector<168x64xf32>
    %c0_7 = arith.constant 0 : index
    %c0_8 = arith.constant 0 : index
    %11 = vector.load %arg4[%c0_7, %c0_8] : memref<168x64xf32, #tpu.memory_space<vmem>>, vector<168x64xf32>
    tpu.vector_store %arg4[%c0_7, %c0_8], %10 {strides = array<i32>} : memref<168x64xf32, #tpu.memory_space<vmem>>, vector<168x64xf32>,
    return
  }
  func.func @transform_0(%arg0: i32) -> (i32, i32) {
    %c0_i32 = arith.constant 0 : i32
    %c0_i32_0 = arith.constant 0 : i32
    return %arg0, %c0_i32 : i32, i32
  }
  func.func @transform_1(%arg0: i32) -> (i32, i32) {
    %c0_i32 = arith.constant 0 : i32
    %c0_i32_0 = arith.constant 0 : i32
    %c0_i32_1 = arith.constant 0 : i32
    return %c0_i32, %c0_i32_0 : i32, i32
  }
  func.func @transform_2(%arg0: i32) -> (i32, i32) {
    %c0_i32 = arith.constant 0 : i32
    %c0_i32_0 = arith.constant 0 : i32
    %c0_i32_1 = arith.constant 0 : i32
    return %c0_i32, %c0_i32_0 : i32, i32
  }
  func.func @transform_3(%arg0: i32) -> (i32, i32) {
    %c0_i32 = arith.constant 0 : i32
    %c0_i32_0 = arith.constant 0 : i32
    return %arg0, %c0_i32 : i32, i32
  }
}

module attributes {stable_mosaic.version = 11 : i64} {
  func.func @_gemm_bias_lrelu_kernel(%arg0: i32, %arg1: memref<104x576xf32, #tpu.memory_space<vmem>>, %arg2: memref<576x64xf32, #tpu.memory_space<vmem>>, %arg3: memref<1x64xf32, #tpu.memory_space<vmem>>, %arg4: memref<104x64xf32, #tpu.memory_space<vmem>>) attributes {dimension_semantics = [#tpu.dimension_semantics<parallel>], iteration_bounds = array<i64: 1>, scalar_prefetch = 0 : i64, scratch_operands = 0 : i64, tpu.core_type = #tpu.core_type<tc>, window_params = [{transform_indices = @transform_0, window_bounds = array<i64: 104, 576>}, {pipeline_mode = #tpu.pipeline_mode<synchronous>, transform_indices = @transform_1, window_bounds = array<i64: 576, 64>}, {pipeline_mode = #tpu.pipeline_mode<synchronous>, transform_indices = @transform_2, window_bounds = array<i64: 1, 64>}, {transform_indices = @transform_3, window_bounds = array<i64: 104, 64>}]} {
    %c0 = arith.constant 0 : index
    %c0_0 = arith.constant 0 : index
    %0 = vector.load %arg1[%c0, %c0_0] : memref<104x576xf32, #tpu.memory_space<vmem>>, vector<104x576xf32>
    %c0_1 = arith.constant 0 : index
    %c0_2 = arith.constant 0 : index
    %1 = vector.load %arg2[%c0_1, %c0_2] : memref<576x64xf32, #tpu.memory_space<vmem>>, vector<576x64xf32>
    %cst = arith.constant dense<0.000000e+00> : vector<104x64xf32>
    %2 = tpu.matmul %0, %1, %cst {dimension_numbers = #tpu.dot_dimension_numbers<[1], [0], [0], [1], [0, 0, 1, 1], [], []>} : vector<104x576xf32>, vector<576x64xf32>, vector<104x64xf32> -> vector<104x64xf32>
    %c0_3 = arith.constant 0 : index
    %c0_4 = arith.constant 0 : index
    %3 = vector.load %arg3[%c0_3, %c0_4] : memref<1x64xf32, #tpu.memory_space<vmem>>, vector<1x64xf32>
    %4 = vector.broadcast %3 : vector<1x64xf32> to vector<104x64xf32>
    %5 = arith.addf %2, %4 : vector<104x64xf32>
    %cst_5 = arith.constant 0.000000e+00 : f32
    %6 = vector.broadcast %cst_5 : f32 to vector<104x64xf32>
    %7 = arith.cmpf ogt, %5, %6 : vector<104x64xf32>
    %cst_6 = arith.constant 0.00999999977 : f32
    %8 = vector.broadcast %cst_6 : f32 to vector<104x64xf32>
    %9 = arith.mulf %8, %5 : vector<104x64xf32>
    %10 = arith.select %7, %5, %9 : vector<104x64xi1>, vector<104x64xf32>
    %c0_7 = arith.constant 0 : index
    %c0_8 = arith.constant 0 : index
    %11 = vector.load %arg4[%c0_7, %c0_8] : memref<104x64xf32, #tpu.memory_space<vmem>>, vector<104x64xf32>
    tpu.vector_store %arg4[%c0_7, %c0_8], %10 {strides = array<i32>} : memref<104x64xf32, #tpu.memory_space<vmem>>, vector<104x64xf32>,
    return
  }
  func.func @transform_0(%arg0: i32) -> (i32, i32) {
    %c0_i32 = arith.constant 0 : i32
    %c0_i32_0 = arith.constant 0 : i32
    return %arg0, %c0_i32 : i32, i32
  }
  func.func @transform_1(%arg0: i32) -> (i32, i32) {
    %c0_i32 = arith.constant 0 : i32
    %c0_i32_0 = arith.constant 0 : i32
    %c0_i32_1 = arith.constant 0 : i32
    return %c0_i32, %c0_i32_0 : i32, i32
  }
  func.func @transform_2(%arg0: i32) -> (i32, i32) {
    %c0_i32 = arith.constant 0 : i32
    %c0_i32_0 = arith.constant 0 : i32
    %c0_i32_1 = arith.constant 0 : i32
    return %c0_i32, %c0_i32_0 : i32, i32
  }
  func.func @transform_3(%arg0: i32) -> (i32, i32) {
    %c0_i32 = arith.constant 0 : i32
    %c0_i32_0 = arith.constant 0 : i32
    return %arg0, %c0_i32 : i32, i32
  }
}

module attributes {stable_mosaic.version = 11 : i64} {
  func.func @_duel_head_kernel(%arg0: i32, %arg1: memref<8x3136xf32, #tpu.memory_space<vmem>>, %arg2: memref<3136x1024xf32, #tpu.memory_space<vmem>>, %arg3: memref<1x1024xf32, #tpu.memory_space<vmem>>, %arg4: memref<1024x8xf32, #tpu.memory_space<vmem>>, %arg5: memref<1x8xf32, #tpu.memory_space<vmem>>, %arg6: memref<8x6xf32, #tpu.memory_space<vmem>>) attributes {dimension_semantics = [#tpu.dimension_semantics<parallel>], iteration_bounds = array<i64: 1>, scalar_prefetch = 0 : i64, scratch_operands = 0 : i64, tpu.core_type = #tpu.core_type<tc>, window_params = [{transform_indices = @transform_0, window_bounds = array<i64: 8, 3136>}, {pipeline_mode = #tpu.pipeline_mode<synchronous>, transform_indices = @transform_1, window_bounds = array<i64: 3136, 1024>}, {pipeline_mode = #tpu.pipeline_mode<synchronous>, transform_indices = @transform_2, window_bounds = array<i64: 1, 1024>}, {pipeline_mode = #tpu.pipeline_mode<synchronous>, transform_indices = @transform_3, window_bounds = array<i64: 1024, 8>}, {pipeline_mode = #tpu.pipeline_mode<synchronous>, transform_indices = @transform_4, window_bounds = array<i64: 1, 8>}, {transform_indices = @transform_5, window_bounds = array<i64: 8, 6>}]} {
    %c0 = arith.constant 0 : index
    %c0_0 = arith.constant 0 : index
    %0 = vector.load %arg1[%c0, %c0_0] : memref<8x3136xf32, #tpu.memory_space<vmem>>, vector<8x3136xf32>
    %c0_1 = arith.constant 0 : index
    %c0_2 = arith.constant 0 : index
    %1 = vector.load %arg2[%c0_1, %c0_2] : memref<3136x1024xf32, #tpu.memory_space<vmem>>, vector<3136x1024xf32>
    %cst = arith.constant dense<0.000000e+00> : vector<8x1024xf32>
    %2 = tpu.matmul %0, %1, %cst {dimension_numbers = #tpu.dot_dimension_numbers<[1], [0], [0], [1], [0, 0, 1, 1], [], []>} : vector<8x3136xf32>, vector<3136x1024xf32>, vector<8x1024xf32> -> vector<8x1024xf32>
    %c0_3 = arith.constant 0 : index
    %c0_4 = arith.constant 0 : index
    %3 = vector.load %arg3[%c0_3, %c0_4] : memref<1x1024xf32, #tpu.memory_space<vmem>>, vector<1x1024xf32>
    %4 = vector.broadcast %3 : vector<1x1024xf32> to vector<8x1024xf32>
    %5 = arith.addf %2, %4 : vector<8x1024xf32>
    %cst_5 = arith.constant 0.000000e+00 : f32
    %6 = vector.broadcast %cst_5 : f32 to vector<8x1024xf32>
    %7 = arith.cmpf ogt, %5, %6 : vector<8x1024xf32>
    %cst_6 = arith.constant 0.00999999977 : f32
    %8 = vector.broadcast %cst_6 : f32 to vector<8x1024xf32>
    %9 = arith.mulf %8, %5 : vector<8x1024xf32>
    %10 = arith.select %7, %5, %9 : vector<8x1024xi1>, vector<8x1024xf32>
    %c0_7 = arith.constant 0 : index
    %c0_8 = arith.constant 0 : index
    %11 = vector.load %arg4[%c0_7, %c0_8] : memref<1024x8xf32, #tpu.memory_space<vmem>>, vector<1024x8xf32>
    %cst_9 = arith.constant dense<0.000000e+00> : vector<8x8xf32>
    %12 = tpu.matmul %10, %11, %cst_9 {dimension_numbers = #tpu.dot_dimension_numbers<[1], [0], [0], [1], [0, 0, 1, 1], [], []>} : vector<8x1024xf32>, vector<1024x8xf32>, vector<8x8xf32> -> vector<8x8xf32>
    %c0_10 = arith.constant 0 : index
    %c0_11 = arith.constant 0 : index
    %13 = vector.load %arg5[%c0_10, %c0_11] : memref<1x8xf32, #tpu.memory_space<vmem>>, vector<1x8xf32>
    %14 = vector.broadcast %13 : vector<1x8xf32> to vector<8x8xf32>
    %15 = arith.addf %12, %14 : vector<8x8xf32>
    %16 = vector.extract_strided_slice %15 {offsets = [0, 0], sizes = [8, 6], strides = [1, 1]} : vector<8x8xf32> to vector<8x6xf32>
    %17 = vector.extract_strided_slice %15 {offsets = [0, 6], sizes = [8, 1], strides = [1, 1]} : vector<8x8xf32> to vector<8x1xf32>
    %18 = vector.extract_strided_slice %15 {offsets = [0, 7], sizes = [8, 1], strides = [1, 1]} : vector<8x8xf32> to vector<8x1xf32>
    %19 = vector.broadcast %17 : vector<8x1xf32> to vector<8x6xf32>
    %20 = arith.addf %19, %16 : vector<8x6xf32>
    %21 = vector.broadcast %18 : vector<8x1xf32> to vector<8x6xf32>
    %22 = arith.subf %20, %21 : vector<8x6xf32>
    %c0_12 = arith.constant 0 : index
    %c0_13 = arith.constant 0 : index
    %23 = vector.load %arg6[%c0_12, %c0_13] : memref<8x6xf32, #tpu.memory_space<vmem>>, vector<8x6xf32>
    tpu.vector_store %arg6[%c0_12, %c0_13], %22 {strides = array<i32>} : memref<8x6xf32, #tpu.memory_space<vmem>>, vector<8x6xf32>,
    return
  }
  func.func @transform_0(%arg0: i32) -> (i32, i32) {
    %c0_i32 = arith.constant 0 : i32
    %c0_i32_0 = arith.constant 0 : i32
    return %arg0, %c0_i32 : i32, i32
  }
  func.func @transform_1(%arg0: i32) -> (i32, i32) {
    %c0_i32 = arith.constant 0 : i32
    %c0_i32_0 = arith.constant 0 : i32
    %c0_i32_1 = arith.constant 0 : i32
    return %c0_i32, %c0_i32_0 : i32, i32
  }
  func.func @transform_2(%arg0: i32) -> (i32, i32) {
    %c0_i32 = arith.constant 0 : i32
    %c0_i32_0 = arith.constant 0 : i32
    %c0_i32_1 = arith.constant 0 : i32
    return %c0_i32, %c0_i32_0 : i32, i32
  }
  func.func @transform_3(%arg0: i32) -> (i32, i32) {
    %c0_i32 = arith.constant 0 : i32
    %c0_i32_0 = arith.constant 0 : i32
    %c0_i32_1 = arith.constant 0 : i32
    return %c0_i32, %c0_i32_0 : i32, i32
  }
  func.func @transform_4(%arg0: i32) -> (i32, i32) {
    %c0_i32 = arith.constant 0 : i32
    %c0_i32_0 = arith.constant 0 : i32
    %c0_i32_1 = arith.constant 0 : i32
    return %c0_i32, %c0_i32_0 : i32, i32
  }
  func.func @transform_5(%arg0: i32) -> (i32, i32) {
    %c0_i32 = arith.constant 0 : i32
    %c0_i32_0 = arith.constant 0 : i32
    return %arg0, %c0_i32 : i32, i32
  }
}

</mosaic_0001>

<llo_original>
// kernel: duelnet_forward.4
$region0: #{duelnet_forward.4}
  #allocation0 [shape = 'u32[]', space=smem, size = 0x4, offset = 0x4, fixed_abs, tag = 'smem constant byte address 0x4 - core index']
  #allocation1 [shape = 'u32[72,128]{1,0:T(1,128)}', space=vmem, size = 0x9000, scoped, tag = 'internal scratch']
  %s0 = inlined_call_operand.vmem [shape: f32[1024,192], index: 0, kind: input, shape index: {}]
  %s1 = inlined_call_operand.vmem [shape: f32[192,32], index: 1, kind: input, shape index: {}]
  %s2 = inlined_call_operand.vmem [shape: f32[1,32], index: 2, kind: input, shape index: {}]
  %s3 = inlined_call_operand.vmem [shape: f32[1024,32], index: 3, kind: output, shape index: {}]
  %s4 = sld [smem:[#allocation0]]
  $region45: #{duelnet_forward.4} parent=0
    _
  %s6 = ssub.s32 1, %s4
  %s7 = scalar_select 0, %s6, %s4
  loop: start=0, step=1, limit=6
  $region2: #{duelnet_forward.4} parent=0 // loop_pre_header
    _
  $region3: #{duelnet_forward.4} parent=0 // loop_header
    %s9 = sphi 0, %s13
    %p10 = scmp.ge.s32.totalorder %s9, 6
    %s19 = sphi 0, %s21
    %s22 = sphi 0, %s19
    %s23 = sphi 0, %s22
    %s39 = sphi 0, %s23
    %s43 = sphi 0, %s43
    %s45 = sphi 0, %s43
    %s46 = sphi 0, %s45
    %s60 = sphi 0, %s46
    %s64 = sphi 0, %s64
    %s66 = sphi 0, %s64
    %s67 = sphi 0, %s66
    %s81 = sphi 0, %s67
    %s87 = sphi 0, %s89
    %s90 = sphi 0, %s87
    %s91 = sphi 0, %s90
    %s107 = sphi 0, %s91
  $region4: #{duelnet_forward.4} parent=0 // loop_header_branch
    %12 = sbr.rel (%p10) target = $region8
  $region5: #{duelnet_forward.4} parent=0 // loop_body
    %s14 = ssub.s32 %s9, 1
    %s15 = ssub.s32 %s9, 2
    %s16 = sadd.s32 %s9, 1
    %s17 = ssub.s32 %s9, %s16
    %p18 = scmp.eq.s32.totalorder %s17, 0
    %s20 = sadd.s32 %s19, 1
    %s21 = scalar_select %p18, %s19, %s20
    %p24 = pneg %p18
    %p25 = scmp.eq.s32.totalorder %s9, 3
    %p26 = por %p24, %p25
    %p27 = scmp.ne.s32.totalorder %s19, %s22
    %p28 = scmp.eq.s32.totalorder %s9, 0
    %p29 = por %p27, %p28
    %p30 = scmp.ne.s32.totalorder %s19, %s22
    %p31 = scmp.eq.s32.totalorder %s14, 3
    %p32 = por %p30, %p31
    %p33 = scmp.ne.s32.totalorder %s22, %s23
    %p34 = scmp.eq.s32.totalorder %s14, 0
    %p35 = por %p33, %p34
    %p36 = scmp.ne.s32.totalorder %s22, %s23
    %p37 = scmp.eq.s32.totalorder %s15, 3
    %p38 = por %p36, %p37
    %p40 = scmp.ne.s32.totalorder %s23, %s39
    %p41 = scmp.eq.s32.totalorder %s15, 0
    %p42 = por %p40, %p41
    %s44 = sadd.s32 %s43, 1
    %p47 = scmp.eq.s32.totalorder %s9, 3
    %p48 = scmp.ne.s32.totalorder %s43, %s45
    %p49 = scmp.eq.s32.totalorder %s9, 0
    %p50 = por %p48, %p49
    %p51 = scmp.ne.s32.totalorder %s43, %s45
    %p52 = scmp.eq.s32.totalorder %s14, 3
    %p53 = por %p51, %p52
    %p54 = scmp.ne.s32.totalorder %s45, %s46
    %p55 = scmp.eq.s32.totalorder %s14, 0
    %p56 = por %p54, %p55
    %p57 = scmp.ne.s32.totalorder %s45, %s46
    %p58 = scmp.eq.s32.totalorder %s15, 3
    %p59 = por %p57, %p58
    %p61 = scmp.ne.s32.totalorder %s46, %s60
    %p62 = scmp.eq.s32.totalorder %s15, 0
    %p63 = por %p61, %p62
    %s65 = sadd.s32 %s64, 1
    %p68 = scmp.eq.s32.totalorder %s9, 3
    %p69 = scmp.ne.s32.totalorder %s64, %s66
    %p70 = scmp.eq.s32.totalorder %s9, 0
    %p71 = por %p69, %p70
    %p72 = scmp.ne.s32.totalorder %s64, %s66
    %p73 = scmp.eq.s32.totalorder %s14, 3
    %p74 = por %p72, %p73
    %p75 = scmp.ne.s32.totalorder %s66, %s67
    %p76 = scmp.eq.s32.totalorder %s14, 0
    %p77 = por %p75, %p76
    %p78 = scmp.ne.s32.totalorder %s66, %s67
    %p79 = scmp.eq.s32.totalorder %s15, 3
    %p80 = por %p78, %p79
    %p82 = scmp.ne.s32.totalorder %s67, %s81
    %p83 = scmp.eq.s32.totalorder %s15, 0
    %p84 = por %p82, %p83
    %s85 = ssub.s32 %s9, %s16
    %p86 = scmp.eq.s32.totalorder %s85, 0
    %s88 = sadd.s32 %s87, 1
    %s89 = scalar_select %p86, %s87, %s88
    %p92 = pneg %p86
    %p93 = scmp.eq.s32.totalorder %s9, 3
    %p94 = por %p92, %p93
    %p95 = scmp.ne.s32.totalorder %s87, %s90
    %p96 = scmp.eq.s32.totalorder %s9, 0
    %p97 = por %p95, %p96
    %p98 = scmp.ne.s32.totalorder %s87, %s90
    %p99 = scmp.eq.s32.totalorder %s14, 3
    %p100 = por %p98, %p99
    %p101 = scmp.ne.s32.totalorder %s90, %s91
    %p102 = scmp.eq.s32.totalorder %s14, 0
    %p103 = por %p101, %p102
    %p104 = scmp.ne.s32.totalorder %s90, %s91
    %p105 = scmp.eq.s32.totalorder %s15, 3
    %p106 = por %p104, %p105
    %p108 = scmp.ne.s32.totalorder %s91, %s107
    %p109 = scmp.eq.s32.totalorder %s15, 0
    %p110 = por %p108, %p109
    %p111 = scmp.le.s32.totalorder 1, %s9
    %p112 = scmp.lt.s32.totalorder %s9, 5
    %p113 = pnand %p111, %p112
    %p114 = pneg %p113
    // Predicated region
    $region9: #{duelnet_forward.4} parent=5 // pred_check
      _
    $region10: #{duelnet_forward.4} parent=5 // pred_check_branch
      %116 = sbr.rel (%p113) target = $region12
    $region11: #{duelnet_forward.4} parent=5 // pred_region
      %s117 = ssub.s32 %s9, 1
      // Predicated region
      $region13: #{duelnet_forward.4} parent=11 // pred_check
        %p118 = pneg %p56
      $region14: #{duelnet_forward.4} parent=11 // pred_check_branch
        %120 = sbr.rel (%p118) target = $region16
      $region15: #{duelnet_forward.4} parent=11 // pred_region
        _
      $region16: #{duelnet_forward.4} parent=11 // pred_fallthru
        _
      // Predicated region
      $region17: #{duelnet_forward.4} parent=11 // pred_check
        %p121 = pneg %p77
      $region18: #{duelnet_forward.4} parent=11 // pred_check_branch
        %123 = sbr.rel (%p121) target = $region20
      $region19: #{duelnet_forward.4} parent=11 // pred_region
        _
      $region20: #{duelnet_forward.4} parent=11 // pred_fallthru
        _
    $region12: #{duelnet_forward.4} parent=5 // pred_fallthru
      _
    %p124 = scmp.lt.s32.totalorder %s9, 4
    // Predicated region
    $region21: #{duelnet_forward.4} parent=5 // pred_check
      %p125 = pneg %p124
    $region22: #{duelnet_forward.4} parent=5 // pred_check_branch
      %127 = sbr.rel (%p125) target = $region24
    $region23: #{duelnet_forward.4} parent=5 // pred_region
      // Predicated region
      $region25: #{duelnet_forward.4} parent=23 // pred_check
        %p128 = pneg %p29
      $region26: #{duelnet_forward.4} parent=23 // pred_check_branch
        %130 = sbr.rel (%p128) target = $region28
      $region27: #{duelnet_forward.4} parent=23 // pred_region
        %s131 = smul.u32 32, %s9
        %p132 = scmp.lt.s32.totalorder %s131, 127
        %s133 = scalar_select %p132, %s131, 127
        %s134 = smul.addr %s133, 2
        %s135 = smul.addr %s134, 8
        %s136 = scalar_lea.vmem %s0, %s135
        %s137 = smul.u32 32, %s9
      $region28: #{duelnet_forward.4} parent=23 // pred_fallthru
        _
    $region24: #{duelnet_forward.4} parent=5 // pred_fallthru
      _
    %p138 = scmp.le.s32.totalorder 1, %s9
    %p139 = scmp.lt.s32.totalorder %s9, 5
    %p140 = pnand %p138, %p139
    %p141 = pneg %p140
    // Predicated region
    $region29: #{duelnet_forward.4} parent=5 // pred_check
      _
    $region30: #{duelnet_forward.4} parent=5 // pred_check_branch
      %143 = sbr.rel (%p140) target = $region32
    $region31: #{duelnet_forward.4} parent=5 // pred_region
      %s144 = ssub.s32 %s9, 1
      %s145 = smul.u32 32, %s14
      %p146 = scmp.lt.s32.totalorder %s145, 127
      %s147 = scalar_select %p146, %s145, 127
      %s148 = smul.addr %s147, 2
      %s149 = smul.addr %s148, 8
      %s150 = scalar_lea.vmem %s0, %s149
      %p151 = pneg %p35
      %p152 = pneg %p32
      %p153 = pneg %p56
      %p154 = pneg %p53
      %p155 = pneg %p77
      %p156 = pneg %p74
      %p157 = pneg %p103
      %p158 = pneg %p100
      %s159 = smul.u32 32, %s14
      %p160 = scmp.lt.s32.totalorder %s159, 127
      %s161 = scalar_select %p160, %s159, 127
      %s162 = smul.addr %s161, 8
      %s163 = scalar_lea.vmem %s3, %s162
      %s164 = smul.u32 32, %s14
      %p165 = scmp.lt.s32.totalorder %s164, 127
      %s166 = scalar_select %p165, %s164, 127
      %s167 = smul.addr %s166, 2
      %s168 = smul.addr %s167, 8
      %s169 = scalar_lea.vmem %s0, %s168
      %s170 = smul.u32 32, %s14
      %s171 = smul.u32 32, %s14
      %p172 = scmp.lt.s32.totalorder %s171, 127
      %s173 = scalar_select %p172, %s171, 127
      %s174 = smul.addr %s173, 8
      %s175 = scalar_lea.vmem %s3, %s174
      %s176 = smul.u32 32, %s14
      %v177 = vld [vmem:[%s169] sm:$0xff]
      %v178 = vld [vmem:[%s169 + $0x8] sm:$0xff]
      %v179 = vld [vmem:[%s169 + $0x10] sm:$0xff]
      %v180 = vld [vmem:[%s169 + $0x18] sm:$0xff]
      %v181 = vld [vmem:[%s169 + $0x20] sm:$0xff]
      %v182 = vld [vmem:[%s169 + $0x28] sm:$0xff]
      %v183 = vld [vmem:[%s169 + $0x30] sm:$0xff]
      %v184 = vld [vmem:[%s169 + $0x38] sm:$0xff]
      %v185 = vld [vmem:[%s169 + $0x40] sm:$0xff]
      %v186 = vld [vmem:[%s169 + $0x48] sm:$0xff]
      %v187 = vld [vmem:[%s169 + $0x50] sm:$0xff]
      %v188 = vld [vmem:[%s169 + $0x58] sm:$0xff]
      %v189 = vld [vmem:[%s169 + $0x60] sm:$0xff]
      %v190 = vld [vmem:[%s169 + $0x68] sm:$0xff]
      %v191 = vld [vmem:[%s169 + $0x70] sm:$0xff]
      %v192 = vld [vmem:[%s169 + $0x78] sm:$0xff]
      %v193 = vld [vmem:[%s169 + $0x80] sm:$0xff]
      %v194 = vld [vmem:[%s169 + $0x88] sm:$0xff]
      %v195 = vld [vmem:[%s169 + $0x90] sm:$0xff]
      %v196 = vld [vmem:[%s169 + $0x98] sm:$0xff]
      %v197 = vld [vmem:[%s169 + $0xa0] sm:$0xff]
      %v198 = vld [vmem:[%s169 + $0xa8] sm:$0xff]
      %v199 = vld [vmem:[%s169 + $0xb0] sm:$0xff]
      %v200 = vld [vmem:[%s169 + $0xb8] sm:$0xff]
      %v201 = vld [vmem:[%s169 + $0xc0] sm:$0xff]
      %v202 = vld [vmem:[%s169 + $0xc8] sm:$0xff]
      %v203 = vld [vmem:[%s169 + $0xd0] sm:$0xff]
      %v204 = vld [vmem:[%s169 + $0xd8] sm:$0xff]
      %v205 = vld [vmem:[%s169 + $0xe0] sm:$0xff]
      %v206 = vld [vmem:[%s169 + $0xe8] sm:$0xff]
      %v207 = vld [vmem:[%s169 + $0xf0] sm:$0xff]
      %v208 = vld [vmem:[%s169 + $0xf8] sm:$0xff]
      %v209 = vld [vmem:[%s169 + $0x100] sm:$0xff]
      %v210 = vld [vmem:[%s169 + $0x108] sm:$0xff]
      %v211 = vld [vmem:[%s169 + $0x110] sm:$0xff]
      %v212 = vld [vmem:[%s169 + $0x118] sm:$0xff]
      %v213 = vld [vmem:[%s169 + $0x120] sm:$0xff]
      %v214 = vld [vmem:[%s169 + $0x128] sm:$0xff]
      %v215 = vld [vmem:[%s169 + $0x130] sm:$0xff]
      %v216 = vld [vmem:[%s169 + $0x138] sm:$0xff]
      %v217 = vld [vmem:[%s169 + $0x140] sm:$0xff]
      %v218 = vld [vmem:[%s169 + $0x148] sm:$0xff]
      %v219 = vld [vmem:[%s169 + $0x150] sm:$0xff]
      %v220 = vld [vmem:[%s169 + $0x158] sm:$0xff]
      %v221 = vld [vmem:[%s169 + $0x160] sm:$0xff]
      %v222 = vld [vmem:[%s169 + $0x168] sm:$0xff]
      %v223 = vld [vmem:[%s169 + $0x170] sm:$0xff]
      %v224 = vld [vmem:[%s169 + $0x178] sm:$0xff]
      %v225 = vld [vmem:[%s169 + $0x180] sm:$0xff]
      %v226 = vld [vmem:[%s169 + $0x188] sm:$0xff]
      %v227 = vld [vmem:[%s169 + $0x190] sm:$0xff]
      %v228 = vld [vmem:[%s169 + $0x198] sm:$0xff]
      %v229 = vld [vmem:[%s169 + $0x1a0] sm:$0xff]
      %v230 = vld [vmem:[%s169 + $0x1a8] sm:$0xff]
      %v231 = vld [vmem:[%s169 + $0x1b0] sm:$0xff]
      %v232 = vld [vmem:[%s169 + $0x1b8] sm:$0xff]
      %v233 = vld [vmem:[%s169 + $0x1c0] sm:$0xff]
      %v234 = vld [vmem:[%s169 + $0x1c8] sm:$0xff]
      %v235 = vld [vmem:[%s169 + $0x1d0] sm:$0xff]
      %v236 = vld [vmem:[%s169 + $0x1d8] sm:$0xff]
      %v237 = vld [vmem:[%s169 + $0x1e0] sm:$0xff]
      %v238 = vld [vmem:[%s169 + $0x1e8] sm:$0xff]
      %v239 = vld [vmem:[%s169 + $0x1f0] sm:$0xff]
      %v240 = vld [vmem:[%s169 + $0x1f8] sm:$0xff]
      %v241 = vld [vmem:[%s1] sm:$0xff]
      %v242 = vld [vmem:[%s1 + $0x8] sm:$0xff]
      %v243 = vld [vmem:[%s1 + $0x10] sm:$0xff]
      %v244 = vld [vmem:[%s1 + $0x18] sm:$0xff]
      %v245 = vld [vmem:[%s1 + $0x20] sm:$0xff]
      %v246 = vld [vmem:[%s1 + $0x28] sm:$0xff]
      %v247 = vld [vmem:[%s1 + $0x30] sm:$0xff]
      %v248 = vld [vmem:[%s1 + $0x38] sm:$0xff]
      %v249 = vld [vmem:[%s1 + $0x40] sm:$0xff]
      %v250 = vld [vmem:[%s1 + $0x48] sm:$0xff]
      %v251 = vld [vmem:[%s1 + $0x50] sm:$0xff]
      %v252 = vld [vmem:[%s1 + $0x58] sm:$0xff]
      %v253 = vld [vmem:[%s1 + $0x60] sm:$0xff]
      %v254 = vld [vmem:[%s1 + $0x68] sm:$0xff]
      %v255 = vld [vmem:[%s1 + $0x70] sm:$0xff]
      %v256 = vld [vmem:[%s1 + $0x78] sm:$0xff]
      %v257 = vld [vmem:[%s1 + $0x80] sm:$0xff]
      %v258 = vld [vmem:[%s1 + $0x88] sm:$0xff]
      %v259 = vld [vmem:[%s1 + $0x90] sm:$0xff]
      %v260 = vld [vmem:[%s1 + $0x98] sm:$0xff]
      %v261 = vld [vmem:[%s1 + $0xa0] sm:$0xff]
      %v262 = vld [vmem:[%s1 + $0xa8] sm:$0xff]
      %v263 = vld [vmem:[%s1 + $0xb0] sm:$0xff]
      %v264 = vld [vmem:[%s1 + $0xb8] sm:$0xff]
      %v265 = vld [vmem:[%s2] sm:$0x1]
      %v267 = vperm.slane %v265, 0
      %vm269 = vcmask 523264
      %v271 = vsel %vm269, %v178, 0
      %v274 = vsel %vm269, %v180, 0
      %v277 = vsel %vm269, %v182, 0
      %v280 = vsel %vm269, %v184, 0
      %v283 = vsel %vm269, %v186, 0
      %v286 = vsel %vm269, %v188, 0
      %v289 = vsel %vm269, %v190, 0
      %v292 = vsel %vm269, %v192, 0
      %v295 = vsel %vm269, %v194, 0
      %v298 = vsel %vm269, %v196, 0
      %v301 = vsel %vm269, %v198, 0
      %v304 = vsel %vm269, %v200, 0
      %v307 = vsel %vm269, %v202, 0
      %v310 = vsel %vm269, %v204, 0
      %v313 = vsel %vm269, %v206, 0
      %v316 = vsel %vm269, %v208, 0
      %v319 = vsel %vm269, %v210, 0
      %v322 = vsel %vm269, %v212, 0
      %v325 = vsel %vm269, %v214, 0
      %v328 = vsel %vm269, %v216, 0
      %v331 = vsel %vm269, %v218, 0
      %v334 = vsel %vm269, %v220, 0
      %v337 = vsel %vm269, %v222, 0
      %v340 = vsel %vm269, %v224, 0
      %v343 = vsel %vm269, %v226, 0
      %v346 = vsel %vm269, %v228, 0
      %v349 = vsel %vm269, %v230, 0
      %v352 = vsel %vm269, %v232, 0
      %v355 = vsel %vm269, %v234, 0
      %v358 = vsel %vm269, %v236, 0
      %v361 = vsel %vm269, %v238, 0
      %v364 = vsel %vm269, %v240, 0
      %366 = vmatpush.msra.mxu0 %v256
      %367 = vmatpush.msra.mxu0 %v255
      %368 = vmatpush.msra.mxu0 %v254
      %369 = vmatpush.msra.mxu0 %v253
      %370 = vmatpush.msra.mxu0 %v252
      %371 = vmatpush.msra.mxu0 %v251
      %372 = vmatpush.msra.mxu0 %v250
      %373 = vmatpush.msra.mxu0 %v249
      %374 = vmatpush.msra.mxu0 %v248
      %375 = vmatpush.msra.mxu0 %v247
      %376 = vmatpush.msra.mxu0 %v246
      %377 = vmatpush.msra.mxu0 %v245
      %378 = vmatpush.msra.mxu0 %v244
      %379 = vmatpush.msra.mxu0 %v243
      %380 = vmatpush.msra.mxu0 %v242
      %381 = vmatpush.msra.mxu0 %v241
      %382 = vmatmul.f32.gmra.mxu0 %v177
      %v383 = vpop.f32.mrf.mxu0
      %v384 = vadd.f32 %v267, %v383
      %385 = vmatmul.f32.gmra.mxu0 %v179
      %v386 = vpop.f32.mrf.mxu0
      %v387 = vadd.f32 %v267, %v386
      %388 = vmatmul.f32.gmra.mxu0 %v181
      %v389 = vpop.f32.mrf.mxu0
      %v390 = vadd.f32 %v267, %v389
      %391 = vmatmul.f32.gmra.mxu0 %v183
      %v392 = vpop.f32.mrf.mxu0
      %v393 = vadd.f32 %v267, %v392
      %394 = vmatmul.f32.gmra.mxu0 %v185
      %v395 = vpop.f32.mrf.mxu0
      %v396 = vadd.f32 %v267, %v395
      %397 = vmatmul.f32.gmra.mxu0 %v187
      %v398 = vpop.f32.mrf.mxu0
      %v399 = vadd.f32 %v267, %v398
      %400 = vmatmul.f32.gmra.mxu0 %v189
      %v401 = vpop.f32.mrf.mxu0
      %v402 = vadd.f32 %v267, %v401
      %403 = vmatmul.f32.gmra.mxu0 %v191
      %v404 = vpop.f32.mrf.mxu0
      %v405 = vadd.f32 %v267, %v404
      %406 = vmatmul.f32.gmra.mxu0 %v193
      %v407 = vpop.f32.mrf.mxu0
      %v408 = vadd.f32 %v267, %v407
      %409 = vmatmul.f32.gmra.mxu0 %v195
      %v410 = vpop.f32.mrf.mxu0
      %v411 = vadd.f32 %v267, %v410
      %412 = vmatmul.f32.gmra.mxu0 %v197
      %v413 = vpop.f32.mrf.mxu0
      %v414 = vadd.f32 %v267, %v413
      %415 = vmatmul.f32.gmra.mxu0 %v199
      %v416 = vpop.f32.mrf.mxu0
      %v417 = vadd.f32 %v267, %v416
      %418 = vmatmul.f32.gmra.mxu0 %v201
      %v419 = vpop.f32.mrf.mxu0
      %v420 = vadd.f32 %v267, %v419
      %421 = vmatmul.f32.gmra.mxu0 %v203
      %v422 = vpop.f32.mrf.mxu0
      %v423 = vadd.f32 %v267, %v422
      %424 = vmatmul.f32.gmra.mxu0 %v205
      %v425 = vpop.f32.mrf.mxu0
      %v426 = vadd.f32 %v267, %v425
      %427 = vmatmul.f32.gmra.mxu0 %v207
      %v428 = vpop.f32.mrf.mxu0
      %v429 = vadd.f32 %v267, %v428
      %430 = vmatmul.f32.gmra.mxu0 %v209
      %v431 = vpop.f32.mrf.mxu0
      %v432 = vadd.f32 %v267, %v431
      %433 = vmatmul.f32.gmra.mxu0 %v211
      %v434 = vpop.f32.mrf.mxu0
      %v435 = vadd.f32 %v267, %v434
      %436 = vmatmul.f32.gmra.mxu0 %v213
      %v437 = vpop.f32.mrf.mxu0
      %v438 = vadd.f32 %v267, %v437
      %439 = vmatmul.f32.gmra.mxu0 %v215
      %v440 = vpop.f32.mrf.mxu0
      %v441 = vadd.f32 %v267, %v440
      %442 = vmatmul.f32.gmra.mxu0 %v217
      %v443 = vpop.f32.mrf.mxu0
      %v444 = vadd.f32 %v267, %v443
      %445 = vmatmul.f32.gmra.mxu0 %v219
      %v446 = vpop.f32.mrf.mxu0
      %v447 = vadd.f32 %v267, %v446
      %448 = vmatmul.f32.gmra.mxu0 %v221
      %v449 = vpop.f32.mrf.mxu0
      %v450 = vadd.f32 %v267, %v449
      %451 = vmatmul.f32.gmra.mxu0 %v223
      %v452 = vpop.f32.mrf.mxu0
      %v453 = vadd.f32 %v267, %v452
      %454 = vmatmul.f32.gmra.mxu0 %v225
      %v455 = vpop.f32.mrf.mxu0
      %v456 = vadd.f32 %v267, %v455
      %457 = vmatmul.f32.gmra.mxu0 %v227
      %v458 = vpop.f32.mrf.mxu0
      %v459 = vadd.f32 %v267, %v458
      %460 = vmatmul.f32.gmra.mxu0 %v229
      %v461 = vpop.f32.mrf.mxu0
      %v462 = vadd.f32 %v267, %v461
      %463 = vmatmul.f32.gmra.mxu0 %v231
      %v464 = vpop.f32.mrf.mxu0
      %v465 = vadd.f32 %v267, %v464
      %466 = vmatmul.f32.gmra.mxu0 %v233
      %v467 = vpop.f32.mrf.mxu0
      %v468 = vadd.f32 %v267, %v467
      %469 = vmatmul.f32.gmra.mxu0 %v235
      %v470 = vpop.f32.mrf.mxu0
      %v471 = vadd.f32 %v267, %v470
      %472 = vmatmul.f32.gmra.mxu0 %v237
      %v473 = vpop.f32.mrf.mxu0
      %v474 = vadd.f32 %v267, %v473
      %475 = vmatmul.f32.gmra.mxu0 %v239
      %v476 = vpop.f32.mrf.mxu0
      %v477 = vadd.f32 %v267, %v476
      %478 = vdwg.mxu0
      %479 = vmatpush.msra.mxu0 0.0
      %480 = vmatpush.msra.mxu0 0.0
      %481 = vmatpush.msra.mxu0 0.0
      %482 = vmatpush.msra.mxu0 0.0
      %483 = vmatpush.msra.mxu0 0.0
      %484 = vmatpush.msra.mxu0 0.0
      %485 = vmatpush.msra.mxu0 0.0
      %486 = vmatpush.msra.mxu0 0.0
      %487 = vmatpush.msra.mxu0 %v264
      %488 = vmatpush.msra.mxu0 %v263
      %489 = vmatpush.msra.mxu0 %v262
      %490 = vmatpush.msra.mxu0 %v261
      %491 = vmatpush.msra.mxu0 %v260
      %492 = vmatpush.msra.mxu0 %v259
      %493 = vmatpush.msra.mxu0 %v258
      %494 = vmatpush.msra.mxu0 %v257
      %495 = vmatmul.f32.gmra.mxu0 %v271
      %v496 = vpop.f32.mrf.mxu0
      %v497 = vadd.f32 %v384, %v496
      %498 = vmatmul.f32.gmra.mxu0 %v274
      %v499 = vpop.f32.mrf.mxu0
      %v500 = vadd.f32 %v387, %v499
      %501 = vmatmul.f32.gmra.mxu0 %v277
      %v502 = vpop.f32.mrf.mxu0
      %v503 = vadd.f32 %v390, %v502
      %504 = vmatmul.f32.gmra.mxu0 %v280
      %v505 = vpop.f32.mrf.mxu0
      %v506 = vadd.f32 %v393, %v505
      %507 = vmatmul.f32.gmra.mxu0 %v283
      %v508 = vpop.f32.mrf.mxu0
      %v509 = vadd.f32 %v396, %v508
      %510 = vmatmul.f32.gmra.mxu0 %v286
      %v511 = vpop.f32.mrf.mxu0
      %v512 = vadd.f32 %v399, %v511
      %513 = vmatmul.f32.gmra.mxu0 %v289
      %v514 = vpop.f32.mrf.mxu0
      %v515 = vadd.f32 %v402, %v514
      %516 = vmatmul.f32.gmra.mxu0 %v292
      %v517 = vpop.f32.mrf.mxu0
      %v518 = vadd.f32 %v405, %v517
      %519 = vmatmul.f32.gmra.mxu0 %v295
      %v520 = vpop.f32.mrf.mxu0
      %v521 = vadd.f32 %v408, %v520
      %522 = vmatmul.f32.gmra.mxu0 %v298
      %v523 = vpop.f32.mrf.mxu0
      %v524 = vadd.f32 %v411, %v523
      %525 = vmatmul.f32.gmra.mxu0 %v301
      %v526 = vpop.f32.mrf.mxu0
      %v527 = vadd.f32 %v414, %v526
      %528 = vmatmul.f32.gmra.mxu0 %v304
      %v529 = vpop.f32.mrf.mxu0
      %v530 = vadd.f32 %v417, %v529
      %531 = vmatmul.f32.gmra.mxu0 %v307
      %v532 = vpop.f32.mrf.mxu0
      %v533 = vadd.f32 %v420, %v532
      %534 = vmatmul.f32.gmra.mxu0 %v310
      %v535 = vpop.f32.mrf.mxu0
      %v536 = vadd.f32 %v423, %v535
      %537 = vmatmul.f32.gmra.mxu0 %v313
      %v538 = vpop.f32.mrf.mxu0
      %v539 = vadd.f32 %v426, %v538
      %540 = vmatmul.f32.gmra.mxu0 %v316
      %v541 = vpop.f32.mrf.mxu0
      %v542 = vadd.f32 %v429, %v541
      %543 = vmatmul.f32.gmra.mxu0 %v319
      %v544 = vpop.f32.mrf.mxu0
      %v545 = vadd.f32 %v432, %v544
      %546 = vmatmul.f32.gmra.mxu0 %v322
      %v547 = vpop.f32.mrf.mxu0
      %v548 = vadd.f32 %v435, %v547
      %549 = vmatmul.f32.gmra.mxu0 %v325
      %v550 = vpop.f32.mrf.mxu0
      %v551 = vadd.f32 %v438, %v550
      %552 = vmatmul.f32.gmra.mxu0 %v328
      %v553 = vpop.f32.mrf.mxu0
      %v554 = vadd.f32 %v441, %v553
      %555 = vmatmul.f32.gmra.mxu0 %v331
      %v556 = vpop.f32.mrf.mxu0
      %v557 = vadd.f32 %v444, %v556
      %558 = vmatmul.f32.gmra.mxu0 %v334
      %v559 = vpop.f32.mrf.mxu0
      %v560 = vadd.f32 %v447, %v559
      %561 = vmatmul.f32.gmra.mxu0 %v337
      %v562 = vpop.f32.mrf.mxu0
      %v563 = vadd.f32 %v450, %v562
      %564 = vmatmul.f32.gmra.mxu0 %v340
      %v565 = vpop.f32.mrf.mxu0
      %v566 = vadd.f32 %v453, %v565
      %567 = vmatmul.f32.gmra.mxu0 %v343
      %v568 = vpop.f32.mrf.mxu0
      %v569 = vadd.f32 %v456, %v568
      %570 = vmatmul.f32.gmra.mxu0 %v346
      %v571 = vpop.f32.mrf.mxu0
      %v572 = vadd.f32 %v459, %v571
      %573 = vmatmul.f32.gmra.mxu0 %v349
      %v574 = vpop.f32.mrf.mxu0
      %v575 = vadd.f32 %v462, %v574
      %576 = vmatmul.f32.gmra.mxu0 %v352
      %v577 = vpop.f32.mrf.mxu0
      %v578 = vadd.f32 %v465, %v577
      %579 = vmatmul.f32.gmra.mxu0 %v355
      %v580 = vpop.f32.mrf.mxu0
      %v581 = vadd.f32 %v468, %v580
      %582 = vmatmul.f32.gmra.mxu0 %v358
      %v583 = vpop.f32.mrf.mxu0
      %v584 = vadd.f32 %v471, %v583
      %585 = vmatmul.f32.gmra.mxu0 %v361
      %v586 = vpop.f32.mrf.mxu0
      %v587 = vadd.f32 %v474, %v586
      %588 = vmatmul.f32.gmra.mxu0 %v364
      %v589 = vpop.f32.mrf.mxu0
      %v590 = vadd.f32 %v477, %v589
      %591 = vdwg.mxu0
      %vm592 = vcmp.gt.f32.partialorder %v497, 0.0
      %vm593 = vcmp.gt.f32.partialorder %v500, 0.0
      %vm594 = vcmp.gt.f32.partialorder %v503, 0.0
      %vm595 = vcmp.gt.f32.partialorder %v506, 0.0
      %vm596 = vcmp.gt.f32.partialorder %v509, 0.0
      %vm597 = vcmp.gt.f32.partialorder %v512, 0.0
      %vm598 = vcmp.gt.f32.partialorder %v515, 0.0
      %vm599 = vcmp.gt.f32.partialorder %v518, 0.0
      %vm600 = vcmp.gt.f32.partialorder %v521, 0.0
      %vm601 = vcmp.gt.f32.partialorder %v524, 0.0
      %vm602 = vcmp.gt.f32.partialorder %v527, 0.0
      %vm603 = vcmp.gt.f32.partialorder %v530, 0.0
      %vm604 = vcmp.gt.f32.partialorder %v533, 0.0
      %vm605 = vcmp.gt.f32.partialorder %v536, 0.0
      %vm606 = vcmp.gt.f32.partialorder %v539, 0.0
      %vm607 = vcmp.gt.f32.partialorder %v542, 0.0
      %vm608 = vcmp.gt.f32.partialorder %v545, 0.0
      %vm609 = vcmp.gt.f32.partialorder %v548, 0.0
      %vm610 = vcmp.gt.f32.partialorder %v551, 0.0
      %vm611 = vcmp.gt.f32.partialorder %v554, 0.0
      %vm612 = vcmp.gt.f32.partialorder %v557, 0.0
      %vm613 = vcmp.gt.f32.partialorder %v560, 0.0
      %vm614 = vcmp.gt.f32.partialorder %v563, 0.0
      %vm615 = vcmp.gt.f32.partialorder %v566, 0.0
      %vm616 = vcmp.gt.f32.partialorder %v569, 0.0
      %vm617 = vcmp.gt.f32.partialorder %v572, 0.0
      %vm618 = vcmp.gt.f32.partialorder %v575, 0.0
      %vm619 = vcmp.gt.f32.partialorder %v578, 0.0
      %vm620 = vcmp.gt.f32.partialorder %v581, 0.0
      %vm621 = vcmp.gt.f32.partialorder %v584, 0.0
      %vm622 = vcmp.gt.f32.partialorder %v587, 0.0
      %vm623 = vcmp.gt.f32.partialorder %v590, 0.0
      %v624 = vmul.f32 %v497, 0.01
      %v625 = vmul.f32 %v500, 0.01
      %v626 = vmul.f32 %v503, 0.01
      %v627 = vmul.f32 %v506, 0.01
      %v628 = vmul.f32 %v509, 0.01
      %v629 = vmul.f32 %v512, 0.01
      %v630 = vmul.f32 %v515, 0.01
      %v631 = vmul.f32 %v518, 0.01
      %v632 = vmul.f32 %v521, 0.01
      %v633 = vmul.f32 %v524, 0.01
      %v634 = vmul.f32 %v527, 0.01
      %v635 = vmul.f32 %v530, 0.01
      %v636 = vmul.f32 %v533, 0.01
      %v637 = vmul.f32 %v536, 0.01
      %v638 = vmul.f32 %v539, 0.01
      %v639 = vmul.f32 %v542, 0.01
      %v640 = vmul.f32 %v545, 0.01
      %v641 = vmul.f32 %v548, 0.01
      %v642 = vmul.f32 %v551, 0.01
      %v643 = vmul.f32 %v554, 0.01
      %v644 = vmul.f32 %v557, 0.01
      %v645 = vmul.f32 %v560, 0.01
      %v646 = vmul.f32 %v563, 0.01
      %v647 = vmul.f32 %v566, 0.01
      %v648 = vmul.f32 %v569, 0.01
      %v649 = vmul.f32 %v572, 0.01
      %v650 = vmul.f32 %v575, 0.01
      %v651 = vmul.f32 %v578, 0.01
      %v652 = vmul.f32 %v581, 0.01
      %v653 = vmul.f32 %v584, 0.01
      %v654 = vmul.f32 %v587, 0.01
      %v655 = vmul.f32 %v590, 0.01
      %v656 = vsel %vm592, %v497, %v624
      %v657 = vsel %vm593, %v500, %v625
      %v658 = vsel %vm594, %v503, %v626
      %v659 = vsel %vm595, %v506, %v627
      %v660 = vsel %vm596, %v509, %v628
      %v661 = vsel %vm597, %v512, %v629
      %v662 = vsel %vm598, %v515, %v630
      %v663 = vsel %vm599, %v518, %v631
      %v664 = vsel %vm600, %v521, %v632
      %v665 = vsel %vm601, %v524, %v633
      %v666 = vsel %vm602, %v527, %v634
      %v667 = vsel %vm603, %v530, %v635
      %v668 = vsel %vm604, %v533, %v636
      %v669 = vsel %vm605, %v536, %v637
      %v670 = vsel %vm606, %v539, %v638
      %v671 = vsel %vm607, %v542, %v639
      %v672 = vsel %vm608, %v545, %v640
      %v673 = vsel %vm609, %v548, %v641
      %v674 = vsel %vm610, %v551, %v642
      %v675 = vsel %vm611, %v554, %v643
      %v676 = vsel %vm612, %v557, %v644
      %v677 = vsel %vm613, %v560, %v645
      %v678 = vsel %vm614, %v563, %v646
      %v679 = vsel %vm615, %v566, %v647
      %v680 = vsel %vm616, %v569, %v648
      %v681 = vsel %vm617, %v572, %v649
      %v682 = vsel %vm618, %v575, %v650
      %v683 = vsel %vm619, %v578, %v651
      %v684 = vsel %vm620, %v581, %v652
      %v685 = vsel %vm621, %v584, %v653
      %v686 = vsel %vm622, %v587, %v654
      %v687 = vsel %vm623, %v590, %v655
      %vm688 = vcmask 261120
      %689 = vst.msk [vmem:[%s175] sm:$0xff] %vm688, %v656
      %690 = vst.msk [vmem:[%s175 + $0x8] sm:$0xff] %vm688, %v657
      %691 = vst.msk [vmem:[%s175 + $0x10] sm:$0xff] %vm688, %v658
      %692 = vst.msk [vmem:[%s175 + $0x18] sm:$0xff] %vm688, %v659
      %693 = vst.msk [vmem:[%s175 + $0x20] sm:$0xff] %vm688, %v660
      %694 = vst.msk [vmem:[%s175 + $0x28] sm:$0xff] %vm688, %v661
      %695 = vst.msk [vmem:[%s175 + $0x30] sm:$0xff] %vm688, %v662
      %696 = vst.msk [vmem:[%s175 + $0x38] sm:$0xff] %vm688, %v663
      %697 = vst.msk [vmem:[%s175 + $0x40] sm:$0xff] %vm688, %v664
      %698 = vst.msk [vmem:[%s175 + $0x48] sm:$0xff] %vm688, %v665
      %699 = vst.msk [vmem:[%s175 + $0x50] sm:$0xff] %vm688, %v666
      %700 = vst.msk [vmem:[%s175 + $0x58] sm:$0xff] %vm688, %v667
      %701 = vst.msk [vmem:[%s175 + $0x60] sm:$0xff] %vm688, %v668
      %702 = vst.msk [vmem:[%s175 + $0x68] sm:$0xff] %vm688, %v669
      %703 = vst.msk [vmem:[%s175 + $0x70] sm:$0xff] %vm688, %v670
      %704 = vst.msk [vmem:[%s175 + $0x78] sm:$0xff] %vm688, %v671
      %705 = vst.msk [vmem:[%s175 + $0x80] sm:$0xff] %vm688, %v672
      %706 = vst.msk [vmem:[%s175 + $0x88] sm:$0xff] %vm688, %v673
      %707 = vst.msk [vmem:[%s175 + $0x90] sm:$0xff] %vm688, %v674
      %708 = vst.msk [vmem:[%s175 + $0x98] sm:$0xff] %vm688, %v675
      %709 = vst.msk [vmem:[%s175 + $0xa0] sm:$0xff] %vm688, %v676
      %710 = vst.msk [vmem:[%s175 + $0xa8] sm:$0xff] %vm688, %v677
      %711 = vst.msk [vmem:[%s175 + $0xb0] sm:$0xff] %vm688, %v678
      %712 = vst.msk [vmem:[%s175 + $0xb8] sm:$0xff] %vm688, %v679
      %713 = vst.msk [vmem:[%s175 + $0xc0] sm:$0xff] %vm688, %v680
      %714 = vst.msk [vmem:[%s175 + $0xc8] sm:$0xff] %vm688, %v681
      %715 = vst.msk [vmem:[%s175 + $0xd0] sm:$0xff] %vm688, %v682
      %716 = vst.msk [vmem:[%s175 + $0xd8] sm:$0xff] %vm688, %v683
      %717 = vst.msk [vmem:[%s175 + $0xe0] sm:$0xff] %vm688, %v684
      %718 = vst.msk [vmem:[%s175 + $0xe8] sm:$0xff] %vm688, %v685
      %719 = vst.msk [vmem:[%s175 + $0xf0] sm:$0xff] %vm688, %v686
      %720 = vst.msk [vmem:[%s175 + $0xf8] sm:$0xff] %vm688, %v687
      %s721 = smul.u32 32, %s14
      %p722 = scmp.lt.s32.totalorder %s721, 127
      %s723 = scalar_select %p722, %s721, 127
      %s724 = smul.addr %s723, 8
      %s725 = scalar_lea.vmem %s3, %s724
      // Predicated region
      $region33: #{duelnet_forward.4} parent=31 // pred_check
        %p726 = pneg %p100
      $region34: #{duelnet_forward.4} parent=31 // pred_check_branch
        %728 = sbr.rel (%p726) target = $region36
      $region35: #{duelnet_forward.4} parent=31 // pred_region
        %s729 = smul.u32 32, %s14
      $region36: #{duelnet_forward.4} parent=31 // pred_fallthru
        _
    $region32: #{duelnet_forward.4} parent=5 // pred_fallthru
      _
    %p730 = scmp.le.s32.totalorder 2, %s9
    // Predicated region
    $region37: #{duelnet_forward.4} parent=5 // pred_check
      %p731 = pneg %p730
    $region38: #{duelnet_forward.4} parent=5 // pred_check_branch
      %733 = sbr.rel (%p731) target = $region40
    $region39: #{duelnet_forward.4} parent=5 // pred_region
      %s734 = ssub.s32 %s9, 2
      // Predicated region
      $region41: #{duelnet_forward.4} parent=39 // pred_check
        %p735 = pneg %p106
      $region42: #{duelnet_forward.4} parent=39 // pred_check_branch
        %737 = sbr.rel (%p735) target = $region44
      $region43: #{duelnet_forward.4} parent=39 // pred_region
        %s738 = smul.u32 32, %s15
        %p739 = scmp.lt.s32.totalorder %s738, 127
        %s740 = scalar_select %p739, %s738, 127
        %s741 = smul.addr %s740, 8
        %s742 = scalar_lea.vmem %s3, %s741
      $region44: #{duelnet_forward.4} parent=39 // pred_fallthru
        _
    $region40: #{duelnet_forward.4} parent=5 // pred_fallthru
      _
  $region6: #{duelnet_forward.4} parent=0 // loop_footer
    %s13 = sadd.s32 1, %s9
  $region7: #{duelnet_forward.4} parent=0 // loop_footer_branch
    %8 = sbr.rel target = $region3
  $region8: #{duelnet_forward.4} parent=0 // loop_exit
    _

// kernel: duelnet_forward.5
$region0: #{duelnet_forward.5}
  #allocation0 [shape = 'u32[]', space=smem, size = 0x4, offset = 0x4, fixed_abs, tag = 'smem constant byte address 0x4 - core index']
  #allocation1 [shape = 'u32[72,128]{1,0:T(1,128)}', space=vmem, size = 0x9000, scoped, tag = 'internal scratch']
  %s0 = inlined_call_operand.vmem [shape: f32[168,512], index: 0, kind: input, shape index: {}]
  %s1 = inlined_call_operand.vmem [shape: f32[512,64], index: 1, kind: input, shape index: {}]
  %s2 = inlined_call_operand.vmem [shape: f32[1,64], index: 2, kind: input, shape index: {}]
  %s3 = inlined_call_operand.vmem [shape: f32[168,64], index: 3, kind: output, shape index: {}]
  %s4 = sld [smem:[#allocation0]]
  $region22: #{duelnet_forward.5} parent=0
    _
  %s6 = ssub.s32 1, %s4
  %s7 = scalar_select 0, %s6, %s4
  // Predicated region
  $region2: #{duelnet_forward.5} parent=0 // pred_check
    _
  $region3: #{duelnet_forward.5} parent=0 // pred_check_branch
    %9 = sbr.rel (0) target = $region5
  $region4: #{duelnet_forward.5} parent=0 // pred_region
    _
  $region5: #{duelnet_forward.5} parent=0 // pred_fallthru
    _
  // Predicated region
  $region6: #{duelnet_forward.5} parent=0 // pred_check
    _
  $region7: #{duelnet_forward.5} parent=0 // pred_check_branch
    %11 = sbr.rel (0) target = $region9
  $region8: #{duelnet_forward.5} parent=0 // pred_region
    _
  $region9: #{duelnet_forward.5} parent=0 // pred_fallthru
    _
  // Predicated region
  $region10: #{duelnet_forward.5} parent=0 // pred_check
    _
  $region11: #{duelnet_forward.5} parent=0 // pred_check_branch
    %13 = sbr.rel (0) target = $region13
  $region12: #{duelnet_forward.5} parent=0 // pred_region
    _
  $region13: #{duelnet_forward.5} parent=0 // pred_fallthru
    _
  %v14 = vld [vmem:[%s0] sm:$0xff]
  %v15 = vld [vmem:[%s0 + $0x8] sm:$0xff]
  %v16 = vld [vmem:[%s0 + $0x10] sm:$0xff]
  %v17 = vld [vmem:[%s0 + $0x18] sm:$0xff]
  %v18 = vld [vmem:[%s0 + $0x20] sm:$0xff]
  %v19 = vld [vmem:[%s0 + $0x28] sm:$0xff]
  %v20 = vld [vmem:[%s0 + $0x30] sm:$0xff]
  %v21 = vld [vmem:[%s0 + $0x38] sm:$0xff]
  %v22 = vld [vmem:[%s0 + $0x40] sm:$0xff]
  %v23 = vld [vmem:[%s0 + $0x48] sm:$0xff]
  %v24 = vld [vmem:[%s0 + $0x50] sm:$0xff]
  %v25 = vld [vmem:[%s0 + $0x58] sm:$0xff]
  %v26 = vld [vmem:[%s0 + $0x60] sm:$0xff]
  %v27 = vld [vmem:[%s0 + $0x68] sm:$0xff]
  %v28 = vld [vmem:[%s0 + $0x70] sm:$0xff]
  %v29 = vld [vmem:[%s0 + $0x78] sm:$0xff]
  %v30 = vld [vmem:[%s0 + $0x80] sm:$0xff]
  %v31 = vld [vmem:[%s0 + $0x88] sm:$0xff]
  %v32 = vld [vmem:[%s0 + $0x90] sm:$0xff]
  %v33 = vld [vmem:[%s0 + $0x98] sm:$0xff]
  %v34 = vld [vmem:[%s0 + $0xa0] sm:$0xff]
  %v35 = vld [vmem:[%s0 + $0xa8] sm:$0xff]
  %v36 = vld [vmem:[%s0 + $0xb0] sm:$0xff]
  %v37 = vld [vmem:[%s0 + $0xb8] sm:$0xff]
  %v38 = vld [vmem:[%s0 + $0xc0] sm:$0xff]
  %v39 = vld [vmem:[%s0 + $0xc8] sm:$0xff]
  %v40 = vld [vmem:[%s0 + $0xd0] sm:$0xff]
  %v41 = vld [vmem:[%s0 + $0xd8] sm:$0xff]
  %v42 = vld [vmem:[%s0 + $0xe0] sm:$0xff]
  %v43 = vld [vmem:[%s0 + $0xe8] sm:$0xff]
  %v44 = vld [vmem:[%s0 + $0xf0] sm:$0xff]
  %v45 = vld [vmem:[%s0 + $0xf8] sm:$0xff]
  %v46 = vld [vmem:[%s0 + $0x100] sm:$0xff]
  %v47 = vld [vmem:[%s0 + $0x108] sm:$0xff]
  %v48 = vld [vmem:[%s0 + $0x110] sm:$0xff]
  %v49 = vld [vmem:[%s0 + $0x118] sm:$0xff]
  %v50 = vld [vmem:[%s0 + $0x120] sm:$0xff]
  %v51 = vld [vmem:[%s0 + $0x128] sm:$0xff]
  %v52 = vld [vmem:[%s0 + $0x130] sm:$0xff]
  %v53 = vld [vmem:[%s0 + $0x138] sm:$0xff]
  %v54 = vld [vmem:[%s0 + $0x140] sm:$0xff]
  %v55 = vld [vmem:[%s0 + $0x148] sm:$0xff]
  %v56 = vld [vmem:[%s0 + $0x150] sm:$0xff]
  %v57 = vld [vmem:[%s0 + $0x158] sm:$0xff]
  %v58 = vld [vmem:[%s0 + $0x160] sm:$0xff]
  %v59 = vld [vmem:[%s0 + $0x168] sm:$0xff]
  %v60 = vld [vmem:[%s0 + $0x170] sm:$0xff]
  %v61 = vld [vmem:[%s0 + $0x178] sm:$0xff]
  %v62 = vld [vmem:[%s0 + $0x180] sm:$0xff]
  %v63 = vld [vmem:[%s0 + $0x188] sm:$0xff]
  %v64 = vld [vmem:[%s0 + $0x190] sm:$0xff]
  %v65 = vld [vmem:[%s0 + $0x198] sm:$0xff]
  %v66 = vld [vmem:[%s0 + $0x1a0] sm:$0xff]
  %v67 = vld [vmem:[%s0 + $0x1a8] sm:$0xff]
  %v68 = vld [vmem:[%s0 + $0x1b0] sm:$0xff]
  %v69 = vld [vmem:[%s0 + $0x1b8] sm:$0xff]
  %v70 = vld [vmem:[%s0 + $0x1c0] sm:$0xff]
  %v71 = vld [vmem:[%s0 + $0x1c8] sm:$0xff]
  %v72 = vld [vmem:[%s0 + $0x1d0] sm:$0xff]
  %v73 = vld [vmem:[%s0 + $0x1d8] sm:$0xff]
  %v74 = vld [vmem:[%s0 + $0x1e0] sm:$0xff]
  %v75 = vld [vmem:[%s0 + $0x1e8] sm:$0xff]
  %v76 = vld [vmem:[%s0 + $0x1f0] sm:$0xff]
  %v77 = vld [vmem:[%s0 + $0x1f8] sm:$0xff]
  %v78 = vld [vmem:[%s0 + $0x200] sm:$0xff]
  %v79 = vld [vmem:[%s0 + $0x208] sm:$0xff]
  %v80 = vld [vmem:[%s0 + $0x210] sm:$0xff]
  %v81 = vld [vmem:[%s0 + $0x218] sm:$0xff]
  %v82 = vld [vmem:[%s0 + $0x220] sm:$0xff]
  %v83 = vld [vmem:[%s0 + $0x228] sm:$0xff]
  %v84 = vld [vmem:[%s0 + $0x230] sm:$0xff]
  %v85 = vld [vmem:[%s0 + $0x238] sm:$0xff]
  %v86 = vld [vmem:[%s0 + $0x240] sm:$0xff]
  %v87 = vld [vmem:[%s0 + $0x248] sm:$0xff]
  %v88 = vld [vmem:[%s0 + $0x250] sm:$0xff]
  %v89 = vld [vmem:[%s0 + $0x258] sm:$0xff]
  %v90 = vld [vmem:[%s0 + $0x260] sm:$0xff]
  %v91 = vld [vmem:[%s0 + $0x268] sm:$0xff]
  %v92 = vld [vmem:[%s0 + $0x270] sm:$0xff]
  %v93 = vld [vmem:[%s0 + $0x278] sm:$0xff]
  %v94 = vld [vmem:[%s0 + $0x280] sm:$0xff]
  %v95 = vld [vmem:[%s0 + $0x288] sm:$0xff]
  %v96 = vld [vmem:[%s0 + $0x290] sm:$0xff]
  %v97 = vld [vmem:[%s0 + $0x298] sm:$0xff]
  %v98 = vld [vmem:[%s1] sm:$0xff]
  %v99 = vld [vmem:[%s1 + $0x8] sm:$0xff]
  %v100 = vld [vmem:[%s1 + $0x10] sm:$0xff]
  %v101 = vld [vmem:[%s1 + $0x18] sm:$0xff]
  %v102 = vld [vmem:[%s1 + $0x20] sm:$0xff]
  %v103 = vld [vmem:[%s1 + $0x28] sm:$0xff]
  %v104 = vld [vmem:[%s1 + $0x30] sm:$0xff]
  %v105 = vld [vmem:[%s1 + $0x38] sm:$0xff]
  %v106 = vld [vmem:[%s1 + $0x40] sm:$0xff]
  %v107 = vld [vmem:[%s1 + $0x48] sm:$0xff]
  %v108 = vld [vmem:[%s1 + $0x50] sm:$0xff]
  %v109 = vld [vmem:[%s1 + $0x58] sm:$0xff]
  %v110 = vld [vmem:[%s1 + $0x60] sm:$0xff]
  %v111 = vld [vmem:[%s1 + $0x68] sm:$0xff]
  %v112 = vld [vmem:[%s1 + $0x70] sm:$0xff]
  %v113 = vld [vmem:[%s1 + $0x78] sm:$0xff]
  %v114 = vld [vmem:[%s1 + $0x80] sm:$0xff]
  %v115 = vld [vmem:[%s1 + $0x88] sm:$0xff]
  %v116 = vld [vmem:[%s1 + $0x90] sm:$0xff]
  %v117 = vld [vmem:[%s1 + $0x98] sm:$0xff]
  %v118 = vld [vmem:[%s1 + $0xa0] sm:$0xff]
  %v119 = vld [vmem:[%s1 + $0xa8] sm:$0xff]
  %v120 = vld [vmem:[%s1 + $0xb0] sm:$0xff]
  %v121 = vld [vmem:[%s1 + $0xb8] sm:$0xff]
  %v122 = vld [vmem:[%s1 + $0xc0] sm:$0xff]
  %v123 = vld [vmem:[%s1 + $0xc8] sm:$0xff]
  %v124 = vld [vmem:[%s1 + $0xd0] sm:$0xff]
  %v125 = vld [vmem:[%s1 + $0xd8] sm:$0xff]
  %v126 = vld [vmem:[%s1 + $0xe0] sm:$0xff]
  %v127 = vld [vmem:[%s1 + $0xe8] sm:$0xff]
  %v128 = vld [vmem:[%s1 + $0xf0] sm:$0xff]
  %v129 = vld [vmem:[%s1 + $0xf8] sm:$0xff]
  %v130 = vld [vmem:[%s1 + $0x100] sm:$0xff]
  %v131 = vld [vmem:[%s1 + $0x108] sm:$0xff]
  %v132 = vld [vmem:[%s1 + $0x110] sm:$0xff]
  %v133 = vld [vmem:[%s1 + $0x118] sm:$0xff]
  %v134 = vld [vmem:[%s1 + $0x120] sm:$0xff]
  %v135 = vld [vmem:[%s1 + $0x128] sm:$0xff]
  %v136 = vld [vmem:[%s1 + $0x130] sm:$0xff]
  %v137 = vld [vmem:[%s1 + $0x138] sm:$0xff]
  %v138 = vld [vmem:[%s1 + $0x140] sm:$0xff]
  %v139 = vld [vmem:[%s1 + $0x148] sm:$0xff]
  %v140 = vld [vmem:[%s1 + $0x150] sm:$0xff]
  %v141 = vld [vmem:[%s1 + $0x158] sm:$0xff]
  %v142 = vld [vmem:[%s1 + $0x160] sm:$0xff]
  %v143 = vld [vmem:[%s1 + $0x168] sm:$0xff]
  %v144 = vld [vmem:[%s1 + $0x170] sm:$0xff]
  %v145 = vld [vmem:[%s1 + $0x178] sm:$0xff]
  %v146 = vld [vmem:[%s1 + $0x180] sm:$0xff]
  %v147 = vld [vmem:[%s1 + $0x188] sm:$0xff]
  %v148 = vld [vmem:[%s1 + $0x190] sm:$0xff]
  %v149 = vld [vmem:[%s1 + $0x198] sm:$0xff]
  %v150 = vld [vmem:[%s1 + $0x1a0] sm:$0xff]
  %v151 = vld [vmem:[%s1 + $0x1a8] sm:$0xff]
  %v152 = vld [vmem:[%s1 + $0x1b0] sm:$0xff]
  %v153 = vld [vmem:[%s1 + $0x1b8] sm:$0xff]
  %v154 = vld [vmem:[%s1 + $0x1c0] sm:$0xff]
  %v155 = vld [vmem:[%s1 + $0x1c8] sm:$0xff]
  %v156 = vld [vmem:[%s1 + $0x1d0] sm:$0xff]
  %v157 = vld [vmem:[%s1 + $0x1d8] sm:$0xff]
  %v158 = vld [vmem:[%s1 + $0x1e0] sm:$0xff]
  %v159 = vld [vmem:[%s1 + $0x1e8] sm:$0xff]
  %v160 = vld [vmem:[%s1 + $0x1f0] sm:$0xff]
  %v161 = vld [vmem:[%s1 + $0x1f8] sm:$0xff]
  %v162 = vld [vmem:[%s2] sm:$0x1]
  %v164 = vperm.slane %v162, 0
  %166 = vmatpush.msra.mxu0 %v113
  %167 = vmatpush.msra.mxu0 %v112
  %168 = vmatpush.msra.mxu0 %v111
  %169 = vmatpush.msra.mxu0 %v110
  %170 = vmatpush.msra.mxu0 %v109
  %171 = vmatpush.msra.mxu0 %v108
  %172 = vmatpush.msra.mxu0 %v107
  %173 = vmatpush.msra.mxu0 %v106
  %174 = vmatpush.msra.mxu0 %v105
  %175 = vmatpush.msra.mxu0 %v104
  %176 = vmatpush.msra.mxu0 %v103
  %177 = vmatpush.msra.mxu0 %v102
  %178 = vmatpush.msra.mxu0 %v101
  %179 = vmatpush.msra.mxu0 %v100
  %180 = vmatpush.msra.mxu0 %v99
  %181 = vmatpush.msra.mxu0 %v98
  %182 = vmatmul.f32.gmra.mxu0 %v14
  %v183 = vpop.f32.mrf.mxu0
  %v184 = vadd.f32 %v164, %v183
  %185 = vmatmul.f32.gmra.mxu0 %v18
  %v186 = vpop.f32.mrf.mxu0
  %v187 = vadd.f32 %v164, %v186
  %188 = vmatmul.f32.gmra.mxu0 %v22
  %v189 = vpop.f32.mrf.mxu0
  %v190 = vadd.f32 %v164, %v189
  %191 = vmatmul.f32.gmra.mxu0 %v26
  %v192 = vpop.f32.mrf.mxu0
  %v193 = vadd.f32 %v164, %v192
  %194 = vmatmul.f32.gmra.mxu0 %v30
  %v195 = vpop.f32.mrf.mxu0
  %v196 = vadd.f32 %v164, %v195
  %197 = vmatmul.f32.gmra.mxu0 %v34
  %v198 = vpop.f32.mrf.mxu0
  %v199 = vadd.f32 %v164, %v198
  %200 = vmatmul.f32.gmra.mxu0 %v38
  %v201 = vpop.f32.mrf.mxu0
  %v202 = vadd.f32 %v164, %v201
  %203 = vmatmul.f32.gmra.mxu0 %v42
  %v204 = vpop.f32.mrf.mxu0
  %v205 = vadd.f32 %v164, %v204
  %206 = vmatmul.f32.gmra.mxu0 %v46
  %v207 = vpop.f32.mrf.mxu0
  %v208 = vadd.f32 %v164, %v207
  %209 = vmatmul.f32.gmra.mxu0 %v50
  %v210 = vpop.f32.mrf.mxu0
  %v211 = vadd.f32 %v164, %v210
  %212 = vmatmul.f32.gmra.mxu0 %v54
  %v213 = vpop.f32.mrf.mxu0
  %v214 = vadd.f32 %v164, %v213
  %215 = vmatmul.f32.gmra.mxu0 %v58
  %v216 = vpop.f32.mrf.mxu0
  %v217 = vadd.f32 %v164, %v216
  %218 = vmatmul.f32.gmra.mxu0 %v62
  %v219 = vpop.f32.mrf.mxu0
  %v220 = vadd.f32 %v164, %v219
  %221 = vmatmul.f32.gmra.mxu0 %v66
  %v222 = vpop.f32.mrf.mxu0
  %v223 = vadd.f32 %v164, %v222
  %224 = vmatmul.f32.gmra.mxu0 %v70
  %v225 = vpop.f32.mrf.mxu0
  %v226 = vadd.f32 %v164, %v225
  %227 = vmatmul.f32.gmra.mxu0 %v74
  %v228 = vpop.f32.mrf.mxu0
  %v229 = vadd.f32 %v164, %v228
  %230 = vmatmul.f32.gmra.mxu0 %v78
  %v231 = vpop.f32.mrf.mxu0
  %v232 = vadd.f32 %v164, %v231
  %233 = vmatmul.f32.gmra.mxu0 %v82
  %v234 = vpop.f32.mrf.mxu0
  %v235 = vadd.f32 %v164, %v234
  %236 = vmatmul.f32.gmra.mxu0 %v86
  %v237 = vpop.f32.mrf.mxu0
  %v238 = vadd.f32 %v164, %v237
  %239 = vmatmul.f32.gmra.mxu0 %v90
  %v240 = vpop.f32.mrf.mxu0
  %v241 = vadd.f32 %v164, %v240
  %242 = vmatmul.f32.gmra.mxu0 %v94
  %v243 = vpop.f32.mrf.mxu0
  %v244 = vadd.f32 %v164, %v243
  %245 = vdwg.mxu0
  %246 = vmatpush.msra.mxu0 %v129
  %247 = vmatpush.msra.mxu0 %v128
  %248 = vmatpush.msra.mxu0 %v127
  %249 = vmatpush.msra.mxu0 %v126
  %250 = vmatpush.msra.mxu0 %v125
  %251 = vmatpush.msra.mxu0 %v124
  %252 = vmatpush.msra.mxu0 %v123
  %253 = vmatpush.msra.mxu0 %v122
  %254 = vmatpush.msra.mxu0 %v121
  %255 = vmatpush.msra.mxu0 %v120
  %256 = vmatpush.msra.mxu0 %v119
  %257 = vmatpush.msra.mxu0 %v118
  %258 = vmatpush.msra.mxu0 %v117
  %259 = vmatpush.msra.mxu0 %v116
  %260 = vmatpush.msra.mxu0 %v115
  %261 = vmatpush.msra.mxu0 %v114
  %262 = vmatmul.f32.gmra.mxu0 %v15
  %v263 = vpop.f32.mrf.mxu0
  %v264 = vadd.f32 %v184, %v263
  %265 = vmatmul.f32.gmra.mxu0 %v19
  %v266 = vpop.f32.mrf.mxu0
  %v267 = vadd.f32 %v187, %v266
  %268 = vmatmul.f32.gmra.mxu0 %v23
  %v269 = vpop.f32.mrf.mxu0
  %v270 = vadd.f32 %v190, %v269
  %271 = vmatmul.f32.gmra.mxu0 %v27
  %v272 = vpop.f32.mrf.mxu0
  %v273 = vadd.f32 %v193, %v272
  %274 = vmatmul.f32.gmra.mxu0 %v31
  %v275 = vpop.f32.mrf.mxu0
  %v276 = vadd.f32 %v196, %v275
  %277 = vmatmul.f32.gmra.mxu0 %v35
  %v278 = vpop.f32.mrf.mxu0
  %v279 = vadd.f32 %v199, %v278
  %280 = vmatmul.f32.gmra.mxu0 %v39
  %v281 = vpop.f32.mrf.mxu0
  %v282 = vadd.f32 %v202, %v281
  %283 = vmatmul.f32.gmra.mxu0 %v43
  %v284 = vpop.f32.mrf.mxu0
  %v285 = vadd.f32 %v205, %v284
  %286 = vmatmul.f32.gmra.mxu0 %v47
  %v287 = vpop.f32.mrf.mxu0
  %v288 = vadd.f32 %v208, %v287
  %289 = vmatmul.f32.gmra.mxu0 %v51
  %v290 = vpop.f32.mrf.mxu0
  %v291 = vadd.f32 %v211, %v290
  %292 = vmatmul.f32.gmra.mxu0 %v55
  %v293 = vpop.f32.mrf.mxu0
  %v294 = vadd.f32 %v214, %v293
  %295 = vmatmul.f32.gmra.mxu0 %v59
  %v296 = vpop.f32.mrf.mxu0
  %v297 = vadd.f32 %v217, %v296
  %298 = vmatmul.f32.gmra.mxu0 %v63
  %v299 = vpop.f32.mrf.mxu0
  %v300 = vadd.f32 %v220, %v299
  %301 = vmatmul.f32.gmra.mxu0 %v67
  %v302 = vpop.f32.mrf.mxu0
  %v303 = vadd.f32 %v223, %v302
  %304 = vmatmul.f32.gmra.mxu0 %v71
  %v305 = vpop.f32.mrf.mxu0
  %v306 = vadd.f32 %v226, %v305
  %307 = vmatmul.f32.gmra.mxu0 %v75
  %v308 = vpop.f32.mrf.mxu0
  %v309 = vadd.f32 %v229, %v308
  %310 = vmatmul.f32.gmra.mxu0 %v79
  %v311 = vpop.f32.mrf.mxu0
  %v312 = vadd.f32 %v232, %v311
  %313 = vmatmul.f32.gmra.mxu0 %v83
  %v314 = vpop.f32.mrf.mxu0
  %v315 = vadd.f32 %v235, %v314
  %316 = vmatmul.f32.gmra.mxu0 %v87
  %v317 = vpop.f32.mrf.mxu0
  %v318 = vadd.f32 %v238, %v317
  %319 = vmatmul.f32.gmra.mxu0 %v91
  %v320 = vpop.f32.mrf.mxu0
  %v321 = vadd.f32 %v241, %v320
  %322 = vmatmul.f32.gmra.mxu0 %v95
  %v323 = vpop.f32.mrf.mxu0
  %v324 = vadd.f32 %v244, %v323
  %325 = vdwg.mxu0
  %326 = vmatpush.msra.mxu0 %v145
  %327 = vmatpush.msra.mxu0 %v144
  %328 = vmatpush.msra.mxu0 %v143
  %329 = vmatpush.msra.mxu0 %v142
  %330 = vmatpush.msra.mxu0 %v141
  %331 = vmatpush.msra.mxu0 %v140
  %332 = vmatpush.msra.mxu0 %v139
  %333 = vmatpush.msra.mxu0 %v138
  %334 = vmatpush.msra.mxu0 %v137
  %335 = vmatpush.msra.mxu0 %v136
  %336 = vmatpush.msra.mxu0 %v135
  %337 = vmatpush.msra.mxu0 %v134
  %338 = vmatpush.msra.mxu0 %v133
  %339 = vmatpush.msra.mxu0 %v132
  %340 = vmatpush.msra.mxu0 %v131
  %341 = vmatpush.msra.mxu0 %v130
  %342 = vmatmul.f32.gmra.mxu0 %v16
  %v343 = vpop.f32.mrf.mxu0
  %v344 = vadd.f32 %v264, %v343
  %345 = vmatmul.f32.gmra.mxu0 %v20
  %v346 = vpop.f32.mrf.mxu0
  %v347 = vadd.f32 %v267, %v346
  %348 = vmatmul.f32.gmra.mxu0 %v24
  %v349 = vpop.f32.mrf.mxu0
  %v350 = vadd.f32 %v270, %v349
  %351 = vmatmul.f32.gmra.mxu0 %v28
  %v352 = vpop.f32.mrf.mxu0
  %v353 = vadd.f32 %v273, %v352
  %354 = vmatmul.f32.gmra.mxu0 %v32
  %v355 = vpop.f32.mrf.mxu0
  %v356 = vadd.f32 %v276, %v355
  %357 = vmatmul.f32.gmra.mxu0 %v36
  %v358 = vpop.f32.mrf.mxu0
  %v359 = vadd.f32 %v279, %v358
  %360 = vmatmul.f32.gmra.mxu0 %v40
  %v361 = vpop.f32.mrf.mxu0
  %v362 = vadd.f32 %v282, %v361
  %363 = vmatmul.f32.gmra.mxu0 %v44
  %v364 = vpop.f32.mrf.mxu0
  %v365 = vadd.f32 %v285, %v364
  %366 = vmatmul.f32.gmra.mxu0 %v48
  %v367 = vpop.f32.mrf.mxu0
  %v368 = vadd.f32 %v288, %v367
  %369 = vmatmul.f32.gmra.mxu0 %v52
  %v370 = vpop.f32.mrf.mxu0
  %v371 = vadd.f32 %v291, %v370
  %372 = vmatmul.f32.gmra.mxu0 %v56
  %v373 = vpop.f32.mrf.mxu0
  %v374 = vadd.f32 %v294, %v373
  %375 = vmatmul.f32.gmra.mxu0 %v60
  %v376 = vpop.f32.mrf.mxu0
  %v377 = vadd.f32 %v297, %v376
  %378 = vmatmul.f32.gmra.mxu0 %v64
  %v379 = vpop.f32.mrf.mxu0
  %v380 = vadd.f32 %v300, %v379
  %381 = vmatmul.f32.gmra.mxu0 %v68
  %v382 = vpop.f32.mrf.mxu0
  %v383 = vadd.f32 %v303, %v382
  %384 = vmatmul.f32.gmra.mxu0 %v72
  %v385 = vpop.f32.mrf.mxu0
  %v386 = vadd.f32 %v306, %v385
  %387 = vmatmul.f32.gmra.mxu0 %v76
  %v388 = vpop.f32.mrf.mxu0
  %v389 = vadd.f32 %v309, %v388
  %390 = vmatmul.f32.gmra.mxu0 %v80
  %v391 = vpop.f32.mrf.mxu0
  %v392 = vadd.f32 %v312, %v391
  %393 = vmatmul.f32.gmra.mxu0 %v84
  %v394 = vpop.f32.mrf.mxu0
  %v395 = vadd.f32 %v315, %v394
  %396 = vmatmul.f32.gmra.mxu0 %v88
  %v397 = vpop.f32.mrf.mxu0
  %v398 = vadd.f32 %v318, %v397
  %399 = vmatmul.f32.gmra.mxu0 %v92
  %v400 = vpop.f32.mrf.mxu0
  %v401 = vadd.f32 %v321, %v400
  %402 = vmatmul.f32.gmra.mxu0 %v96
  %v403 = vpop.f32.mrf.mxu0
  %v404 = vadd.f32 %v324, %v403
  %405 = vdwg.mxu0
  %406 = vmatpush.msra.mxu0 %v161
  %407 = vmatpush.msra.mxu0 %v160
  %408 = vmatpush.msra.mxu0 %v159
  %409 = vmatpush.msra.mxu0 %v158
  %410 = vmatpush.msra.mxu0 %v157
  %411 = vmatpush.msra.mxu0 %v156
  %412 = vmatpush.msra.mxu0 %v155
  %413 = vmatpush.msra.mxu0 %v154
  %414 = vmatpush.msra.mxu0 %v153
  %415 = vmatpush.msra.mxu0 %v152
  %416 = vmatpush.msra.mxu0 %v151
  %417 = vmatpush.msra.mxu0 %v150
  %418 = vmatpush.msra.mxu0 %v149
  %419 = vmatpush.msra.mxu0 %v148
  %420 = vmatpush.msra.mxu0 %v147
  %421 = vmatpush.msra.mxu0 %v146
  %422 = vmatmul.f32.gmra.mxu0 %v17
  %v423 = vpop.f32.mrf.mxu0
  %v424 = vadd.f32 %v344, %v423
  %425 = vmatmul.f32.gmra.mxu0 %v21
  %v426 = vpop.f32.mrf.mxu0
  %v427 = vadd.f32 %v347, %v426
  %428 = vmatmul.f32.gmra.mxu0 %v25
  %v429 = vpop.f32.mrf.mxu0
  %v430 = vadd.f32 %v350, %v429
  %431 = vmatmul.f32.gmra.mxu0 %v29
  %v432 = vpop.f32.mrf.mxu0
  %v433 = vadd.f32 %v353, %v432
  %434 = vmatmul.f32.gmra.mxu0 %v33
  %v435 = vpop.f32.mrf.mxu0
  %v436 = vadd.f32 %v356, %v435
  %437 = vmatmul.f32.gmra.mxu0 %v37
  %v438 = vpop.f32.mrf.mxu0
  %v439 = vadd.f32 %v359, %v438
  %440 = vmatmul.f32.gmra.mxu0 %v41
  %v441 = vpop.f32.mrf.mxu0
  %v442 = vadd.f32 %v362, %v441
  %443 = vmatmul.f32.gmra.mxu0 %v45
  %v444 = vpop.f32.mrf.mxu0
  %v445 = vadd.f32 %v365, %v444
  %446 = vmatmul.f32.gmra.mxu0 %v49
  %v447 = vpop.f32.mrf.mxu0
  %v448 = vadd.f32 %v368, %v447
  %449 = vmatmul.f32.gmra.mxu0 %v53
  %v450 = vpop.f32.mrf.mxu0
  %v451 = vadd.f32 %v371, %v450
  %452 = vmatmul.f32.gmra.mxu0 %v57
  %v453 = vpop.f32.mrf.mxu0
  %v454 = vadd.f32 %v374, %v453
  %455 = vmatmul.f32.gmra.mxu0 %v61
  %v456 = vpop.f32.mrf.mxu0
  %v457 = vadd.f32 %v377, %v456
  %458 = vmatmul.f32.gmra.mxu0 %v65
  %v459 = vpop.f32.mrf.mxu0
  %v460 = vadd.f32 %v380, %v459
  %461 = vmatmul.f32.gmra.mxu0 %v69
  %v462 = vpop.f32.mrf.mxu0
  %v463 = vadd.f32 %v383, %v462
  %464 = vmatmul.f32.gmra.mxu0 %v73
  %v465 = vpop.f32.mrf.mxu0
  %v466 = vadd.f32 %v386, %v465
  %467 = vmatmul.f32.gmra.mxu0 %v77
  %v468 = vpop.f32.mrf.mxu0
  %v469 = vadd.f32 %v389, %v468
  %470 = vmatmul.f32.gmra.mxu0 %v81
  %v471 = vpop.f32.mrf.mxu0
  %v472 = vadd.f32 %v392, %v471
  %473 = vmatmul.f32.gmra.mxu0 %v85
  %v474 = vpop.f32.mrf.mxu0
  %v475 = vadd.f32 %v395, %v474
  %476 = vmatmul.f32.gmra.mxu0 %v89
  %v477 = vpop.f32.mrf.mxu0
  %v478 = vadd.f32 %v398, %v477
  %479 = vmatmul.f32.gmra.mxu0 %v93
  %v480 = vpop.f32.mrf.mxu0
  %v481 = vadd.f32 %v401, %v480
  %482 = vmatmul.f32.gmra.mxu0 %v97
  %v483 = vpop.f32.mrf.mxu0
  %v484 = vadd.f32 %v404, %v483
  %485 = vdwg.mxu0
  %vm486 = vcmp.gt.f32.partialorder %v424, 0.0
  %vm487 = vcmp.gt.f32.partialorder %v427, 0.0
  %vm488 = vcmp.gt.f32.partialorder %v430, 0.0
  %vm489 = vcmp.gt.f32.partialorder %v433, 0.0
  %vm490 = vcmp.gt.f32.partialorder %v436, 0.0
  %vm491 = vcmp.gt.f32.partialorder %v439, 0.0
  %vm492 = vcmp.gt.f32.partialorder %v442, 0.0
  %vm493 = vcmp.gt.f32.partialorder %v445, 0.0
  %vm494 = vcmp.gt.f32.partialorder %v448, 0.0
  %vm495 = vcmp.gt.f32.partialorder %v451, 0.0
  %vm496 = vcmp.gt.f32.partialorder %v454, 0.0
  %vm497 = vcmp.gt.f32.partialorder %v457, 0.0
  %vm498 = vcmp.gt.f32.partialorder %v460, 0.0
  %vm499 = vcmp.gt.f32.partialorder %v463, 0.0
  %vm500 = vcmp.gt.f32.partialorder %v466, 0.0
  %vm501 = vcmp.gt.f32.partialorder %v469, 0.0
  %vm502 = vcmp.gt.f32.partialorder %v472, 0.0
  %vm503 = vcmp.gt.f32.partialorder %v475, 0.0
  %vm504 = vcmp.gt.f32.partialorder %v478, 0.0
  %vm505 = vcmp.gt.f32.partialorder %v481, 0.0
  %vm506 = vcmp.gt.f32.partialorder %v484, 0.0
  %v507 = vmul.f32 %v424, 0.01
  %v508 = vmul.f32 %v427, 0.01
  %v509 = vmul.f32 %v430, 0.01
  %v510 = vmul.f32 %v433, 0.01
  %v511 = vmul.f32 %v436, 0.01
  %v512 = vmul.f32 %v439, 0.01
  %v513 = vmul.f32 %v442, 0.01
  %v514 = vmul.f32 %v445, 0.01
  %v515 = vmul.f32 %v448, 0.01
  %v516 = vmul.f32 %v451, 0.01
  %v517 = vmul.f32 %v454, 0.01
  %v518 = vmul.f32 %v457, 0.01
  %v519 = vmul.f32 %v460, 0.01
  %v520 = vmul.f32 %v463, 0.01
  %v521 = vmul.f32 %v466, 0.01
  %v522 = vmul.f32 %v469, 0.01
  %v523 = vmul.f32 %v472, 0.01
  %v524 = vmul.f32 %v475, 0.01
  %v525 = vmul.f32 %v478, 0.01
  %v526 = vmul.f32 %v481, 0.01
  %v527 = vmul.f32 %v484, 0.01
  %v528 = vsel %vm486, %v424, %v507
  %v529 = vsel %vm487, %v427, %v508
  %v530 = vsel %vm488, %v430, %v509
  %v531 = vsel %vm489, %v433, %v510
  %v532 = vsel %vm490, %v436, %v511
  %v533 = vsel %vm491, %v439, %v512
  %v534 = vsel %vm492, %v442, %v513
  %v535 = vsel %vm493, %v445, %v514
  %v536 = vsel %vm494, %v448, %v515
  %v537 = vsel %vm495, %v451, %v516
  %v538 = vsel %vm496, %v454, %v517
  %v539 = vsel %vm497, %v457, %v518
  %v540 = vsel %vm498, %v460, %v519
  %v541 = vsel %vm499, %v463, %v520
  %v542 = vsel %vm500, %v466, %v521
  %v543 = vsel %vm501, %v469, %v522
  %v544 = vsel %vm502, %v472, %v523
  %v545 = vsel %vm503, %v475, %v524
  %v546 = vsel %vm504, %v478, %v525
  %v547 = vsel %vm505, %v481, %v526
  %v548 = vsel %vm506, %v484, %v527
  %vm549 = vcmask 523264
  %550 = vst.msk [vmem:[%s3] sm:$0xff] %vm549, %v528
  %551 = vst.msk [vmem:[%s3 + $0x8] sm:$0xff] %vm549, %v529
  %552 = vst.msk [vmem:[%s3 + $0x10] sm:$0xff] %vm549, %v530
  %553 = vst.msk [vmem:[%s3 + $0x18] sm:$0xff] %vm549, %v531
  %554 = vst.msk [vmem:[%s3 + $0x20] sm:$0xff] %vm549, %v532
  %555 = vst.msk [vmem:[%s3 + $0x28] sm:$0xff] %vm549, %v533
  %556 = vst.msk [vmem:[%s3 + $0x30] sm:$0xff] %vm549, %v534
  %557 = vst.msk [vmem:[%s3 + $0x38] sm:$0xff] %vm549, %v535
  %558 = vst.msk [vmem:[%s3 + $0x40] sm:$0xff] %vm549, %v536
  %559 = vst.msk [vmem:[%s3 + $0x48] sm:$0xff] %vm549, %v537
  %560 = vst.msk [vmem:[%s3 + $0x50] sm:$0xff] %vm549, %v538
  %561 = vst.msk [vmem:[%s3 + $0x58] sm:$0xff] %vm549, %v539
  %562 = vst.msk [vmem:[%s3 + $0x60] sm:$0xff] %vm549, %v540
  %563 = vst.msk [vmem:[%s3 + $0x68] sm:$0xff] %vm549, %v541
  %564 = vst.msk [vmem:[%s3 + $0x70] sm:$0xff] %vm549, %v542
  %565 = vst.msk [vmem:[%s3 + $0x78] sm:$0xff] %vm549, %v543
  %566 = vst.msk [vmem:[%s3 + $0x80] sm:$0xff] %vm549, %v544
  %567 = vst.msk [vmem:[%s3 + $0x88] sm:$0xff] %vm549, %v545
  %568 = vst.msk [vmem:[%s3 + $0x90] sm:$0xff] %vm549, %v546
  %569 = vst.msk [vmem:[%s3 + $0x98] sm:$0xff] %vm549, %v547
  %570 = vst.msk [vmem:[%s3 + $0xa0] sm:$0xff] %vm549, %v548
  // Predicated region
  $region14: #{duelnet_forward.5} parent=0 // pred_check
    _
  $region15: #{duelnet_forward.5} parent=0 // pred_check_branch
    %572 = sbr.rel (0) target = $region17
  $region16: #{duelnet_forward.5} parent=0 // pred_region
    _
  $region17: #{duelnet_forward.5} parent=0 // pred_fallthru
    _
  // Predicated region
  $region18: #{duelnet_forward.5} parent=0 // pred_check
    _
  $region19: #{duelnet_forward.5} parent=0 // pred_check_branch
    %574 = sbr.rel (0) target = $region21
  $region20: #{duelnet_forward.5} parent=0 // pred_region
    _
  $region21: #{duelnet_forward.5} parent=0 // pred_fallthru
    _

// kernel: duelnet_forward.6
$region0: #{duelnet_forward.6}
  #allocation0 [shape = 'u32[]', space=smem, size = 0x4, offset = 0x4, fixed_abs, tag = 'smem constant byte address 0x4 - core index']
  #allocation1 [shape = 'u32[72,128]{1,0:T(1,128)}', space=vmem, size = 0x9000, scoped, tag = 'internal scratch']
  %s0 = inlined_call_operand.vmem [shape: f32[104,576], index: 0, kind: input, shape index: {}]
  %s1 = inlined_call_operand.vmem [shape: f32[576,64], index: 1, kind: input, shape index: {}]
  %s2 = inlined_call_operand.vmem [shape: f32[1,64], index: 2, kind: input, shape index: {}]
  %s3 = inlined_call_operand.vmem [shape: f32[104,64], index: 3, kind: output, shape index: {}]
  %s4 = sld [smem:[#allocation0]]
  $region22: #{duelnet_forward.6} parent=0
    _
  %s6 = ssub.s32 1, %s4
  %s7 = scalar_select 0, %s6, %s4
  // Predicated region
  $region2: #{duelnet_forward.6} parent=0 // pred_check
    _
  $region3: #{duelnet_forward.6} parent=0 // pred_check_branch
    %9 = sbr.rel (0) target = $region5
  $region4: #{duelnet_forward.6} parent=0 // pred_region
    _
  $region5: #{duelnet_forward.6} parent=0 // pred_fallthru
    _
  // Predicated region
  $region6: #{duelnet_forward.6} parent=0 // pred_check
    _
  $region7: #{duelnet_forward.6} parent=0 // pred_check_branch
    %11 = sbr.rel (0) target = $region9
  $region8: #{duelnet_forward.6} parent=0 // pred_region
    _
  $region9: #{duelnet_forward.6} parent=0 // pred_fallthru
    _
  // Predicated region
  $region10: #{duelnet_forward.6} parent=0 // pred_check
    _
  $region11: #{duelnet_forward.6} parent=0 // pred_check_branch
    %13 = sbr.rel (0) target = $region13
  $region12: #{duelnet_forward.6} parent=0 // pred_region
    _
  $region13: #{duelnet_forward.6} parent=0 // pred_fallthru
    _
  %v14 = vld [vmem:[%s0] sm:$0xff]
  %v15 = vld [vmem:[%s0 + $0x8] sm:$0xff]
  %v16 = vld [vmem:[%s0 + $0x10] sm:$0xff]
  %v17 = vld [vmem:[%s0 + $0x18] sm:$0xff]
  %v18 = vld [vmem:[%s0 + $0x20] sm:$0xff]
  %v19 = vld [vmem:[%s0 + $0x28] sm:$0xff]
  %v20 = vld [vmem:[%s0 + $0x30] sm:$0xff]
  %v21 = vld [vmem:[%s0 + $0x38] sm:$0xff]
  %v22 = vld [vmem:[%s0 + $0x40] sm:$0xff]
  %v23 = vld [vmem:[%s0 + $0x48] sm:$0xff]
  %v24 = vld [vmem:[%s0 + $0x50] sm:$0xff]
  %v25 = vld [vmem:[%s0 + $0x58] sm:$0xff]
  %v26 = vld [vmem:[%s0 + $0x60] sm:$0xff]
  %v27 = vld [vmem:[%s0 + $0x68] sm:$0xff]
  %v28 = vld [vmem:[%s0 + $0x70] sm:$0xff]
  %v29 = vld [vmem:[%s0 + $0x78] sm:$0xff]
  %v30 = vld [vmem:[%s0 + $0x80] sm:$0xff]
  %v31 = vld [vmem:[%s0 + $0x88] sm:$0xff]
  %v32 = vld [vmem:[%s0 + $0x90] sm:$0xff]
  %v33 = vld [vmem:[%s0 + $0x98] sm:$0xff]
  %v34 = vld [vmem:[%s0 + $0xa0] sm:$0xff]
  %v35 = vld [vmem:[%s0 + $0xa8] sm:$0xff]
  %v36 = vld [vmem:[%s0 + $0xb0] sm:$0xff]
  %v37 = vld [vmem:[%s0 + $0xb8] sm:$0xff]
  %v38 = vld [vmem:[%s0 + $0xc0] sm:$0xff]
  %v39 = vld [vmem:[%s0 + $0xc8] sm:$0xff]
  %v40 = vld [vmem:[%s0 + $0xd0] sm:$0xff]
  %v41 = vld [vmem:[%s0 + $0xd8] sm:$0xff]
  %v42 = vld [vmem:[%s0 + $0xe0] sm:$0xff]
  %v43 = vld [vmem:[%s0 + $0xe8] sm:$0xff]
  %v44 = vld [vmem:[%s0 + $0xf0] sm:$0xff]
  %v45 = vld [vmem:[%s0 + $0xf8] sm:$0xff]
  %v46 = vld [vmem:[%s0 + $0x100] sm:$0xff]
  %v47 = vld [vmem:[%s0 + $0x108] sm:$0xff]
  %v48 = vld [vmem:[%s0 + $0x110] sm:$0xff]
  %v49 = vld [vmem:[%s0 + $0x118] sm:$0xff]
  %v50 = vld [vmem:[%s0 + $0x120] sm:$0xff]
  %v51 = vld [vmem:[%s0 + $0x128] sm:$0xff]
  %v52 = vld [vmem:[%s0 + $0x130] sm:$0xff]
  %v53 = vld [vmem:[%s0 + $0x138] sm:$0xff]
  %v54 = vld [vmem:[%s0 + $0x140] sm:$0xff]
  %v55 = vld [vmem:[%s0 + $0x148] sm:$0xff]
  %v56 = vld [vmem:[%s0 + $0x150] sm:$0xff]
  %v57 = vld [vmem:[%s0 + $0x158] sm:$0xff]
  %v58 = vld [vmem:[%s0 + $0x160] sm:$0xff]
  %v59 = vld [vmem:[%s0 + $0x168] sm:$0xff]
  %v60 = vld [vmem:[%s0 + $0x170] sm:$0xff]
  %v61 = vld [vmem:[%s0 + $0x178] sm:$0xff]
  %v62 = vld [vmem:[%s0 + $0x180] sm:$0xff]
  %v63 = vld [vmem:[%s0 + $0x188] sm:$0xff]
  %v64 = vld [vmem:[%s0 + $0x190] sm:$0xff]
  %v65 = vld [vmem:[%s0 + $0x198] sm:$0xff]
  %v66 = vld [vmem:[%s0 + $0x1a0] sm:$0xff]
  %v67 = vld [vmem:[%s0 + $0x1a8] sm:$0xff]
  %v68 = vld [vmem:[%s0 + $0x1b0] sm:$0xff]
  %v69 = vld [vmem:[%s0 + $0x1b8] sm:$0xff]
  %v70 = vld [vmem:[%s0 + $0x1c0] sm:$0xff]
  %v71 = vld [vmem:[%s0 + $0x1c8] sm:$0xff]
  %v72 = vld [vmem:[%s0 + $0x1d0] sm:$0xff]
  %v73 = vld [vmem:[%s0 + $0x1d8] sm:$0xff]
  %v74 = vld [vmem:[%s0 + $0x1e0] sm:$0xff]
  %v75 = vld [vmem:[%s0 + $0x1e8] sm:$0xff]
  %v76 = vld [vmem:[%s0 + $0x1f0] sm:$0xff]
  %v77 = vld [vmem:[%s0 + $0x1f8] sm:$0xff]
  %v78 = vld [vmem:[%s0 + $0x200] sm:$0xff]
  %v79 = vld [vmem:[%s1] sm:$0xff]
  %v80 = vld [vmem:[%s1 + $0x8] sm:$0xff]
  %v81 = vld [vmem:[%s1 + $0x10] sm:$0xff]
  %v82 = vld [vmem:[%s1 + $0x18] sm:$0xff]
  %v83 = vld [vmem:[%s1 + $0x20] sm:$0xff]
  %v84 = vld [vmem:[%s1 + $0x28] sm:$0xff]
  %v85 = vld [vmem:[%s1 + $0x30] sm:$0xff]
  %v86 = vld [vmem:[%s1 + $0x38] sm:$0xff]
  %v87 = vld [vmem:[%s1 + $0x40] sm:$0xff]
  %v88 = vld [vmem:[%s1 + $0x48] sm:$0xff]
  %v89 = vld [vmem:[%s1 + $0x50] sm:$0xff]
  %v90 = vld [vmem:[%s1 + $0x58] sm:$0xff]
  %v91 = vld [vmem:[%s1 + $0x60] sm:$0xff]
  %v92 = vld [vmem:[%s1 + $0x68] sm:$0xff]
  %v93 = vld [vmem:[%s1 + $0x70] sm:$0xff]
  %v94 = vld [vmem:[%s1 + $0x78] sm:$0xff]
  %v95 = vld [vmem:[%s1 + $0x80] sm:$0xff]
  %v96 = vld [vmem:[%s1 + $0x88] sm:$0xff]
  %v97 = vld [vmem:[%s1 + $0x90] sm:$0xff]
  %v98 = vld [vmem:[%s1 + $0x98] sm:$0xff]
  %v99 = vld [vmem:[%s1 + $0xa0] sm:$0xff]
  %v100 = vld [vmem:[%s1 + $0xa8] sm:$0xff]
  %v101 = vld [vmem:[%s1 + $0xb0] sm:$0xff]
  %v102 = vld [vmem:[%s1 + $0xb8] sm:$0xff]
  %v103 = vld [vmem:[%s1 + $0xc0] sm:$0xff]
  %v104 = vld [vmem:[%s1 + $0xc8] sm:$0xff]
  %v105 = vld [vmem:[%s1 + $0xd0] sm:$0xff]
  %v106 = vld [vmem:[%s1 + $0xd8] sm:$0xff]
  %v107 = vld [vmem:[%s1 + $0xe0] sm:$0xff]
  %v108 = vld [vmem:[%s1 + $0xe8] sm:$0xff]
  %v109 = vld [vmem:[%s1 + $0xf0] sm:$0xff]
  %v110 = vld [vmem:[%s1 + $0xf8] sm:$0xff]
  %v111 = vld [vmem:[%s1 + $0x100] sm:$0xff]
  %v112 = vld [vmem:[%s1 + $0x108] sm:$0xff]
  %v113 = vld [vmem:[%s1 + $0x110] sm:$0xff]
  %v114 = vld [vmem:[%s1 + $0x118] sm:$0xff]
  %v115 = vld [vmem:[%s1 + $0x120] sm:$0xff]
  %v116 = vld [vmem:[%s1 + $0x128] sm:$0xff]
  %v117 = vld [vmem:[%s1 + $0x130] sm:$0xff]
  %v118 = vld [vmem:[%s1 + $0x138] sm:$0xff]
  %v119 = vld [vmem:[%s1 + $0x140] sm:$0xff]
  %v120 = vld [vmem:[%s1 + $0x148] sm:$0xff]
  %v121 = vld [vmem:[%s1 + $0x150] sm:$0xff]
  %v122 = vld [vmem:[%s1 + $0x158] sm:$0xff]
  %v123 = vld [vmem:[%s1 + $0x160] sm:$0xff]
  %v124 = vld [vmem:[%s1 + $0x168] sm:$0xff]
  %v125 = vld [vmem:[%s1 + $0x170] sm:$0xff]
  %v126 = vld [vmem:[%s1 + $0x178] sm:$0xff]
  %v127 = vld [vmem:[%s1 + $0x180] sm:$0xff]
  %v128 = vld [vmem:[%s1 + $0x188] sm:$0xff]
  %v129 = vld [vmem:[%s1 + $0x190] sm:$0xff]
  %v130 = vld [vmem:[%s1 + $0x198] sm:$0xff]
  %v131 = vld [vmem:[%s1 + $0x1a0] sm:$0xff]
  %v132 = vld [vmem:[%s1 + $0x1a8] sm:$0xff]
  %v133 = vld [vmem:[%s1 + $0x1b0] sm:$0xff]
  %v134 = vld [vmem:[%s1 + $0x1b8] sm:$0xff]
  %v135 = vld [vmem:[%s1 + $0x1c0] sm:$0xff]
  %v136 = vld [vmem:[%s1 + $0x1c8] sm:$0xff]
  %v137 = vld [vmem:[%s1 + $0x1d0] sm:$0xff]
  %v138 = vld [vmem:[%s1 + $0x1d8] sm:$0xff]
  %v139 = vld [vmem:[%s1 + $0x1e0] sm:$0xff]
  %v140 = vld [vmem:[%s1 + $0x1e8] sm:$0xff]
  %v141 = vld [vmem:[%s1 + $0x1f0] sm:$0xff]
  %v142 = vld [vmem:[%s1 + $0x1f8] sm:$0xff]
  %v143 = vld [vmem:[%s1 + $0x200] sm:$0xff]
  %v144 = vld [vmem:[%s1 + $0x208] sm:$0xff]
  %v145 = vld [vmem:[%s1 + $0x210] sm:$0xff]
  %v146 = vld [vmem:[%s1 + $0x218] sm:$0xff]
  %v147 = vld [vmem:[%s1 + $0x220] sm:$0xff]
  %v148 = vld [vmem:[%s1 + $0x228] sm:$0xff]
  %v149 = vld [vmem:[%s1 + $0x230] sm:$0xff]
  %v150 = vld [vmem:[%s1 + $0x238] sm:$0xff]
  %v151 = vld [vmem:[%s2] sm:$0x1]
  %v153 = vperm.slane %v151, 0
  %vm155 = vcmask 523264
  %v157 = vsel %vm155, %v18, 0
  %v160 = vsel %vm155, %v23, 0
  %v163 = vsel %vm155, %v28, 0
  %v166 = vsel %vm155, %v33, 0
  %v169 = vsel %vm155, %v38, 0
  %v172 = vsel %vm155, %v43, 0
  %v175 = vsel %vm155, %v48, 0
  %v178 = vsel %vm155, %v53, 0
  %v181 = vsel %vm155, %v58, 0
  %v184 = vsel %vm155, %v63, 0
  %v187 = vsel %vm155, %v68, 0
  %v190 = vsel %vm155, %v73, 0
  %v193 = vsel %vm155, %v78, 0
  %195 = vmatpush.msra.mxu0 %v94
  %196 = vmatpush.msra.mxu0 %v93
  %197 = vmatpush.msra.mxu0 %v92
  %198 = vmatpush.msra.mxu0 %v91
  %199 = vmatpush.msra.mxu0 %v90
  %200 = vmatpush.msra.mxu0 %v89
  %201 = vmatpush.msra.mxu0 %v88
  %202 = vmatpush.msra.mxu0 %v87
  %203 = vmatpush.msra.mxu0 %v86
  %204 = vmatpush.msra.mxu0 %v85
  %205 = vmatpush.msra.mxu0 %v84
  %206 = vmatpush.msra.mxu0 %v83
  %207 = vmatpush.msra.mxu0 %v82
  %208 = vmatpush.msra.mxu0 %v81
  %209 = vmatpush.msra.mxu0 %v80
  %210 = vmatpush.msra.mxu0 %v79
  %211 = vmatmul.f32.gmra.mxu0 %v14
  %v212 = vpop.f32.mrf.mxu0
  %v213 = vadd.f32 %v153, %v212
  %214 = vmatmul.f32.gmra.mxu0 %v19
  %v215 = vpop.f32.mrf.mxu0
  %v216 = vadd.f32 %v153, %v215
  %217 = vmatmul.f32.gmra.mxu0 %v24
  %v218 = vpop.f32.mrf.mxu0
  %v219 = vadd.f32 %v153, %v218
  %220 = vmatmul.f32.gmra.mxu0 %v29
  %v221 = vpop.f32.mrf.mxu0
  %v222 = vadd.f32 %v153, %v221
  %223 = vmatmul.f32.gmra.mxu0 %v34
  %v224 = vpop.f32.mrf.mxu0
  %v225 = vadd.f32 %v153, %v224
  %226 = vmatmul.f32.gmra.mxu0 %v39
  %v227 = vpop.f32.mrf.mxu0
  %v228 = vadd.f32 %v153, %v227
  %229 = vmatmul.f32.gmra.mxu0 %v44
  %v230 = vpop.f32.mrf.mxu0
  %v231 = vadd.f32 %v153, %v230
  %232 = vmatmul.f32.gmra.mxu0 %v49
  %v233 = vpop.f32.mrf.mxu0
  %v234 = vadd.f32 %v153, %v233
  %235 = vmatmul.f32.gmra.mxu0 %v54
  %v236 = vpop.f32.mrf.mxu0
  %v237 = vadd.f32 %v153, %v236
  %238 = vmatmul.f32.gmra.mxu0 %v59
  %v239 = vpop.f32.mrf.mxu0
  %v240 = vadd.f32 %v153, %v239
  %241 = vmatmul.f32.gmra.mxu0 %v64
  %v242 = vpop.f32.mrf.mxu0
  %v243 = vadd.f32 %v153, %v242
  %244 = vmatmul.f32.gmra.mxu0 %v69
  %v245 = vpop.f32.mrf.mxu0
  %v246 = vadd.f32 %v153, %v245
  %247 = vmatmul.f32.gmra.mxu0 %v74
  %v248 = vpop.f32.mrf.mxu0
  %v249 = vadd.f32 %v153, %v248
  %250 = vdwg.mxu0
  %251 = vmatpush.msra.mxu0 %v110
  %252 = vmatpush.msra.mxu0 %v109
  %253 = vmatpush.msra.mxu0 %v108
  %254 = vmatpush.msra.mxu0 %v107
  %255 = vmatpush.msra.mxu0 %v106
  %256 = vmatpush.msra.mxu0 %v105
  %257 = vmatpush.msra.mxu0 %v104
  %258 = vmatpush.msra.mxu0 %v103
  %259 = vmatpush.msra.mxu0 %v102
  %260 = vmatpush.msra.mxu0 %v101
  %261 = vmatpush.msra.mxu0 %v100
  %262 = vmatpush.msra.mxu0 %v99
  %263 = vmatpush.msra.mxu0 %v98
  %264 = vmatpush.msra.mxu0 %v97
  %265 = vmatpush.msra.mxu0 %v96
  %266 = vmatpush.msra.mxu0 %v95
  %267 = vmatmul.f32.gmra.mxu0 %v15
  %v268 = vpop.f32.mrf.mxu0
  %v269 = vadd.f32 %v213, %v268
  %270 = vmatmul.f32.gmra.mxu0 %v20
  %v271 = vpop.f32.mrf.mxu0
  %v272 = vadd.f32 %v216, %v271
  %273 = vmatmul.f32.gmra.mxu0 %v25
  %v274 = vpop.f32.mrf.mxu0
  %v275 = vadd.f32 %v219, %v274
  %276 = vmatmul.f32.gmra.mxu0 %v30
  %v277 = vpop.f32.mrf.mxu0
  %v278 = vadd.f32 %v222, %v277
  %279 = vmatmul.f32.gmra.mxu0 %v35
  %v280 = vpop.f32.mrf.mxu0
  %v281 = vadd.f32 %v225, %v280
  %282 = vmatmul.f32.gmra.mxu0 %v40
  %v283 = vpop.f32.mrf.mxu0
  %v284 = vadd.f32 %v228, %v283
  %285 = vmatmul.f32.gmra.mxu0 %v45
  %v286 = vpop.f32.mrf.mxu0
  %v287 = vadd.f32 %v231, %v286
  %288 = vmatmul.f32.gmra.mxu0 %v50
  %v289 = vpop.f32.mrf.mxu0
  %v290 = vadd.f32 %v234, %v289
  %291 = vmatmul.f32.gmra.mxu0 %v55
  %v292 = vpop.f32.mrf.mxu0
  %v293 = vadd.f32 %v237, %v292
  %294 = vmatmul.f32.gmra.mxu0 %v60
  %v295 = vpop.f32.mrf.mxu0
  %v296 = vadd.f32 %v240, %v295
  %297 = vmatmul.f32.gmra.mxu0 %v65
  %v298 = vpop.f32.mrf.mxu0
  %v299 = vadd.f32 %v243, %v298
  %300 = vmatmul.f32.gmra.mxu0 %v70
  %v301 = vpop.f32.mrf.mxu0
  %v302 = vadd.f32 %v246, %v301
  %303 = vmatmul.f32.gmra.mxu0 %v75
  %v304 = vpop.f32.mrf.mxu0
  %v305 = vadd.f32 %v249, %v304
  %306 = vdwg.mxu0
  %307 = vmatpush.msra.mxu0 %v126
  %308 = vmatpush.msra.mxu0 %v125
  %309 = vmatpush.msra.mxu0 %v124
  %310 = vmatpush.msra.mxu0 %v123
  %311 = vmatpush.msra.mxu0 %v122
  %312 = vmatpush.msra.mxu0 %v121
  %313 = vmatpush.msra.mxu0 %v120
  %314 = vmatpush.msra.mxu0 %v119
  %315 = vmatpush.msra.mxu0 %v118
  %316 = vmatpush.msra.mxu0 %v117
  %317 = vmatpush.msra.mxu0 %v116
  %318 = vmatpush.msra.mxu0 %v115
  %319 = vmatpush.msra.mxu0 %v114
  %320 = vmatpush.msra.mxu0 %v113
  %321 = vmatpush.msra.mxu0 %v112
  %322 = vmatpush.msra.mxu0 %v111
  %323 = vmatmul.f32.gmra.mxu0 %v16
  %v324 = vpop.f32.mrf.mxu0
  %v325 = vadd.f32 %v269, %v324
  %326 = vmatmul.f32.gmra.mxu0 %v21
  %v327 = vpop.f32.mrf.mxu0
  %v328 = vadd.f32 %v272, %v327
  %329 = vmatmul.f32.gmra.mxu0 %v26
  %v330 = vpop.f32.mrf.mxu0
  %v331 = vadd.f32 %v275, %v330
  %332 = vmatmul.f32.gmra.mxu0 %v31
  %v333 = vpop.f32.mrf.mxu0
  %v334 = vadd.f32 %v278, %v333
  %335 = vmatmul.f32.gmra.mxu0 %v36
  %v336 = vpop.f32.mrf.mxu0
  %v337 = vadd.f32 %v281, %v336
  %338 = vmatmul.f32.gmra.mxu0 %v41
  %v339 = vpop.f32.mrf.mxu0
  %v340 = vadd.f32 %v284, %v339
  %341 = vmatmul.f32.gmra.mxu0 %v46
  %v342 = vpop.f32.mrf.mxu0
  %v343 = vadd.f32 %v287, %v342
  %344 = vmatmul.f32.gmra.mxu0 %v51
  %v345 = vpop.f32.mrf.mxu0
  %v346 = vadd.f32 %v290, %v345
  %347 = vmatmul.f32.gmra.mxu0 %v56
  %v348 = vpop.f32.mrf.mxu0
  %v349 = vadd.f32 %v293, %v348
  %350 = vmatmul.f32.gmra.mxu0 %v61
  %v351 = vpop.f32.mrf.mxu0
  %v352 = vadd.f32 %v296, %v351
  %353 = vmatmul.f32.gmra.mxu0 %v66
  %v354 = vpop.f32.mrf.mxu0
  %v355 = vadd.f32 %v299, %v354
  %356 = vmatmul.f32.gmra.mxu0 %v71
  %v357 = vpop.f32.mrf.mxu0
  %v358 = vadd.f32 %v302, %v357
  %359 = vmatmul.f32.gmra.mxu0 %v76
  %v360 = vpop.f32.mrf.mxu0
  %v361 = vadd.f32 %v305, %v360
  %362 = vdwg.mxu0
  %363 = vmatpush.msra.mxu0 %v142
  %364 = vmatpush.msra.mxu0 %v141
  %365 = vmatpush.msra.mxu0 %v140
  %366 = vmatpush.msra.mxu0 %v139
  %367 = vmatpush.msra.mxu0 %v138
  %368 = vmatpush.msra.mxu0 %v137
  %369 = vmatpush.msra.mxu0 %v136
  %370 = vmatpush.msra.mxu0 %v135
  %371 = vmatpush.msra.mxu0 %v134
  %372 = vmatpush.msra.mxu0 %v133
  %373 = vmatpush.msra.mxu0 %v132
  %374 = vmatpush.msra.mxu0 %v131
  %375 = vmatpush.msra.mxu0 %v130
  %376 = vmatpush.msra.mxu0 %v129
  %377 = vmatpush.msra.mxu0 %v128
  %378 = vmatpush.msra.mxu0 %v127
  %379 = vmatmul.f32.gmra.mxu0 %v17
  %v380 = vpop.f32.mrf.mxu0
  %v381 = vadd.f32 %v325, %v380
  %382 = vmatmul.f32.gmra.mxu0 %v22
  %v383 = vpop.f32.mrf.mxu0
  %v384 = vadd.f32 %v328, %v383
  %385 = vmatmul.f32.gmra.mxu0 %v27
  %v386 = vpop.f32.mrf.mxu0
  %v387 = vadd.f32 %v331, %v386
  %388 = vmatmul.f32.gmra.mxu0 %v32
  %v389 = vpop.f32.mrf.mxu0
  %v390 = vadd.f32 %v334, %v389
  %391 = vmatmul.f32.gmra.mxu0 %v37
  %v392 = vpop.f32.mrf.mxu0
  %v393 = vadd.f32 %v337, %v392
  %394 = vmatmul.f32.gmra.mxu0 %v42
  %v395 = vpop.f32.mrf.mxu0
  %v396 = vadd.f32 %v340, %v395
  %397 = vmatmul.f32.gmra.mxu0 %v47
  %v398 = vpop.f32.mrf.mxu0
  %v399 = vadd.f32 %v343, %v398
  %400 = vmatmul.f32.gmra.mxu0 %v52
  %v401 = vpop.f32.mrf.mxu0
  %v402 = vadd.f32 %v346, %v401
  %403 = vmatmul.f32.gmra.mxu0 %v57
  %v404 = vpop.f32.mrf.mxu0
  %v405 = vadd.f32 %v349, %v404
  %406 = vmatmul.f32.gmra.mxu0 %v62
  %v407 = vpop.f32.mrf.mxu0
  %v408 = vadd.f32 %v352, %v407
  %409 = vmatmul.f32.gmra.mxu0 %v67
  %v410 = vpop.f32.mrf.mxu0
  %v411 = vadd.f32 %v355, %v410
  %412 = vmatmul.f32.gmra.mxu0 %v72
  %v413 = vpop.f32.mrf.mxu0
  %v414 = vadd.f32 %v358, %v413
  %415 = vmatmul.f32.gmra.mxu0 %v77
  %v416 = vpop.f32.mrf.mxu0
  %v417 = vadd.f32 %v361, %v416
  %418 = vdwg.mxu0
  %419 = vmatpush.msra.mxu0 0.0
  %420 = vmatpush.msra.mxu0 0.0
  %421 = vmatpush.msra.mxu0 0.0
  %422 = vmatpush.msra.mxu0 0.0
  %423 = vmatpush.msra.mxu0 0.0
  %424 = vmatpush.msra.mxu0 0.0
  %425 = vmatpush.msra.mxu0 0.0
  %426 = vmatpush.msra.mxu0 0.0
  %427 = vmatpush.msra.mxu0 %v150
  %428 = vmatpush.msra.mxu0 %v149
  %429 = vmatpush.msra.mxu0 %v148
  %430 = vmatpush.msra.mxu0 %v147
  %431 = vmatpush.msra.mxu0 %v146
  %432 = vmatpush.msra.mxu0 %v145
  %433 = vmatpush.msra.mxu0 %v144
  %434 = vmatpush.msra.mxu0 %v143
  %435 = vmatmul.f32.gmra.mxu0 %v157
  %v436 = vpop.f32.mrf.mxu0
  %v437 = vadd.f32 %v381, %v436
  %438 = vmatmul.f32.gmra.mxu0 %v160
  %v439 = vpop.f32.mrf.mxu0
  %v440 = vadd.f32 %v384, %v439
  %441 = vmatmul.f32.gmra.mxu0 %v163
  %v442 = vpop.f32.mrf.mxu0
  %v443 = vadd.f32 %v387, %v442
  %444 = vmatmul.f32.gmra.mxu0 %v166
  %v445 = vpop.f32.mrf.mxu0
  %v446 = vadd.f32 %v390, %v445
  %447 = vmatmul.f32.gmra.mxu0 %v169
  %v448 = vpop.f32.mrf.mxu0
  %v449 = vadd.f32 %v393, %v448
  %450 = vmatmul.f32.gmra.mxu0 %v172
  %v451 = vpop.f32.mrf.mxu0
  %v452 = vadd.f32 %v396, %v451
  %453 = vmatmul.f32.gmra.mxu0 %v175
  %v454 = vpop.f32.mrf.mxu0
  %v455 = vadd.f32 %v399, %v454
  %456 = vmatmul.f32.gmra.mxu0 %v178
  %v457 = vpop.f32.mrf.mxu0
  %v458 = vadd.f32 %v402, %v457
  %459 = vmatmul.f32.gmra.mxu0 %v181
  %v460 = vpop.f32.mrf.mxu0
  %v461 = vadd.f32 %v405, %v460
  %462 = vmatmul.f32.gmra.mxu0 %v184
  %v463 = vpop.f32.mrf.mxu0
  %v464 = vadd.f32 %v408, %v463
  %465 = vmatmul.f32.gmra.mxu0 %v187
  %v466 = vpop.f32.mrf.mxu0
  %v467 = vadd.f32 %v411, %v466
  %468 = vmatmul.f32.gmra.mxu0 %v190
  %v469 = vpop.f32.mrf.mxu0
  %v470 = vadd.f32 %v414, %v469
  %471 = vmatmul.f32.gmra.mxu0 %v193
  %v472 = vpop.f32.mrf.mxu0
  %v473 = vadd.f32 %v417, %v472
  %474 = vdwg.mxu0
  %vm475 = vcmp.gt.f32.partialorder %v437, 0.0
  %vm476 = vcmp.gt.f32.partialorder %v440, 0.0
  %vm477 = vcmp.gt.f32.partialorder %v443, 0.0
  %vm478 = vcmp.gt.f32.partialorder %v446, 0.0
  %vm479 = vcmp.gt.f32.partialorder %v449, 0.0
  %vm480 = vcmp.gt.f32.partialorder %v452, 0.0
  %vm481 = vcmp.gt.f32.partialorder %v455, 0.0
  %vm482 = vcmp.gt.f32.partialorder %v458, 0.0
  %vm483 = vcmp.gt.f32.partialorder %v461, 0.0
  %vm484 = vcmp.gt.f32.partialorder %v464, 0.0
  %vm485 = vcmp.gt.f32.partialorder %v467, 0.0
  %vm486 = vcmp.gt.f32.partialorder %v470, 0.0
  %vm487 = vcmp.gt.f32.partialorder %v473, 0.0
  %v488 = vmul.f32 %v437, 0.01
  %v489 = vmul.f32 %v440, 0.01
  %v490 = vmul.f32 %v443, 0.01
  %v491 = vmul.f32 %v446, 0.01
  %v492 = vmul.f32 %v449, 0.01
  %v493 = vmul.f32 %v452, 0.01
  %v494 = vmul.f32 %v455, 0.01
  %v495 = vmul.f32 %v458, 0.01
  %v496 = vmul.f32 %v461, 0.01
  %v497 = vmul.f32 %v464, 0.01
  %v498 = vmul.f32 %v467, 0.01
  %v499 = vmul.f32 %v470, 0.01
  %v500 = vmul.f32 %v473, 0.01
  %v501 = vsel %vm475, %v437, %v488
  %v502 = vsel %vm476, %v440, %v489
  %v503 = vsel %vm477, %v443, %v490
  %v504 = vsel %vm478, %v446, %v491
  %v505 = vsel %vm479, %v449, %v492
  %v506 = vsel %vm480, %v452, %v493
  %v507 = vsel %vm481, %v455, %v494
  %v508 = vsel %vm482, %v458, %v495
  %v509 = vsel %vm483, %v461, %v496
  %v510 = vsel %vm484, %v464, %v497
  %v511 = vsel %vm485, %v467, %v498
  %v512 = vsel %vm486, %v470, %v499
  %v513 = vsel %vm487, %v473, %v500
  %514 = vst.msk [vmem:[%s3] sm:$0xff] %vm155, %v501
  %515 = vst.msk [vmem:[%s3 + $0x8] sm:$0xff] %vm155, %v502
  %516 = vst.msk [vmem:[%s3 + $0x10] sm:$0xff] %vm155, %v503
  %517 = vst.msk [vmem:[%s3 + $0x18] sm:$0xff] %vm155, %v504
  %518 = vst.msk [vmem:[%s3 + $0x20] sm:$0xff] %vm155, %v505
  %519 = vst.msk [vmem:[%s3 + $0x28] sm:$0xff] %vm155, %v506
  %520 = vst.msk [vmem:[%s3 + $0x30] sm:$0xff] %vm155, %v507
  %521 = vst.msk [vmem:[%s3 + $0x38] sm:$0xff] %vm155, %v508
  %522 = vst.msk [vmem:[%s3 + $0x40] sm:$0xff] %vm155, %v509
  %523 = vst.msk [vmem:[%s3 + $0x48] sm:$0xff] %vm155, %v510
  %524 = vst.msk [vmem:[%s3 + $0x50] sm:$0xff] %vm155, %v511
  %525 = vst.msk [vmem:[%s3 + $0x58] sm:$0xff] %vm155, %v512
  %526 = vst.msk [vmem:[%s3 + $0x60] sm:$0xff] %vm155, %v513
  // Predicated region
  $region14: #{duelnet_forward.6} parent=0 // pred_check
    _
  $region15: #{duelnet_forward.6} parent=0 // pred_check_branch
    %528 = sbr.rel (0) target = $region17
  $region16: #{duelnet_forward.6} parent=0 // pred_region
    _
  $region17: #{duelnet_forward.6} parent=0 // pred_fallthru
    _
  // Predicated region
  $region18: #{duelnet_forward.6} parent=0 // pred_check
    _
  $region19: #{duelnet_forward.6} parent=0 // pred_check_branch
    %530 = sbr.rel (0) target = $region21
  $region20: #{duelnet_forward.6} parent=0 // pred_region
    _
  $region21: #{duelnet_forward.6} parent=0 // pred_fallthru
    _

// kernel: duelnet_forward.7
$region0: #{duelnet_forward.7}
  #allocation0 [shape = 'u32[]', space=smem, size = 0x4, offset = 0x4, fixed_abs, tag = 'smem constant byte address 0x4 - core index']
  #allocation1 [shape = 'u32[72,128]{1,0:T(1,128)}', space=vmem, size = 0x9000, scoped, tag = 'internal scratch']
  %s0 = inlined_call_operand.vmem [shape: f32[8,3136], index: 0, kind: input, shape index: {}]
  %s1 = inlined_call_operand.vmem [shape: f32[3136,1024], index: 1, kind: input, shape index: {}]
  %s2 = inlined_call_operand.vmem [shape: f32[1,1024], index: 2, kind: input, shape index: {}]
  %s3 = inlined_call_operand.vmem [shape: f32[1024,8], index: 3, kind: input, shape index: {}]
  %s4 = inlined_call_operand.vmem [shape: f32[1,8], index: 4, kind: input, shape index: {}]
  %s5 = inlined_call_operand.vmem [shape: f32[8,6], index: 5, kind: output, shape index: {}]
  %s6 = sld [smem:[#allocation0]]
  $region30: #{duelnet_forward.7} parent=0
    _
  %s8 = ssub.s32 1, %s6
  %s9 = scalar_select 0, %s8, %s6
  // Predicated region
  $region2: #{duelnet_forward.7} parent=0 // pred_check
    _
  $region3: #{duelnet_forward.7} parent=0 // pred_check_branch
    %11 = sbr.rel (0) target = $region5
  $region4: #{duelnet_forward.7} parent=0 // pred_region
    _
  $region5: #{duelnet_forward.7} parent=0 // pred_fallthru
    _
  // Predicated region
  $region6: #{duelnet_forward.7} parent=0 // pred_check
    _
  $region7: #{duelnet_forward.7} parent=0 // pred_check_branch
    %13 = sbr.rel (0) target = $region9
  $region8: #{duelnet_forward.7} parent=0 // pred_region
    _
  $region9: #{duelnet_forward.7} parent=0 // pred_fallthru
    _
  // Predicated region
  $region10: #{duelnet_forward.7} parent=0 // pred_check
    _
  $region11: #{duelnet_forward.7} parent=0 // pred_check_branch
    %15 = sbr.rel (0) target = $region13
  $region12: #{duelnet_forward.7} parent=0 // pred_region
    _
  $region13: #{duelnet_forward.7} parent=0 // pred_fallthru
    _
  // Predicated region
  $region14: #{duelnet_forward.7} parent=0 // pred_check
    _
  $region15: #{duelnet_forward.7} parent=0 // pred_check_branch
    %17 = sbr.rel (0) target = $region17
  $region16: #{duelnet_forward.7} parent=0 // pred_region
    _
  $region17: #{duelnet_forward.7} parent=0 // pred_fallthru
    _
  // Predicated region
  $region18: #{duelnet_forward.7} parent=0 // pred_check
    _
  $region19: #{duelnet_forward.7} parent=0 // pred_check_branch
    %19 = sbr.rel (0) target = $region21
  $region20: #{duelnet_forward.7} parent=0 // pred_region
    _
  $region21: #{duelnet_forward.7} parent=0 // pred_fallthru
    _
  %v20 = vld [vmem:[%s0] sm:$0xff]
  %v21 = vld [vmem:[%s0 + $0x8] sm:$0xff]
  %v22 = vld [vmem:[%s0 + $0x10] sm:$0xff]
  %v23 = vld [vmem:[%s0 + $0x18] sm:$0xff]
  %v24 = vld [vmem:[%s0 + $0x20] sm:$0xff]
  %v25 = vld [vmem:[%s0 + $0x28] sm:$0xff]
  %v26 = vld [vmem:[%s0 + $0x30] sm:$0xff]
  %v27 = vld [vmem:[%s0 + $0x38] sm:$0xff]
  %v28 = vld [vmem:[%s0 + $0x40] sm:$0xff]
  %v29 = vld [vmem:[%s0 + $0x48] sm:$0xff]
  %v30 = vld [vmem:[%s0 + $0x50] sm:$0xff]
  %v31 = vld [vmem:[%s0 + $0x58] sm:$0xff]
  %v32 = vld [vmem:[%s0 + $0x60] sm:$0xff]
  %v33 = vld [vmem:[%s0 + $0x68] sm:$0xff]
  %v34 = vld [vmem:[%s0 + $0x70] sm:$0xff]
  %v35 = vld [vmem:[%s0 + $0x78] sm:$0xff]
  %v36 = vld [vmem:[%s0 + $0x80] sm:$0xff]
  %v37 = vld [vmem:[%s0 + $0x88] sm:$0xff]
  %v38 = vld [vmem:[%s0 + $0x90] sm:$0xff]
  %v39 = vld [vmem:[%s0 + $0x98] sm:$0xff]
  %v40 = vld [vmem:[%s0 + $0xa0] sm:$0xff]
  %v41 = vld [vmem:[%s0 + $0xa8] sm:$0xff]
  %v42 = vld [vmem:[%s0 + $0xb0] sm:$0xff]
  %v43 = vld [vmem:[%s0 + $0xb8] sm:$0xff]
  %v44 = vld [vmem:[%s0 + $0xc0] sm:$0xff]
  %v45 = vld [vmem:[%s1] sm:$0xff]
  %v46 = vld [vmem:[%s1 + $0x8] sm:$0xff]
  %v47 = vld [vmem:[%s1 + $0x10] sm:$0xff]
  %v48 = vld [vmem:[%s1 + $0x18] sm:$0xff]
  %v49 = vld [vmem:[%s1 + $0x20] sm:$0xff]
  %v50 = vld [vmem:[%s1 + $0x28] sm:$0xff]
  %v51 = vld [vmem:[%s1 + $0x30] sm:$0xff]
  %v52 = vld [vmem:[%s1 + $0x38] sm:$0xff]
  %v53 = vld [vmem:[%s1 + $0x40] sm:$0xff]
  %v54 = vld [vmem:[%s1 + $0x48] sm:$0xff]
  %v55 = vld [vmem:[%s1 + $0x50] sm:$0xff]
  %v56 = vld [vmem:[%s1 + $0x58] sm:$0xff]
  %v57 = vld [vmem:[%s1 + $0x60] sm:$0xff]
  %v58 = vld [vmem:[%s1 + $0x68] sm:$0xff]
  %v59 = vld [vmem:[%s1 + $0x70] sm:$0xff]
  %v60 = vld [vmem:[%s1 + $0x78] sm:$0xff]
  %v61 = vld [vmem:[%s1 + $0x80] sm:$0xff]
  %v62 = vld [vmem:[%s1 + $0x88] sm:$0xff]
  %v63 = vld [vmem:[%s1 + $0x90] sm:$0xff]
  %v64 = vld [vmem:[%s1 + $0x98] sm:$0xff]
  %v65 = vld [vmem:[%s1 + $0xa0] sm:$0xff]
  %v66 = vld [vmem:[%s1 + $0xa8] sm:$0xff]
  %v67 = vld [vmem:[%s1 + $0xb0] sm:$0xff]
  %v68 = vld [vmem:[%s1 + $0xb8] sm:$0xff]
  %v69 = vld [vmem:[%s1 + $0xc0] sm:$0xff]
  %v70 = vld [vmem:[%s1 + $0xc8] sm:$0xff]
  %v71 = vld [vmem:[%s1 + $0xd0] sm:$0xff]
  %v72 = vld [vmem:[%s1 + $0xd8] sm:$0xff]
  %v73 = vld [vmem:[%s1 + $0xe0] sm:$0xff]
  %v74 = vld [vmem:[%s1 + $0xe8] sm:$0xff]
  %v75 = vld [vmem:[%s1 + $0xf0] sm:$0xff]
  %v76 = vld [vmem:[%s1 + $0xf8] sm:$0xff]
  %v77 = vld [vmem:[%s1 + $0x100] sm:$0xff]
  %v78 = vld [vmem:[%s1 + $0x108] sm:$0xff]
  %v79 = vld [vmem:[%s1 + $0x110] sm:$0xff]
  %v80 = vld [vmem:[%s1 + $0x118] sm:$0xff]
  %v81 = vld [vmem:[%s1 + $0x120] sm:$0xff]
  %v82 = vld [vmem:[%s1 + $0x128] sm:$0xff]
  %v83 = vld [vmem:[%s1 + $0x130] sm:$0xff]
  %v84 = vld [vmem:[%s1 + $0x138] sm:$0xff]
  %v85 = vld [vmem:[%s1 + $0x140] sm:$0xff]
  %v86 = vld [vmem:[%s1 + $0x148] sm:$0xff]
  %v87 = vld [vmem:[%s1 + $0x150] sm:$0xff]
  %v88 = vld [vmem:[%s1 + $0x158] sm:$0xff]
  %v89 = vld [vmem:[%s1 + $0x160] sm:$0xff]
  %v90 = vld [vmem:[%s1 + $0x168] sm:$0xff]
  %v91 = vld [vmem:[%s1 + $0x170] sm:$0xff]
  %v92 = vld [vmem:[%s1 + $0x178] sm:$0xff]
  %v93 = vld [vmem:[%s1 + $0x180] sm:$0xff]
  %v94 = vld [vmem:[%s1 + $0x188] sm:$0xff]
  %v95 = vld [vmem:[%s1 + $0x190] sm:$0xff]
  %v96 = vld [vmem:[%s1 + $0x198] sm:$0xff]
  %v97 = vld [vmem:[%s1 + $0x1a0] sm:$0xff]
  %v98 = vld [vmem:[%s1 + $0x1a8] sm:$0xff]
  %v99 = vld [vmem:[%s1 + $0x1b0] sm:$0xff]
  %v100 = vld [vmem:[%s1 + $0x1b8] sm:$0xff]
  %v101 = vld [vmem:[%s1 + $0x1c0] sm:$0xff]
  %v102 = vld [vmem:[%s1 + $0x1c8] sm:$0xff]
  %v103 = vld [vmem:[%s1 + $0x1d0] sm:$0xff]
  %v104 = vld [vmem:[%s1 + $0x1d8] sm:$0xff]
  %v105 = vld [vmem:[%s1 + $0x1e0] sm:$0xff]
  %v106 = vld [vmem:[%s1 + $0x1e8] sm:$0xff]
  %v107 = vld [vmem:[%s1 + $0x1f0] sm:$0xff]
  %v108 = vld [vmem:[%s1 + $0x1f8] sm:$0xff]
  %v109 = vld [vmem:[%s1 + $0x200] sm:$0xff]
  %v110 = vld [vmem:[%s1 + $0x208] sm:$0xff]
  %v111 = vld [vmem:[%s1 + $0x210] sm:$0xff]
  %v112 = vld [vmem:[%s1 + $0x218] sm:$0xff]
  %v113 = vld [vmem:[%s1 + $0x220] sm:$0xff]
  %v114 = vld [vmem:[%s1 + $0x228] sm:$0xff]
  %v115 = vld [vmem:[%s1 + $0x230] sm:$0xff]
  %v116 = vld [vmem:[%s1 + $0x238] sm:$0xff]
  %v117 = vld [vmem:[%s1 + $0x240] sm:$0xff]
  %v118 = vld [vmem:[%s1 + $0x248] sm:$0xff]
  %v119 = vld [vmem:[%s1 + $0x250] sm:$0xff]
  %v120 = vld [vmem:[%s1 + $0x258] sm:$0xff]
  %v121 = vld [vmem:[%s1 + $0x260] sm:$0xff]
  %v122 = vld [vmem:[%s1 + $0x268] sm:$0xff]
  %v123 = vld [vmem:[%s1 + $0x270] sm:$0xff]
  %v124 = vld [vmem:[%s1 + $0x278] sm:$0xff]
  %v125 = vld [vmem:[%s1 + $0x280] sm:$0xff]
  %v126 = vld [vmem:[%s1 + $0x288] sm:$0xff]
  %v127 = vld [vmem:[%s1 + $0x290] sm:$0xff]
  %v128 = vld [vmem:[%s1 + $0x298] sm:$0xff]
  %v129 = vld [vmem:[%s1 + $0x2a0] sm:$0xff]
  %v130 = vld [vmem:[%s1 + $0x2a8] sm:$0xff]
  %v131 = vld [vmem:[%s1 + $0x2b0] sm:$0xff]
  %v132 = vld [vmem:[%s1 + $0x2b8] sm:$0xff]
  %v133 = vld [vmem:[%s1 + $0x2c0] sm:$0xff]
  %v134 = vld [vmem:[%s1 + $0x2c8] sm:$0xff]
  %v135 = vld [vmem:[%s1 + $0x2d0] sm:$0xff]
  %v136 = vld [vmem:[%s1 + $0x2d8] sm:$0xff]
  %v137 = vld [vmem:[%s1 + $0x2e0] sm:$0xff]
  %v138 = vld [vmem:[%s1 + $0x2e8] sm:$0xff]
  %v139 = vld [vmem:[%s1 + $0x2f0] sm:$0xff]
  %v140 = vld [vmem:[%s1 + $0x2f8] sm:$0xff]
  %v141 = vld [vmem:[%s1 + $0x300] sm:$0xff]
  %v142 = vld [vmem:[%s1 + $0x308] sm:$0xff]
  %v143 = vld [vmem:[%s1 + $0x310] sm:$0xff]
  %v144 = vld [vmem:[%s1 + $0x318] sm:$0xff]
  %v145 = vld [vmem:[%s1 + $0x320] sm:$0xff]
  %v146 = vld [vmem:[%s1 + $0x328] sm:$0xff]
  %v147 = vld [vmem:[%s1 + $0x330] sm:$0xff]
  %v148 = vld [vmem:[%s1 + $0x338] sm:$0xff]
  %v149 = vld [vmem:[%s1 + $0x340] sm:$0xff]
  %v150 = vld [vmem:[%s1 + $0x348] sm:$0xff]
  %v151 = vld [vmem:[%s1 + $0x350] sm:$0xff]
  %v152 = vld [vmem:[%s1 + $0x358] sm:$0xff]
  %v153 = vld [vmem:[%s1 + $0x360] sm:$0xff]
  %v154 = vld [vmem:[%s1 + $0x368] sm:$0xff]
  %v155 = vld [vmem:[%s1 + $0x370] sm:$0xff]
  %v156 = vld [vmem:[%s1 + $0x378] sm:$0xff]
  %v157 = vld [vmem:[%s1 + $0x380] sm:$0xff]
  %v158 = vld [vmem:[%s1 + $0x388] sm:$0xff]
  %v159 = vld [vmem:[%s1 + $0x390] sm:$0xff]
  %v160 = vld [vmem:[%s1 + $0x398] sm:$0xff]
  %v161 = vld [vmem:[%s1 + $0x3a0] sm:$0xff]
  %v162 = vld [vmem:[%s1 + $0x3a8] sm:$0xff]
  %v163 = vld [vmem:[%s1 + $0x3b0] sm:$0xff]
  %v164 = vld [vmem:[%s1 + $0x3b8] sm:$0xff]
  %v165 = vld [vmem:[%s1 + $0x3c0] sm:$0xff]
  %v166 = vld [vmem:[%s1 + $0x3c8] sm:$0xff]
  %v167 = vld [vmem:[%s1 + $0x3d0] sm:$0xff]
  %v168 = vld [vmem:[%s1 + $0x3d8] sm:$0xff]
  %v169 = vld [vmem:[%s1 + $0x3e0] sm:$0xff]
  %v170 = vld [vmem:[%s1 + $0x3e8] sm:$0xff]
  %v171 = vld [vmem:[%s1 + $0x3f0] sm:$0xff]
  %v172 = vld [vmem:[%s1 + $0x3f8] sm:$0xff]
  %v173 = vld [vmem:[%s1 + $0x400] sm:$0xff]
  %v174 = vld [vmem:[%s1 + $0x408] sm:$0xff]
  %v175 = vld [vmem:[%s1 + $0x410] sm:$0xff]
  %v176 = vld [vmem:[%s1 + $0x418] sm:$0xff]
  %v177 = vld [vmem:[%s1 + $0x420] sm:$0xff]
  %v178 = vld [vmem:[%s1 + $0x428] sm:$0xff]
  %v179 = vld [vmem:[%s1 + $0x430] sm:$0xff]
  %v180 = vld [vmem:[%s1 + $0x438] sm:$0xff]
  %v181 = vld [vmem:[%s1 + $0x440] sm:$0xff]
  %v182 = vld [vmem:[%s1 + $0x448] sm:$0xff]
  %v183 = vld [vmem:[%s1 + $0x450] sm:$0xff]
  %v184 = vld [vmem:[%s1 + $0x458] sm:$0xff]
  %v185 = vld [vmem:[%s1 + $0x460] sm:$0xff]
  %v186 = vld [vmem:[%s1 + $0x468] sm:$0xff]
  %v187 = vld [vmem:[%s1 + $0x470] sm:$0xff]
  %v188 = vld [vmem:[%s1 + $0x478] sm:$0xff]
  %v189 = vld [vmem:[%s1 + $0x480] sm:$0xff]
  %v190 = vld [vmem:[%s1 + $0x488] sm:$0xff]
  %v191 = vld [vmem:[%s1 + $0x490] sm:$0xff]
  %v192 = vld [vmem:[%s1 + $0x498] sm:$0xff]
  %v193 = vld [vmem:[%s1 + $0x4a0] sm:$0xff]
  %v194 = vld [vmem:[%s1 + $0x4a8] sm:$0xff]
  %v195 = vld [vmem:[%s1 + $0x4b0] sm:$0xff]
  %v196 = vld [vmem:[%s1 + $0x4b8] sm:$0xff]
  %v197 = vld [vmem:[%s1 + $0x4c0] sm:$0xff]
  %v198 = vld [vmem:[%s1 + $0x4c8] sm:$0xff]
  %v199 = vld [vmem:[%s1 + $0x4d0] sm:$0xff]
  %v200 = vld [vmem:[%s1 + $0x4d8] sm:$0xff]
  %v201 = vld [vmem:[%s1 + $0x4e0] sm:$0xff]
  %v202 = vld [vmem:[%s1 + $0x4e8] sm:$0xff]
  %v203 = vld [vmem:[%s1 + $0x4f0] sm:$0xff]
  %v204 = vld [vmem:[%s1 + $0x4f8] sm:$0xff]
  %v205 = vld [vmem:[%s1 + $0x500] sm:$0xff]
  %v206 = vld [vmem:[%s1 + $0x508] sm:$0xff]
  %v207 = vld [vmem:[%s1 + $0x510] sm:$0xff]
  %v208 = vld [vmem:[%s1 + $0x518] sm:$0xff]
  %v209 = vld [vmem:[%s1 + $0x520] sm:$0xff]
  %v210 = vld [vmem:[%s1 + $0x528] sm:$0xff]
  %v211 = vld [vmem:[%s1 + $0x530] sm:$0xff]
  %v212 = vld [vmem:[%s1 + $0x538] sm:$0xff]
  %v213 = vld [vmem:[%s1 + $0x540] sm:$0xff]
  %v214 = vld [vmem:[%s1 + $0x548] sm:$0xff]
  %v215 = vld [vmem:[%s1 + $0x550] sm:$0xff]
  %v216 = vld [vmem:[%s1 + $0x558] sm:$0xff]
  %v217 = vld [vmem:[%s1 + $0x560] sm:$0xff]
  %v218 = vld [vmem:[%s1 + $0x568] sm:$0xff]
  %v219 = vld [vmem:[%s1 + $0x570] sm:$0xff]
  %v220 = vld [vmem:[%s1 + $0x578] sm:$0xff]
  %v221 = vld [vmem:[%s1 + $0x580] sm:$0xff]
  %v222 = vld [vmem:[%s1 + $0x588] sm:$0xff]
  %v223 = vld [vmem:[%s1 + $0x590] sm:$0xff]
  %v224 = vld [vmem:[%s1 + $0x598] sm:$0xff]
  %v225 = vld [vmem:[%s1 + $0x5a0] sm:$0xff]
  %v226 = vld [vmem:[%s1 + $0x5a8] sm:$0xff]
  %v227 = vld [vmem:[%s1 + $0x5b0] sm:$0xff]
  %v228 = vld [vmem:[%s1 + $0x5b8] sm:$0xff]
  %v229 = vld [vmem:[%s1 + $0x5c0] sm:$0xff]
  %v230 = vld [vmem:[%s1 + $0x5c8] sm:$0xff]
  %v231 = vld [vmem:[%s1 + $0x5d0] sm:$0xff]
  %v232 = vld [vmem:[%s1 + $0x5d8] sm:$0xff]
  %v233 = vld [vmem:[%s1 + $0x5e0] sm:$0xff]
  %v234 = vld [vmem:[%s1 + $0x5e8] sm:$0xff]
  %v235 = vld [vmem:[%s1 + $0x5f0] sm:$0xff]
  %v236 = vld [vmem:[%s1 + $0x5f8] sm:$0xff]
  %v237 = vld [vmem:[%s1 + $0x600] sm:$0xff]
  %v238 = vld [vmem:[%s1 + $0x608] sm:$0xff]
  %v239 = vld [vmem:[%s1 + $0x610] sm:$0xff]
  %v240 = vld [vmem:[%s1 + $0x618] sm:$0xff]
  %v241 = vld [vmem:[%s1 + $0x620] sm:$0xff]
  %v242 = vld [vmem:[%s1 + $0x628] sm:$0xff]
  %v243 = vld [vmem:[%s1 + $0x630] sm:$0xff]
  %v244 = vld [vmem:[%s1 + $0x638] sm:$0xff]
  %v245 = vld [vmem:[%s1 + $0x640] sm:$0xff]
  %v246 = vld [vmem:[%s1 + $0x648] sm:$0xff]
  %v247 = vld [vmem:[%s1 + $0x650] sm:$0xff]
  %v248 = vld [vmem:[%s1 + $0x658] sm:$0xff]
  %v249 = vld [vmem:[%s1 + $0x660] sm:$0xff]
  %v250 = vld [vmem:[%s1 + $0x668] sm:$0xff]
  %v251 = vld [vmem:[%s1 + $0x670] sm:$0xff]
  %v252 = vld [vmem:[%s1 + $0x678] sm:$0xff]
  %v253 = vld [vmem:[%s1 + $0x680] sm:$0xff]
  %v254 = vld [vmem:[%s1 + $0x688] sm:$0xff]
  %v255 = vld [vmem:[%s1 + $0x690] sm:$0xff]
  %v256 = vld [vmem:[%s1 + $0x698] sm:$0xff]
  %v257 = vld [vmem:[%s1 + $0x6a0] sm:$0xff]
  %v258 = vld [vmem:[%s1 + $0x6a8] sm:$0xff]
  %v259 = vld [vmem:[%s1 + $0x6b0] sm:$0xff]
  %v260 = vld [vmem:[%s1 + $0x6b8] sm:$0xff]
  %v261 = vld [vmem:[%s1 + $0x6c0] sm:$0xff]
  %v262 = vld [vmem:[%s1 + $0x6c8] sm:$0xff]
  %v263 = vld [vmem:[%s1 + $0x6d0] sm:$0xff]
  %v264 = vld [vmem:[%s1 + $0x6d8] sm:$0xff]
  %v265 = vld [vmem:[%s1 + $0x6e0] sm:$0xff]
  %v266 = vld [vmem:[%s1 + $0x6e8] sm:$0xff]
  %v267 = vld [vmem:[%s1 + $0x6f0] sm:$0xff]
  %v268 = vld [vmem:[%s1 + $0x6f8] sm:$0xff]
  %v269 = vld [vmem:[%s1 + $0x700] sm:$0xff]
  %v270 = vld [vmem:[%s1 + $0x708] sm:$0xff]
  %v271 = vld [vmem:[%s1 + $0x710] sm:$0xff]
  %v272 = vld [vmem:[%s1 + $0x718] sm:$0xff]
  %v273 = vld [vmem:[%s1 + $0x720] sm:$0xff]
  %v274 = vld [vmem:[%s1 + $0x728] sm:$0xff]
  %v275 = vld [vmem:[%s1 + $0x730] sm:$0xff]
  %v276 = vld [vmem:[%s1 + $0x738] sm:$0xff]
  %v277 = vld [vmem:[%s1 + $0x740] sm:$0xff]
  %v278 = vld [vmem:[%s1 + $0x748] sm:$0xff]
  %v279 = vld [vmem:[%s1 + $0x750] sm:$0xff]
  %v280 = vld [vmem:[%s1 + $0x758] sm:$0xff]
  %v281 = vld [vmem:[%s1 + $0x760] sm:$0xff]
  %v282 = vld [vmem:[%s1 + $0x768] sm:$0xff]
  %v283 = vld [vmem:[%s1 + $0x770] sm:$0xff]
  %v284 = vld [vmem:[%s1 + $0x778] sm:$0xff]
  %v285 = vld [vmem:[%s1 + $0x780] sm:$0xff]
  %v286 = vld [vmem:[%s1 + $0x788] sm:$0xff]
  %v287 = vld [vmem:[%s1 + $0x790] sm:$0xff]
  %v288 = vld [vmem:[%s1 + $0x798] sm:$0xff]
  %v289 = vld [vmem:[%s1 + $0x7a0] sm:$0xff]
  %v290 = vld [vmem:[%s1 + $0x7a8] sm:$0xff]
  %v291 = vld [vmem:[%s1 + $0x7b0] sm:$0xff]
  %v292 = vld [vmem:[%s1 + $0x7b8] sm:$0xff]
  %v293 = vld [vmem:[%s1 + $0x7c0] sm:$0xff]
  %v294 = vld [vmem:[%s1 + $0x7c8] sm:$0xff]
  %v295 = vld [vmem:[%s1 + $0x7d0] sm:$0xff]
  %v296 = vld [vmem:[%s1 + $0x7d8] sm:$0xff]
  %v297 = vld [vmem:[%s1 + $0x7e0] sm:$0xff]
  %v298 = vld [vmem:[%s1 + $0x7e8] sm:$0xff]
  %v299 = vld [vmem:[%s1 + $0x7f0] sm:$0xff]
  %v300 = vld [vmem:[%s1 + $0x7f8] sm:$0xff]
  %v301 = vld [vmem:[%s1 + $0x800] sm:$0xff]
  %v302 = vld [vmem:[%s1 + $0x808] sm:$0xff]
  %v303 = vld [vmem:[%s1 + $0x810] sm:$0xff]
  %v304 = vld [vmem:[%s1 + $0x818] sm:$0xff]
  %v305 = vld [vmem:[%s1 + $0x820] sm:$0xff]
  %v306 = vld [vmem:[%s1 + $0x828] sm:$0xff]
  %v307 = vld [vmem:[%s1 + $0x830] sm:$0xff]
  %v308 = vld [vmem:[%s1 + $0x838] sm:$0xff]
  %v309 = vld [vmem:[%s1 + $0x840] sm:$0xff]
  %v310 = vld [vmem:[%s1 + $0x848] sm:$0xff]
  %v311 = vld [vmem:[%s1 + $0x850] sm:$0xff]
  %v312 = vld [vmem:[%s1 + $0x858] sm:$0xff]
  %v313 = vld [vmem:[%s1 + $0x860] sm:$0xff]
  %v314 = vld [vmem:[%s1 + $0x868] sm:$0xff]
  %v315 = vld [vmem:[%s1 + $0x870] sm:$0xff]
  %v316 = vld [vmem:[%s1 + $0x878] sm:$0xff]
  %v317 = vld [vmem:[%s1 + $0x880] sm:$0xff]
  %v318 = vld [vmem:[%s1 + $0x888] sm:$0xff]
  %v319 = vld [vmem:[%s1 + $0x890] sm:$0xff]
  %v320 = vld [vmem:[%s1 + $0x898] sm:$0xff]
  %v321 = vld [vmem:[%s1 + $0x8a0] sm:$0xff]
  %v322 = vld [vmem:[%s1 + $0x8a8] sm:$0xff]
  %v323 = vld [vmem:[%s1 + $0x8b0] sm:$0xff]
  %v324 = vld [vmem:[%s1 + $0x8b8] sm:$0xff]
  %v325 = vld [vmem:[%s1 + $0x8c0] sm:$0xff]
  %v326 = vld [vmem:[%s1 + $0x8c8] sm:$0xff]
  %v327 = vld [vmem:[%s1 + $0x8d0] sm:$0xff]
  %v328 = vld [vmem:[%s1 + $0x8d8] sm:$0xff]
  %v329 = vld [vmem:[%s1 + $0x8e0] sm:$0xff]
  %v330 = vld [vmem:[%s1 + $0x8e8] sm:$0xff]
  %v331 = vld [vmem:[%s1 + $0x8f0] sm:$0xff]
  %v332 = vld [vmem:[%s1 + $0x8f8] sm:$0xff]
  %v333 = vld [vmem:[%s1 + $0x900] sm:$0xff]
  %v334 = vld [vmem:[%s1 + $0x908] sm:$0xff]
  %v335 = vld [vmem:[%s1 + $0x910] sm:$0xff]
  %v336 = vld [vmem:[%s1 + $0x918] sm:$0xff]
  %v337 = vld [vmem:[%s1 + $0x920] sm:$0xff]
  %v338 = vld [vmem:[%s1 + $0x928] sm:$0xff]
  %v339 = vld [vmem:[%s1 + $0x930] sm:$0xff]
  %v340 = vld [vmem:[%s1 + $0x938] sm:$0xff]
  %v341 = vld [vmem:[%s1 + $0x940] sm:$0xff]
  %v342 = vld [vmem:[%s1 + $0x948] sm:$0xff]
  %v343 = vld [vmem:[%s1 + $0x950] sm:$0xff]
  %v344 = vld [vmem:[%s1 + $0x958] sm:$0xff]
  %v345 = vld [vmem:[%s1 + $0x960] sm:$0xff]
  %v346 = vld [vmem:[%s1 + $0x968] sm:$0xff]
  %v347 = vld [vmem:[%s1 + $0x970] sm:$0xff]
  %v348 = vld [vmem:[%s1 + $0x978] sm:$0xff]
  %v349 = vld [vmem:[%s1 + $0x980] sm:$0xff]
  %v350 = vld [vmem:[%s1 + $0x988] sm:$0xff]
  %v351 = vld [vmem:[%s1 + $0x990] sm:$0xff]
  %v352 = vld [vmem:[%s1 + $0x998] sm:$0xff]
  %v353 = vld [vmem:[%s1 + $0x9a0] sm:$0xff]
  %v354 = vld [vmem:[%s1 + $0x9a8] sm:$0xff]
  %v355 = vld [vmem:[%s1 + $0x9b0] sm:$0xff]
  %v356 = vld [vmem:[%s1 + $0x9b8] sm:$0xff]
  %v357 = vld [vmem:[%s1 + $0x9c0] sm:$0xff]
  %v358 = vld [vmem:[%s1 + $0x9c8] sm:$0xff]
  %v359 = vld [vmem:[%s1 + $0x9d0] sm:$0xff]
  %v360 = vld [vmem:[%s1 + $0x9d8] sm:$0xff]
  %v361 = vld [vmem:[%s1 + $0x9e0] sm:$0xff]
  %v362 = vld [vmem:[%s1 + $0x9e8] sm:$0xff]
  %v363 = vld [vmem:[%s1 + $0x9f0] sm:$0xff]
  %v364 = vld [vmem:[%s1 + $0x9f8] sm:$0xff]
  %v365 = vld [vmem:[%s1 + $0xa00] sm:$0xff]
  %v366 = vld [vmem:[%s1 + $0xa08] sm:$0xff]
  %v367 = vld [vmem:[%s1 + $0xa10] sm:$0xff]
  %v368 = vld [vmem:[%s1 + $0xa18] sm:$0xff]
  %v369 = vld [vmem:[%s1 + $0xa20] sm:$0xff]
  %v370 = vld [vmem:[%s1 + $0xa28] sm:$0xff]
  %v371 = vld [vmem:[%s1 + $0xa30] sm:$0xff]
  %v372 = vld [vmem:[%s1 + $0xa38] sm:$0xff]
  %v373 = vld [vmem:[%s1 + $0xa40] sm:$0xff]
  %v374 = vld [vmem:[%s1 + $0xa48] sm:$0xff]
  %v375 = vld [vmem:[%s1 + $0xa50] sm:$0xff]
  %v376 = vld [vmem:[%s1 + $0xa58] sm:$0xff]
  %v377 = vld [vmem:[%s1 + $0xa60] sm:$0xff]
  %v378 = vld [vmem:[%s1 + $0xa68] sm:$0xff]
  %v379 = vld [vmem:[%s1 + $0xa70] sm:$0xff]
  %v380 = vld [vmem:[%s1 + $0xa78] sm:$0xff]
  %v381 = vld [vmem:[%s1 + $0xa80] sm:$0xff]
  %v382 = vld [vmem:[%s1 + $0xa88] sm:$0xff]
  %v383 = vld [vmem:[%s1 + $0xa90] sm:$0xff]
  %v384 = vld [vmem:[%s1 + $0xa98] sm:$0xff]
  %v385 = vld [vmem:[%s1 + $0xaa0] sm:$0xff]
  %v386 = vld [vmem:[%s1 + $0xaa8] sm:$0xff]
  %v387 = vld [vmem:[%s1 + $0xab0] sm:$0xff]
  %v388 = vld [vmem:[%s1 + $0xab8] sm:$0xff]
  %v389 = vld [vmem:[%s1 + $0xac0] sm:$0xff]
  %v390 = vld [vmem:[%s1 + $0xac8] sm:$0xff]
  %v391 = vld [vmem:[%s1 + $0xad0] sm:$0xff]
  %v392 = vld [vmem:[%s1 + $0xad8] sm:$0xff]
  %v393 = vld [vmem:[%s1 + $0xae0] sm:$0xff]
  %v394 = vld [vmem:[%s1 + $0xae8] sm:$0xff]
  %v395 = vld [vmem:[%s1 + $0xaf0] sm:$0xff]
  %v396 = vld [vmem:[%s1 + $0xaf8] sm:$0xff]
  %v397 = vld [vmem:[%s1 + $0xb00] sm:$0xff]
  %v398 = vld [vmem:[%s1 + $0xb08] sm:$0xff]
  %v399 = vld [vmem:[%s1 + $0xb10] sm:$0xff]
  %v400 = vld [vmem:[%s1 + $0xb18] sm:$0xff]
  %v401 = vld [vmem:[%s1 + $0xb20] sm:$0xff]
  %v402 = vld [vmem:[%s1 + $0xb28] sm:$0xff]
  %v403 = vld [vmem:[%s1 + $0xb30] sm:$0xff]
  %v404 = vld [vmem:[%s1 + $0xb38] sm:$0xff]
  %v405 = vld [vmem:[%s1 + $0xb40] sm:$0xff]
  %v406 = vld [vmem:[%s1 + $0xb48] sm:$0xff]
  %v407 = vld [vmem:[%s1 + $0xb50] sm:$0xff]
  %v408 = vld [vmem:[%s1 + $0xb58] sm:$0xff]
  %v409 = vld [vmem:[%s1 + $0xb60] sm:$0xff]
  %v410 = vld [vmem:[%s1 + $0xb68] sm:$0xff]
  %v411 = vld [vmem:[%s1 + $0xb70] sm:$0xff]
  %v412 = vld [vmem:[%s1 + $0xb78] sm:$0xff]
  %v413 = vld [vmem:[%s1 + $0xb80] sm:$0xff]
  %v414 = vld [vmem:[%s1 + $0xb88] sm:$0xff]
  %v415 = vld [vmem:[%s1 + $0xb90] sm:$0xff]
  %v416 = vld [vmem:[%s1 + $0xb98] sm:$0xff]
  %v417 = vld [vmem:[%s1 + $0xba0] sm:$0xff]
  %v418 = vld [vmem:[%s1 + $0xba8] sm:$0xff]
  %v419 = vld [vmem:[%s1 + $0xbb0] sm:$0xff]
  %v420 = vld [vmem:[%s1 + $0xbb8] sm:$0xff]
  %v421 = vld [vmem:[%s1 + $0xbc0] sm:$0xff]
  %v422 = vld [vmem:[%s1 + $0xbc8] sm:$0xff]
  %v423 = vld [vmem:[%s1 + $0xbd0] sm:$0xff]
  %v424 = vld [vmem:[%s1 + $0xbd8] sm:$0xff]
  %v425 = vld [vmem:[%s1 + $0xbe0] sm:$0xff]
  %v426 = vld [vmem:[%s1 + $0xbe8] sm:$0xff]
  %v427 = vld [vmem:[%s1 + $0xbf0] sm:$0xff]
  %v428 = vld [vmem:[%s1 + $0xbf8] sm:$0xff]
  %v429 = vld [vmem:[%s1 + $0xc00] sm:$0xff]
  %v430 = vld [vmem:[%s1 + $0xc08] sm:$0xff]
  %v431 = vld [vmem:[%s1 + $0xc10] sm:$0xff]
  %v432 = vld [vmem:[%s1 + $0xc18] sm:$0xff]
  %v433 = vld [vmem:[%s1 + $0xc20] sm:$0xff]
  %v434 = vld [vmem:[%s1 + $0xc28] sm:$0xff]
  %v435 = vld [vmem:[%s1 + $0xc30] sm:$0xff]
  %v436 = vld [vmem:[%s1 + $0xc38] sm:$0xff]
  %v437 = vld [vmem:[%s1 + $0xc40] sm:$0xff]
  %v438 = vld [vmem:[%s1 + $0xc48] sm:$0xff]
  %v439 = vld [vmem:[%s1 + $0xc50] sm:$0xff]
  %v440 = vld [vmem:[%s1 + $0xc58] sm:$0xff]
  %v441 = vld [vmem:[%s1 + $0xc60] sm:$0xff]
  %v442 = vld [vmem:[%s1 + $0xc68] sm:$0xff]
  %v443 = vld [vmem:[%s1 + $0xc70] sm:$0xff]
  %v444 = vld [vmem:[%s1 + $0xc78] sm:$0xff]
  %v445 = vld [vmem:[%s1 + $0xc80] sm:$0xff]
  %v446 = vld [vmem:[%s1 + $0xc88] sm:$0xff]
  %v447 = vld [vmem:[%s1 + $0xc90] sm:$0xff]
  %v448 = vld [vmem:[%s1 + $0xc98] sm:$0xff]
  %v449 = vld [vmem:[%s1 + $0xca0] sm:$0xff]
  %v450 = vld [vmem:[%s1 + $0xca8] sm:$0xff]
  %v451 = vld [vmem:[%s1 + $0xcb0] sm:$0xff]
  %v452 = vld [vmem:[%s1 + $0xcb8] sm:$0xff]
  %v453 = vld [vmem:[%s1 + $0xcc0] sm:$0xff]
  %v454 = vld [vmem:[%s1 + $0xcc8] sm:$0xff]
  %v455 = vld [vmem:[%s1 + $0xcd0] sm:$0xff]
  %v456 = vld [vmem:[%s1 + $0xcd8] sm:$0xff]
  %v457 = vld [vmem:[%s1 + $0xce0] sm:$0xff]
  %v458 = vld [vmem:[%s1 + $0xce8] sm:$0xff]
  %v459 = vld [vmem:[%s1 + $0xcf0] sm:$0xff]
  %v460 = vld [vmem:[%s1 + $0xcf8] sm:$0xff]
  %v461 = vld [vmem:[%s1 + $0xd00] sm:$0xff]
  %v462 = vld [vmem:[%s1 + $0xd08] sm:$0xff]
  %v463 = vld [vmem:[%s1 + $0xd10] sm:$0xff]
  %v464 = vld [vmem:[%s1 + $0xd18] sm:$0xff]
  %v465 = vld [vmem:[%s1 + $0xd20] sm:$0xff]
  %v466 = vld [vmem:[%s1 + $0xd28] sm:$0xff]
  %v467 = vld [vmem:[%s1 + $0xd30] sm:$0xff]
  %v468 = vld [vmem:[%s1 + $0xd38] sm:$0xff]
  %v469 = vld [vmem:[%s1 + $0xd40] sm:$0xff]
  %v470 = vld [vmem:[%s1 + $0xd48] sm:$0xff]
  %v471 = vld [vmem:[%s1 + $0xd50] sm:$0xff]
  %v472 = vld [vmem:[%s1 + $0xd58] sm:$0xff]
  %v473 = vld [vmem:[%s1 + $0xd60] sm:$0xff]
  %v474 = vld [vmem:[%s1 + $0xd68] sm:$0xff]
  %v475 = vld [vmem:[%s1 + $0xd70] sm:$0xff]
  %v476 = vld [vmem:[%s1 + $0xd78] sm:$0xff]
  %v477 = vld [vmem:[%s1 + $0xd80] sm:$0xff]
  %v478 = vld [vmem:[%s1 + $0xd88] sm:$0xff]
  %v479 = vld [vmem:[%s1 + $0xd90] sm:$0xff]
  %v480 = vld [vmem:[%s1 + $0xd98] sm:$0xff]
  %v481 = vld [vmem:[%s1 + $0xda0] sm:$0xff]
  %v482 = vld [vmem:[%s1 + $0xda8] sm:$0xff]
  %v483 = vld [vmem:[%s1 + $0xdb0] sm:$0xff]
  %v484 = vld [vmem:[%s1 + $0xdb8] sm:$0xff]
  %v485 = vld [vmem:[%s1 + $0xdc0] sm:$0xff]
  %v486 = vld [vmem:[%s1 + $0xdc8] sm:$0xff]
  %v487 = vld [vmem:[%s1 + $0xdd0] sm:$0xff]
  %v488 = vld [vmem:[%s1 + $0xdd8] sm:$0xff]
  %v489 = vld [vmem:[%s1 + $0xde0] sm:$0xff]
  %v490 = vld [vmem:[%s1 + $0xde8] sm:$0xff]
  %v491 = vld [vmem:[%s1 + $0xdf0] sm:$0xff]
  %v492 = vld [vmem:[%s1 + $0xdf8] sm:$0xff]
  %v493 = vld [vmem:[%s1 + $0xe00] sm:$0xff]
  %v494 = vld [vmem:[%s1 + $0xe08] sm:$0xff]
  %v495 = vld [vmem:[%s1 + $0xe10] sm:$0xff]
  %v496 = vld [vmem:[%s1 + $0xe18] sm:$0xff]
  %v497 = vld [vmem:[%s1 + $0xe20] sm:$0xff]
  %v498 = vld [vmem:[%s1 + $0xe28] sm:$0xff]
  %v499 = vld [vmem:[%s1 + $0xe30] sm:$0xff]
  %v500 = vld [vmem:[%s1 + $0xe38] sm:$0xff]
  %v501 = vld [vmem:[%s1 + $0xe40] sm:$0xff]
  %v502 = vld [vmem:[%s1 + $0xe48] sm:$0xff]
  %v503 = vld [vmem:[%s1 + $0xe50] sm:$0xff]
  %v504 = vld [vmem:[%s1 + $0xe58] sm:$0xff]
  %v505 = vld [vmem:[%s1 + $0xe60] sm:$0xff]
  %v506 = vld [vmem:[%s1 + $0xe68] sm:$0xff]
  %v507 = vld [vmem:[%s1 + $0xe70] sm:$0xff]
  %v508 = vld [vmem:[%s1 + $0xe78] sm:$0xff]
  %v509 = vld [vmem:[%s1 + $0xe80] sm:$0xff]
  %v510 = vld [vmem:[%s1 + $0xe88] sm:$0xff]
  %v511 = vld [vmem:[%s1 + $0xe90] sm:$0xff]
  %v512 = vld [vmem:[%s1 + $0xe98] sm:$0xff]
  %v513 = vld [vmem:[%s1 + $0xea0] sm:$0xff]
  %v514 = vld [vmem:[%s1 + $0xea8] sm:$0xff]
  %v515 = vld [vmem:[%s1 + $0xeb0] sm:$0xff]
  %v516 = vld [vmem:[%s1 + $0xeb8] sm:$0xff]
  %v517 = vld [vmem:[%s1 + $0xec0] sm:$0xff]
  %v518 = vld [vmem:[%s1 + $0xec8] sm:$0xff]
  %v519 = vld [vmem:[%s1 + $0xed0] sm:$0xff]
  %v520 = vld [vmem:[%s1 + $0xed8] sm:$0xff]
  %v521 = vld [vmem:[%s1 + $0xee0] sm:$0xff]
  %v522 = vld [vmem:[%s1 + $0xee8] sm:$0xff]
  %v523 = vld [vmem:[%s1 + $0xef0] sm:$0xff]
  %v524 = vld [vmem:[%s1 + $0xef8] sm:$0xff]
  %v525 = vld [vmem:[%s1 + $0xf00] sm:$0xff]
  %v526 = vld [vmem:[%s1 + $0xf08] sm:$0xff]
  %v527 = vld [vmem:[%s1 + $0xf10] sm:$0xff]
  %v528 = vld [vmem:[%s1 + $0xf18] sm:$0xff]
  %v529 = vld [vmem:[%s1 + $0xf20] sm:$0xff]
  %v530 = vld [vmem:[%s1 + $0xf28] sm:$0xff]
  %v531 = vld [vmem:[%s1 + $0xf30] sm:$0xff]
  %v532 = vld [vmem:[%s1 + $0xf38] sm:$0xff]
  %v533 = vld [vmem:[%s1 + $0xf40] sm:$0xff]
  %v534 = vld [vmem:[%s1 + $0xf48] sm:$0xff]
  %v535 = vld [vmem:[%s1 + $0xf50] sm:$0xff]
  %v536 = vld [vmem:[%s1 + $0xf58] sm:$0xff]
  %v537 = vld [vmem:[%s1 + $0xf60] sm:$0xff]
  %v538 = vld [vmem:[%s1 + $0xf68] sm:$0xff]
  %v539 = vld [vmem:[%s1 + $0xf70] sm:$0xff]
  %v540 = vld [vmem:[%s1 + $0xf78] sm:$0xff]
  %v541 = vld [vmem:[%s1 + $0xf80] sm:$0xff]
  %v542 = vld [vmem:[%s1 + $0xf88] sm:$0xff]
  %v543 = vld [vmem:[%s1 + $0xf90] sm:$0xff]
  %v544 = vld [vmem:[%s1 + $0xf98] sm:$0xff]
  %v545 = vld [vmem:[%s1 + $0xfa0] sm:$0xff]
  %v546 = vld [vmem:[%s1 + $0xfa8] sm:$0xff]
  %v547 = vld [vmem:[%s1 + $0xfb0] sm:$0xff]
  %v548 = vld [vmem:[%s1 + $0xfb8] sm:$0xff]
  %v549 = vld [vmem:[%s1 + $0xfc0] sm:$0xff]
  %v550 = vld [vmem:[%s1 + $0xfc8] sm:$0xff]
  %v551 = vld [vmem:[%s1 + $0xfd0] sm:$0xff]
  %v552 = vld [vmem:[%s1 + $0xfd8] sm:$0xff]
  %v553 = vld [vmem:[%s1 + $0xfe0] sm:$0xff]
  %v554 = vld [vmem:[%s1 + $0xfe8] sm:$0xff]
  %v555 = vld [vmem:[%s1 + $0xff0] sm:$0xff]
  %v556 = vld [vmem:[%s1 + $0xff8] sm:$0xff]
  %v557 = vld [vmem:[%s1 + $0x1000] sm:$0xff]
  %v558 = vld [vmem:[%s1 + $0x1008] sm:$0xff]
  %v559 = vld [vmem:[%s1 + $0x1010] sm:$0xff]
  %v560 = vld [vmem:[%s1 + $0x1018] sm:$0xff]
  %v561 = vld [vmem:[%s1 + $0x1020] sm:$0xff]
  %v562 = vld [vmem:[%s1 + $0x1028] sm:$0xff]
  %v563 = vld [vmem:[%s1 + $0x1030] sm:$0xff]
  %v564 = vld [vmem:[%s1 + $0x1038] sm:$0xff]
  %v565 = vld [vmem:[%s1 + $0x1040] sm:$0xff]
  %v566 = vld [vmem:[%s1 + $0x1048] sm:$0xff]
  %v567 = vld [vmem:[%s1 + $0x1050] sm:$0xff]
  %v568 = vld [vmem:[%s1 + $0x1058] sm:$0xff]
  %v569 = vld [vmem:[%s1 + $0x1060] sm:$0xff]
  %v570 = vld [vmem:[%s1 + $0x1068] sm:$0xff]
  %v571 = vld [vmem:[%s1 + $0x1070] sm:$0xff]
  %v572 = vld [vmem:[%s1 + $0x1078] sm:$0xff]
  %v573 = vld [vmem:[%s1 + $0x1080] sm:$0xff]
  %v574 = vld [vmem:[%s1 + $0x1088] sm:$0xff]
  %v575 = vld [vmem:[%s1 + $0x1090] sm:$0xff]
  %v576 = vld [vmem:[%s1 + $0x1098] sm:$0xff]
  %v577 = vld [vmem:[%s1 + $0x10a0] sm:$0xff]
  %v578 = vld [vmem:[%s1 + $0x10a8] sm:$0xff]
  %v579 = vld [vmem:[%s1 + $0x10b0] sm:$0xff]
  %v580 = vld [vmem:[%s1 + $0x10b8] sm:$0xff]
  %v581 = vld [vmem:[%s1 + $0x10c0] sm:$0xff]
  %v582 = vld [vmem:[%s1 + $0x10c8] sm:$0xff]
  %v583 = vld [vmem:[%s1 + $0x10d0] sm:$0xff]
  %v584 = vld [vmem:[%s1 + $0x10d8] sm:$0xff]
  %v585 = vld [vmem:[%s1 + $0x10e0] sm:$0xff]
  %v586 = vld [vmem:[%s1 + $0x10e8] sm:$0xff]
  %v587 = vld [vmem:[%s1 + $0x10f0] sm:$0xff]
  %v588 = vld [vmem:[%s1 + $0x10f8] sm:$0xff]
  %v589 = vld [vmem:[%s1 + $0x1100] sm:$0xff]
  %v590 = vld [vmem:[%s1 + $0x1108] sm:$0xff]
  %v591 = vld [vmem:[%s1 + $0x1110] sm:$0xff]
  %v592 = vld [vmem:[%s1 + $0x1118] sm:$0xff]
  %v593 = vld [vmem:[%s1 + $0x1120] sm:$0xff]
  %v594 = vld [vmem:[%s1 + $0x1128] sm:$0xff]
  %v595 = vld [vmem:[%s1 + $0x1130] sm:$0xff]
  %v596 = vld [vmem:[%s1 + $0x1138] sm:$0xff]
  %v597 = vld [vmem:[%s1 + $0x1140] sm:$0xff]
  %v598 = vld [vmem:[%s1 + $0x1148] sm:$0xff]
  %v599 = vld [vmem:[%s1 + $0x1150] sm:$0xff]
  %v600 = vld [vmem:[%s1 + $0x1158] sm:$0xff]
  %v601 = vld [vmem:[%s1 + $0x1160] sm:$0xff]
  %v602 = vld [vmem:[%s1 + $0x1168] sm:$0xff]
  %v603 = vld [vmem:[%s1 + $0x1170] sm:$0xff]
  %v604 = vld [vmem:[%s1 + $0x1178] sm:$0xff]
  %v605 = vld [vmem:[%s1 + $0x1180] sm:$0xff]
  %v606 = vld [vmem:[%s1 + $0x1188] sm:$0xff]
  %v607 = vld [vmem:[%s1 + $0x1190] sm:$0xff]
  %v608 = vld [vmem:[%s1 + $0x1198] sm:$0xff]
  %v609 = vld [vmem:[%s1 + $0x11a0] sm:$0xff]
  %v610 = vld [vmem:[%s1 + $0x11a8] sm:$0xff]
  %v611 = vld [vmem:[%s1 + $0x11b0] sm:$0xff]
  %v612 = vld [vmem:[%s1 + $0x11b8] sm:$0xff]
  %v613 = vld [vmem:[%s1 + $0x11c0] sm:$0xff]
  %v614 = vld [vmem:[%s1 + $0x11c8] sm:$0xff]
  %v615 = vld [vmem:[%s1 + $0x11d0] sm:$0xff]
  %v616 = vld [vmem:[%s1 + $0x11d8] sm:$0xff]
  %v617 = vld [vmem:[%s1 + $0x11e0] sm:$0xff]
  %v618 = vld [vmem:[%s1 + $0x11e8] sm:$0xff]
  %v619 = vld [vmem:[%s1 + $0x11f0] sm:$0xff]
  %v620 = vld [vmem:[%s1 + $0x11f8] sm:$0xff]
  %v621 = vld [vmem:[%s1 + $0x1200] sm:$0xff]
  %v622 = vld [vmem:[%s1 + $0x1208] sm:$0xff]
  %v623 = vld [vmem:[%s1 + $0x1210] sm:$0xff]
  %v624 = vld [vmem:[%s1 + $0x1218] sm:$0xff]
  %v625 = vld [vmem:[%s1 + $0x1220] sm:$0xff]
  %v626 = vld [vmem:[%s1 + $0x1228] sm:$0xff]
  %v627 = vld [vmem:[%s1 + $0x1230] sm:$0xff]
  %v628 = vld [vmem:[%s1 + $0x1238] sm:$0xff]
  %v629 = vld [vmem:[%s1 + $0x1240] sm:$0xff]
  %v630 = vld [vmem:[%s1 + $0x1248] sm:$0xff]
  %v631 = vld [vmem:[%s1 + $0x1250] sm:$0xff]
  %v632 = vld [vmem:[%s1 + $0x1258] sm:$0xff]
  %v633 = vld [vmem:[%s1 + $0x1260] sm:$0xff]
  %v634 = vld [vmem:[%s1 + $0x1268] sm:$0xff]
  %v635 = vld [vmem:[%s1 + $0x1270] sm:$0xff]
  %v636 = vld [vmem:[%s1 + $0x1278] sm:$0xff]
  %v637 = vld [vmem:[%s1 + $0x1280] sm:$0xff]
  %v638 = vld [vmem:[%s1 + $0x1288] sm:$0xff]
  %v639 = vld [vmem:[%s1 + $0x1290] sm:$0xff]
  %v640 = vld [vmem:[%s1 + $0x1298] sm:$0xff]
  %v641 = vld [vmem:[%s1 + $0x12a0] sm:$0xff]
  %v642 = vld [vmem:[%s1 + $0x12a8] sm:$0xff]
  %v643 = vld [vmem:[%s1 + $0x12b0] sm:$0xff]
  %v644 = vld [vmem:[%s1 + $0x12b8] sm:$0xff]
  %v645 = vld [vmem:[%s1 + $0x12c0] sm:$0xff]
  %v646 = vld [vmem:[%s1 + $0x12c8] sm:$0xff]
  %v647 = vld [vmem:[%s1 + $0x12d0] sm:$0xff]
  %v648 = vld [vmem:[%s1 + $0x12d8] sm:$0xff]
  %v649 = vld [vmem:[%s1 + $0x12e0] sm:$0xff]
  %v650 = vld [vmem:[%s1 + $0x12e8] sm:$0xff]
  %v651 = vld [vmem:[%s1 + $0x12f0] sm:$0xff]
  %v652 = vld [vmem:[%s1 + $0x12f8] sm:$0xff]
  %v653 = vld [vmem:[%s1 + $0x1300] sm:$0xff]
  %v654 = vld [vmem:[%s1 + $0x1308] sm:$0xff]
  %v655 = vld [vmem:[%s1 + $0x1310] sm:$0xff]
  %v656 = vld [vmem:[%s1 + $0x1318] sm:$0xff]
  %v657 = vld [vmem:[%s1 + $0x1320] sm:$0xff]
  %v658 = vld [vmem:[%s1 + $0x1328] sm:$0xff]
  %v659 = vld [vmem:[%s1 + $0x1330] sm:$0xff]
  %v660 = vld [vmem:[%s1 + $0x1338] sm:$0xff]
  %v661 = vld [vmem:[%s1 + $0x1340] sm:$0xff]
  %v662 = vld [vmem:[%s1 + $0x1348] sm:$0xff]
  %v663 = vld [vmem:[%s1 + $0x1350] sm:$0xff]
  %v664 = vld [vmem:[%s1 + $0x1358] sm:$0xff]
  %v665 = vld [vmem:[%s1 + $0x1360] sm:$0xff]
  %v666 = vld [vmem:[%s1 + $0x1368] sm:$0xff]
  %v667 = vld [vmem:[%s1 + $0x1370] sm:$0xff]
  %v668 = vld [vmem:[%s1 + $0x1378] sm:$0xff]
  %v669 = vld [vmem:[%s1 + $0x1380] sm:$0xff]
  %v670 = vld [vmem:[%s1 + $0x1388] sm:$0xff]
  %v671 = vld [vmem:[%s1 + $0x1390] sm:$0xff]
  %v672 = vld [vmem:[%s1 + $0x1398] sm:$0xff]
  %v673 = vld [vmem:[%s1 + $0x13a0] sm:$0xff]
  %v674 = vld [vmem:[%s1 + $0x13a8] sm:$0xff]
  %v675 = vld [vmem:[%s1 + $0x13b0] sm:$0xff]
  %v676 = vld [vmem:[%s1 + $0x13b8] sm:$0xff]
  %v677 = vld [vmem:[%s1 + $0x13c0] sm:$0xff]
  %v678 = vld [vmem:[%s1 + $0x13c8] sm:$0xff]
  %v679 = vld [vmem:[%s1 + $0x13d0] sm:$0xff]
  %v680 = vld [vmem:[%s1 + $0x13d8] sm:$0xff]
  %v681 = vld [vmem:[%s1 + $0x13e0] sm:$0xff]
  %v682 = vld [vmem:[%s1 + $0x13e8] sm:$0xff]
  %v683 = vld [vmem:[%s1 + $0x13f0] sm:$0xff]
  %v684 = vld [vmem:[%s1 + $0x13f8] sm:$0xff]
  %v685 = vld [vmem:[%s1 + $0x1400] sm:$0xff]
  %v686 = vld [vmem:[%s1 + $0x1408] sm:$0xff]
  %v687 = vld [vmem:[%s1 + $0x1410] sm:$0xff]
  %v688 = vld [vmem:[%s1 + $0x1418] sm:$0xff]
  %v689 = vld [vmem:[%s1 + $0x1420] sm:$0xff]
  %v690 = vld [vmem:[%s1 + $0x1428] sm:$0xff]
  %v691 = vld [vmem:[%s1 + $0x1430] sm:$0xff]
  %v692 = vld [vmem:[%s1 + $0x1438] sm:$0xff]
  %v693 = vld [vmem:[%s1 + $0x1440] sm:$0xff]
  %v694 = vld [vmem:[%s1 + $0x1448] sm:$0xff]
  %v695 = vld [vmem:[%s1 + $0x1450] sm:$0xff]
  %v696 = vld [vmem:[%s1 + $0x1458] sm:$0xff]
  %v697 = vld [vmem:[%s1 + $0x1460] sm:$0xff]
  %v698 = vld [vmem:[%s1 + $0x1468] sm:$0xff]
  %v699 = vld [vmem:[%s1 + $0x1470] sm:$0xff]
  %v700 = vld [vmem:[%s1 + $0x1478] sm:$0xff]
  %v701 = vld [vmem:[%s1 + $0x1480] sm:$0xff]
  %v702 = vld [vmem:[%s1 + $0x1488] sm:$0xff]
  %v703 = vld [vmem:[%s1 + $0x1490] sm:$0xff]
  %v704 = vld [vmem:[%s1 + $0x1498] sm:$0xff]
  %v705 = vld [vmem:[%s1 + $0x14a0] sm:$0xff]
  %v706 = vld [vmem:[%s1 + $0x14a8] sm:$0xff]
  %v707 = vld [vmem:[%s1 + $0x14b0] sm:$0xff]
  %v708 = vld [vmem:[%s1 + $0x14b8] sm:$0xff]
  %v709 = vld [vmem:[%s1 + $0x14c0] sm:$0xff]
  %v710 = vld [vmem:[%s1 + $0x14c8] sm:$0xff]
  %v711 = vld [vmem:[%s1 + $0x14d0] sm:$0xff]
  %v712 = vld [vmem:[%s1 + $0x14d8] sm:$0xff]
  %v713 = vld [vmem:[%s1 + $0x14e0] sm:$0xff]
  %v714 = vld [vmem:[%s1 + $0x14e8] sm:$0xff]
  %v715 = vld [vmem:[%s1 + $0x14f0] sm:$0xff]
  %v716 = vld [vmem:[%s1 + $0x14f8] sm:$0xff]
  %v717 = vld [vmem:[%s1 + $0x1500] sm:$0xff]
  %v718 = vld [vmem:[%s1 + $0x1508] sm:$0xff]
  %v719 = vld [vmem:[%s1 + $0x1510] sm:$0xff]
  %v720 = vld [vmem:[%s1 + $0x1518] sm:$0xff]
  %v721 = vld [vmem:[%s1 + $0x1520] sm:$0xff]
  %v722 = vld [vmem:[%s1 + $0x1528] sm:$0xff]
  %v723 = vld [vmem:[%s1 + $0x1530] sm:$0xff]
  %v724 = vld [vmem:[%s1 + $0x1538] sm:$0xff]
  %v725 = vld [vmem:[%s1 + $0x1540] sm:$0xff]
  %v726 = vld [vmem:[%s1 + $0x1548] sm:$0xff]
  %v727 = vld [vmem:[%s1 + $0x1550] sm:$0xff]
  %v728 = vld [vmem:[%s1 + $0x1558] sm:$0xff]
  %v729 = vld [vmem:[%s1 + $0x1560] sm:$0xff]
  %v730 = vld [vmem:[%s1 + $0x1568] sm:$0xff]
  %v731 = vld [vmem:[%s1 + $0x1570] sm:$0xff]
  %v732 = vld [vmem:[%s1 + $0x1578] sm:$0xff]
  %v733 = vld [vmem:[%s1 + $0x1580] sm:$0xff]
  %v734 = vld [vmem:[%s1 + $0x1588] sm:$0xff]
  %v735 = vld [vmem:[%s1 + $0x1590] sm:$0xff]
  %v736 = vld [vmem:[%s1 + $0x1598] sm:$0xff]
  %v737 = vld [vmem:[%s1 + $0x15a0] sm:$0xff]
  %v738 = vld [vmem:[%s1 + $0x15a8] sm:$0xff]
  %v739 = vld [vmem:[%s1 + $0x15b0] sm:$0xff]
  %v740 = vld [vmem:[%s1 + $0x15b8] sm:$0xff]
  %v741 = vld [vmem:[%s1 + $0x15c0] sm:$0xff]
  %v742 = vld [vmem:[%s1 + $0x15c8] sm:$0xff]
  %v743 = vld [vmem:[%s1 + $0x15d0] sm:$0xff]
  %v744 = vld [vmem:[%s1 + $0x15d8] sm:$0xff]
  %v745 = vld [vmem:[%s1 + $0x15e0] sm:$0xff]
  %v746 = vld [vmem:[%s1 + $0x15e8] sm:$0xff]
  %v747 = vld [vmem:[%s1 + $0x15f0] sm:$0xff]
  %v748 = vld [vmem:[%s1 + $0x15f8] sm:$0xff]
  %v749 = vld [vmem:[%s1 + $0x1600] sm:$0xff]
  %v750 = vld [vmem:[%s1 + $0x1608] sm:$0xff]
  %v751 = vld [vmem:[%s1 + $0x1610] sm:$0xff]
  %v752 = vld [vmem:[%s1 + $0x1618] sm:$0xff]
  %v753 = vld [vmem:[%s1 + $0x1620] sm:$0xff]
  %v754 = vld [vmem:[%s1 + $0x1628] sm:$0xff]
  %v755 = vld [vmem:[%s1 + $0x1630] sm:$0xff]
  %v756 = vld [vmem:[%s1 + $0x1638] sm:$0xff]
  %v757 = vld [vmem:[%s1 + $0x1640] sm:$0xff]
  %v758 = vld [vmem:[%s1 + $0x1648] sm:$0xff]
  %v759 = vld [vmem:[%s1 + $0x1650] sm:$0xff]
  %v760 = vld [vmem:[%s1 + $0x1658] sm:$0xff]
  %v761 = vld [vmem:[%s1 + $0x1660] sm:$0xff]
  %v762 = vld [vmem:[%s1 + $0x1668] sm:$0xff]
  %v763 = vld [vmem:[%s1 + $0x1670] sm:$0xff]
  %v764 = vld [vmem:[%s1 + $0x1678] sm:$0xff]
  %v765 = vld [vmem:[%s1 + $0x1680] sm:$0xff]
  %v766 = vld [vmem:[%s1 + $0x1688] sm:$0xff]
  %v767 = vld [vmem:[%s1 + $0x1690] sm:$0xff]
  %v768 = vld [vmem:[%s1 + $0x1698] sm:$0xff]
  %v769 = vld [vmem:[%s1 + $0x16a0] sm:$0xff]
  %v770 = vld [vmem:[%s1 + $0x16a8] sm:$0xff]
  %v771 = vld [vmem:[%s1 + $0x16b0] sm:$0xff]
  %v772 = vld [vmem:[%s1 + $0x16b8] sm:$0xff]
  %v773 = vld [vmem:[%s1 + $0x16c0] sm:$0xff]
  %v774 = vld [vmem:[%s1 + $0x16c8] sm:$0xff]
  %v775 = vld [vmem:[%s1 + $0x16d0] sm:$0xff]
  %v776 = vld [vmem:[%s1 + $0x16d8] sm:$0xff]
  %v777 = vld [vmem:[%s1 + $0x16e0] sm:$0xff]
  %v778 = vld [vmem:[%s1 + $0x16e8] sm:$0xff]
  %v779 = vld [vmem:[%s1 + $0x16f0] sm:$0xff]
  %v780 = vld [vmem:[%s1 + $0x16f8] sm:$0xff]
  %v781 = vld [vmem:[%s1 + $0x1700] sm:$0xff]
  %v782 = vld [vmem:[%s1 + $0x1708] sm:$0xff]
  %v783 = vld [vmem:[%s1 + $0x1710] sm:$0xff]
  %v784 = vld [vmem:[%s1 + $0x1718] sm:$0xff]
  %v785 = vld [vmem:[%s1 + $0x1720] sm:$0xff]
  %v786 = vld [vmem:[%s1 + $0x1728] sm:$0xff]
  %v787 = vld [vmem:[%s1 + $0x1730] sm:$0xff]
  %v788 = vld [vmem:[%s1 + $0x1738] sm:$0xff]
  %v789 = vld [vmem:[%s1 + $0x1740] sm:$0xff]
  %v790 = vld [vmem:[%s1 + $0x1748] sm:$0xff]
  %v791 = vld [vmem:[%s1 + $0x1750] sm:$0xff]
  %v792 = vld [vmem:[%s1 + $0x1758] sm:$0xff]
  %v793 = vld [vmem:[%s1 + $0x1760] sm:$0xff]
  %v794 = vld [vmem:[%s1 + $0x1768] sm:$0xff]
  %v795 = vld [vmem:[%s1 + $0x1770] sm:$0xff]
  %v796 = vld [vmem:[%s1 + $0x1778] sm:$0xff]
  %v797 = vld [vmem:[%s1 + $0x1780] sm:$0xff]
  %v798 = vld [vmem:[%s1 + $0x1788] sm:$0xff]
  %v799 = vld [vmem:[%s1 + $0x1790] sm:$0xff]
  %v800 = vld [vmem:[%s1 + $0x1798] sm:$0xff]
  %v801 = vld [vmem:[%s1 + $0x17a0] sm:$0xff]
  %v802 = vld [vmem:[%s1 + $0x17a8] sm:$0xff]
  %v803 = vld [vmem:[%s1 + $0x17b0] sm:$0xff]
  %v804 = vld [vmem:[%s1 + $0x17b8] sm:$0xff]
  %v805 = vld [vmem:[%s1 + $0x17c0] sm:$0xff]
  %v806 = vld [vmem:[%s1 + $0x17c8] sm:$0xff]
  %v807 = vld [vmem:[%s1 + $0x17d0] sm:$0xff]
  %v808 = vld [vmem:[%s1 + $0x17d8] sm:$0xff]
  %v809 = vld [vmem:[%s1 + $0x17e0] sm:$0xff]
  %v810 = vld [vmem:[%s1 + $0x17e8] sm:$0xff]
  %v811 = vld [vmem:[%s1 + $0x17f0] sm:$0xff]
  %v812 = vld [vmem:[%s1 + $0x17f8] sm:$0xff]
  %v813 = vld [vmem:[%s1 + $0x1800] sm:$0xff]
  %v814 = vld [vmem:[%s1 + $0x1808] sm:$0xff]
  %v815 = vld [vmem:[%s1 + $0x1810] sm:$0xff]
  %v816 = vld [vmem:[%s1 + $0x1818] sm:$0xff]
  %v817 = vld [vmem:[%s1 + $0x1820] sm:$0xff]
  %v818 = vld [vmem:[%s1 + $0x1828] sm:$0xff]
  %v819 = vld [vmem:[%s1 + $0x1830] sm:$0xff]
  %v820 = vld [vmem:[%s1 + $0x1838] sm:$0xff]
  %v821 = vld [vmem:[%s1 + $0x1840] sm:$0xff]
  %v822 = vld [vmem:[%s1 + $0x1848] sm:$0xff]
  %v823 = vld [vmem:[%s1 + $0x1850] sm:$0xff]
  %v824 = vld [vmem:[%s1 + $0x1858] sm:$0xff]
  %v825 = vld [vmem:[%s1 + $0x1860] sm:$0xff]
  %v826 = vld [vmem:[%s1 + $0x1868] sm:$0xff]
  %v827 = vld [vmem:[%s1 + $0x1870] sm:$0xff]
  %v828 = vld [vmem:[%s1 + $0x1878] sm:$0xff]
  %v829 = vld [vmem:[%s1 + $0x1880] sm:$0xff]
  %v830 = vld [vmem:[%s1 + $0x1888] sm:$0xff]
  %v831 = vld [vmem:[%s1 + $0x1890] sm:$0xff]
  %v832 = vld [vmem:[%s1 + $0x1898] sm:$0xff]
  %v833 = vld [vmem:[%s1 + $0x18a0] sm:$0xff]
  %v834 = vld [vmem:[%s1 + $0x18a8] sm:$0xff]
  %v835 = vld [vmem:[%s1 + $0x18b0] sm:$0xff]
  %v836 = vld [vmem:[%s1 + $0x18b8] sm:$0xff]
  %v837 = vld [vmem:[%s1 + $0x18c0] sm:$0xff]
  %v838 = vld [vmem:[%s1 + $0x18c8] sm:$0xff]
  %v839 = vld [vmem:[%s1 + $0x18d0] sm:$0xff]
  %v840 = vld [vmem:[%s1 + $0x18d8] sm:$0xff]
  %v841 = vld [vmem:[%s1 + $0x18e0] sm:$0xff]
  %v842 = vld [vmem:[%s1 + $0x18e8] sm:$0xff]
  %v843 = vld [vmem:[%s1 + $0x18f0] sm:$0xff]
  %v844 = vld [vmem:[%s1 + $0x18f8] sm:$0xff]
  %v845 = vld [vmem:[%s1 + $0x1900] sm:$0xff]
  %v846 = vld [vmem:[%s1 + $0x1908] sm:$0xff]
  %v847 = vld [vmem:[%s1 + $0x1910] sm:$0xff]
  %v848 = vld [vmem:[%s1 + $0x1918] sm:$0xff]
  %v849 = vld [vmem:[%s1 + $0x1920] sm:$0xff]
  %v850 = vld [vmem:[%s1 + $0x1928] sm:$0xff]
  %v851 = vld [vmem:[%s1 + $0x1930] sm:$0xff]
  %v852 = vld [vmem:[%s1 + $0x1938] sm:$0xff]
  %v853 = vld [vmem:[%s1 + $0x1940] sm:$0xff]
  %v854 = vld [vmem:[%s1 + $0x1948] sm:$0xff]
  %v855 = vld [vmem:[%s1 + $0x1950] sm:$0xff]
  %v856 = vld [vmem:[%s1 + $0x1958] sm:$0xff]
  %v857 = vld [vmem:[%s1 + $0x1960] sm:$0xff]
  %v858 = vld [vmem:[%s1 + $0x1968] sm:$0xff]
  %v859 = vld [vmem:[%s1 + $0x1970] sm:$0xff]
  %v860 = vld [vmem:[%s1 + $0x1978] sm:$0xff]
  %v861 = vld [vmem:[%s1 + $0x1980] sm:$0xff]
  %v862 = vld [vmem:[%s1 + $0x1988] sm:$0xff]
  %v863 = vld [vmem:[%s1 + $0x1990] sm:$0xff]
  %v864 = vld [vmem:[%s1 + $0x1998] sm:$0xff]
  %v865 = vld [vmem:[%s1 + $0x19a0] sm:$0xff]
  %v866 = vld [vmem:[%s1 + $0x19a8] sm:$0xff]
  %v867 = vld [vmem:[%s1 + $0x19b0] sm:$0xff]
  %v868 = vld [vmem:[%s1 + $0x19b8] sm:$0xff]
  %v869 = vld [vmem:[%s1 + $0x19c0] sm:$0xff]
  %v870 = vld [vmem:[%s1 + $0x19c8] sm:$0xff]
  %v871 = vld [vmem:[%s1 + $0x19d0] sm:$0xff]
  %v872 = vld [vmem:[%s1 + $0x19d8] sm:$0xff]
  %v873 = vld [vmem:[%s1 + $0x19e0] sm:$0xff]
  %v874 = vld [vmem:[%s1 + $0x19e8] sm:$0xff]
  %v875 = vld [vmem:[%s1 + $0x19f0] sm:$0xff]
  %v876 = vld [vmem:[%s1 + $0x19f8] sm:$0xff]
  %v877 = vld [vmem:[%s1 + $0x1a00] sm:$0xff]
  %v878 = vld [vmem:[%s1 + $0x1a08] sm:$0xff]
  %v879 = vld [vmem:[%s1 + $0x1a10] sm:$0xff]
  %v880 = vld [vmem:[%s1 + $0x1a18] sm:$0xff]
  %v881 = vld [vmem:[%s1 + $0x1a20] sm:$0xff]
  %v882 = vld [vmem:[%s1 + $0x1a28] sm:$0xff]
  %v883 = vld [vmem:[%s1 + $0x1a30] sm:$0xff]
  %v884 = vld [vmem:[%s1 + $0x1a38] sm:$0xff]
  %v885 = vld [vmem:[%s1 + $0x1a40] sm:$0xff]
  %v886 = vld [vmem:[%s1 + $0x1a48] sm:$0xff]
  %v887 = vld [vmem:[%s1 + $0x1a50] sm:$0xff]
  %v888 = vld [vmem:[%s1 + $0x1a58] sm:$0xff]
  %v889 = vld [vmem:[%s1 + $0x1a60] sm:$0xff]
  %v890 = vld [vmem:[%s1 + $0x1a68] sm:$0xff]
  %v891 = vld [vmem:[%s1 + $0x1a70] sm:$0xff]
  %v892 = vld [vmem:[%s1 + $0x1a78] sm:$0xff]
  %v893 = vld [vmem:[%s1 + $0x1a80] sm:$0xff]
  %v894 = vld [vmem:[%s1 + $0x1a88] sm:$0xff]
  %v895 = vld [vmem:[%s1 + $0x1a90] sm:$0xff]
  %v896 = vld [vmem:[%s1 + $0x1a98] sm:$0xff]
  %v897 = vld [vmem:[%s1 + $0x1aa0] sm:$0xff]
  %v898 = vld [vmem:[%s1 + $0x1aa8] sm:$0xff]
  %v899 = vld [vmem:[%s1 + $0x1ab0] sm:$0xff]
  %v900 = vld [vmem:[%s1 + $0x1ab8] sm:$0xff]
  %v901 = vld [vmem:[%s1 + $0x1ac0] sm:$0xff]
  %v902 = vld [vmem:[%s1 + $0x1ac8] sm:$0xff]
  %v903 = vld [vmem:[%s1 + $0x1ad0] sm:$0xff]
  %v904 = vld [vmem:[%s1 + $0x1ad8] sm:$0xff]
  %v905 = vld [vmem:[%s1 + $0x1ae0] sm:$0xff]
  %v906 = vld [vmem:[%s1 + $0x1ae8] sm:$0xff]
  %v907 = vld [vmem:[%s1 + $0x1af0] sm:$0xff]
  %v908 = vld [vmem:[%s1 + $0x1af8] sm:$0xff]
  %v909 = vld [vmem:[%s1 + $0x1b00] sm:$0xff]
  %v910 = vld [vmem:[%s1 + $0x1b08] sm:$0xff]
  %v911 = vld [vmem:[%s1 + $0x1b10] sm:$0xff]
  %v912 = vld [vmem:[%s1 + $0x1b18] sm:$0xff]
  %v913 = vld [vmem:[%s1 + $0x1b20] sm:$0xff]
  %v914 = vld [vmem:[%s1 + $0x1b28] sm:$0xff]
  %v915 = vld [vmem:[%s1 + $0x1b30] sm:$0xff]
  %v916 = vld [vmem:[%s1 + $0x1b38] sm:$0xff]
  %v917 = vld [vmem:[%s1 + $0x1b40] sm:$0xff]
  %v918 = vld [vmem:[%s1 + $0x1b48] sm:$0xff]
  %v919 = vld [vmem:[%s1 + $0x1b50] sm:$0xff]
  %v920 = vld [vmem:[%s1 + $0x1b58] sm:$0xff]
  %v921 = vld [vmem:[%s1 + $0x1b60] sm:$0xff]
  %v922 = vld [vmem:[%s1 + $0x1b68] sm:$0xff]
  %v923 = vld [vmem:[%s1 + $0x1b70] sm:$0xff]
  %v924 = vld [vmem:[%s1 + $0x1b78] sm:$0xff]
  %v925 = vld [vmem:[%s1 + $0x1b80] sm:$0xff]
  %v926 = vld [vmem:[%s1 + $0x1b88] sm:$0xff]
  %v927 = vld [vmem:[%s1 + $0x1b90] sm:$0xff]
  %v928 = vld [vmem:[%s1 + $0x1b98] sm:$0xff]
  %v929 = vld [vmem:[%s1 + $0x1ba0] sm:$0xff]
  %v930 = vld [vmem:[%s1 + $0x1ba8] sm:$0xff]
  %v931 = vld [vmem:[%s1 + $0x1bb0] sm:$0xff]
  %v932 = vld [vmem:[%s1 + $0x1bb8] sm:$0xff]
  %v933 = vld [vmem:[%s1 + $0x1bc0] sm:$0xff]
  %v934 = vld [vmem:[%s1 + $0x1bc8] sm:$0xff]
  %v935 = vld [vmem:[%s1 + $0x1bd0] sm:$0xff]
  %v936 = vld [vmem:[%s1 + $0x1bd8] sm:$0xff]
  %v937 = vld [vmem:[%s1 + $0x1be0] sm:$0xff]
  %v938 = vld [vmem:[%s1 + $0x1be8] sm:$0xff]
  %v939 = vld [vmem:[%s1 + $0x1bf0] sm:$0xff]
  %v940 = vld [vmem:[%s1 + $0x1bf8] sm:$0xff]
  %v941 = vld [vmem:[%s1 + $0x1c00] sm:$0xff]
  %v942 = vld [vmem:[%s1 + $0x1c08] sm:$0xff]
  %v943 = vld [vmem:[%s1 + $0x1c10] sm:$0xff]
  %v944 = vld [vmem:[%s1 + $0x1c18] sm:$0xff]
  %v945 = vld [vmem:[%s1 + $0x1c20] sm:$0xff]
  %v946 = vld [vmem:[%s1 + $0x1c28] sm:$0xff]
  %v947 = vld [vmem:[%s1 + $0x1c30] sm:$0xff]
  %v948 = vld [vmem:[%s1 + $0x1c38] sm:$0xff]
  %v949 = vld [vmem:[%s1 + $0x1c40] sm:$0xff]
  %v950 = vld [vmem:[%s1 + $0x1c48] sm:$0xff]
  %v951 = vld [vmem:[%s1 + $0x1c50] sm:$0xff]
  %v952 = vld [vmem:[%s1 + $0x1c58] sm:$0xff]
  %v953 = vld [vmem:[%s1 + $0x1c60] sm:$0xff]
  %v954 = vld [vmem:[%s1 + $0x1c68] sm:$0xff]
  %v955 = vld [vmem:[%s1 + $0x1c70] sm:$0xff]
  %v956 = vld [vmem:[%s1 + $0x1c78] sm:$0xff]
  %v957 = vld [vmem:[%s1 + $0x1c80] sm:$0xff]
  %v958 = vld [vmem:[%s1 + $0x1c88] sm:$0xff]
  %v959 = vld [vmem:[%s1 + $0x1c90] sm:$0xff]
  %v960 = vld [vmem:[%s1 + $0x1c98] sm:$0xff]
  %v961 = vld [vmem:[%s1 + $0x1ca0] sm:$0xff]
  %v962 = vld [vmem:[%s1 + $0x1ca8] sm:$0xff]
  %v963 = vld [vmem:[%s1 + $0x1cb0] sm:$0xff]
  %v964 = vld [vmem:[%s1 + $0x1cb8] sm:$0xff]
  %v965 = vld [vmem:[%s1 + $0x1cc0] sm:$0xff]
  %v966 = vld [vmem:[%s1 + $0x1cc8] sm:$0xff]
  %v967 = vld [vmem:[%s1 + $0x1cd0] sm:$0xff]
  %v968 = vld [vmem:[%s1 + $0x1cd8] sm:$0xff]
  %v969 = vld [vmem:[%s1 + $0x1ce0] sm:$0xff]
  %v970 = vld [vmem:[%s1 + $0x1ce8] sm:$0xff]
  %v971 = vld [vmem:[%s1 + $0x1cf0] sm:$0xff]
  %v972 = vld [vmem:[%s1 + $0x1cf8] sm:$0xff]
  %v973 = vld [vmem:[%s1 + $0x1d00] sm:$0xff]
  %v974 = vld [vmem:[%s1 + $0x1d08] sm:$0xff]
  %v975 = vld [vmem:[%s1 + $0x1d10] sm:$0xff]
  %v976 = vld [vmem:[%s1 + $0x1d18] sm:$0xff]
  %v977 = vld [vmem:[%s1 + $0x1d20] sm:$0xff]
  %v978 = vld [vmem:[%s1 + $0x1d28] sm:$0xff]
  %v979 = vld [vmem:[%s1 + $0x1d30] sm:$0xff]
  %v980 = vld [vmem:[%s1 + $0x1d38] sm:$0xff]
  %v981 = vld [vmem:[%s1 + $0x1d40] sm:$0xff]
  %v982 = vld [vmem:[%s1 + $0x1d48] sm:$0xff]
  %v983 = vld [vmem:[%s1 + $0x1d50] sm:$0xff]
  %v984 = vld [vmem:[%s1 + $0x1d58] sm:$0xff]
  %v985 = vld [vmem:[%s1 + $0x1d60] sm:$0xff]
  %v986 = vld [vmem:[%s1 + $0x1d68] sm:$0xff]
  %v987 = vld [vmem:[%s1 + $0x1d70] sm:$0xff]
  %v988 = vld [vmem:[%s1 + $0x1d78] sm:$0xff]
  %v989 = vld [vmem:[%s1 + $0x1d80] sm:$0xff]
  %v990 = vld [vmem:[%s1 + $0x1d88] sm:$0xff]
  %v991 = vld [vmem:[%s1 + $0x1d90] sm:$0xff]
  %v992 = vld [vmem:[%s1 + $0x1d98] sm:$0xff]
  %v993 = vld [vmem:[%s1 + $0x1da0] sm:$0xff]
  %v994 = vld [vmem:[%s1 + $0x1da8] sm:$0xff]
  %v995 = vld [vmem:[%s1 + $0x1db0] sm:$0xff]
  %v996 = vld [vmem:[%s1 + $0x1db8] sm:$0xff]
  %v997 = vld [vmem:[%s1 + $0x1dc0] sm:$0xff]
  %v998 = vld [vmem:[%s1 + $0x1dc8] sm:$0xff]
  %v999 = vld [vmem:[%s1 + $0x1dd0] sm:$0xff]
  %v1000 = vld [vmem:[%s1 + $0x1dd8] sm:$0xff]
  %v1001 = vld [vmem:[%s1 + $0x1de0] sm:$0xff]
  %v1002 = vld [vmem:[%s1 + $0x1de8] sm:$0xff]
  %v1003 = vld [vmem:[%s1 + $0x1df0] sm:$0xff]
  %v1004 = vld [vmem:[%s1 + $0x1df8] sm:$0xff]
  %v1005 = vld [vmem:[%s1 + $0x1e00] sm:$0xff]
  %v1006 = vld [vmem:[%s1 + $0x1e08] sm:$0xff]
  %v1007 = vld [vmem:[%s1 + $0x1e10] sm:$0xff]
  %v1008 = vld [vmem:[%s1 + $0x1e18] sm:$0xff]
  %v1009 = vld [vmem:[%s1 + $0x1e20] sm:$0xff]
  %v1010 = vld [vmem:[%s1 + $0x1e28] sm:$0xff]
  %v1011 = vld [vmem:[%s1 + $0x1e30] sm:$0xff]
  %v1012 = vld [vmem:[%s1 + $0x1e38] sm:$0xff]
  %v1013 = vld [vmem:[%s1 + $0x1e40] sm:$0xff]
  %v1014 = vld [vmem:[%s1 + $0x1e48] sm:$0xff]
  %v1015 = vld [vmem:[%s1 + $0x1e50] sm:$0xff]
  %v1016 = vld [vmem:[%s1 + $0x1e58] sm:$0xff]
  %v1017 = vld [vmem:[%s1 + $0x1e60] sm:$0xff]
  %v1018 = vld [vmem:[%s1 + $0x1e68] sm:$0xff]
  %v1019 = vld [vmem:[%s1 + $0x1e70] sm:$0xff]
  %v1020 = vld [vmem:[%s1 + $0x1e78] sm:$0xff]
  %v1021 = vld [vmem:[%s1 + $0x1e80] sm:$0xff]
  %v1022 = vld [vmem:[%s1 + $0x1e88] sm:$0xff]
  %v1023 = vld [vmem:[%s1 + $0x1e90] sm:$0xff]
  %v1024 = vld [vmem:[%s1 + $0x1e98] sm:$0xff]
  %v1025 = vld [vmem:[%s1 + $0x1ea0] sm:$0xff]
  %v1026 = vld [vmem:[%s1 + $0x1ea8] sm:$0xff]
  %v1027 = vld [vmem:[%s1 + $0x1eb0] sm:$0xff]
  %v1028 = vld [vmem:[%s1 + $0x1eb8] sm:$0xff]
  %v1029 = vld [vmem:[%s1 + $0x1ec0] sm:$0xff]
  %v1030 = vld [vmem:[%s1 + $0x1ec8] sm:$0xff]
  %v1031 = vld [vmem:[%s1 + $0x1ed0] sm:$0xff]
  %v1032 = vld [vmem:[%s1 + $0x1ed8] sm:$0xff]
  %v1033 = vld [vmem:[%s1 + $0x1ee0] sm:$0xff]
  %v1034 = vld [vmem:[%s1 + $0x1ee8] sm:$0xff]
  %v1035 = vld [vmem:[%s1 + $0x1ef0] sm:$0xff]
  %v1036 = vld [vmem:[%s1 + $0x1ef8] sm:$0xff]
  %v1037 = vld [vmem:[%s1 + $0x1f00] sm:$0xff]
  %v1038 = vld [vmem:[%s1 + $0x1f08] sm:$0xff]
  %v1039 = vld [vmem:[%s1 + $0x1f10] sm:$0xff]
  %v1040 = vld [vmem:[%s1 + $0x1f18] sm:$0xff]
  %v1041 = vld [vmem:[%s1 + $0x1f20] sm:$0xff]
  %v1042 = vld [vmem:[%s1 + $0x1f28] sm:$0xff]
  %v1043 = vld [vmem:[%s1 + $0x1f30] sm:$0xff]
  %v1044 = vld [vmem:[%s1 + $0x1f38] sm:$0xff]
  %v1045 = vld [vmem:[%s1 + $0x1f40] sm:$0xff]
  %v1046 = vld [vmem:[%s1 + $0x1f48] sm:$0xff]
  %v1047 = vld [vmem:[%s1 + $0x1f50] sm:$0xff]
  %v1048 = vld [vmem:[%s1 + $0x1f58] sm:$0xff]
  %v1049 = vld [vmem:[%s1 + $0x1f60] sm:$0xff]
  %v1050 = vld [vmem:[%s1 + $0x1f68] sm:$0xff]
  %v1051 = vld [vmem:[%s1 + $0x1f70] sm:$0xff]
  %v1052 = vld [vmem:[%s1 + $0x1f78] sm:$0xff]
  %v1053 = vld [vmem:[%s1 + $0x1f80] sm:$0xff]
  %v1054 = vld [vmem:[%s1 + $0x1f88] sm:$0xff]
  %v1055 = vld [vmem:[%s1 + $0x1f90] sm:$0xff]
  %v1056 = vld [vmem:[%s1 + $0x1f98] sm:$0xff]
  %v1057 = vld [vmem:[%s1 + $0x1fa0] sm:$0xff]
  %v1058 = vld [vmem:[%s1 + $0x1fa8] sm:$0xff]
  %v1059 = vld [vmem:[%s1 + $0x1fb0] sm:$0xff]
  %v1060 = vld [vmem:[%s1 + $0x1fb8] sm:$0xff]
  %v1061 = vld [vmem:[%s1 + $0x1fc0] sm:$0xff]
  %v1062 = vld [vmem:[%s1 + $0x1fc8] sm:$0xff]
  %v1063 = vld [vmem:[%s1 + $0x1fd0] sm:$0xff]
  %v1064 = vld [vmem:[%s1 + $0x1fd8] sm:$0xff]
  %v1065 = vld [vmem:[%s1 + $0x1fe0] sm:$0xff]
  %v1066 = vld [vmem:[%s1 + $0x1fe8] sm:$0xff]
  %v1067 = vld [vmem:[%s1 + $0x1ff0] sm:$0xff]
  %v1068 = vld [vmem:[%s1 + $0x1ff8] sm:$0xff]
  %v1069 = vld [vmem:[%s1 + $0x2000] sm:$0xff]
  %v1070 = vld [vmem:[%s1 + $0x2008] sm:$0xff]
  %v1071 = vld [vmem:[%s1 + $0x2010] sm:$0xff]
  %v1072 = vld [vmem:[%s1 + $0x2018] sm:$0xff]
  %v1073 = vld [vmem:[%s1 + $0x2020] sm:$0xff]
  %v1074 = vld [vmem:[%s1 + $0x2028] sm:$0xff]
  %v1075 = vld [vmem:[%s1 + $0x2030] sm:$0xff]
  %v1076 = vld [vmem:[%s1 + $0x2038] sm:$0xff]
  %v1077 = vld [vmem:[%s1 + $0x2040] sm:$0xff]
  %v1078 = vld [vmem:[%s1 + $0x2048] sm:$0xff]
  %v1079 = vld [vmem:[%s1 + $0x2050] sm:$0xff]
  %v1080 = vld [vmem:[%s1 + $0x2058] sm:$0xff]
  %v1081 = vld [vmem:[%s1 + $0x2060] sm:$0xff]
  %v1082 = vld [vmem:[%s1 + $0x2068] sm:$0xff]
  %v1083 = vld [vmem:[%s1 + $0x2070] sm:$0xff]
  %v1084 = vld [vmem:[%s1 + $0x2078] sm:$0xff]
  %v1085 = vld [vmem:[%s1 + $0x2080] sm:$0xff]
  %v1086 = vld [vmem:[%s1 + $0x2088] sm:$0xff]
  %v1087 = vld [vmem:[%s1 + $0x2090] sm:$0xff]
  %v1088 = vld [vmem:[%s1 + $0x2098] sm:$0xff]
  %v1089 = vld [vmem:[%s1 + $0x20a0] sm:$0xff]
  %v1090 = vld [vmem:[%s1 + $0x20a8] sm:$0xff]
  %v1091 = vld [vmem:[%s1 + $0x20b0] sm:$0xff]
  %v1092 = vld [vmem:[%s1 + $0x20b8] sm:$0xff]
  %v1093 = vld [vmem:[%s1 + $0x20c0] sm:$0xff]
  %v1094 = vld [vmem:[%s1 + $0x20c8] sm:$0xff]
  %v1095 = vld [vmem:[%s1 + $0x20d0] sm:$0xff]
  %v1096 = vld [vmem:[%s1 + $0x20d8] sm:$0xff]
  %v1097 = vld [vmem:[%s1 + $0x20e0] sm:$0xff]
  %v1098 = vld [vmem:[%s1 + $0x20e8] sm:$0xff]
  %v1099 = vld [vmem:[%s1 + $0x20f0] sm:$0xff]
  %v1100 = vld [vmem:[%s1 + $0x20f8] sm:$0xff]
  %v1101 = vld [vmem:[%s1 + $0x2100] sm:$0xff]
  %v1102 = vld [vmem:[%s1 + $0x2108] sm:$0xff]
  %v1103 = vld [vmem:[%s1 + $0x2110] sm:$0xff]
  %v1104 = vld [vmem:[%s1 + $0x2118] sm:$0xff]
  %v1105 = vld [vmem:[%s1 + $0x2120] sm:$0xff]
  %v1106 = vld [vmem:[%s1 + $0x2128] sm:$0xff]
  %v1107 = vld [vmem:[%s1 + $0x2130] sm:$0xff]
  %v1108 = vld [vmem:[%s1 + $0x2138] sm:$0xff]
  %v1109 = vld [vmem:[%s1 + $0x2140] sm:$0xff]
  %v1110 = vld [vmem:[%s1 + $0x2148] sm:$0xff]
  %v1111 = vld [vmem:[%s1 + $0x2150] sm:$0xff]
  %v1112 = vld [vmem:[%s1 + $0x2158] sm:$0xff]
  %v1113 = vld [vmem:[%s1 + $0x2160] sm:$0xff]
  %v1114 = vld [vmem:[%s1 + $0x2168] sm:$0xff]
  %v1115 = vld [vmem:[%s1 + $0x2170] sm:$0xff]
  %v1116 = vld [vmem:[%s1 + $0x2178] sm:$0xff]
  %v1117 = vld [vmem:[%s1 + $0x2180] sm:$0xff]
  %v1118 = vld [vmem:[%s1 + $0x2188] sm:$0xff]
  %v1119 = vld [vmem:[%s1 + $0x2190] sm:$0xff]
  %v1120 = vld [vmem:[%s1 + $0x2198] sm:$0xff]
  %v1121 = vld [vmem:[%s1 + $0x21a0] sm:$0xff]
  %v1122 = vld [vmem:[%s1 + $0x21a8] sm:$0xff]
  %v1123 = vld [vmem:[%s1 + $0x21b0] sm:$0xff]
  %v1124 = vld [vmem:[%s1 + $0x21b8] sm:$0xff]
  %v1125 = vld [vmem:[%s1 + $0x21c0] sm:$0xff]
  %v1126 = vld [vmem:[%s1 + $0x21c8] sm:$0xff]
  %v1127 = vld [vmem:[%s1 + $0x21d0] sm:$0xff]
  %v1128 = vld [vmem:[%s1 + $0x21d8] sm:$0xff]
  %v1129 = vld [vmem:[%s1 + $0x21e0] sm:$0xff]
  %v1130 = vld [vmem:[%s1 + $0x21e8] sm:$0xff]
  %v1131 = vld [vmem:[%s1 + $0x21f0] sm:$0xff]
  %v1132 = vld [vmem:[%s1 + $0x21f8] sm:$0xff]
  %v1133 = vld [vmem:[%s1 + $0x2200] sm:$0xff]
  %v1134 = vld [vmem:[%s1 + $0x2208] sm:$0xff]
  %v1135 = vld [vmem:[%s1 + $0x2210] sm:$0xff]
  %v1136 = vld [vmem:[%s1 + $0x2218] sm:$0xff]
  %v1137 = vld [vmem:[%s1 + $0x2220] sm:$0xff]
  %v1138 = vld [vmem:[%s1 + $0x2228] sm:$0xff]
  %v1139 = vld [vmem:[%s1 + $0x2230] sm:$0xff]
  %v1140 = vld [vmem:[%s1 + $0x2238] sm:$0xff]
  %v1141 = vld [vmem:[%s1 + $0x2240] sm:$0xff]
  %v1142 = vld [vmem:[%s1 + $0x2248] sm:$0xff]
  %v1143 = vld [vmem:[%s1 + $0x2250] sm:$0xff]
  %v1144 = vld [vmem:[%s1 + $0x2258] sm:$0xff]
  %v1145 = vld [vmem:[%s1 + $0x2260] sm:$0xff]
  %v1146 = vld [vmem:[%s1 + $0x2268] sm:$0xff]
  %v1147 = vld [vmem:[%s1 + $0x2270] sm:$0xff]
  %v1148 = vld [vmem:[%s1 + $0x2278] sm:$0xff]
  %v1149 = vld [vmem:[%s1 + $0x2280] sm:$0xff]
  %v1150 = vld [vmem:[%s1 + $0x2288] sm:$0xff]
  %v1151 = vld [vmem:[%s1 + $0x2290] sm:$0xff]
  %v1152 = vld [vmem:[%s1 + $0x2298] sm:$0xff]
  %v1153 = vld [vmem:[%s1 + $0x22a0] sm:$0xff]
  %v1154 = vld [vmem:[%s1 + $0x22a8] sm:$0xff]
  %v1155 = vld [vmem:[%s1 + $0x22b0] sm:$0xff]
  %v1156 = vld [vmem:[%s1 + $0x22b8] sm:$0xff]
  %v1157 = vld [vmem:[%s1 + $0x22c0] sm:$0xff]
  %v1158 = vld [vmem:[%s1 + $0x22c8] sm:$0xff]
  %v1159 = vld [vmem:[%s1 + $0x22d0] sm:$0xff]
  %v1160 = vld [vmem:[%s1 + $0x22d8] sm:$0xff]
  %v1161 = vld [vmem:[%s1 + $0x22e0] sm:$0xff]
  %v1162 = vld [vmem:[%s1 + $0x22e8] sm:$0xff]
  %v1163 = vld [vmem:[%s1 + $0x22f0] sm:$0xff]
  %v1164 = vld [vmem:[%s1 + $0x22f8] sm:$0xff]
  %v1165 = vld [vmem:[%s1 + $0x2300] sm:$0xff]
  %v1166 = vld [vmem:[%s1 + $0x2308] sm:$0xff]
  %v1167 = vld [vmem:[%s1 + $0x2310] sm:$0xff]
  %v1168 = vld [vmem:[%s1 + $0x2318] sm:$0xff]
  %v1169 = vld [vmem:[%s1 + $0x2320] sm:$0xff]
  %v1170 = vld [vmem:[%s1 + $0x2328] sm:$0xff]
  %v1171 = vld [vmem:[%s1 + $0x2330] sm:$0xff]
  %v1172 = vld [vmem:[%s1 + $0x2338] sm:$0xff]
  %v1173 = vld [vmem:[%s1 + $0x2340] sm:$0xff]
  %v1174 = vld [vmem:[%s1 + $0x2348] sm:$0xff]
  %v1175 = vld [vmem:[%s1 + $0x2350] sm:$0xff]
  %v1176 = vld [vmem:[%s1 + $0x2358] sm:$0xff]
  %v1177 = vld [vmem:[%s1 + $0x2360] sm:$0xff]
  %v1178 = vld [vmem:[%s1 + $0x2368] sm:$0xff]
  %v1179 = vld [vmem:[%s1 + $0x2370] sm:$0xff]
  %v1180 = vld [vmem:[%s1 + $0x2378] sm:$0xff]
  %v1181 = vld [vmem:[%s1 + $0x2380] sm:$0xff]
  %v1182 = vld [vmem:[%s1 + $0x2388] sm:$0xff]
  %v1183 = vld [vmem:[%s1 + $0x2390] sm:$0xff]
  %v1184 = vld [vmem:[%s1 + $0x2398] sm:$0xff]
  %v1185 = vld [vmem:[%s1 + $0x23a0] sm:$0xff]
  %v1186 = vld [vmem:[%s1 + $0x23a8] sm:$0xff]
  %v1187 = vld [vmem:[%s1 + $0x23b0] sm:$0xff]
  %v1188 = vld [vmem:[%s1 + $0x23b8] sm:$0xff]
  %v1189 = vld [vmem:[%s1 + $0x23c0] sm:$0xff]
  %v1190 = vld [vmem:[%s1 + $0x23c8] sm:$0xff]
  %v1191 = vld [vmem:[%s1 + $0x23d0] sm:$0xff]
  %v1192 = vld [vmem:[%s1 + $0x23d8] sm:$0xff]
  %v1193 = vld [vmem:[%s1 + $0x23e0] sm:$0xff]
  %v1194 = vld [vmem:[%s1 + $0x23e8] sm:$0xff]
  %v1195 = vld [vmem:[%s1 + $0x23f0] sm:$0xff]
  %v1196 = vld [vmem:[%s1 + $0x23f8] sm:$0xff]
  %v1197 = vld [vmem:[%s1 + $0x2400] sm:$0xff]
  %v1198 = vld [vmem:[%s1 + $0x2408] sm:$0xff]
  %v1199 = vld [vmem:[%s1 + $0x2410] sm:$0xff]
  %v1200 = vld [vmem:[%s1 + $0x2418] sm:$0xff]
  %v1201 = vld [vmem:[%s1 + $0x2420] sm:$0xff]
  %v1202 = vld [vmem:[%s1 + $0x2428] sm:$0xff]
  %v1203 = vld [vmem:[%s1 + $0x2430] sm:$0xff]
  %v1204 = vld [vmem:[%s1 + $0x2438] sm:$0xff]
  %v1205 = vld [vmem:[%s1 + $0x2440] sm:$0xff]
  %v1206 = vld [vmem:[%s1 + $0x2448] sm:$0xff]
  %v1207 = vld [vmem:[%s1 + $0x2450] sm:$0xff]
  %v1208 = vld [vmem:[%s1 + $0x2458] sm:$0xff]
  %v1209 = vld [vmem:[%s1 + $0x2460] sm:$0xff]
  %v1210 = vld [vmem:[%s1 + $0x2468] sm:$0xff]
  %v1211 = vld [vmem:[%s1 + $0x2470] sm:$0xff]
  %v1212 = vld [vmem:[%s1 + $0x2478] sm:$0xff]
  %v1213 = vld [vmem:[%s1 + $0x2480] sm:$0xff]
  %v1214 = vld [vmem:[%s1 + $0x2488] sm:$0xff]
  %v1215 = vld [vmem:[%s1 + $0x2490] sm:$0xff]
  %v1216 = vld [vmem:[%s1 + $0x2498] sm:$0xff]
  %v1217 = vld [vmem:[%s1 + $0x24a0] sm:$0xff]
  %v1218 = vld [vmem:[%s1 + $0x24a8] sm:$0xff]
  %v1219 = vld [vmem:[%s1 + $0x24b0] sm:$0xff]
  %v1220 = vld [vmem:[%s1 + $0x24b8] sm:$0xff]
  %v1221 = vld [vmem:[%s1 + $0x24c0] sm:$0xff]
  %v1222 = vld [vmem:[%s1 + $0x24c8] sm:$0xff]
  %v1223 = vld [vmem:[%s1 + $0x24d0] sm:$0xff]
  %v1224 = vld [vmem:[%s1 + $0x24d8] sm:$0xff]
  %v1225 = vld [vmem:[%s1 + $0x24e0] sm:$0xff]
  %v1226 = vld [vmem:[%s1 + $0x24e8] sm:$0xff]
  %v1227 = vld [vmem:[%s1 + $0x24f0] sm:$0xff]
  %v1228 = vld [vmem:[%s1 + $0x24f8] sm:$0xff]
  %v1229 = vld [vmem:[%s1 + $0x2500] sm:$0xff]
  %v1230 = vld [vmem:[%s1 + $0x2508] sm:$0xff]
  %v1231 = vld [vmem:[%s1 + $0x2510] sm:$0xff]
  %v1232 = vld [vmem:[%s1 + $0x2518] sm:$0xff]
  %v1233 = vld [vmem:[%s1 + $0x2520] sm:$0xff]
  %v1234 = vld [vmem:[%s1 + $0x2528] sm:$0xff]
  %v1235 = vld [vmem:[%s1 + $0x2530] sm:$0xff]
  %v1236 = vld [vmem:[%s1 + $0x2538] sm:$0xff]
  %v1237 = vld [vmem:[%s1 + $0x2540] sm:$0xff]
  %v1238 = vld [vmem:[%s1 + $0x2548] sm:$0xff]
  %v1239 = vld [vmem:[%s1 + $0x2550] sm:$0xff]
  %v1240 = vld [vmem:[%s1 + $0x2558] sm:$0xff]
  %v1241 = vld [vmem:[%s1 + $0x2560] sm:$0xff]
  %v1242 = vld [vmem:[%s1 + $0x2568] sm:$0xff]
  %v1243 = vld [vmem:[%s1 + $0x2570] sm:$0xff]
  %v1244 = vld [vmem:[%s1 + $0x2578] sm:$0xff]
  %v1245 = vld [vmem:[%s1 + $0x2580] sm:$0xff]
  %v1246 = vld [vmem:[%s1 + $0x2588] sm:$0xff]
  %v1247 = vld [vmem:[%s1 + $0x2590] sm:$0xff]
  %v1248 = vld [vmem:[%s1 + $0x2598] sm:$0xff]
  %v1249 = vld [vmem:[%s1 + $0x25a0] sm:$0xff]
  %v1250 = vld [vmem:[%s1 + $0x25a8] sm:$0xff]
  %v1251 = vld [vmem:[%s1 + $0x25b0] sm:$0xff]
  %v1252 = vld [vmem:[%s1 + $0x25b8] sm:$0xff]
  %v1253 = vld [vmem:[%s1 + $0x25c0] sm:$0xff]
  %v1254 = vld [vmem:[%s1 + $0x25c8] sm:$0xff]
  %v1255 = vld [vmem:[%s1 + $0x25d0] sm:$0xff]
  %v1256 = vld [vmem:[%s1 + $0x25d8] sm:$0xff]
  %v1257 = vld [vmem:[%s1 + $0x25e0] sm:$0xff]
  %v1258 = vld [vmem:[%s1 + $0x25e8] sm:$0xff]
  %v1259 = vld [vmem:[%s1 + $0x25f0] sm:$0xff]
  %v1260 = vld [vmem:[%s1 + $0x25f8] sm:$0xff]
  %v1261 = vld [vmem:[%s1 + $0x2600] sm:$0xff]
  %v1262 = vld [vmem:[%s1 + $0x2608] sm:$0xff]
  %v1263 = vld [vmem:[%s1 + $0x2610] sm:$0xff]
  %v1264 = vld [vmem:[%s1 + $0x2618] sm:$0xff]
  %v1265 = vld [vmem:[%s1 + $0x2620] sm:$0xff]
  %v1266 = vld [vmem:[%s1 + $0x2628] sm:$0xff]
  %v1267 = vld [vmem:[%s1 + $0x2630] sm:$0xff]
  %v1268 = vld [vmem:[%s1 + $0x2638] sm:$0xff]
  %v1269 = vld [vmem:[%s1 + $0x2640] sm:$0xff]
  %v1270 = vld [vmem:[%s1 + $0x2648] sm:$0xff]
  %v1271 = vld [vmem:[%s1 + $0x2650] sm:$0xff]
  %v1272 = vld [vmem:[%s1 + $0x2658] sm:$0xff]
  %v1273 = vld [vmem:[%s1 + $0x2660] sm:$0xff]
  %v1274 = vld [vmem:[%s1 + $0x2668] sm:$0xff]
  %v1275 = vld [vmem:[%s1 + $0x2670] sm:$0xff]
  %v1276 = vld [vmem:[%s1 + $0x2678] sm:$0xff]
  %v1277 = vld [vmem:[%s1 + $0x2680] sm:$0xff]
  %v1278 = vld [vmem:[%s1 + $0x2688] sm:$0xff]
  %v1279 = vld [vmem:[%s1 + $0x2690] sm:$0xff]
  %v1280 = vld [vmem:[%s1 + $0x2698] sm:$0xff]
  %v1281 = vld [vmem:[%s1 + $0x26a0] sm:$0xff]
  %v1282 = vld [vmem:[%s1 + $0x26a8] sm:$0xff]
  %v1283 = vld [vmem:[%s1 + $0x26b0] sm:$0xff]
  %v1284 = vld [vmem:[%s1 + $0x26b8] sm:$0xff]
  %v1285 = vld [vmem:[%s1 + $0x26c0] sm:$0xff]
  %v1286 = vld [vmem:[%s1 + $0x26c8] sm:$0xff]
  %v1287 = vld [vmem:[%s1 + $0x26d0] sm:$0xff]
  %v1288 = vld [vmem:[%s1 + $0x26d8] sm:$0xff]
  %v1289 = vld [vmem:[%s1 + $0x26e0] sm:$0xff]
  %v1290 = vld [vmem:[%s1 + $0x26e8] sm:$0xff]
  %v1291 = vld [vmem:[%s1 + $0x26f0] sm:$0xff]
  %v1292 = vld [vmem:[%s1 + $0x26f8] sm:$0xff]
  %v1293 = vld [vmem:[%s1 + $0x2700] sm:$0xff]
  %v1294 = vld [vmem:[%s1 + $0x2708] sm:$0xff]
  %v1295 = vld [vmem:[%s1 + $0x2710] sm:$0xff]
  %v1296 = vld [vmem:[%s1 + $0x2718] sm:$0xff]
  %v1297 = vld [vmem:[%s1 + $0x2720] sm:$0xff]
  %v1298 = vld [vmem:[%s1 + $0x2728] sm:$0xff]
  %v1299 = vld [vmem:[%s1 + $0x2730] sm:$0xff]
  %v1300 = vld [vmem:[%s1 + $0x2738] sm:$0xff]
  %v1301 = vld [vmem:[%s1 + $0x2740] sm:$0xff]
  %v1302 = vld [vmem:[%s1 + $0x2748] sm:$0xff]
  %v1303 = vld [vmem:[%s1 + $0x2750] sm:$0xff]
  %v1304 = vld [vmem:[%s1 + $0x2758] sm:$0xff]
  %v1305 = vld [vmem:[%s1 + $0x2760] sm:$0xff]
  %v1306 = vld [vmem:[%s1 + $0x2768] sm:$0xff]
  %v1307 = vld [vmem:[%s1 + $0x2770] sm:$0xff]
  %v1308 = vld [vmem:[%s1 + $0x2778] sm:$0xff]
  %v1309 = vld [vmem:[%s1 + $0x2780] sm:$0xff]
  %v1310 = vld [vmem:[%s1 + $0x2788] sm:$0xff]
  %v1311 = vld [vmem:[%s1 + $0x2790] sm:$0xff]
  %v1312 = vld [vmem:[%s1 + $0x2798] sm:$0xff]
  %v1313 = vld [vmem:[%s1 + $0x27a0] sm:$0xff]
  %v1314 = vld [vmem:[%s1 + $0x27a8] sm:$0xff]
  %v1315 = vld [vmem:[%s1 + $0x27b0] sm:$0xff]
  %v1316 = vld [vmem:[%s1 + $0x27b8] sm:$0xff]
  %v1317 = vld [vmem:[%s1 + $0x27c0] sm:$0xff]
  %v1318 = vld [vmem:[%s1 + $0x27c8] sm:$0xff]
  %v1319 = vld [vmem:[%s1 + $0x27d0] sm:$0xff]
  %v1320 = vld [vmem:[%s1 + $0x27d8] sm:$0xff]
  %v1321 = vld [vmem:[%s1 + $0x27e0] sm:$0xff]
  %v1322 = vld [vmem:[%s1 + $0x27e8] sm:$0xff]
  %v1323 = vld [vmem:[%s1 + $0x27f0] sm:$0xff]
  %v1324 = vld [vmem:[%s1 + $0x27f8] sm:$0xff]
  %v1325 = vld [vmem:[%s1 + $0x2800] sm:$0xff]
  %v1326 = vld [vmem:[%s1 + $0x2808] sm:$0xff]
  %v1327 = vld [vmem:[%s1 + $0x2810] sm:$0xff]
  %v1328 = vld [vmem:[%s1 + $0x2818] sm:$0xff]
  %v1329 = vld [vmem:[%s1 + $0x2820] sm:$0xff]
  %v1330 = vld [vmem:[%s1 + $0x2828] sm:$0xff]
  %v1331 = vld [vmem:[%s1 + $0x2830] sm:$0xff]
  %v1332 = vld [vmem:[%s1 + $0x2838] sm:$0xff]
  %v1333 = vld [vmem:[%s1 + $0x2840] sm:$0xff]
  %v1334 = vld [vmem:[%s1 + $0x2848] sm:$0xff]
  %v1335 = vld [vmem:[%s1 + $0x2850] sm:$0xff]
  %v1336 = vld [vmem:[%s1 + $0x2858] sm:$0xff]
  %v1337 = vld [vmem:[%s1 + $0x2860] sm:$0xff]
  %v1338 = vld [vmem:[%s1 + $0x2868] sm:$0xff]
  %v1339 = vld [vmem:[%s1 + $0x2870] sm:$0xff]
  %v1340 = vld [vmem:[%s1 + $0x2878] sm:$0xff]
  %v1341 = vld [vmem:[%s1 + $0x2880] sm:$0xff]
  %v1342 = vld [vmem:[%s1 + $0x2888] sm:$0xff]
  %v1343 = vld [vmem:[%s1 + $0x2890] sm:$0xff]
  %v1344 = vld [vmem:[%s1 + $0x2898] sm:$0xff]
  %v1345 = vld [vmem:[%s1 + $0x28a0] sm:$0xff]
  %v1346 = vld [vmem:[%s1 + $0x28a8] sm:$0xff]
  %v1347 = vld [vmem:[%s1 + $0x28b0] sm:$0xff]
  %v1348 = vld [vmem:[%s1 + $0x28b8] sm:$0xff]
  %v1349 = vld [vmem:[%s1 + $0x28c0] sm:$0xff]
  %v1350 = vld [vmem:[%s1 + $0x28c8] sm:$0xff]
  %v1351 = vld [vmem:[%s1 + $0x28d0] sm:$0xff]
  %v1352 = vld [vmem:[%s1 + $0x28d8] sm:$0xff]
  %v1353 = vld [vmem:[%s1 + $0x28e0] sm:$0xff]
  %v1354 = vld [vmem:[%s1 + $0x28e8] sm:$0xff]
  %v1355 = vld [vmem:[%s1 + $0x28f0] sm:$0xff]
  %v1356 = vld [vmem:[%s1 + $0x28f8] sm:$0xff]
  %v1357 = vld [vmem:[%s1 + $0x2900] sm:$0xff]
  %v1358 = vld [vmem:[%s1 + $0x2908] sm:$0xff]
  %v1359 = vld [vmem:[%s1 + $0x2910] sm:$0xff]
  %v1360 = vld [vmem:[%s1 + $0x2918] sm:$0xff]
  %v1361 = vld [vmem:[%s1 + $0x2920] sm:$0xff]
  %v1362 = vld [vmem:[%s1 + $0x2928] sm:$0xff]
  %v1363 = vld [vmem:[%s1 + $0x2930] sm:$0xff]
  %v1364 = vld [vmem:[%s1 + $0x2938] sm:$0xff]
  %v1365 = vld [vmem:[%s1 + $0x2940] sm:$0xff]
  %v1366 = vld [vmem:[%s1 + $0x2948] sm:$0xff]
  %v1367 = vld [vmem:[%s1 + $0x2950] sm:$0xff]
  %v1368 = vld [vmem:[%s1 + $0x2958] sm:$0xff]
  %v1369 = vld [vmem:[%s1 + $0x2960] sm:$0xff]
  %v1370 = vld [vmem:[%s1 + $0x2968] sm:$0xff]
  %v1371 = vld [vmem:[%s1 + $0x2970] sm:$0xff]
  %v1372 = vld [vmem:[%s1 + $0x2978] sm:$0xff]
  %v1373 = vld [vmem:[%s1 + $0x2980] sm:$0xff]
  %v1374 = vld [vmem:[%s1 + $0x2988] sm:$0xff]
  %v1375 = vld [vmem:[%s1 + $0x2990] sm:$0xff]
  %v1376 = vld [vmem:[%s1 + $0x2998] sm:$0xff]
  %v1377 = vld [vmem:[%s1 + $0x29a0] sm:$0xff]
  %v1378 = vld [vmem:[%s1 + $0x29a8] sm:$0xff]
  %v1379 = vld [vmem:[%s1 + $0x29b0] sm:$0xff]
  %v1380 = vld [vmem:[%s1 + $0x29b8] sm:$0xff]
  %v1381 = vld [vmem:[%s1 + $0x29c0] sm:$0xff]
  %v1382 = vld [vmem:[%s1 + $0x29c8] sm:$0xff]
  %v1383 = vld [vmem:[%s1 + $0x29d0] sm:$0xff]
  %v1384 = vld [vmem:[%s1 + $0x29d8] sm:$0xff]
  %v1385 = vld [vmem:[%s1 + $0x29e0] sm:$0xff]
  %v1386 = vld [vmem:[%s1 + $0x29e8] sm:$0xff]
  %v1387 = vld [vmem:[%s1 + $0x29f0] sm:$0xff]
  %v1388 = vld [vmem:[%s1 + $0x29f8] sm:$0xff]
  %v1389 = vld [vmem:[%s1 + $0x2a00] sm:$0xff]
  %v1390 = vld [vmem:[%s1 + $0x2a08] sm:$0xff]
  %v1391 = vld [vmem:[%s1 + $0x2a10] sm:$0xff]
  %v1392 = vld [vmem:[%s1 + $0x2a18] sm:$0xff]
  %v1393 = vld [vmem:[%s1 + $0x2a20] sm:$0xff]
  %v1394 = vld [vmem:[%s1 + $0x2a28] sm:$0xff]
  %v1395 = vld [vmem:[%s1 + $0x2a30] sm:$0xff]
  %v1396 = vld [vmem:[%s1 + $0x2a38] sm:$0xff]
  %v1397 = vld [vmem:[%s1 + $0x2a40] sm:$0xff]
  %v1398 = vld [vmem:[%s1 + $0x2a48] sm:$0xff]
  %v1399 = vld [vmem:[%s1 + $0x2a50] sm:$0xff]
  %v1400 = vld [vmem:[%s1 + $0x2a58] sm:$0xff]
  %v1401 = vld [vmem:[%s1 + $0x2a60] sm:$0xff]
  %v1402 = vld [vmem:[%s1 + $0x2a68] sm:$0xff]
  %v1403 = vld [vmem:[%s1 + $0x2a70] sm:$0xff]
  %v1404 = vld [vmem:[%s1 + $0x2a78] sm:$0xff]
  %v1405 = vld [vmem:[%s1 + $0x2a80] sm:$0xff]
  %v1406 = vld [vmem:[%s1 + $0x2a88] sm:$0xff]
  %v1407 = vld [vmem:[%s1 + $0x2a90] sm:$0xff]
  %v1408 = vld [vmem:[%s1 + $0x2a98] sm:$0xff]
  %v1409 = vld [vmem:[%s1 + $0x2aa0] sm:$0xff]
  %v1410 = vld [vmem:[%s1 + $0x2aa8] sm:$0xff]
  %v1411 = vld [vmem:[%s1 + $0x2ab0] sm:$0xff]
  %v1412 = vld [vmem:[%s1 + $0x2ab8] sm:$0xff]
  %v1413 = vld [vmem:[%s1 + $0x2ac0] sm:$0xff]
  %v1414 = vld [vmem:[%s1 + $0x2ac8] sm:$0xff]
  %v1415 = vld [vmem:[%s1 + $0x2ad0] sm:$0xff]
  %v1416 = vld [vmem:[%s1 + $0x2ad8] sm:$0xff]
  %v1417 = vld [vmem:[%s1 + $0x2ae0] sm:$0xff]
  %v1418 = vld [vmem:[%s1 + $0x2ae8] sm:$0xff]
  %v1419 = vld [vmem:[%s1 + $0x2af0] sm:$0xff]
  %v1420 = vld [vmem:[%s1 + $0x2af8] sm:$0xff]
  %v1421 = vld [vmem:[%s1 + $0x2b00] sm:$0xff]
  %v1422 = vld [vmem:[%s1 + $0x2b08] sm:$0xff]
  %v1423 = vld [vmem:[%s1 + $0x2b10] sm:$0xff]
  %v1424 = vld [vmem:[%s1 + $0x2b18] sm:$0xff]
  %v1425 = vld [vmem:[%s1 + $0x2b20] sm:$0xff]
  %v1426 = vld [vmem:[%s1 + $0x2b28] sm:$0xff]
  %v1427 = vld [vmem:[%s1 + $0x2b30] sm:$0xff]
  %v1428 = vld [vmem:[%s1 + $0x2b38] sm:$0xff]
  %v1429 = vld [vmem:[%s1 + $0x2b40] sm:$0xff]
  %v1430 = vld [vmem:[%s1 + $0x2b48] sm:$0xff]
  %v1431 = vld [vmem:[%s1 + $0x2b50] sm:$0xff]
  %v1432 = vld [vmem:[%s1 + $0x2b58] sm:$0xff]
  %v1433 = vld [vmem:[%s1 + $0x2b60] sm:$0xff]
  %v1434 = vld [vmem:[%s1 + $0x2b68] sm:$0xff]
  %v1435 = vld [vmem:[%s1 + $0x2b70] sm:$0xff]
  %v1436 = vld [vmem:[%s1 + $0x2b78] sm:$0xff]
  %v1437 = vld [vmem:[%s1 + $0x2b80] sm:$0xff]
  %v1438 = vld [vmem:[%s1 + $0x2b88] sm:$0xff]
  %v1439 = vld [vmem:[%s1 + $0x2b90] sm:$0xff]
  %v1440 = vld [vmem:[%s1 + $0x2b98] sm:$0xff]
  %v1441 = vld [vmem:[%s1 + $0x2ba0] sm:$0xff]
  %v1442 = vld [vmem:[%s1 + $0x2ba8] sm:$0xff]
  %v1443 = vld [vmem:[%s1 + $0x2bb0] sm:$0xff]
  %v1444 = vld [vmem:[%s1 + $0x2bb8] sm:$0xff]
  %v1445 = vld [vmem:[%s1 + $0x2bc0] sm:$0xff]
  %v1446 = vld [vmem:[%s1 + $0x2bc8] sm:$0xff]
  %v1447 = vld [vmem:[%s1 + $0x2bd0] sm:$0xff]
  %v1448 = vld [vmem:[%s1 + $0x2bd8] sm:$0xff]
  %v1449 = vld [vmem:[%s1 + $0x2be0] sm:$0xff]
  %v1450 = vld [vmem:[%s1 + $0x2be8] sm:$0xff]
  %v1451 = vld [vmem:[%s1 + $0x2bf0] sm:$0xff]
  %v1452 = vld [vmem:[%s1 + $0x2bf8] sm:$0xff]
  %v1453 = vld [vmem:[%s1 + $0x2c00] sm:$0xff]
  %v1454 = vld [vmem:[%s1 + $0x2c08] sm:$0xff]
  %v1455 = vld [vmem:[%s1 + $0x2c10] sm:$0xff]
  %v1456 = vld [vmem:[%s1 + $0x2c18] sm:$0xff]
  %v1457 = vld [vmem:[%s1 + $0x2c20] sm:$0xff]
  %v1458 = vld [vmem:[%s1 + $0x2c28] sm:$0xff]
  %v1459 = vld [vmem:[%s1 + $0x2c30] sm:$0xff]
  %v1460 = vld [vmem:[%s1 + $0x2c38] sm:$0xff]
  %v1461 = vld [vmem:[%s1 + $0x2c40] sm:$0xff]
  %v1462 = vld [vmem:[%s1 + $0x2c48] sm:$0xff]
  %v1463 = vld [vmem:[%s1 + $0x2c50] sm:$0xff]
  %v1464 = vld [vmem:[%s1 + $0x2c58] sm:$0xff]
  %v1465 = vld [vmem:[%s1 + $0x2c60] sm:$0xff]
  %v1466 = vld [vmem:[%s1 + $0x2c68] sm:$0xff]
  %v1467 = vld [vmem:[%s1 + $0x2c70] sm:$0xff]
  %v1468 = vld [vmem:[%s1 + $0x2c78] sm:$0xff]
  %v1469 = vld [vmem:[%s1 + $0x2c80] sm:$0xff]
  %v1470 = vld [vmem:[%s1 + $0x2c88] sm:$0xff]
  %v1471 = vld [vmem:[%s1 + $0x2c90] sm:$0xff]
  %v1472 = vld [vmem:[%s1 + $0x2c98] sm:$0xff]
  %v1473 = vld [vmem:[%s1 + $0x2ca0] sm:$0xff]
  %v1474 = vld [vmem:[%s1 + $0x2ca8] sm:$0xff]
  %v1475 = vld [vmem:[%s1 + $0x2cb0] sm:$0xff]
  %v1476 = vld [vmem:[%s1 + $0x2cb8] sm:$0xff]
  %v1477 = vld [vmem:[%s1 + $0x2cc0] sm:$0xff]
  %v1478 = vld [vmem:[%s1 + $0x2cc8] sm:$0xff]
  %v1479 = vld [vmem:[%s1 + $0x2cd0] sm:$0xff]
  %v1480 = vld [vmem:[%s1 + $0x2cd8] sm:$0xff]
  %v1481 = vld [vmem:[%s1 + $0x2ce0] sm:$0xff]
  %v1482 = vld [vmem:[%s1 + $0x2ce8] sm:$0xff]
  %v1483 = vld [vmem:[%s1 + $0x2cf0] sm:$0xff]
  %v1484 = vld [vmem:[%s1 + $0x2cf8] sm:$0xff]
  %v1485 = vld [vmem:[%s1 + $0x2d00] sm:$0xff]
  %v1486 = vld [vmem:[%s1 + $0x2d08] sm:$0xff]
  %v1487 = vld [vmem:[%s1 + $0x2d10] sm:$0xff]
  %v1488 = vld [vmem:[%s1 + $0x2d18] sm:$0xff]
  %v1489 = vld [vmem:[%s1 + $0x2d20] sm:$0xff]
  %v1490 = vld [vmem:[%s1 + $0x2d28] sm:$0xff]
  %v1491 = vld [vmem:[%s1 + $0x2d30] sm:$0xff]
  %v1492 = vld [vmem:[%s1 + $0x2d38] sm:$0xff]
  %v1493 = vld [vmem:[%s1 + $0x2d40] sm:$0xff]
  %v1494 = vld [vmem:[%s1 + $0x2d48] sm:$0xff]
  %v1495 = vld [vmem:[%s1 + $0x2d50] sm:$0xff]
  %v1496 = vld [vmem:[%s1 + $0x2d58] sm:$0xff]
  %v1497 = vld [vmem:[%s1 + $0x2d60] sm:$0xff]
  %v1498 = vld [vmem:[%s1 + $0x2d68] sm:$0xff]
  %v1499 = vld [vmem:[%s1 + $0x2d70] sm:$0xff]
  %v1500 = vld [vmem:[%s1 + $0x2d78] sm:$0xff]
  %v1501 = vld [vmem:[%s1 + $0x2d80] sm:$0xff]
  %v1502 = vld [vmem:[%s1 + $0x2d88] sm:$0xff]
  %v1503 = vld [vmem:[%s1 + $0x2d90] sm:$0xff]
  %v1504 = vld [vmem:[%s1 + $0x2d98] sm:$0xff]
  %v1505 = vld [vmem:[%s1 + $0x2da0] sm:$0xff]
  %v1506 = vld [vmem:[%s1 + $0x2da8] sm:$0xff]
  %v1507 = vld [vmem:[%s1 + $0x2db0] sm:$0xff]
  %v1508 = vld [vmem:[%s1 + $0x2db8] sm:$0xff]
  %v1509 = vld [vmem:[%s1 + $0x2dc0] sm:$0xff]
  %v1510 = vld [vmem:[%s1 + $0x2dc8] sm:$0xff]
  %v1511 = vld [vmem:[%s1 + $0x2dd0] sm:$0xff]
  %v1512 = vld [vmem:[%s1 + $0x2dd8] sm:$0xff]
  %v1513 = vld [vmem:[%s1 + $0x2de0] sm:$0xff]
  %v1514 = vld [vmem:[%s1 + $0x2de8] sm:$0xff]
  %v1515 = vld [vmem:[%s1 + $0x2df0] sm:$0xff]
  %v1516 = vld [vmem:[%s1 + $0x2df8] sm:$0xff]
  %v1517 = vld [vmem:[%s1 + $0x2e00] sm:$0xff]
  %v1518 = vld [vmem:[%s1 + $0x2e08] sm:$0xff]
  %v1519 = vld [vmem:[%s1 + $0x2e10] sm:$0xff]
  %v1520 = vld [vmem:[%s1 + $0x2e18] sm:$0xff]
  %v1521 = vld [vmem:[%s1 + $0x2e20] sm:$0xff]
  %v1522 = vld [vmem:[%s1 + $0x2e28] sm:$0xff]
  %v1523 = vld [vmem:[%s1 + $0x2e30] sm:$0xff]
  %v1524 = vld [vmem:[%s1 + $0x2e38] sm:$0xff]
  %v1525 = vld [vmem:[%s1 + $0x2e40] sm:$0xff]
  %v1526 = vld [vmem:[%s1 + $0x2e48] sm:$0xff]
  %v1527 = vld [vmem:[%s1 + $0x2e50] sm:$0xff]
  %v1528 = vld [vmem:[%s1 + $0x2e58] sm:$0xff]
  %v1529 = vld [vmem:[%s1 + $0x2e60] sm:$0xff]
  %v1530 = vld [vmem:[%s1 + $0x2e68] sm:$0xff]
  %v1531 = vld [vmem:[%s1 + $0x2e70] sm:$0xff]
  %v1532 = vld [vmem:[%s1 + $0x2e78] sm:$0xff]
  %v1533 = vld [vmem:[%s1 + $0x2e80] sm:$0xff]
  %v1534 = vld [vmem:[%s1 + $0x2e88] sm:$0xff]
  %v1535 = vld [vmem:[%s1 + $0x2e90] sm:$0xff]
  %v1536 = vld [vmem:[%s1 + $0x2e98] sm:$0xff]
  %v1537 = vld [vmem:[%s1 + $0x2ea0] sm:$0xff]
  %v1538 = vld [vmem:[%s1 + $0x2ea8] sm:$0xff]
  %v1539 = vld [vmem:[%s1 + $0x2eb0] sm:$0xff]
  %v1540 = vld [vmem:[%s1 + $0x2eb8] sm:$0xff]
  %v1541 = vld [vmem:[%s1 + $0x2ec0] sm:$0xff]
  %v1542 = vld [vmem:[%s1 + $0x2ec8] sm:$0xff]
  %v1543 = vld [vmem:[%s1 + $0x2ed0] sm:$0xff]
  %v1544 = vld [vmem:[%s1 + $0x2ed8] sm:$0xff]
  %v1545 = vld [vmem:[%s1 + $0x2ee0] sm:$0xff]
  %v1546 = vld [vmem:[%s1 + $0x2ee8] sm:$0xff]
  %v1547 = vld [vmem:[%s1 + $0x2ef0] sm:$0xff]
  %v1548 = vld [vmem:[%s1 + $0x2ef8] sm:$0xff]
  %v1549 = vld [vmem:[%s1 + $0x2f00] sm:$0xff]
  %v1550 = vld [vmem:[%s1 + $0x2f08] sm:$0xff]
  %v1551 = vld [vmem:[%s1 + $0x2f10] sm:$0xff]
  %v1552 = vld [vmem:[%s1 + $0x2f18] sm:$0xff]
  %v1553 = vld [vmem:[%s1 + $0x2f20] sm:$0xff]
  %v1554 = vld [vmem:[%s1 + $0x2f28] sm:$0xff]
  %v1555 = vld [vmem:[%s1 + $0x2f30] sm:$0xff]
  %v1556 = vld [vmem:[%s1 + $0x2f38] sm:$0xff]
  %v1557 = vld [vmem:[%s1 + $0x2f40] sm:$0xff]
  %v1558 = vld [vmem:[%s1 + $0x2f48] sm:$0xff]
  %v1559 = vld [vmem:[%s1 + $0x2f50] sm:$0xff]
  %v1560 = vld [vmem:[%s1 + $0x2f58] sm:$0xff]
  %v1561 = vld [vmem:[%s1 + $0x2f60] sm:$0xff]
  %v1562 = vld [vmem:[%s1 + $0x2f68] sm:$0xff]
  %v1563 = vld [vmem:[%s1 + $0x2f70] sm:$0xff]
  %v1564 = vld [vmem:[%s1 + $0x2f78] sm:$0xff]
  %v1565 = vld [vmem:[%s1 + $0x2f80] sm:$0xff]
  %v1566 = vld [vmem:[%s1 + $0x2f88] sm:$0xff]
  %v1567 = vld [vmem:[%s1 + $0x2f90] sm:$0xff]
  %v1568 = vld [vmem:[%s1 + $0x2f98] sm:$0xff]
  %v1569 = vld [vmem:[%s1 + $0x2fa0] sm:$0xff]
  %v1570 = vld [vmem:[%s1 + $0x2fa8] sm:$0xff]
  %v1571 = vld [vmem:[%s1 + $0x2fb0] sm:$0xff]
  %v1572 = vld [vmem:[%s1 + $0x2fb8] sm:$0xff]
  %v1573 = vld [vmem:[%s1 + $0x2fc0] sm:$0xff]
  %v1574 = vld [vmem:[%s1 + $0x2fc8] sm:$0xff]
  %v1575 = vld [vmem:[%s1 + $0x2fd0] sm:$0xff]
  %v1576 = vld [vmem:[%s1 + $0x2fd8] sm:$0xff]
  %v1577 = vld [vmem:[%s1 + $0x2fe0] sm:$0xff]
  %v1578 = vld [vmem:[%s1 + $0x2fe8] sm:$0xff]
  %v1579 = vld [vmem:[%s1 + $0x2ff0] sm:$0xff]
  %v1580 = vld [vmem:[%s1 + $0x2ff8] sm:$0xff]
  %v1581 = vld [vmem:[%s1 + $0x3000] sm:$0xff]
  %v1582 = vld [vmem:[%s1 + $0x3008] sm:$0xff]
  %v1583 = vld [vmem:[%s1 + $0x3010] sm:$0xff]
  %v1584 = vld [vmem:[%s1 + $0x3018] sm:$0xff]
  %v1585 = vld [vmem:[%s1 + $0x3020] sm:$0xff]
  %v1586 = vld [vmem:[%s1 + $0x3028] sm:$0xff]
  %v1587 = vld [vmem:[%s1 + $0x3030] sm:$0xff]
  %v1588 = vld [vmem:[%s1 + $0x3038] sm:$0xff]
  %v1589 = vld [vmem:[%s1 + $0x3040] sm:$0xff]
  %v1590 = vld [vmem:[%s1 + $0x3048] sm:$0xff]
  %v1591 = vld [vmem:[%s1 + $0x3050] sm:$0xff]
  %v1592 = vld [vmem:[%s1 + $0x3058] sm:$0xff]
  %v1593 = vld [vmem:[%s1 + $0x3060] sm:$0xff]
  %v1594 = vld [vmem:[%s1 + $0x3068] sm:$0xff]
  %v1595 = vld [vmem:[%s1 + $0x3070] sm:$0xff]
  %v1596 = vld [vmem:[%s1 + $0x3078] sm:$0xff]
  %v1597 = vld [vmem:[%s1 + $0x3080] sm:$0xff]
  %v1598 = vld [vmem:[%s1 + $0x3088] sm:$0xff]
  %v1599 = vld [vmem:[%s1 + $0x3090] sm:$0xff]
  %v1600 = vld [vmem:[%s1 + $0x3098] sm:$0xff]
  %v1601 = vld [vmem:[%s1 + $0x30a0] sm:$0xff]
  %v1602 = vld [vmem:[%s1 + $0x30a8] sm:$0xff]
  %v1603 = vld [vmem:[%s1 + $0x30b0] sm:$0xff]
  %v1604 = vld [vmem:[%s1 + $0x30b8] sm:$0xff]
  %v1605 = vld [vmem:[%s1 + $0x30c0] sm:$0xff]
  %v1606 = vld [vmem:[%s1 + $0x30c8] sm:$0xff]
  %v1607 = vld [vmem:[%s1 + $0x30d0] sm:$0xff]
  %v1608 = vld [vmem:[%s1 + $0x30d8] sm:$0xff]
  %v1609 = vld [vmem:[%s1 + $0x30e0] sm:$0xff]
  %v1610 = vld [vmem:[%s1 + $0x30e8] sm:$0xff]
  %v1611 = vld [vmem:[%s1 + $0x30f0] sm:$0xff]
  %v1612 = vld [vmem:[%s1 + $0x30f8] sm:$0xff]
  %v1613 = vld [vmem:[%s1 + $0x3100] sm:$0xff]
  %v1614 = vld [vmem:[%s1 + $0x3108] sm:$0xff]
  %v1615 = vld [vmem:[%s1 + $0x3110] sm:$0xff]
  %v1616 = vld [vmem:[%s1 + $0x3118] sm:$0xff]
  %v1617 = vld [vmem:[%s1 + $0x3120] sm:$0xff]
  %v1618 = vld [vmem:[%s1 + $0x3128] sm:$0xff]
  %v1619 = vld [vmem:[%s1 + $0x3130] sm:$0xff]
  %v1620 = vld [vmem:[%s1 + $0x3138] sm:$0xff]
  %v1621 = vld [vmem:[%s1 + $0x3140] sm:$0xff]
  %v1622 = vld [vmem:[%s1 + $0x3148] sm:$0xff]
  %v1623 = vld [vmem:[%s1 + $0x3150] sm:$0xff]
  %v1624 = vld [vmem:[%s1 + $0x3158] sm:$0xff]
  %v1625 = vld [vmem:[%s1 + $0x3160] sm:$0xff]
  %v1626 = vld [vmem:[%s1 + $0x3168] sm:$0xff]
  %v1627 = vld [vmem:[%s1 + $0x3170] sm:$0xff]
  %v1628 = vld [vmem:[%s1 + $0x3178] sm:$0xff]
  %v1629 = vld [vmem:[%s1 + $0x3180] sm:$0xff]
  %v1630 = vld [vmem:[%s1 + $0x3188] sm:$0xff]
  %v1631 = vld [vmem:[%s1 + $0x3190] sm:$0xff]
  %v1632 = vld [vmem:[%s1 + $0x3198] sm:$0xff]
  %v1633 = vld [vmem:[%s1 + $0x31a0] sm:$0xff]
  %v1634 = vld [vmem:[%s1 + $0x31a8] sm:$0xff]
  %v1635 = vld [vmem:[%s1 + $0x31b0] sm:$0xff]
  %v1636 = vld [vmem:[%s1 + $0x31b8] sm:$0xff]
  %v1637 = vld [vmem:[%s1 + $0x31c0] sm:$0xff]
  %v1638 = vld [vmem:[%s1 + $0x31c8] sm:$0xff]
  %v1639 = vld [vmem:[%s1 + $0x31d0] sm:$0xff]
  %v1640 = vld [vmem:[%s1 + $0x31d8] sm:$0xff]
  %v1641 = vld [vmem:[%s1 + $0x31e0] sm:$0xff]
  %v1642 = vld [vmem:[%s1 + $0x31e8] sm:$0xff]
  %v1643 = vld [vmem:[%s1 + $0x31f0] sm:$0xff]
  %v1644 = vld [vmem:[%s1 + $0x31f8] sm:$0xff]
  %v1645 = vld [vmem:[%s1 + $0x3200] sm:$0xff]
  %v1646 = vld [vmem:[%s1 + $0x3208] sm:$0xff]
  %v1647 = vld [vmem:[%s1 + $0x3210] sm:$0xff]
  %v1648 = vld [vmem:[%s1 + $0x3218] sm:$0xff]
  %v1649 = vld [vmem:[%s1 + $0x3220] sm:$0xff]
  %v1650 = vld [vmem:[%s1 + $0x3228] sm:$0xff]
  %v1651 = vld [vmem:[%s1 + $0x3230] sm:$0xff]
  %v1652 = vld [vmem:[%s1 + $0x3238] sm:$0xff]
  %v1653 = vld [vmem:[%s1 + $0x3240] sm:$0xff]
  %v1654 = vld [vmem:[%s1 + $0x3248] sm:$0xff]
  %v1655 = vld [vmem:[%s1 + $0x3250] sm:$0xff]
  %v1656 = vld [vmem:[%s1 + $0x3258] sm:$0xff]
  %v1657 = vld [vmem:[%s1 + $0x3260] sm:$0xff]
  %v1658 = vld [vmem:[%s1 + $0x3268] sm:$0xff]
  %v1659 = vld [vmem:[%s1 + $0x3270] sm:$0xff]
  %v1660 = vld [vmem:[%s1 + $0x3278] sm:$0xff]
  %v1661 = vld [vmem:[%s1 + $0x3280] sm:$0xff]
  %v1662 = vld [vmem:[%s1 + $0x3288] sm:$0xff]
  %v1663 = vld [vmem:[%s1 + $0x3290] sm:$0xff]
  %v1664 = vld [vmem:[%s1 + $0x3298] sm:$0xff]
  %v1665 = vld [vmem:[%s1 + $0x32a0] sm:$0xff]
  %v1666 = vld [vmem:[%s1 + $0x32a8] sm:$0xff]
  %v1667 = vld [vmem:[%s1 + $0x32b0] sm:$0xff]
  %v1668 = vld [vmem:[%s1 + $0x32b8] sm:$0xff]
  %v1669 = vld [vmem:[%s1 + $0x32c0] sm:$0xff]
  %v1670 = vld [vmem:[%s1 + $0x32c8] sm:$0xff]
  %v1671 = vld [vmem:[%s1 + $0x32d0] sm:$0xff]
  %v1672 = vld [vmem:[%s1 + $0x32d8] sm:$0xff]
  %v1673 = vld [vmem:[%s1 + $0x32e0] sm:$0xff]
  %v1674 = vld [vmem:[%s1 + $0x32e8] sm:$0xff]
  %v1675 = vld [vmem:[%s1 + $0x32f0] sm:$0xff]
  %v1676 = vld [vmem:[%s1 + $0x32f8] sm:$0xff]
  %v1677 = vld [vmem:[%s1 + $0x3300] sm:$0xff]
  %v1678 = vld [vmem:[%s1 + $0x3308] sm:$0xff]
  %v1679 = vld [vmem:[%s1 + $0x3310] sm:$0xff]
  %v1680 = vld [vmem:[%s1 + $0x3318] sm:$0xff]
  %v1681 = vld [vmem:[%s1 + $0x3320] sm:$0xff]
  %v1682 = vld [vmem:[%s1 + $0x3328] sm:$0xff]
  %v1683 = vld [vmem:[%s1 + $0x3330] sm:$0xff]
  %v1684 = vld [vmem:[%s1 + $0x3338] sm:$0xff]
  %v1685 = vld [vmem:[%s1 + $0x3340] sm:$0xff]
  %v1686 = vld [vmem:[%s1 + $0x3348] sm:$0xff]
  %v1687 = vld [vmem:[%s1 + $0x3350] sm:$0xff]
  %v1688 = vld [vmem:[%s1 + $0x3358] sm:$0xff]
  %v1689 = vld [vmem:[%s1 + $0x3360] sm:$0xff]
  %v1690 = vld [vmem:[%s1 + $0x3368] sm:$0xff]
  %v1691 = vld [vmem:[%s1 + $0x3370] sm:$0xff]
  %v1692 = vld [vmem:[%s1 + $0x3378] sm:$0xff]
  %v1693 = vld [vmem:[%s1 + $0x3380] sm:$0xff]
  %v1694 = vld [vmem:[%s1 + $0x3388] sm:$0xff]
  %v1695 = vld [vmem:[%s1 + $0x3390] sm:$0xff]
  %v1696 = vld [vmem:[%s1 + $0x3398] sm:$0xff]
  %v1697 = vld [vmem:[%s1 + $0x33a0] sm:$0xff]
  %v1698 = vld [vmem:[%s1 + $0x33a8] sm:$0xff]
  %v1699 = vld [vmem:[%s1 + $0x33b0] sm:$0xff]
  %v1700 = vld [vmem:[%s1 + $0x33b8] sm:$0xff]
  %v1701 = vld [vmem:[%s1 + $0x33c0] sm:$0xff]
  %v1702 = vld [vmem:[%s1 + $0x33c8] sm:$0xff]
  %v1703 = vld [vmem:[%s1 + $0x33d0] sm:$0xff]
  %v1704 = vld [vmem:[%s1 + $0x33d8] sm:$0xff]
  %v1705 = vld [vmem:[%s1 + $0x33e0] sm:$0xff]
  %v1706 = vld [vmem:[%s1 + $0x33e8] sm:$0xff]
  %v1707 = vld [vmem:[%s1 + $0x33f0] sm:$0xff]
  %v1708 = vld [vmem:[%s1 + $0x33f8] sm:$0xff]
  %v1709 = vld [vmem:[%s1 + $0x3400] sm:$0xff]
  %v1710 = vld [vmem:[%s1 + $0x3408] sm:$0xff]
  %v1711 = vld [vmem:[%s1 + $0x3410] sm:$0xff]
  %v1712 = vld [vmem:[%s1 + $0x3418] sm:$0xff]
  %v1713 = vld [vmem:[%s1 + $0x3420] sm:$0xff]
  %v1714 = vld [vmem:[%s1 + $0x3428] sm:$0xff]
  %v1715 = vld [vmem:[%s1 + $0x3430] sm:$0xff]
  %v1716 = vld [vmem:[%s1 + $0x3438] sm:$0xff]
  %v1717 = vld [vmem:[%s1 + $0x3440] sm:$0xff]
  %v1718 = vld [vmem:[%s1 + $0x3448] sm:$0xff]
  %v1719 = vld [vmem:[%s1 + $0x3450] sm:$0xff]
  %v1720 = vld [vmem:[%s1 + $0x3458] sm:$0xff]
  %v1721 = vld [vmem:[%s1 + $0x3460] sm:$0xff]
  %v1722 = vld [vmem:[%s1 + $0x3468] sm:$0xff]
  %v1723 = vld [vmem:[%s1 + $0x3470] sm:$0xff]
  %v1724 = vld [vmem:[%s1 + $0x3478] sm:$0xff]
  %v1725 = vld [vmem:[%s1 + $0x3480] sm:$0xff]
  %v1726 = vld [vmem:[%s1 + $0x3488] sm:$0xff]
  %v1727 = vld [vmem:[%s1 + $0x3490] sm:$0xff]
  %v1728 = vld [vmem:[%s1 + $0x3498] sm:$0xff]
  %v1729 = vld [vmem:[%s1 + $0x34a0] sm:$0xff]
  %v1730 = vld [vmem:[%s1 + $0x34a8] sm:$0xff]
  %v1731 = vld [vmem:[%s1 + $0x34b0] sm:$0xff]
  %v1732 = vld [vmem:[%s1 + $0x34b8] sm:$0xff]
  %v1733 = vld [vmem:[%s1 + $0x34c0] sm:$0xff]
  %v1734 = vld [vmem:[%s1 + $0x34c8] sm:$0xff]
  %v1735 = vld [vmem:[%s1 + $0x34d0] sm:$0xff]
  %v1736 = vld [vmem:[%s1 + $0x34d8] sm:$0xff]
  %v1737 = vld [vmem:[%s1 + $0x34e0] sm:$0xff]
  %v1738 = vld [vmem:[%s1 + $0x34e8] sm:$0xff]
  %v1739 = vld [vmem:[%s1 + $0x34f0] sm:$0xff]
  %v1740 = vld [vmem:[%s1 + $0x34f8] sm:$0xff]
  %v1741 = vld [vmem:[%s1 + $0x3500] sm:$0xff]
  %v1742 = vld [vmem:[%s1 + $0x3508] sm:$0xff]
  %v1743 = vld [vmem:[%s1 + $0x3510] sm:$0xff]
  %v1744 = vld [vmem:[%s1 + $0x3518] sm:$0xff]
  %v1745 = vld [vmem:[%s1 + $0x3520] sm:$0xff]
  %v1746 = vld [vmem:[%s1 + $0x3528] sm:$0xff]
  %v1747 = vld [vmem:[%s1 + $0x3530] sm:$0xff]
  %v1748 = vld [vmem:[%s1 + $0x3538] sm:$0xff]
  %v1749 = vld [vmem:[%s1 + $0x3540] sm:$0xff]
  %v1750 = vld [vmem:[%s1 + $0x3548] sm:$0xff]
  %v1751 = vld [vmem:[%s1 + $0x3550] sm:$0xff]
  %v1752 = vld [vmem:[%s1 + $0x3558] sm:$0xff]
  %v1753 = vld [vmem:[%s1 + $0x3560] sm:$0xff]
  %v1754 = vld [vmem:[%s1 + $0x3568] sm:$0xff]
  %v1755 = vld [vmem:[%s1 + $0x3570] sm:$0xff]
  %v1756 = vld [vmem:[%s1 + $0x3578] sm:$0xff]
  %v1757 = vld [vmem:[%s1 + $0x3580] sm:$0xff]
  %v1758 = vld [vmem:[%s1 + $0x3588] sm:$0xff]
  %v1759 = vld [vmem:[%s1 + $0x3590] sm:$0xff]
  %v1760 = vld [vmem:[%s1 + $0x3598] sm:$0xff]
  %v1761 = vld [vmem:[%s1 + $0x35a0] sm:$0xff]
  %v1762 = vld [vmem:[%s1 + $0x35a8] sm:$0xff]
  %v1763 = vld [vmem:[%s1 + $0x35b0] sm:$0xff]
  %v1764 = vld [vmem:[%s1 + $0x35b8] sm:$0xff]
  %v1765 = vld [vmem:[%s1 + $0x35c0] sm:$0xff]
  %v1766 = vld [vmem:[%s1 + $0x35c8] sm:$0xff]
  %v1767 = vld [vmem:[%s1 + $0x35d0] sm:$0xff]
  %v1768 = vld [vmem:[%s1 + $0x35d8] sm:$0xff]
  %v1769 = vld [vmem:[%s1 + $0x35e0] sm:$0xff]
  %v1770 = vld [vmem:[%s1 + $0x35e8] sm:$0xff]
  %v1771 = vld [vmem:[%s1 + $0x35f0] sm:$0xff]
  %v1772 = vld [vmem:[%s1 + $0x35f8] sm:$0xff]
  %v1773 = vld [vmem:[%s1 + $0x3600] sm:$0xff]
  %v1774 = vld [vmem:[%s1 + $0x3608] sm:$0xff]
  %v1775 = vld [vmem:[%s1 + $0x3610] sm:$0xff]
  %v1776 = vld [vmem:[%s1 + $0x3618] sm:$0xff]
  %v1777 = vld [vmem:[%s1 + $0x3620] sm:$0xff]
  %v1778 = vld [vmem:[%s1 + $0x3628] sm:$0xff]
  %v1779 = vld [vmem:[%s1 + $0x3630] sm:$0xff]
  %v1780 = vld [vmem:[%s1 + $0x3638] sm:$0xff]
  %v1781 = vld [vmem:[%s1 + $0x3640] sm:$0xff]
  %v1782 = vld [vmem:[%s1 + $0x3648] sm:$0xff]
  %v1783 = vld [vmem:[%s1 + $0x3650] sm:$0xff]
  %v1784 = vld [vmem:[%s1 + $0x3658] sm:$0xff]
  %v1785 = vld [vmem:[%s1 + $0x3660] sm:$0xff]
  %v1786 = vld [vmem:[%s1 + $0x3668] sm:$0xff]
  %v1787 = vld [vmem:[%s1 + $0x3670] sm:$0xff]
  %v1788 = vld [vmem:[%s1 + $0x3678] sm:$0xff]
  %v1789 = vld [vmem:[%s1 + $0x3680] sm:$0xff]
  %v1790 = vld [vmem:[%s1 + $0x3688] sm:$0xff]
  %v1791 = vld [vmem:[%s1 + $0x3690] sm:$0xff]
  %v1792 = vld [vmem:[%s1 + $0x3698] sm:$0xff]
  %v1793 = vld [vmem:[%s1 + $0x36a0] sm:$0xff]
  %v1794 = vld [vmem:[%s1 + $0x36a8] sm:$0xff]
  %v1795 = vld [vmem:[%s1 + $0x36b0] sm:$0xff]
  %v1796 = vld [vmem:[%s1 + $0x36b8] sm:$0xff]
  %v1797 = vld [vmem:[%s1 + $0x36c0] sm:$0xff]
  %v1798 = vld [vmem:[%s1 + $0x36c8] sm:$0xff]
  %v1799 = vld [vmem:[%s1 + $0x36d0] sm:$0xff]
  %v1800 = vld [vmem:[%s1 + $0x36d8] sm:$0xff]
  %v1801 = vld [vmem:[%s1 + $0x36e0] sm:$0xff]
  %v1802 = vld [vmem:[%s1 + $0x36e8] sm:$0xff]
  %v1803 = vld [vmem:[%s1 + $0x36f0] sm:$0xff]
  %v1804 = vld [vmem:[%s1 + $0x36f8] sm:$0xff]
  %v1805 = vld [vmem:[%s1 + $0x3700] sm:$0xff]
  %v1806 = vld [vmem:[%s1 + $0x3708] sm:$0xff]
  %v1807 = vld [vmem:[%s1 + $0x3710] sm:$0xff]
  %v1808 = vld [vmem:[%s1 + $0x3718] sm:$0xff]
  %v1809 = vld [vmem:[%s1 + $0x3720] sm:$0xff]
  %v1810 = vld [vmem:[%s1 + $0x3728] sm:$0xff]
  %v1811 = vld [vmem:[%s1 + $0x3730] sm:$0xff]
  %v1812 = vld [vmem:[%s1 + $0x3738] sm:$0xff]
  %v1813 = vld [vmem:[%s1 + $0x3740] sm:$0xff]
  %v1814 = vld [vmem:[%s1 + $0x3748] sm:$0xff]
  %v1815 = vld [vmem:[%s1 + $0x3750] sm:$0xff]
  %v1816 = vld [vmem:[%s1 + $0x3758] sm:$0xff]
  %v1817 = vld [vmem:[%s1 + $0x3760] sm:$0xff]
  %v1818 = vld [vmem:[%s1 + $0x3768] sm:$0xff]
  %v1819 = vld [vmem:[%s1 + $0x3770] sm:$0xff]
  %v1820 = vld [vmem:[%s1 + $0x3778] sm:$0xff]
  %v1821 = vld [vmem:[%s1 + $0x3780] sm:$0xff]
  %v1822 = vld [vmem:[%s1 + $0x3788] sm:$0xff]
  %v1823 = vld [vmem:[%s1 + $0x3790] sm:$0xff]
  %v1824 = vld [vmem:[%s1 + $0x3798] sm:$0xff]
  %v1825 = vld [vmem:[%s1 + $0x37a0] sm:$0xff]
  %v1826 = vld [vmem:[%s1 + $0x37a8] sm:$0xff]
  %v1827 = vld [vmem:[%s1 + $0x37b0] sm:$0xff]
  %v1828 = vld [vmem:[%s1 + $0x37b8] sm:$0xff]
  %v1829 = vld [vmem:[%s1 + $0x37c0] sm:$0xff]
  %v1830 = vld [vmem:[%s1 + $0x37c8] sm:$0xff]
  %v1831 = vld [vmem:[%s1 + $0x37d0] sm:$0xff]
  %v1832 = vld [vmem:[%s1 + $0x37d8] sm:$0xff]
  %v1833 = vld [vmem:[%s1 + $0x37e0] sm:$0xff]
  %v1834 = vld [vmem:[%s1 + $0x37e8] sm:$0xff]
  %v1835 = vld [vmem:[%s1 + $0x37f0] sm:$0xff]
  %v1836 = vld [vmem:[%s1 + $0x37f8] sm:$0xff]
  %v1837 = vld [vmem:[%s1 + $0x3800] sm:$0xff]
  %v1838 = vld [vmem:[%s1 + $0x3808] sm:$0xff]
  %v1839 = vld [vmem:[%s1 + $0x3810] sm:$0xff]
  %v1840 = vld [vmem:[%s1 + $0x3818] sm:$0xff]
  %v1841 = vld [vmem:[%s1 + $0x3820] sm:$0xff]
  %v1842 = vld [vmem:[%s1 + $0x3828] sm:$0xff]
  %v1843 = vld [vmem:[%s1 + $0x3830] sm:$0xff]
  %v1844 = vld [vmem:[%s1 + $0x3838] sm:$0xff]
  %v1845 = vld [vmem:[%s1 + $0x3840] sm:$0xff]
  %v1846 = vld [vmem:[%s1 + $0x3848] sm:$0xff]
  %v1847 = vld [vmem:[%s1 + $0x3850] sm:$0xff]
  %v1848 = vld [vmem:[%s1 + $0x3858] sm:$0xff]
  %v1849 = vld [vmem:[%s1 + $0x3860] sm:$0xff]
  %v1850 = vld [vmem:[%s1 + $0x3868] sm:$0xff]
  %v1851 = vld [vmem:[%s1 + $0x3870] sm:$0xff]
  %v1852 = vld [vmem:[%s1 + $0x3878] sm:$0xff]
  %v1853 = vld [vmem:[%s1 + $0x3880] sm:$0xff]
  %v1854 = vld [vmem:[%s1 + $0x3888] sm:$0xff]
  %v1855 = vld [vmem:[%s1 + $0x3890] sm:$0xff]
  %v1856 = vld [vmem:[%s1 + $0x3898] sm:$0xff]
  %v1857 = vld [vmem:[%s1 + $0x38a0] sm:$0xff]
  %v1858 = vld [vmem:[%s1 + $0x38a8] sm:$0xff]
  %v1859 = vld [vmem:[%s1 + $0x38b0] sm:$0xff]
  %v1860 = vld [vmem:[%s1 + $0x38b8] sm:$0xff]
  %v1861 = vld [vmem:[%s1 + $0x38c0] sm:$0xff]
  %v1862 = vld [vmem:[%s1 + $0x38c8] sm:$0xff]
  %v1863 = vld [vmem:[%s1 + $0x38d0] sm:$0xff]
  %v1864 = vld [vmem:[%s1 + $0x38d8] sm:$0xff]
  %v1865 = vld [vmem:[%s1 + $0x38e0] sm:$0xff]
  %v1866 = vld [vmem:[%s1 + $0x38e8] sm:$0xff]
  %v1867 = vld [vmem:[%s1 + $0x38f0] sm:$0xff]
  %v1868 = vld [vmem:[%s1 + $0x38f8] sm:$0xff]
  %v1869 = vld [vmem:[%s1 + $0x3900] sm:$0xff]
  %v1870 = vld [vmem:[%s1 + $0x3908] sm:$0xff]
  %v1871 = vld [vmem:[%s1 + $0x3910] sm:$0xff]
  %v1872 = vld [vmem:[%s1 + $0x3918] sm:$0xff]
  %v1873 = vld [vmem:[%s1 + $0x3920] sm:$0xff]
  %v1874 = vld [vmem:[%s1 + $0x3928] sm:$0xff]
  %v1875 = vld [vmem:[%s1 + $0x3930] sm:$0xff]
  %v1876 = vld [vmem:[%s1 + $0x3938] sm:$0xff]
  %v1877 = vld [vmem:[%s1 + $0x3940] sm:$0xff]
  %v1878 = vld [vmem:[%s1 + $0x3948] sm:$0xff]
  %v1879 = vld [vmem:[%s1 + $0x3950] sm:$0xff]
  %v1880 = vld [vmem:[%s1 + $0x3958] sm:$0xff]
  %v1881 = vld [vmem:[%s1 + $0x3960] sm:$0xff]
  %v1882 = vld [vmem:[%s1 + $0x3968] sm:$0xff]
  %v1883 = vld [vmem:[%s1 + $0x3970] sm:$0xff]
  %v1884 = vld [vmem:[%s1 + $0x3978] sm:$0xff]
  %v1885 = vld [vmem:[%s1 + $0x3980] sm:$0xff]
  %v1886 = vld [vmem:[%s1 + $0x3988] sm:$0xff]
  %v1887 = vld [vmem:[%s1 + $0x3990] sm:$0xff]
  %v1888 = vld [vmem:[%s1 + $0x3998] sm:$0xff]
  %v1889 = vld [vmem:[%s1 + $0x39a0] sm:$0xff]
  %v1890 = vld [vmem:[%s1 + $0x39a8] sm:$0xff]
  %v1891 = vld [vmem:[%s1 + $0x39b0] sm:$0xff]
  %v1892 = vld [vmem:[%s1 + $0x39b8] sm:$0xff]
  %v1893 = vld [vmem:[%s1 + $0x39c0] sm:$0xff]
  %v1894 = vld [vmem:[%s1 + $0x39c8] sm:$0xff]
  %v1895 = vld [vmem:[%s1 + $0x39d0] sm:$0xff]
  %v1896 = vld [vmem:[%s1 + $0x39d8] sm:$0xff]
  %v1897 = vld [vmem:[%s1 + $0x39e0] sm:$0xff]
  %v1898 = vld [vmem:[%s1 + $0x39e8] sm:$0xff]
  %v1899 = vld [vmem:[%s1 + $0x39f0] sm:$0xff]
  %v1900 = vld [vmem:[%s1 + $0x39f8] sm:$0xff]
  %v1901 = vld [vmem:[%s1 + $0x3a00] sm:$0xff]
  %v1902 = vld [vmem:[%s1 + $0x3a08] sm:$0xff]
  %v1903 = vld [vmem:[%s1 + $0x3a10] sm:$0xff]
  %v1904 = vld [vmem:[%s1 + $0x3a18] sm:$0xff]
  %v1905 = vld [vmem:[%s1 + $0x3a20] sm:$0xff]
  %v1906 = vld [vmem:[%s1 + $0x3a28] sm:$0xff]
  %v1907 = vld [vmem:[%s1 + $0x3a30] sm:$0xff]
  %v1908 = vld [vmem:[%s1 + $0x3a38] sm:$0xff]
  %v1909 = vld [vmem:[%s1 + $0x3a40] sm:$0xff]
  %v1910 = vld [vmem:[%s1 + $0x3a48] sm:$0xff]
  %v1911 = vld [vmem:[%s1 + $0x3a50] sm:$0xff]
  %v1912 = vld [vmem:[%s1 + $0x3a58] sm:$0xff]
  %v1913 = vld [vmem:[%s1 + $0x3a60] sm:$0xff]
  %v1914 = vld [vmem:[%s1 + $0x3a68] sm:$0xff]
  %v1915 = vld [vmem:[%s1 + $0x3a70] sm:$0xff]
  %v1916 = vld [vmem:[%s1 + $0x3a78] sm:$0xff]
  %v1917 = vld [vmem:[%s1 + $0x3a80] sm:$0xff]
  %v1918 = vld [vmem:[%s1 + $0x3a88] sm:$0xff]
  %v1919 = vld [vmem:[%s1 + $0x3a90] sm:$0xff]
  %v1920 = vld [vmem:[%s1 + $0x3a98] sm:$0xff]
  %v1921 = vld [vmem:[%s1 + $0x3aa0] sm:$0xff]
  %v1922 = vld [vmem:[%s1 + $0x3aa8] sm:$0xff]
  %v1923 = vld [vmem:[%s1 + $0x3ab0] sm:$0xff]
  %v1924 = vld [vmem:[%s1 + $0x3ab8] sm:$0xff]
  %v1925 = vld [vmem:[%s1 + $0x3ac0] sm:$0xff]
  %v1926 = vld [vmem:[%s1 + $0x3ac8] sm:$0xff]
  %v1927 = vld [vmem:[%s1 + $0x3ad0] sm:$0xff]
  %v1928 = vld [vmem:[%s1 + $0x3ad8] sm:$0xff]
  %v1929 = vld [vmem:[%s1 + $0x3ae0] sm:$0xff]
  %v1930 = vld [vmem:[%s1 + $0x3ae8] sm:$0xff]
  %v1931 = vld [vmem:[%s1 + $0x3af0] sm:$0xff]
  %v1932 = vld [vmem:[%s1 + $0x3af8] sm:$0xff]
  %v1933 = vld [vmem:[%s1 + $0x3b00] sm:$0xff]
  %v1934 = vld [vmem:[%s1 + $0x3b08] sm:$0xff]
  %v1935 = vld [vmem:[%s1 + $0x3b10] sm:$0xff]
  %v1936 = vld [vmem:[%s1 + $0x3b18] sm:$0xff]
  %v1937 = vld [vmem:[%s1 + $0x3b20] sm:$0xff]
  %v1938 = vld [vmem:[%s1 + $0x3b28] sm:$0xff]
  %v1939 = vld [vmem:[%s1 + $0x3b30] sm:$0xff]
  %v1940 = vld [vmem:[%s1 + $0x3b38] sm:$0xff]
  %v1941 = vld [vmem:[%s1 + $0x3b40] sm:$0xff]
  %v1942 = vld [vmem:[%s1 + $0x3b48] sm:$0xff]
  %v1943 = vld [vmem:[%s1 + $0x3b50] sm:$0xff]
  %v1944 = vld [vmem:[%s1 + $0x3b58] sm:$0xff]
  %v1945 = vld [vmem:[%s1 + $0x3b60] sm:$0xff]
  %v1946 = vld [vmem:[%s1 + $0x3b68] sm:$0xff]
  %v1947 = vld [vmem:[%s1 + $0x3b70] sm:$0xff]
  %v1948 = vld [vmem:[%s1 + $0x3b78] sm:$0xff]
  %v1949 = vld [vmem:[%s1 + $0x3b80] sm:$0xff]
  %v1950 = vld [vmem:[%s1 + $0x3b88] sm:$0xff]
  %v1951 = vld [vmem:[%s1 + $0x3b90] sm:$0xff]
  %v1952 = vld [vmem:[%s1 + $0x3b98] sm:$0xff]
  %v1953 = vld [vmem:[%s1 + $0x3ba0] sm:$0xff]
  %v1954 = vld [vmem:[%s1 + $0x3ba8] sm:$0xff]
  %v1955 = vld [vmem:[%s1 + $0x3bb0] sm:$0xff]
  %v1956 = vld [vmem:[%s1 + $0x3bb8] sm:$0xff]
  %v1957 = vld [vmem:[%s1 + $0x3bc0] sm:$0xff]
  %v1958 = vld [vmem:[%s1 + $0x3bc8] sm:$0xff]
  %v1959 = vld [vmem:[%s1 + $0x3bd0] sm:$0xff]
  %v1960 = vld [vmem:[%s1 + $0x3bd8] sm:$0xff]
  %v1961 = vld [vmem:[%s1 + $0x3be0] sm:$0xff]
  %v1962 = vld [vmem:[%s1 + $0x3be8] sm:$0xff]
  %v1963 = vld [vmem:[%s1 + $0x3bf0] sm:$0xff]
  %v1964 = vld [vmem:[%s1 + $0x3bf8] sm:$0xff]
  %v1965 = vld [vmem:[%s1 + $0x3c00] sm:$0xff]
  %v1966 = vld [vmem:[%s1 + $0x3c08] sm:$0xff]
  %v1967 = vld [vmem:[%s1 + $0x3c10] sm:$0xff]
  %v1968 = vld [vmem:[%s1 + $0x3c18] sm:$0xff]
  %v1969 = vld [vmem:[%s1 + $0x3c20] sm:$0xff]
  %v1970 = vld [vmem:[%s1 + $0x3c28] sm:$0xff]
  %v1971 = vld [vmem:[%s1 + $0x3c30] sm:$0xff]
  %v1972 = vld [vmem:[%s1 + $0x3c38] sm:$0xff]
  %v1973 = vld [vmem:[%s1 + $0x3c40] sm:$0xff]
  %v1974 = vld [vmem:[%s1 + $0x3c48] sm:$0xff]
  %v1975 = vld [vmem:[%s1 + $0x3c50] sm:$0xff]
  %v1976 = vld [vmem:[%s1 + $0x3c58] sm:$0xff]
  %v1977 = vld [vmem:[%s1 + $0x3c60] sm:$0xff]
  %v1978 = vld [vmem:[%s1 + $0x3c68] sm:$0xff]
  %v1979 = vld [vmem:[%s1 + $0x3c70] sm:$0xff]
  %v1980 = vld [vmem:[%s1 + $0x3c78] sm:$0xff]
  %v1981 = vld [vmem:[%s1 + $0x3c80] sm:$0xff]
  %v1982 = vld [vmem:[%s1 + $0x3c88] sm:$0xff]
  %v1983 = vld [vmem:[%s1 + $0x3c90] sm:$0xff]
  %v1984 = vld [vmem:[%s1 + $0x3c98] sm:$0xff]
  %v1985 = vld [vmem:[%s1 + $0x3ca0] sm:$0xff]
  %v1986 = vld [vmem:[%s1 + $0x3ca8] sm:$0xff]
  %v1987 = vld [vmem:[%s1 + $0x3cb0] sm:$0xff]
  %v1988 = vld [vmem:[%s1 + $0x3cb8] sm:$0xff]
  %v1989 = vld [vmem:[%s1 + $0x3cc0] sm:$0xff]
  %v1990 = vld [vmem:[%s1 + $0x3cc8] sm:$0xff]
  %v1991 = vld [vmem:[%s1 + $0x3cd0] sm:$0xff]
  %v1992 = vld [vmem:[%s1 + $0x3cd8] sm:$0xff]
  %v1993 = vld [vmem:[%s1 + $0x3ce0] sm:$0xff]
  %v1994 = vld [vmem:[%s1 + $0x3ce8] sm:$0xff]
  %v1995 = vld [vmem:[%s1 + $0x3cf0] sm:$0xff]
  %v1996 = vld [vmem:[%s1 + $0x3cf8] sm:$0xff]
  %v1997 = vld [vmem:[%s1 + $0x3d00] sm:$0xff]
  %v1998 = vld [vmem:[%s1 + $0x3d08] sm:$0xff]
  %v1999 = vld [vmem:[%s1 + $0x3d10] sm:$0xff]
  %v2000 = vld [vmem:[%s1 + $0x3d18] sm:$0xff]
  %v2001 = vld [vmem:[%s1 + $0x3d20] sm:$0xff]
  %v2002 = vld [vmem:[%s1 + $0x3d28] sm:$0xff]
  %v2003 = vld [vmem:[%s1 + $0x3d30] sm:$0xff]
  %v2004 = vld [vmem:[%s1 + $0x3d38] sm:$0xff]
  %v2005 = vld [vmem:[%s1 + $0x3d40] sm:$0xff]
  %v2006 = vld [vmem:[%s1 + $0x3d48] sm:$0xff]
  %v2007 = vld [vmem:[%s1 + $0x3d50] sm:$0xff]
  %v2008 = vld [vmem:[%s1 + $0x3d58] sm:$0xff]
  %v2009 = vld [vmem:[%s1 + $0x3d60] sm:$0xff]
  %v2010 = vld [vmem:[%s1 + $0x3d68] sm:$0xff]
  %v2011 = vld [vmem:[%s1 + $0x3d70] sm:$0xff]
  %v2012 = vld [vmem:[%s1 + $0x3d78] sm:$0xff]
  %v2013 = vld [vmem:[%s1 + $0x3d80] sm:$0xff]
  %v2014 = vld [vmem:[%s1 + $0x3d88] sm:$0xff]
  %v2015 = vld [vmem:[%s1 + $0x3d90] sm:$0xff]
  %v2016 = vld [vmem:[%s1 + $0x3d98] sm:$0xff]
  %v2017 = vld [vmem:[%s1 + $0x3da0] sm:$0xff]
  %v2018 = vld [vmem:[%s1 + $0x3da8] sm:$0xff]
  %v2019 = vld [vmem:[%s1 + $0x3db0] sm:$0xff]
  %v2020 = vld [vmem:[%s1 + $0x3db8] sm:$0xff]
  %v2021 = vld [vmem:[%s1 + $0x3dc0] sm:$0xff]
  %v2022 = vld [vmem:[%s1 + $0x3dc8] sm:$0xff]
  %v2023 = vld [vmem:[%s1 + $0x3dd0] sm:$0xff]
  %v2024 = vld [vmem:[%s1 + $0x3dd8] sm:$0xff]
  %v2025 = vld [vmem:[%s1 + $0x3de0] sm:$0xff]
  %v2026 = vld [vmem:[%s1 + $0x3de8] sm:$0xff]
  %v2027 = vld [vmem:[%s1 + $0x3df0] sm:$0xff]
  %v2028 = vld [vmem:[%s1 + $0x3df8] sm:$0xff]
  %v2029 = vld [vmem:[%s1 + $0x3e00] sm:$0xff]
  %v2030 = vld [vmem:[%s1 + $0x3e08] sm:$0xff]
  %v2031 = vld [vmem:[%s1 + $0x3e10] sm:$0xff]
  %v2032 = vld [vmem:[%s1 + $0x3e18] sm:$0xff]
  %v2033 = vld [vmem:[%s1 + $0x3e20] sm:$0xff]
  %v2034 = vld [vmem:[%s1 + $0x3e28] sm:$0xff]
  %v2035 = vld [vmem:[%s1 + $0x3e30] sm:$0xff]
  %v2036 = vld [vmem:[%s1 + $0x3e38] sm:$0xff]
  %v2037 = vld [vmem:[%s1 + $0x3e40] sm:$0xff]
  %v2038 = vld [vmem:[%s1 + $0x3e48] sm:$0xff]
  %v2039 = vld [vmem:[%s1 + $0x3e50] sm:$0xff]
  %v2040 = vld [vmem:[%s1 + $0x3e58] sm:$0xff]
  %v2041 = vld [vmem:[%s1 + $0x3e60] sm:$0xff]
  %v2042 = vld [vmem:[%s1 + $0x3e68] sm:$0xff]
  %v2043 = vld [vmem:[%s1 + $0x3e70] sm:$0xff]
  %v2044 = vld [vmem:[%s1 + $0x3e78] sm:$0xff]
  %v2045 = vld [vmem:[%s1 + $0x3e80] sm:$0xff]
  %v2046 = vld [vmem:[%s1 + $0x3e88] sm:$0xff]
  %v2047 = vld [vmem:[%s1 + $0x3e90] sm:$0xff]
  %v2048 = vld [vmem:[%s1 + $0x3e98] sm:$0xff]
  %v2049 = vld [vmem:[%s1 + $0x3ea0] sm:$0xff]
  %v2050 = vld [vmem:[%s1 + $0x3ea8] sm:$0xff]
  %v2051 = vld [vmem:[%s1 + $0x3eb0] sm:$0xff]
  %v2052 = vld [vmem:[%s1 + $0x3eb8] sm:$0xff]
  %v2053 = vld [vmem:[%s1 + $0x3ec0] sm:$0xff]
  %v2054 = vld [vmem:[%s1 + $0x3ec8] sm:$0xff]
  %v2055 = vld [vmem:[%s1 + $0x3ed0] sm:$0xff]
  %v2056 = vld [vmem:[%s1 + $0x3ed8] sm:$0xff]
  %v2057 = vld [vmem:[%s1 + $0x3ee0] sm:$0xff]
  %v2058 = vld [vmem:[%s1 + $0x3ee8] sm:$0xff]
  %v2059 = vld [vmem:[%s1 + $0x3ef0] sm:$0xff]
  %v2060 = vld [vmem:[%s1 + $0x3ef8] sm:$0xff]
  %v2061 = vld [vmem:[%s1 + $0x3f00] sm:$0xff]
  %v2062 = vld [vmem:[%s1 + $0x3f08] sm:$0xff]
  %v2063 = vld [vmem:[%s1 + $0x3f10] sm:$0xff]
  %v2064 = vld [vmem:[%s1 + $0x3f18] sm:$0xff]
  %v2065 = vld [vmem:[%s1 + $0x3f20] sm:$0xff]
  %v2066 = vld [vmem:[%s1 + $0x3f28] sm:$0xff]
  %v2067 = vld [vmem:[%s1 + $0x3f30] sm:$0xff]
  %v2068 = vld [vmem:[%s1 + $0x3f38] sm:$0xff]
  %v2069 = vld [vmem:[%s1 + $0x3f40] sm:$0xff]
  %v2070 = vld [vmem:[%s1 + $0x3f48] sm:$0xff]
  %v2071 = vld [vmem:[%s1 + $0x3f50] sm:$0xff]
  %v2072 = vld [vmem:[%s1 + $0x3f58] sm:$0xff]
  %v2073 = vld [vmem:[%s1 + $0x3f60] sm:$0xff]
  %v2074 = vld [vmem:[%s1 + $0x3f68] sm:$0xff]
  %v2075 = vld [vmem:[%s1 + $0x3f70] sm:$0xff]
  %v2076 = vld [vmem:[%s1 + $0x3f78] sm:$0xff]
  %v2077 = vld [vmem:[%s1 + $0x3f80] sm:$0xff]
  %v2078 = vld [vmem:[%s1 + $0x3f88] sm:$0xff]
  %v2079 = vld [vmem:[%s1 + $0x3f90] sm:$0xff]
  %v2080 = vld [vmem:[%s1 + $0x3f98] sm:$0xff]
  %v2081 = vld [vmem:[%s1 + $0x3fa0] sm:$0xff]
  %v2082 = vld [vmem:[%s1 + $0x3fa8] sm:$0xff]
  %v2083 = vld [vmem:[%s1 + $0x3fb0] sm:$0xff]
  %v2084 = vld [vmem:[%s1 + $0x3fb8] sm:$0xff]
  %v2085 = vld [vmem:[%s1 + $0x3fc0] sm:$0xff]
  %v2086 = vld [vmem:[%s1 + $0x3fc8] sm:$0xff]
  %v2087 = vld [vmem:[%s1 + $0x3fd0] sm:$0xff]
  %v2088 = vld [vmem:[%s1 + $0x3fd8] sm:$0xff]
  %v2089 = vld [vmem:[%s1 + $0x3fe0] sm:$0xff]
  %v2090 = vld [vmem:[%s1 + $0x3fe8] sm:$0xff]
  %v2091 = vld [vmem:[%s1 + $0x3ff0] sm:$0xff]
  %v2092 = vld [vmem:[%s1 + $0x3ff8] sm:$0xff]
  %v2093 = vld [vmem:[%s1 + $0x4000] sm:$0xff]
  %v2094 = vld [vmem:[%s1 + $0x4008] sm:$0xff]
  %v2095 = vld [vmem:[%s1 + $0x4010] sm:$0xff]
  %v2096 = vld [vmem:[%s1 + $0x4018] sm:$0xff]
  %v2097 = vld [vmem:[%s1 + $0x4020] sm:$0xff]
  %v2098 = vld [vmem:[%s1 + $0x4028] sm:$0xff]
  %v2099 = vld [vmem:[%s1 + $0x4030] sm:$0xff]
  %v2100 = vld [vmem:[%s1 + $0x4038] sm:$0xff]
  %v2101 = vld [vmem:[%s1 + $0x4040] sm:$0xff]
  %v2102 = vld [vmem:[%s1 + $0x4048] sm:$0xff]
  %v2103 = vld [vmem:[%s1 + $0x4050] sm:$0xff]
  %v2104 = vld [vmem:[%s1 + $0x4058] sm:$0xff]
  %v2105 = vld [vmem:[%s1 + $0x4060] sm:$0xff]
  %v2106 = vld [vmem:[%s1 + $0x4068] sm:$0xff]
  %v2107 = vld [vmem:[%s1 + $0x4070] sm:$0xff]
  %v2108 = vld [vmem:[%s1 + $0x4078] sm:$0xff]
  %v2109 = vld [vmem:[%s1 + $0x4080] sm:$0xff]
  %v2110 = vld [vmem:[%s1 + $0x4088] sm:$0xff]
  %v2111 = vld [vmem:[%s1 + $0x4090] sm:$0xff]
  %v2112 = vld [vmem:[%s1 + $0x4098] sm:$0xff]
  %v2113 = vld [vmem:[%s1 + $0x40a0] sm:$0xff]
  %v2114 = vld [vmem:[%s1 + $0x40a8] sm:$0xff]
  %v2115 = vld [vmem:[%s1 + $0x40b0] sm:$0xff]
  %v2116 = vld [vmem:[%s1 + $0x40b8] sm:$0xff]
  %v2117 = vld [vmem:[%s1 + $0x40c0] sm:$0xff]
  %v2118 = vld [vmem:[%s1 + $0x40c8] sm:$0xff]
  %v2119 = vld [vmem:[%s1 + $0x40d0] sm:$0xff]
  %v2120 = vld [vmem:[%s1 + $0x40d8] sm:$0xff]
  %v2121 = vld [vmem:[%s1 + $0x40e0] sm:$0xff]
  %v2122 = vld [vmem:[%s1 + $0x40e8] sm:$0xff]
  %v2123 = vld [vmem:[%s1 + $0x40f0] sm:$0xff]
  %v2124 = vld [vmem:[%s1 + $0x40f8] sm:$0xff]
  %v2125 = vld [vmem:[%s1 + $0x4100] sm:$0xff]
  %v2126 = vld [vmem:[%s1 + $0x4108] sm:$0xff]
  %v2127 = vld [vmem:[%s1 + $0x4110] sm:$0xff]
  %v2128 = vld [vmem:[%s1 + $0x4118] sm:$0xff]
  %v2129 = vld [vmem:[%s1 + $0x4120] sm:$0xff]
  %v2130 = vld [vmem:[%s1 + $0x4128] sm:$0xff]
  %v2131 = vld [vmem:[%s1 + $0x4130] sm:$0xff]
  %v2132 = vld [vmem:[%s1 + $0x4138] sm:$0xff]
  %v2133 = vld [vmem:[%s1 + $0x4140] sm:$0xff]
  %v2134 = vld [vmem:[%s1 + $0x4148] sm:$0xff]
  %v2135 = vld [vmem:[%s1 + $0x4150] sm:$0xff]
  %v2136 = vld [vmem:[%s1 + $0x4158] sm:$0xff]
  %v2137 = vld [vmem:[%s1 + $0x4160] sm:$0xff]
  %v2138 = vld [vmem:[%s1 + $0x4168] sm:$0xff]
  %v2139 = vld [vmem:[%s1 + $0x4170] sm:$0xff]
  %v2140 = vld [vmem:[%s1 + $0x4178] sm:$0xff]
  %v2141 = vld [vmem:[%s1 + $0x4180] sm:$0xff]
  %v2142 = vld [vmem:[%s1 + $0x4188] sm:$0xff]
  %v2143 = vld [vmem:[%s1 + $0x4190] sm:$0xff]
  %v2144 = vld [vmem:[%s1 + $0x4198] sm:$0xff]
  %v2145 = vld [vmem:[%s1 + $0x41a0] sm:$0xff]
  %v2146 = vld [vmem:[%s1 + $0x41a8] sm:$0xff]
  %v2147 = vld [vmem:[%s1 + $0x41b0] sm:$0xff]
  %v2148 = vld [vmem:[%s1 + $0x41b8] sm:$0xff]
  %v2149 = vld [vmem:[%s1 + $0x41c0] sm:$0xff]
  %v2150 = vld [vmem:[%s1 + $0x41c8] sm:$0xff]
  %v2151 = vld [vmem:[%s1 + $0x41d0] sm:$0xff]
  %v2152 = vld [vmem:[%s1 + $0x41d8] sm:$0xff]
  %v2153 = vld [vmem:[%s1 + $0x41e0] sm:$0xff]
  %v2154 = vld [vmem:[%s1 + $0x41e8] sm:$0xff]
  %v2155 = vld [vmem:[%s1 + $0x41f0] sm:$0xff]
  %v2156 = vld [vmem:[%s1 + $0x41f8] sm:$0xff]
  %v2157 = vld [vmem:[%s1 + $0x4200] sm:$0xff]
  %v2158 = vld [vmem:[%s1 + $0x4208] sm:$0xff]
  %v2159 = vld [vmem:[%s1 + $0x4210] sm:$0xff]
  %v2160 = vld [vmem:[%s1 + $0x4218] sm:$0xff]
  %v2161 = vld [vmem:[%s1 + $0x4220] sm:$0xff]
  %v2162 = vld [vmem:[%s1 + $0x4228] sm:$0xff]
  %v2163 = vld [vmem:[%s1 + $0x4230] sm:$0xff]
  %v2164 = vld [vmem:[%s1 + $0x4238] sm:$0xff]
  %v2165 = vld [vmem:[%s1 + $0x4240] sm:$0xff]
  %v2166 = vld [vmem:[%s1 + $0x4248] sm:$0xff]
  %v2167 = vld [vmem:[%s1 + $0x4250] sm:$0xff]
  %v2168 = vld [vmem:[%s1 + $0x4258] sm:$0xff]
  %v2169 = vld [vmem:[%s1 + $0x4260] sm:$0xff]
  %v2170 = vld [vmem:[%s1 + $0x4268] sm:$0xff]
  %v2171 = vld [vmem:[%s1 + $0x4270] sm:$0xff]
  %v2172 = vld [vmem:[%s1 + $0x4278] sm:$0xff]
  %v2173 = vld [vmem:[%s1 + $0x4280] sm:$0xff]
  %v2174 = vld [vmem:[%s1 + $0x4288] sm:$0xff]
  %v2175 = vld [vmem:[%s1 + $0x4290] sm:$0xff]
  %v2176 = vld [vmem:[%s1 + $0x4298] sm:$0xff]
  %v2177 = vld [vmem:[%s1 + $0x42a0] sm:$0xff]
  %v2178 = vld [vmem:[%s1 + $0x42a8] sm:$0xff]
  %v2179 = vld [vmem:[%s1 + $0x42b0] sm:$0xff]
  %v2180 = vld [vmem:[%s1 + $0x42b8] sm:$0xff]
  %v2181 = vld [vmem:[%s1 + $0x42c0] sm:$0xff]
  %v2182 = vld [vmem:[%s1 + $0x42c8] sm:$0xff]
  %v2183 = vld [vmem:[%s1 + $0x42d0] sm:$0xff]
  %v2184 = vld [vmem:[%s1 + $0x42d8] sm:$0xff]
  %v2185 = vld [vmem:[%s1 + $0x42e0] sm:$0xff]
  %v2186 = vld [vmem:[%s1 + $0x42e8] sm:$0xff]
  %v2187 = vld [vmem:[%s1 + $0x42f0] sm:$0xff]
  %v2188 = vld [vmem:[%s1 + $0x42f8] sm:$0xff]
  %v2189 = vld [vmem:[%s1 + $0x4300] sm:$0xff]
  %v2190 = vld [vmem:[%s1 + $0x4308] sm:$0xff]
  %v2191 = vld [vmem:[%s1 + $0x4310] sm:$0xff]
  %v2192 = vld [vmem:[%s1 + $0x4318] sm:$0xff]
  %v2193 = vld [vmem:[%s1 + $0x4320] sm:$0xff]
  %v2194 = vld [vmem:[%s1 + $0x4328] sm:$0xff]
  %v2195 = vld [vmem:[%s1 + $0x4330] sm:$0xff]
  %v2196 = vld [vmem:[%s1 + $0x4338] sm:$0xff]
  %v2197 = vld [vmem:[%s1 + $0x4340] sm:$0xff]
  %v2198 = vld [vmem:[%s1 + $0x4348] sm:$0xff]
  %v2199 = vld [vmem:[%s1 + $0x4350] sm:$0xff]
  %v2200 = vld [vmem:[%s1 + $0x4358] sm:$0xff]
  %v2201 = vld [vmem:[%s1 + $0x4360] sm:$0xff]
  %v2202 = vld [vmem:[%s1 + $0x4368] sm:$0xff]
  %v2203 = vld [vmem:[%s1 + $0x4370] sm:$0xff]
  %v2204 = vld [vmem:[%s1 + $0x4378] sm:$0xff]
  %v2205 = vld [vmem:[%s1 + $0x4380] sm:$0xff]
  %v2206 = vld [vmem:[%s1 + $0x4388] sm:$0xff]
  %v2207 = vld [vmem:[%s1 + $0x4390] sm:$0xff]
  %v2208 = vld [vmem:[%s1 + $0x4398] sm:$0xff]
  %v2209 = vld [vmem:[%s1 + $0x43a0] sm:$0xff]
  %v2210 = vld [vmem:[%s1 + $0x43a8] sm:$0xff]
  %v2211 = vld [vmem:[%s1 + $0x43b0] sm:$0xff]
  %v2212 = vld [vmem:[%s1 + $0x43b8] sm:$0xff]
  %v2213 = vld [vmem:[%s1 + $0x43c0] sm:$0xff]
  %v2214 = vld [vmem:[%s1 + $0x43c8] sm:$0xff]
  %v2215 = vld [vmem:[%s1 + $0x43d0] sm:$0xff]
  %v2216 = vld [vmem:[%s1 + $0x43d8] sm:$0xff]
  %v2217 = vld [vmem:[%s1 + $0x43e0] sm:$0xff]
  %v2218 = vld [vmem:[%s1 + $0x43e8] sm:$0xff]
  %v2219 = vld [vmem:[%s1 + $0x43f0] sm:$0xff]
  %v2220 = vld [vmem:[%s1 + $0x43f8] sm:$0xff]
  %v2221 = vld [vmem:[%s1 + $0x4400] sm:$0xff]
  %v2222 = vld [vmem:[%s1 + $0x4408] sm:$0xff]
  %v2223 = vld [vmem:[%s1 + $0x4410] sm:$0xff]
  %v2224 = vld [vmem:[%s1 + $0x4418] sm:$0xff]
  %v2225 = vld [vmem:[%s1 + $0x4420] sm:$0xff]
  %v2226 = vld [vmem:[%s1 + $0x4428] sm:$0xff]
  %v2227 = vld [vmem:[%s1 + $0x4430] sm:$0xff]
  %v2228 = vld [vmem:[%s1 + $0x4438] sm:$0xff]
  %v2229 = vld [vmem:[%s1 + $0x4440] sm:$0xff]
  %v2230 = vld [vmem:[%s1 + $0x4448] sm:$0xff]
  %v2231 = vld [vmem:[%s1 + $0x4450] sm:$0xff]
  %v2232 = vld [vmem:[%s1 + $0x4458] sm:$0xff]
  %v2233 = vld [vmem:[%s1 + $0x4460] sm:$0xff]
  %v2234 = vld [vmem:[%s1 + $0x4468] sm:$0xff]
  %v2235 = vld [vmem:[%s1 + $0x4470] sm:$0xff]
  %v2236 = vld [vmem:[%s1 + $0x4478] sm:$0xff]
  %v2237 = vld [vmem:[%s1 + $0x4480] sm:$0xff]
  %v2238 = vld [vmem:[%s1 + $0x4488] sm:$0xff]
  %v2239 = vld [vmem:[%s1 + $0x4490] sm:$0xff]
  %v2240 = vld [vmem:[%s1 + $0x4498] sm:$0xff]
  %v2241 = vld [vmem:[%s1 + $0x44a0] sm:$0xff]
  %v2242 = vld [vmem:[%s1 + $0x44a8] sm:$0xff]
  %v2243 = vld [vmem:[%s1 + $0x44b0] sm:$0xff]
  %v2244 = vld [vmem:[%s1 + $0x44b8] sm:$0xff]
  %v2245 = vld [vmem:[%s1 + $0x44c0] sm:$0xff]
  %v2246 = vld [vmem:[%s1 + $0x44c8] sm:$0xff]
  %v2247 = vld [vmem:[%s1 + $0x44d0] sm:$0xff]
  %v2248 = vld [vmem:[%s1 + $0x44d8] sm:$0xff]
  %v2249 = vld [vmem:[%s1 + $0x44e0] sm:$0xff]
  %v2250 = vld [vmem:[%s1 + $0x44e8] sm:$0xff]
  %v2251 = vld [vmem:[%s1 + $0x44f0] sm:$0xff]
  %v2252 = vld [vmem:[%s1 + $0x44f8] sm:$0xff]
  %v2253 = vld [vmem:[%s1 + $0x4500] sm:$0xff]
  %v2254 = vld [vmem:[%s1 + $0x4508] sm:$0xff]
  %v2255 = vld [vmem:[%s1 + $0x4510] sm:$0xff]
  %v2256 = vld [vmem:[%s1 + $0x4518] sm:$0xff]
  %v2257 = vld [vmem:[%s1 + $0x4520] sm:$0xff]
  %v2258 = vld [vmem:[%s1 + $0x4528] sm:$0xff]
  %v2259 = vld [vmem:[%s1 + $0x4530] sm:$0xff]
  %v2260 = vld [vmem:[%s1 + $0x4538] sm:$0xff]
  %v2261 = vld [vmem:[%s1 + $0x4540] sm:$0xff]
  %v2262 = vld [vmem:[%s1 + $0x4548] sm:$0xff]
  %v2263 = vld [vmem:[%s1 + $0x4550] sm:$0xff]
  %v2264 = vld [vmem:[%s1 + $0x4558] sm:$0xff]
  %v2265 = vld [vmem:[%s1 + $0x4560] sm:$0xff]
  %v2266 = vld [vmem:[%s1 + $0x4568] sm:$0xff]
  %v2267 = vld [vmem:[%s1 + $0x4570] sm:$0xff]
  %v2268 = vld [vmem:[%s1 + $0x4578] sm:$0xff]
  %v2269 = vld [vmem:[%s1 + $0x4580] sm:$0xff]
  %v2270 = vld [vmem:[%s1 + $0x4588] sm:$0xff]
  %v2271 = vld [vmem:[%s1 + $0x4590] sm:$0xff]
  %v2272 = vld [vmem:[%s1 + $0x4598] sm:$0xff]
  %v2273 = vld [vmem:[%s1 + $0x45a0] sm:$0xff]
  %v2274 = vld [vmem:[%s1 + $0x45a8] sm:$0xff]
  %v2275 = vld [vmem:[%s1 + $0x45b0] sm:$0xff]
  %v2276 = vld [vmem:[%s1 + $0x45b8] sm:$0xff]
  %v2277 = vld [vmem:[%s1 + $0x45c0] sm:$0xff]
  %v2278 = vld [vmem:[%s1 + $0x45c8] sm:$0xff]
  %v2279 = vld [vmem:[%s1 + $0x45d0] sm:$0xff]
  %v2280 = vld [vmem:[%s1 + $0x45d8] sm:$0xff]
  %v2281 = vld [vmem:[%s1 + $0x45e0] sm:$0xff]
  %v2282 = vld [vmem:[%s1 + $0x45e8] sm:$0xff]
  %v2283 = vld [vmem:[%s1 + $0x45f0] sm:$0xff]
  %v2284 = vld [vmem:[%s1 + $0x45f8] sm:$0xff]
  %v2285 = vld [vmem:[%s1 + $0x4600] sm:$0xff]
  %v2286 = vld [vmem:[%s1 + $0x4608] sm:$0xff]
  %v2287 = vld [vmem:[%s1 + $0x4610] sm:$0xff]
  %v2288 = vld [vmem:[%s1 + $0x4618] sm:$0xff]
  %v2289 = vld [vmem:[%s1 + $0x4620] sm:$0xff]
  %v2290 = vld [vmem:[%s1 + $0x4628] sm:$0xff]
  %v2291 = vld [vmem:[%s1 + $0x4630] sm:$0xff]
  %v2292 = vld [vmem:[%s1 + $0x4638] sm:$0xff]
  %v2293 = vld [vmem:[%s1 + $0x4640] sm:$0xff]
  %v2294 = vld [vmem:[%s1 + $0x4648] sm:$0xff]
  %v2295 = vld [vmem:[%s1 + $0x4650] sm:$0xff]
  %v2296 = vld [vmem:[%s1 + $0x4658] sm:$0xff]
  %v2297 = vld [vmem:[%s1 + $0x4660] sm:$0xff]
  %v2298 = vld [vmem:[%s1 + $0x4668] sm:$0xff]
  %v2299 = vld [vmem:[%s1 + $0x4670] sm:$0xff]
  %v2300 = vld [vmem:[%s1 + $0x4678] sm:$0xff]
  %v2301 = vld [vmem:[%s1 + $0x4680] sm:$0xff]
  %v2302 = vld [vmem:[%s1 + $0x4688] sm:$0xff]
  %v2303 = vld [vmem:[%s1 + $0x4690] sm:$0xff]
  %v2304 = vld [vmem:[%s1 + $0x4698] sm:$0xff]
  %v2305 = vld [vmem:[%s1 + $0x46a0] sm:$0xff]
  %v2306 = vld [vmem:[%s1 + $0x46a8] sm:$0xff]
  %v2307 = vld [vmem:[%s1 + $0x46b0] sm:$0xff]
  %v2308 = vld [vmem:[%s1 + $0x46b8] sm:$0xff]
  %v2309 = vld [vmem:[%s1 + $0x46c0] sm:$0xff]
  %v2310 = vld [vmem:[%s1 + $0x46c8] sm:$0xff]
  %v2311 = vld [vmem:[%s1 + $0x46d0] sm:$0xff]
  %v2312 = vld [vmem:[%s1 + $0x46d8] sm:$0xff]
  %v2313 = vld [vmem:[%s1 + $0x46e0] sm:$0xff]
  %v2314 = vld [vmem:[%s1 + $0x46e8] sm:$0xff]
  %v2315 = vld [vmem:[%s1 + $0x46f0] sm:$0xff]
  %v2316 = vld [vmem:[%s1 + $0x46f8] sm:$0xff]
  %v2317 = vld [vmem:[%s1 + $0x4700] sm:$0xff]
  %v2318 = vld [vmem:[%s1 + $0x4708] sm:$0xff]
  %v2319 = vld [vmem:[%s1 + $0x4710] sm:$0xff]
  %v2320 = vld [vmem:[%s1 + $0x4718] sm:$0xff]
  %v2321 = vld [vmem:[%s1 + $0x4720] sm:$0xff]
  %v2322 = vld [vmem:[%s1 + $0x4728] sm:$0xff]
  %v2323 = vld [vmem:[%s1 + $0x4730] sm:$0xff]
  %v2324 = vld [vmem:[%s1 + $0x4738] sm:$0xff]
  %v2325 = vld [vmem:[%s1 + $0x4740] sm:$0xff]
  %v2326 = vld [vmem:[%s1 + $0x4748] sm:$0xff]
  %v2327 = vld [vmem:[%s1 + $0x4750] sm:$0xff]
  %v2328 = vld [vmem:[%s1 + $0x4758] sm:$0xff]
  %v2329 = vld [vmem:[%s1 + $0x4760] sm:$0xff]
  %v2330 = vld [vmem:[%s1 + $0x4768] sm:$0xff]
  %v2331 = vld [vmem:[%s1 + $0x4770] sm:$0xff]
  %v2332 = vld [vmem:[%s1 + $0x4778] sm:$0xff]
  %v2333 = vld [vmem:[%s1 + $0x4780] sm:$0xff]
  %v2334 = vld [vmem:[%s1 + $0x4788] sm:$0xff]
  %v2335 = vld [vmem:[%s1 + $0x4790] sm:$0xff]
  %v2336 = vld [vmem:[%s1 + $0x4798] sm:$0xff]
  %v2337 = vld [vmem:[%s1 + $0x47a0] sm:$0xff]
  %v2338 = vld [vmem:[%s1 + $0x47a8] sm:$0xff]
  %v2339 = vld [vmem:[%s1 + $0x47b0] sm:$0xff]
  %v2340 = vld [vmem:[%s1 + $0x47b8] sm:$0xff]
  %v2341 = vld [vmem:[%s1 + $0x47c0] sm:$0xff]
  %v2342 = vld [vmem:[%s1 + $0x47c8] sm:$0xff]
  %v2343 = vld [vmem:[%s1 + $0x47d0] sm:$0xff]
  %v2344 = vld [vmem:[%s1 + $0x47d8] sm:$0xff]
  %v2345 = vld [vmem:[%s1 + $0x47e0] sm:$0xff]
  %v2346 = vld [vmem:[%s1 + $0x47e8] sm:$0xff]
  %v2347 = vld [vmem:[%s1 + $0x47f0] sm:$0xff]
  %v2348 = vld [vmem:[%s1 + $0x47f8] sm:$0xff]
  %v2349 = vld [vmem:[%s1 + $0x4800] sm:$0xff]
  %v2350 = vld [vmem:[%s1 + $0x4808] sm:$0xff]
  %v2351 = vld [vmem:[%s1 + $0x4810] sm:$0xff]
  %v2352 = vld [vmem:[%s1 + $0x4818] sm:$0xff]
  %v2353 = vld [vmem:[%s1 + $0x4820] sm:$0xff]
  %v2354 = vld [vmem:[%s1 + $0x4828] sm:$0xff]
  %v2355 = vld [vmem:[%s1 + $0x4830] sm:$0xff]
  %v2356 = vld [vmem:[%s1 + $0x4838] sm:$0xff]
  %v2357 = vld [vmem:[%s1 + $0x4840] sm:$0xff]
  %v2358 = vld [vmem:[%s1 + $0x4848] sm:$0xff]
  %v2359 = vld [vmem:[%s1 + $0x4850] sm:$0xff]
  %v2360 = vld [vmem:[%s1 + $0x4858] sm:$0xff]
  %v2361 = vld [vmem:[%s1 + $0x4860] sm:$0xff]
  %v2362 = vld [vmem:[%s1 + $0x4868] sm:$0xff]
  %v2363 = vld [vmem:[%s1 + $0x4870] sm:$0xff]
  %v2364 = vld [vmem:[%s1 + $0x4878] sm:$0xff]
  %v2365 = vld [vmem:[%s1 + $0x4880] sm:$0xff]
  %v2366 = vld [vmem:[%s1 + $0x4888] sm:$0xff]
  %v2367 = vld [vmem:[%s1 + $0x4890] sm:$0xff]
  %v2368 = vld [vmem:[%s1 + $0x4898] sm:$0xff]
  %v2369 = vld [vmem:[%s1 + $0x48a0] sm:$0xff]
  %v2370 = vld [vmem:[%s1 + $0x48a8] sm:$0xff]
  %v2371 = vld [vmem:[%s1 + $0x48b0] sm:$0xff]
  %v2372 = vld [vmem:[%s1 + $0x48b8] sm:$0xff]
  %v2373 = vld [vmem:[%s1 + $0x48c0] sm:$0xff]
  %v2374 = vld [vmem:[%s1 + $0x48c8] sm:$0xff]
  %v2375 = vld [vmem:[%s1 + $0x48d0] sm:$0xff]
  %v2376 = vld [vmem:[%s1 + $0x48d8] sm:$0xff]
  %v2377 = vld [vmem:[%s1 + $0x48e0] sm:$0xff]
  %v2378 = vld [vmem:[%s1 + $0x48e8] sm:$0xff]
  %v2379 = vld [vmem:[%s1 + $0x48f0] sm:$0xff]
  %v2380 = vld [vmem:[%s1 + $0x48f8] sm:$0xff]
  %v2381 = vld [vmem:[%s1 + $0x4900] sm:$0xff]
  %v2382 = vld [vmem:[%s1 + $0x4908] sm:$0xff]
  %v2383 = vld [vmem:[%s1 + $0x4910] sm:$0xff]
  %v2384 = vld [vmem:[%s1 + $0x4918] sm:$0xff]
  %v2385 = vld [vmem:[%s1 + $0x4920] sm:$0xff]
  %v2386 = vld [vmem:[%s1 + $0x4928] sm:$0xff]
  %v2387 = vld [vmem:[%s1 + $0x4930] sm:$0xff]
  %v2388 = vld [vmem:[%s1 + $0x4938] sm:$0xff]
  %v2389 = vld [vmem:[%s1 + $0x4940] sm:$0xff]
  %v2390 = vld [vmem:[%s1 + $0x4948] sm:$0xff]
  %v2391 = vld [vmem:[%s1 + $0x4950] sm:$0xff]
  %v2392 = vld [vmem:[%s1 + $0x4958] sm:$0xff]
  %v2393 = vld [vmem:[%s1 + $0x4960] sm:$0xff]
  %v2394 = vld [vmem:[%s1 + $0x4968] sm:$0xff]
  %v2395 = vld [vmem:[%s1 + $0x4970] sm:$0xff]
  %v2396 = vld [vmem:[%s1 + $0x4978] sm:$0xff]
  %v2397 = vld [vmem:[%s1 + $0x4980] sm:$0xff]
  %v2398 = vld [vmem:[%s1 + $0x4988] sm:$0xff]
  %v2399 = vld [vmem:[%s1 + $0x4990] sm:$0xff]
  %v2400 = vld [vmem:[%s1 + $0x4998] sm:$0xff]
  %v2401 = vld [vmem:[%s1 + $0x49a0] sm:$0xff]
  %v2402 = vld [vmem:[%s1 + $0x49a8] sm:$0xff]
  %v2403 = vld [vmem:[%s1 + $0x49b0] sm:$0xff]
  %v2404 = vld [vmem:[%s1 + $0x49b8] sm:$0xff]
  %v2405 = vld [vmem:[%s1 + $0x49c0] sm:$0xff]
  %v2406 = vld [vmem:[%s1 + $0x49c8] sm:$0xff]
  %v2407 = vld [vmem:[%s1 + $0x49d0] sm:$0xff]
  %v2408 = vld [vmem:[%s1 + $0x49d8] sm:$0xff]
  %v2409 = vld [vmem:[%s1 + $0x49e0] sm:$0xff]
  %v2410 = vld [vmem:[%s1 + $0x49e8] sm:$0xff]
  %v2411 = vld [vmem:[%s1 + $0x49f0] sm:$0xff]
  %v2412 = vld [vmem:[%s1 + $0x49f8] sm:$0xff]
  %v2413 = vld [vmem:[%s1 + $0x4a00] sm:$0xff]
  %v2414 = vld [vmem:[%s1 + $0x4a08] sm:$0xff]
  %v2415 = vld [vmem:[%s1 + $0x4a10] sm:$0xff]
  %v2416 = vld [vmem:[%s1 + $0x4a18] sm:$0xff]
  %v2417 = vld [vmem:[%s1 + $0x4a20] sm:$0xff]
  %v2418 = vld [vmem:[%s1 + $0x4a28] sm:$0xff]
  %v2419 = vld [vmem:[%s1 + $0x4a30] sm:$0xff]
  %v2420 = vld [vmem:[%s1 + $0x4a38] sm:$0xff]
  %v2421 = vld [vmem:[%s1 + $0x4a40] sm:$0xff]
  %v2422 = vld [vmem:[%s1 + $0x4a48] sm:$0xff]
  %v2423 = vld [vmem:[%s1 + $0x4a50] sm:$0xff]
  %v2424 = vld [vmem:[%s1 + $0x4a58] sm:$0xff]
  %v2425 = vld [vmem:[%s1 + $0x4a60] sm:$0xff]
  %v2426 = vld [vmem:[%s1 + $0x4a68] sm:$0xff]
  %v2427 = vld [vmem:[%s1 + $0x4a70] sm:$0xff]
  %v2428 = vld [vmem:[%s1 + $0x4a78] sm:$0xff]
  %v2429 = vld [vmem:[%s1 + $0x4a80] sm:$0xff]
  %v2430 = vld [vmem:[%s1 + $0x4a88] sm:$0xff]
  %v2431 = vld [vmem:[%s1 + $0x4a90] sm:$0xff]
  %v2432 = vld [vmem:[%s1 + $0x4a98] sm:$0xff]
  %v2433 = vld [vmem:[%s1 + $0x4aa0] sm:$0xff]
  %v2434 = vld [vmem:[%s1 + $0x4aa8] sm:$0xff]
  %v2435 = vld [vmem:[%s1 + $0x4ab0] sm:$0xff]
  %v2436 = vld [vmem:[%s1 + $0x4ab8] sm:$0xff]
  %v2437 = vld [vmem:[%s1 + $0x4ac0] sm:$0xff]
  %v2438 = vld [vmem:[%s1 + $0x4ac8] sm:$0xff]
  %v2439 = vld [vmem:[%s1 + $0x4ad0] sm:$0xff]
  %v2440 = vld [vmem:[%s1 + $0x4ad8] sm:$0xff]
  %v2441 = vld [vmem:[%s1 + $0x4ae0] sm:$0xff]
  %v2442 = vld [vmem:[%s1 + $0x4ae8] sm:$0xff]
  %v2443 = vld [vmem:[%s1 + $0x4af0] sm:$0xff]
  %v2444 = vld [vmem:[%s1 + $0x4af8] sm:$0xff]
  %v2445 = vld [vmem:[%s1 + $0x4b00] sm:$0xff]
  %v2446 = vld [vmem:[%s1 + $0x4b08] sm:$0xff]
  %v2447 = vld [vmem:[%s1 + $0x4b10] sm:$0xff]
  %v2448 = vld [vmem:[%s1 + $0x4b18] sm:$0xff]
  %v2449 = vld [vmem:[%s1 + $0x4b20] sm:$0xff]
  %v2450 = vld [vmem:[%s1 + $0x4b28] sm:$0xff]
  %v2451 = vld [vmem:[%s1 + $0x4b30] sm:$0xff]
  %v2452 = vld [vmem:[%s1 + $0x4b38] sm:$0xff]
  %v2453 = vld [vmem:[%s1 + $0x4b40] sm:$0xff]
  %v2454 = vld [vmem:[%s1 + $0x4b48] sm:$0xff]
  %v2455 = vld [vmem:[%s1 + $0x4b50] sm:$0xff]
  %v2456 = vld [vmem:[%s1 + $0x4b58] sm:$0xff]
  %v2457 = vld [vmem:[%s1 + $0x4b60] sm:$0xff]
  %v2458 = vld [vmem:[%s1 + $0x4b68] sm:$0xff]
  %v2459 = vld [vmem:[%s1 + $0x4b70] sm:$0xff]
  %v2460 = vld [vmem:[%s1 + $0x4b78] sm:$0xff]
  %v2461 = vld [vmem:[%s1 + $0x4b80] sm:$0xff]
  %v2462 = vld [vmem:[%s1 + $0x4b88] sm:$0xff]
  %v2463 = vld [vmem:[%s1 + $0x4b90] sm:$0xff]
  %v2464 = vld [vmem:[%s1 + $0x4b98] sm:$0xff]
  %v2465 = vld [vmem:[%s1 + $0x4ba0] sm:$0xff]
  %v2466 = vld [vmem:[%s1 + $0x4ba8] sm:$0xff]
  %v2467 = vld [vmem:[%s1 + $0x4bb0] sm:$0xff]
  %v2468 = vld [vmem:[%s1 + $0x4bb8] sm:$0xff]
  %v2469 = vld [vmem:[%s1 + $0x4bc0] sm:$0xff]
  %v2470 = vld [vmem:[%s1 + $0x4bc8] sm:$0xff]
  %v2471 = vld [vmem:[%s1 + $0x4bd0] sm:$0xff]
  %v2472 = vld [vmem:[%s1 + $0x4bd8] sm:$0xff]
  %v2473 = vld [vmem:[%s1 + $0x4be0] sm:$0xff]
  %v2474 = vld [vmem:[%s1 + $0x4be8] sm:$0xff]
  %v2475 = vld [vmem:[%s1 + $0x4bf0] sm:$0xff]
  %v2476 = vld [vmem:[%s1 + $0x4bf8] sm:$0xff]
  %v2477 = vld [vmem:[%s1 + $0x4c00] sm:$0xff]
  %v2478 = vld [vmem:[%s1 + $0x4c08] sm:$0xff]
  %v2479 = vld [vmem:[%s1 + $0x4c10] sm:$0xff]
  %v2480 = vld [vmem:[%s1 + $0x4c18] sm:$0xff]
  %v2481 = vld [vmem:[%s1 + $0x4c20] sm:$0xff]
  %v2482 = vld [vmem:[%s1 + $0x4c28] sm:$0xff]
  %v2483 = vld [vmem:[%s1 + $0x4c30] sm:$0xff]
  %v2484 = vld [vmem:[%s1 + $0x4c38] sm:$0xff]
  %v2485 = vld [vmem:[%s1 + $0x4c40] sm:$0xff]
  %v2486 = vld [vmem:[%s1 + $0x4c48] sm:$0xff]
  %v2487 = vld [vmem:[%s1 + $0x4c50] sm:$0xff]
  %v2488 = vld [vmem:[%s1 + $0x4c58] sm:$0xff]
  %v2489 = vld [vmem:[%s1 + $0x4c60] sm:$0xff]
  %v2490 = vld [vmem:[%s1 + $0x4c68] sm:$0xff]
  %v2491 = vld [vmem:[%s1 + $0x4c70] sm:$0xff]
  %v2492 = vld [vmem:[%s1 + $0x4c78] sm:$0xff]
  %v2493 = vld [vmem:[%s1 + $0x4c80] sm:$0xff]
  %v2494 = vld [vmem:[%s1 + $0x4c88] sm:$0xff]
  %v2495 = vld [vmem:[%s1 + $0x4c90] sm:$0xff]
  %v2496 = vld [vmem:[%s1 + $0x4c98] sm:$0xff]
  %v2497 = vld [vmem:[%s1 + $0x4ca0] sm:$0xff]
  %v2498 = vld [vmem:[%s1 + $0x4ca8] sm:$0xff]
  %v2499 = vld [vmem:[%s1 + $0x4cb0] sm:$0xff]
  %v2500 = vld [vmem:[%s1 + $0x4cb8] sm:$0xff]
  %v2501 = vld [vmem:[%s1 + $0x4cc0] sm:$0xff]
  %v2502 = vld [vmem:[%s1 + $0x4cc8] sm:$0xff]
  %v2503 = vld [vmem:[%s1 + $0x4cd0] sm:$0xff]
  %v2504 = vld [vmem:[%s1 + $0x4cd8] sm:$0xff]
  %v2505 = vld [vmem:[%s1 + $0x4ce0] sm:$0xff]
  %v2506 = vld [vmem:[%s1 + $0x4ce8] sm:$0xff]
  %v2507 = vld [vmem:[%s1 + $0x4cf0] sm:$0xff]
  %v2508 = vld [vmem:[%s1 + $0x4cf8] sm:$0xff]
  %v2509 = vld [vmem:[%s1 + $0x4d00] sm:$0xff]
  %v2510 = vld [vmem:[%s1 + $0x4d08] sm:$0xff]
  %v2511 = vld [vmem:[%s1 + $0x4d10] sm:$0xff]
  %v2512 = vld [vmem:[%s1 + $0x4d18] sm:$0xff]
  %v2513 = vld [vmem:[%s1 + $0x4d20] sm:$0xff]
  %v2514 = vld [vmem:[%s1 + $0x4d28] sm:$0xff]
  %v2515 = vld [vmem:[%s1 + $0x4d30] sm:$0xff]
  %v2516 = vld [vmem:[%s1 + $0x4d38] sm:$0xff]
  %v2517 = vld [vmem:[%s1 + $0x4d40] sm:$0xff]
  %v2518 = vld [vmem:[%s1 + $0x4d48] sm:$0xff]
  %v2519 = vld [vmem:[%s1 + $0x4d50] sm:$0xff]
  %v2520 = vld [vmem:[%s1 + $0x4d58] sm:$0xff]
  %v2521 = vld [vmem:[%s1 + $0x4d60] sm:$0xff]
  %v2522 = vld [vmem:[%s1 + $0x4d68] sm:$0xff]
  %v2523 = vld [vmem:[%s1 + $0x4d70] sm:$0xff]
  %v2524 = vld [vmem:[%s1 + $0x4d78] sm:$0xff]
  %v2525 = vld [vmem:[%s1 + $0x4d80] sm:$0xff]
  %v2526 = vld [vmem:[%s1 + $0x4d88] sm:$0xff]
  %v2527 = vld [vmem:[%s1 + $0x4d90] sm:$0xff]
  %v2528 = vld [vmem:[%s1 + $0x4d98] sm:$0xff]
  %v2529 = vld [vmem:[%s1 + $0x4da0] sm:$0xff]
  %v2530 = vld [vmem:[%s1 + $0x4da8] sm:$0xff]
  %v2531 = vld [vmem:[%s1 + $0x4db0] sm:$0xff]
  %v2532 = vld [vmem:[%s1 + $0x4db8] sm:$0xff]
  %v2533 = vld [vmem:[%s1 + $0x4dc0] sm:$0xff]
  %v2534 = vld [vmem:[%s1 + $0x4dc8] sm:$0xff]
  %v2535 = vld [vmem:[%s1 + $0x4dd0] sm:$0xff]
  %v2536 = vld [vmem:[%s1 + $0x4dd8] sm:$0xff]
  %v2537 = vld [vmem:[%s1 + $0x4de0] sm:$0xff]
  %v2538 = vld [vmem:[%s1 + $0x4de8] sm:$0xff]
  %v2539 = vld [vmem:[%s1 + $0x4df0] sm:$0xff]
  %v2540 = vld [vmem:[%s1 + $0x4df8] sm:$0xff]
  %v2541 = vld [vmem:[%s1 + $0x4e00] sm:$0xff]
  %v2542 = vld [vmem:[%s1 + $0x4e08] sm:$0xff]
  %v2543 = vld [vmem:[%s1 + $0x4e10] sm:$0xff]
  %v2544 = vld [vmem:[%s1 + $0x4e18] sm:$0xff]
  %v2545 = vld [vmem:[%s1 + $0x4e20] sm:$0xff]
  %v2546 = vld [vmem:[%s1 + $0x4e28] sm:$0xff]
  %v2547 = vld [vmem:[%s1 + $0x4e30] sm:$0xff]
  %v2548 = vld [vmem:[%s1 + $0x4e38] sm:$0xff]
  %v2549 = vld [vmem:[%s1 + $0x4e40] sm:$0xff]
  %v2550 = vld [vmem:[%s1 + $0x4e48] sm:$0xff]
  %v2551 = vld [vmem:[%s1 + $0x4e50] sm:$0xff]
  %v2552 = vld [vmem:[%s1 + $0x4e58] sm:$0xff]
  %v2553 = vld [vmem:[%s1 + $0x4e60] sm:$0xff]
  %v2554 = vld [vmem:[%s1 + $0x4e68] sm:$0xff]
  %v2555 = vld [vmem:[%s1 + $0x4e70] sm:$0xff]
  %v2556 = vld [vmem:[%s1 + $0x4e78] sm:$0xff]
  %v2557 = vld [vmem:[%s1 + $0x4e80] sm:$0xff]
  %v2558 = vld [vmem:[%s1 + $0x4e88] sm:$0xff]
  %v2559 = vld [vmem:[%s1 + $0x4e90] sm:$0xff]
  %v2560 = vld [vmem:[%s1 + $0x4e98] sm:$0xff]
  %v2561 = vld [vmem:[%s1 + $0x4ea0] sm:$0xff]
  %v2562 = vld [vmem:[%s1 + $0x4ea8] sm:$0xff]
  %v2563 = vld [vmem:[%s1 + $0x4eb0] sm:$0xff]
  %v2564 = vld [vmem:[%s1 + $0x4eb8] sm:$0xff]
  %v2565 = vld [vmem:[%s1 + $0x4ec0] sm:$0xff]
  %v2566 = vld [vmem:[%s1 + $0x4ec8] sm:$0xff]
  %v2567 = vld [vmem:[%s1 + $0x4ed0] sm:$0xff]
  %v2568 = vld [vmem:[%s1 + $0x4ed8] sm:$0xff]
  %v2569 = vld [vmem:[%s1 + $0x4ee0] sm:$0xff]
  %v2570 = vld [vmem:[%s1 + $0x4ee8] sm:$0xff]
  %v2571 = vld [vmem:[%s1 + $0x4ef0] sm:$0xff]
  %v2572 = vld [vmem:[%s1 + $0x4ef8] sm:$0xff]
  %v2573 = vld [vmem:[%s1 + $0x4f00] sm:$0xff]
  %v2574 = vld [vmem:[%s1 + $0x4f08] sm:$0xff]
  %v2575 = vld [vmem:[%s1 + $0x4f10] sm:$0xff]
  %v2576 = vld [vmem:[%s1 + $0x4f18] sm:$0xff]
  %v2577 = vld [vmem:[%s1 + $0x4f20] sm:$0xff]
  %v2578 = vld [vmem:[%s1 + $0x4f28] sm:$0xff]
  %v2579 = vld [vmem:[%s1 + $0x4f30] sm:$0xff]
  %v2580 = vld [vmem:[%s1 + $0x4f38] sm:$0xff]
  %v2581 = vld [vmem:[%s1 + $0x4f40] sm:$0xff]
  %v2582 = vld [vmem:[%s1 + $0x4f48] sm:$0xff]
  %v2583 = vld [vmem:[%s1 + $0x4f50] sm:$0xff]
  %v2584 = vld [vmem:[%s1 + $0x4f58] sm:$0xff]
  %v2585 = vld [vmem:[%s1 + $0x4f60] sm:$0xff]
  %v2586 = vld [vmem:[%s1 + $0x4f68] sm:$0xff]
  %v2587 = vld [vmem:[%s1 + $0x4f70] sm:$0xff]
  %v2588 = vld [vmem:[%s1 + $0x4f78] sm:$0xff]
  %v2589 = vld [vmem:[%s1 + $0x4f80] sm:$0xff]
  %v2590 = vld [vmem:[%s1 + $0x4f88] sm:$0xff]
  %v2591 = vld [vmem:[%s1 + $0x4f90] sm:$0xff]
  %v2592 = vld [vmem:[%s1 + $0x4f98] sm:$0xff]
  %v2593 = vld [vmem:[%s1 + $0x4fa0] sm:$0xff]
  %v2594 = vld [vmem:[%s1 + $0x4fa8] sm:$0xff]
  %v2595 = vld [vmem:[%s1 + $0x4fb0] sm:$0xff]
  %v2596 = vld [vmem:[%s1 + $0x4fb8] sm:$0xff]
  %v2597 = vld [vmem:[%s1 + $0x4fc0] sm:$0xff]
  %v2598 = vld [vmem:[%s1 + $0x4fc8] sm:$0xff]
  %v2599 = vld [vmem:[%s1 + $0x4fd0] sm:$0xff]
  %v2600 = vld [vmem:[%s1 + $0x4fd8] sm:$0xff]
  %v2601 = vld [vmem:[%s1 + $0x4fe0] sm:$0xff]
  %v2602 = vld [vmem:[%s1 + $0x4fe8] sm:$0xff]
  %v2603 = vld [vmem:[%s1 + $0x4ff0] sm:$0xff]
  %v2604 = vld [vmem:[%s1 + $0x4ff8] sm:$0xff]
  %v2605 = vld [vmem:[%s1 + $0x5000] sm:$0xff]
  %v2606 = vld [vmem:[%s1 + $0x5008] sm:$0xff]
  %v2607 = vld [vmem:[%s1 + $0x5010] sm:$0xff]
  %v2608 = vld [vmem:[%s1 + $0x5018] sm:$0xff]
  %v2609 = vld [vmem:[%s1 + $0x5020] sm:$0xff]
  %v2610 = vld [vmem:[%s1 + $0x5028] sm:$0xff]
  %v2611 = vld [vmem:[%s1 + $0x5030] sm:$0xff]
  %v2612 = vld [vmem:[%s1 + $0x5038] sm:$0xff]
  %v2613 = vld [vmem:[%s1 + $0x5040] sm:$0xff]
  %v2614 = vld [vmem:[%s1 + $0x5048] sm:$0xff]
  %v2615 = vld [vmem:[%s1 + $0x5050] sm:$0xff]
  %v2616 = vld [vmem:[%s1 + $0x5058] sm:$0xff]
  %v2617 = vld [vmem:[%s1 + $0x5060] sm:$0xff]
  %v2618 = vld [vmem:[%s1 + $0x5068] sm:$0xff]
  %v2619 = vld [vmem:[%s1 + $0x5070] sm:$0xff]
  %v2620 = vld [vmem:[%s1 + $0x5078] sm:$0xff]
  %v2621 = vld [vmem:[%s1 + $0x5080] sm:$0xff]
  %v2622 = vld [vmem:[%s1 + $0x5088] sm:$0xff]
  %v2623 = vld [vmem:[%s1 + $0x5090] sm:$0xff]
  %v2624 = vld [vmem:[%s1 + $0x5098] sm:$0xff]
  %v2625 = vld [vmem:[%s1 + $0x50a0] sm:$0xff]
  %v2626 = vld [vmem:[%s1 + $0x50a8] sm:$0xff]
  %v2627 = vld [vmem:[%s1 + $0x50b0] sm:$0xff]
  %v2628 = vld [vmem:[%s1 + $0x50b8] sm:$0xff]
  %v2629 = vld [vmem:[%s1 + $0x50c0] sm:$0xff]
  %v2630 = vld [vmem:[%s1 + $0x50c8] sm:$0xff]
  %v2631 = vld [vmem:[%s1 + $0x50d0] sm:$0xff]
  %v2632 = vld [vmem:[%s1 + $0x50d8] sm:$0xff]
  %v2633 = vld [vmem:[%s1 + $0x50e0] sm:$0xff]
  %v2634 = vld [vmem:[%s1 + $0x50e8] sm:$0xff]
  %v2635 = vld [vmem:[%s1 + $0x50f0] sm:$0xff]
  %v2636 = vld [vmem:[%s1 + $0x50f8] sm:$0xff]
  %v2637 = vld [vmem:[%s1 + $0x5100] sm:$0xff]
  %v2638 = vld [vmem:[%s1 + $0x5108] sm:$0xff]
  %v2639 = vld [vmem:[%s1 + $0x5110] sm:$0xff]
  %v2640 = vld [vmem:[%s1 + $0x5118] sm:$0xff]
  %v2641 = vld [vmem:[%s1 + $0x5120] sm:$0xff]
  %v2642 = vld [vmem:[%s1 + $0x5128] sm:$0xff]
  %v2643 = vld [vmem:[%s1 + $0x5130] sm:$0xff]
  %v2644 = vld [vmem:[%s1 + $0x5138] sm:$0xff]
  %v2645 = vld [vmem:[%s1 + $0x5140] sm:$0xff]
  %v2646 = vld [vmem:[%s1 + $0x5148] sm:$0xff]
  %v2647 = vld [vmem:[%s1 + $0x5150] sm:$0xff]
  %v2648 = vld [vmem:[%s1 + $0x5158] sm:$0xff]
  %v2649 = vld [vmem:[%s1 + $0x5160] sm:$0xff]
  %v2650 = vld [vmem:[%s1 + $0x5168] sm:$0xff]
  %v2651 = vld [vmem:[%s1 + $0x5170] sm:$0xff]
  %v2652 = vld [vmem:[%s1 + $0x5178] sm:$0xff]
  %v2653 = vld [vmem:[%s1 + $0x5180] sm:$0xff]
  %v2654 = vld [vmem:[%s1 + $0x5188] sm:$0xff]
  %v2655 = vld [vmem:[%s1 + $0x5190] sm:$0xff]
  %v2656 = vld [vmem:[%s1 + $0x5198] sm:$0xff]
  %v2657 = vld [vmem:[%s1 + $0x51a0] sm:$0xff]
  %v2658 = vld [vmem:[%s1 + $0x51a8] sm:$0xff]
  %v2659 = vld [vmem:[%s1 + $0x51b0] sm:$0xff]
  %v2660 = vld [vmem:[%s1 + $0x51b8] sm:$0xff]
  %v2661 = vld [vmem:[%s1 + $0x51c0] sm:$0xff]
  %v2662 = vld [vmem:[%s1 + $0x51c8] sm:$0xff]
  %v2663 = vld [vmem:[%s1 + $0x51d0] sm:$0xff]
  %v2664 = vld [vmem:[%s1 + $0x51d8] sm:$0xff]
  %v2665 = vld [vmem:[%s1 + $0x51e0] sm:$0xff]
  %v2666 = vld [vmem:[%s1 + $0x51e8] sm:$0xff]
  %v2667 = vld [vmem:[%s1 + $0x51f0] sm:$0xff]
  %v2668 = vld [vmem:[%s1 + $0x51f8] sm:$0xff]
  %v2669 = vld [vmem:[%s1 + $0x5200] sm:$0xff]
  %v2670 = vld [vmem:[%s1 + $0x5208] sm:$0xff]
  %v2671 = vld [vmem:[%s1 + $0x5210] sm:$0xff]
  %v2672 = vld [vmem:[%s1 + $0x5218] sm:$0xff]
  %v2673 = vld [vmem:[%s1 + $0x5220] sm:$0xff]
  %v2674 = vld [vmem:[%s1 + $0x5228] sm:$0xff]
  %v2675 = vld [vmem:[%s1 + $0x5230] sm:$0xff]
  %v2676 = vld [vmem:[%s1 + $0x5238] sm:$0xff]
  %v2677 = vld [vmem:[%s1 + $0x5240] sm:$0xff]
  %v2678 = vld [vmem:[%s1 + $0x5248] sm:$0xff]
  %v2679 = vld [vmem:[%s1 + $0x5250] sm:$0xff]
  %v2680 = vld [vmem:[%s1 + $0x5258] sm:$0xff]
  %v2681 = vld [vmem:[%s1 + $0x5260] sm:$0xff]
  %v2682 = vld [vmem:[%s1 + $0x5268] sm:$0xff]
  %v2683 = vld [vmem:[%s1 + $0x5270] sm:$0xff]
  %v2684 = vld [vmem:[%s1 + $0x5278] sm:$0xff]
  %v2685 = vld [vmem:[%s1 + $0x5280] sm:$0xff]
  %v2686 = vld [vmem:[%s1 + $0x5288] sm:$0xff]
  %v2687 = vld [vmem:[%s1 + $0x5290] sm:$0xff]
  %v2688 = vld [vmem:[%s1 + $0x5298] sm:$0xff]
  %v2689 = vld [vmem:[%s1 + $0x52a0] sm:$0xff]
  %v2690 = vld [vmem:[%s1 + $0x52a8] sm:$0xff]
  %v2691 = vld [vmem:[%s1 + $0x52b0] sm:$0xff]
  %v2692 = vld [vmem:[%s1 + $0x52b8] sm:$0xff]
  %v2693 = vld [vmem:[%s1 + $0x52c0] sm:$0xff]
  %v2694 = vld [vmem:[%s1 + $0x52c8] sm:$0xff]
  %v2695 = vld [vmem:[%s1 + $0x52d0] sm:$0xff]
  %v2696 = vld [vmem:[%s1 + $0x52d8] sm:$0xff]
  %v2697 = vld [vmem:[%s1 + $0x52e0] sm:$0xff]
  %v2698 = vld [vmem:[%s1 + $0x52e8] sm:$0xff]
  %v2699 = vld [vmem:[%s1 + $0x52f0] sm:$0xff]
  %v2700 = vld [vmem:[%s1 + $0x52f8] sm:$0xff]
  %v2701 = vld [vmem:[%s1 + $0x5300] sm:$0xff]
  %v2702 = vld [vmem:[%s1 + $0x5308] sm:$0xff]
  %v2703 = vld [vmem:[%s1 + $0x5310] sm:$0xff]
  %v2704 = vld [vmem:[%s1 + $0x5318] sm:$0xff]
  %v2705 = vld [vmem:[%s1 + $0x5320] sm:$0xff]
  %v2706 = vld [vmem:[%s1 + $0x5328] sm:$0xff]
  %v2707 = vld [vmem:[%s1 + $0x5330] sm:$0xff]
  %v2708 = vld [vmem:[%s1 + $0x5338] sm:$0xff]
  %v2709 = vld [vmem:[%s1 + $0x5340] sm:$0xff]
  %v2710 = vld [vmem:[%s1 + $0x5348] sm:$0xff]
  %v2711 = vld [vmem:[%s1 + $0x5350] sm:$0xff]
  %v2712 = vld [vmem:[%s1 + $0x5358] sm:$0xff]
  %v2713 = vld [vmem:[%s1 + $0x5360] sm:$0xff]
  %v2714 = vld [vmem:[%s1 + $0x5368] sm:$0xff]
  %v2715 = vld [vmem:[%s1 + $0x5370] sm:$0xff]
  %v2716 = vld [vmem:[%s1 + $0x5378] sm:$0xff]
  %v2717 = vld [vmem:[%s1 + $0x5380] sm:$0xff]
  %v2718 = vld [vmem:[%s1 + $0x5388] sm:$0xff]
  %v2719 = vld [vmem:[%s1 + $0x5390] sm:$0xff]
  %v2720 = vld [vmem:[%s1 + $0x5398] sm:$0xff]
  %v2721 = vld [vmem:[%s1 + $0x53a0] sm:$0xff]
  %v2722 = vld [vmem:[%s1 + $0x53a8] sm:$0xff]
  %v2723 = vld [vmem:[%s1 + $0x53b0] sm:$0xff]
  %v2724 = vld [vmem:[%s1 + $0x53b8] sm:$0xff]
  %v2725 = vld [vmem:[%s1 + $0x53c0] sm:$0xff]
  %v2726 = vld [vmem:[%s1 + $0x53c8] sm:$0xff]
  %v2727 = vld [vmem:[%s1 + $0x53d0] sm:$0xff]
  %v2728 = vld [vmem:[%s1 + $0x53d8] sm:$0xff]
  %v2729 = vld [vmem:[%s1 + $0x53e0] sm:$0xff]
  %v2730 = vld [vmem:[%s1 + $0x53e8] sm:$0xff]
  %v2731 = vld [vmem:[%s1 + $0x53f0] sm:$0xff]
  %v2732 = vld [vmem:[%s1 + $0x53f8] sm:$0xff]
  %v2733 = vld [vmem:[%s1 + $0x5400] sm:$0xff]
  %v2734 = vld [vmem:[%s1 + $0x5408] sm:$0xff]
  %v2735 = vld [vmem:[%s1 + $0x5410] sm:$0xff]
  %v2736 = vld [vmem:[%s1 + $0x5418] sm:$0xff]
  %v2737 = vld [vmem:[%s1 + $0x5420] sm:$0xff]
  %v2738 = vld [vmem:[%s1 + $0x5428] sm:$0xff]
  %v2739 = vld [vmem:[%s1 + $0x5430] sm:$0xff]
  %v2740 = vld [vmem:[%s1 + $0x5438] sm:$0xff]
  %v2741 = vld [vmem:[%s1 + $0x5440] sm:$0xff]
  %v2742 = vld [vmem:[%s1 + $0x5448] sm:$0xff]
  %v2743 = vld [vmem:[%s1 + $0x5450] sm:$0xff]
  %v2744 = vld [vmem:[%s1 + $0x5458] sm:$0xff]
  %v2745 = vld [vmem:[%s1 + $0x5460] sm:$0xff]
  %v2746 = vld [vmem:[%s1 + $0x5468] sm:$0xff]
  %v2747 = vld [vmem:[%s1 + $0x5470] sm:$0xff]
  %v2748 = vld [vmem:[%s1 + $0x5478] sm:$0xff]
  %v2749 = vld [vmem:[%s1 + $0x5480] sm:$0xff]
  %v2750 = vld [vmem:[%s1 + $0x5488] sm:$0xff]
  %v2751 = vld [vmem:[%s1 + $0x5490] sm:$0xff]
  %v2752 = vld [vmem:[%s1 + $0x5498] sm:$0xff]
  %v2753 = vld [vmem:[%s1 + $0x54a0] sm:$0xff]
  %v2754 = vld [vmem:[%s1 + $0x54a8] sm:$0xff]
  %v2755 = vld [vmem:[%s1 + $0x54b0] sm:$0xff]
  %v2756 = vld [vmem:[%s1 + $0x54b8] sm:$0xff]
  %v2757 = vld [vmem:[%s1 + $0x54c0] sm:$0xff]
  %v2758 = vld [vmem:[%s1 + $0x54c8] sm:$0xff]
  %v2759 = vld [vmem:[%s1 + $0x54d0] sm:$0xff]
  %v2760 = vld [vmem:[%s1 + $0x54d8] sm:$0xff]
  %v2761 = vld [vmem:[%s1 + $0x54e0] sm:$0xff]
  %v2762 = vld [vmem:[%s1 + $0x54e8] sm:$0xff]
  %v2763 = vld [vmem:[%s1 + $0x54f0] sm:$0xff]
  %v2764 = vld [vmem:[%s1 + $0x54f8] sm:$0xff]
  %v2765 = vld [vmem:[%s1 + $0x5500] sm:$0xff]
  %v2766 = vld [vmem:[%s1 + $0x5508] sm:$0xff]
  %v2767 = vld [vmem:[%s1 + $0x5510] sm:$0xff]
  %v2768 = vld [vmem:[%s1 + $0x5518] sm:$0xff]
  %v2769 = vld [vmem:[%s1 + $0x5520] sm:$0xff]
  %v2770 = vld [vmem:[%s1 + $0x5528] sm:$0xff]
  %v2771 = vld [vmem:[%s1 + $0x5530] sm:$0xff]
  %v2772 = vld [vmem:[%s1 + $0x5538] sm:$0xff]
  %v2773 = vld [vmem:[%s1 + $0x5540] sm:$0xff]
  %v2774 = vld [vmem:[%s1 + $0x5548] sm:$0xff]
  %v2775 = vld [vmem:[%s1 + $0x5550] sm:$0xff]
  %v2776 = vld [vmem:[%s1 + $0x5558] sm:$0xff]
  %v2777 = vld [vmem:[%s1 + $0x5560] sm:$0xff]
  %v2778 = vld [vmem:[%s1 + $0x5568] sm:$0xff]
  %v2779 = vld [vmem:[%s1 + $0x5570] sm:$0xff]
  %v2780 = vld [vmem:[%s1 + $0x5578] sm:$0xff]
  %v2781 = vld [vmem:[%s1 + $0x5580] sm:$0xff]
  %v2782 = vld [vmem:[%s1 + $0x5588] sm:$0xff]
  %v2783 = vld [vmem:[%s1 + $0x5590] sm:$0xff]
  %v2784 = vld [vmem:[%s1 + $0x5598] sm:$0xff]
  %v2785 = vld [vmem:[%s1 + $0x55a0] sm:$0xff]
  %v2786 = vld [vmem:[%s1 + $0x55a8] sm:$0xff]
  %v2787 = vld [vmem:[%s1 + $0x55b0] sm:$0xff]
  %v2788 = vld [vmem:[%s1 + $0x55b8] sm:$0xff]
  %v2789 = vld [vmem:[%s1 + $0x55c0] sm:$0xff]
  %v2790 = vld [vmem:[%s1 + $0x55c8] sm:$0xff]
  %v2791 = vld [vmem:[%s1 + $0x55d0] sm:$0xff]
  %v2792 = vld [vmem:[%s1 + $0x55d8] sm:$0xff]
  %v2793 = vld [vmem:[%s1 + $0x55e0] sm:$0xff]
  %v2794 = vld [vmem:[%s1 + $0x55e8] sm:$0xff]
  %v2795 = vld [vmem:[%s1 + $0x55f0] sm:$0xff]
  %v2796 = vld [vmem:[%s1 + $0x55f8] sm:$0xff]
  %v2797 = vld [vmem:[%s1 + $0x5600] sm:$0xff]
  %v2798 = vld [vmem:[%s1 + $0x5608] sm:$0xff]
  %v2799 = vld [vmem:[%s1 + $0x5610] sm:$0xff]
  %v2800 = vld [vmem:[%s1 + $0x5618] sm:$0xff]
  %v2801 = vld [vmem:[%s1 + $0x5620] sm:$0xff]
  %v2802 = vld [vmem:[%s1 + $0x5628] sm:$0xff]
  %v2803 = vld [vmem:[%s1 + $0x5630] sm:$0xff]
  %v2804 = vld [vmem:[%s1 + $0x5638] sm:$0xff]
  %v2805 = vld [vmem:[%s1 + $0x5640] sm:$0xff]
  %v2806 = vld [vmem:[%s1 + $0x5648] sm:$0xff]
  %v2807 = vld [vmem:[%s1 + $0x5650] sm:$0xff]
  %v2808 = vld [vmem:[%s1 + $0x5658] sm:$0xff]
  %v2809 = vld [vmem:[%s1 + $0x5660] sm:$0xff]
  %v2810 = vld [vmem:[%s1 + $0x5668] sm:$0xff]
  %v2811 = vld [vmem:[%s1 + $0x5670] sm:$0xff]
  %v2812 = vld [vmem:[%s1 + $0x5678] sm:$0xff]
  %v2813 = vld [vmem:[%s1 + $0x5680] sm:$0xff]
  %v2814 = vld [vmem:[%s1 + $0x5688] sm:$0xff]
  %v2815 = vld [vmem:[%s1 + $0x5690] sm:$0xff]
  %v2816 = vld [vmem:[%s1 + $0x5698] sm:$0xff]
  %v2817 = vld [vmem:[%s1 + $0x56a0] sm:$0xff]
  %v2818 = vld [vmem:[%s1 + $0x56a8] sm:$0xff]
  %v2819 = vld [vmem:[%s1 + $0x56b0] sm:$0xff]
  %v2820 = vld [vmem:[%s1 + $0x56b8] sm:$0xff]
  %v2821 = vld [vmem:[%s1 + $0x56c0] sm:$0xff]
  %v2822 = vld [vmem:[%s1 + $0x56c8] sm:$0xff]
  %v2823 = vld [vmem:[%s1 + $0x56d0] sm:$0xff]
  %v2824 = vld [vmem:[%s1 + $0x56d8] sm:$0xff]
  %v2825 = vld [vmem:[%s1 + $0x56e0] sm:$0xff]
  %v2826 = vld [vmem:[%s1 + $0x56e8] sm:$0xff]
  %v2827 = vld [vmem:[%s1 + $0x56f0] sm:$0xff]
  %v2828 = vld [vmem:[%s1 + $0x56f8] sm:$0xff]
  %v2829 = vld [vmem:[%s1 + $0x5700] sm:$0xff]
  %v2830 = vld [vmem:[%s1 + $0x5708] sm:$0xff]
  %v2831 = vld [vmem:[%s1 + $0x5710] sm:$0xff]
  %v2832 = vld [vmem:[%s1 + $0x5718] sm:$0xff]
  %v2833 = vld [vmem:[%s1 + $0x5720] sm:$0xff]
  %v2834 = vld [vmem:[%s1 + $0x5728] sm:$0xff]
  %v2835 = vld [vmem:[%s1 + $0x5730] sm:$0xff]
  %v2836 = vld [vmem:[%s1 + $0x5738] sm:$0xff]
  %v2837 = vld [vmem:[%s1 + $0x5740] sm:$0xff]
  %v2838 = vld [vmem:[%s1 + $0x5748] sm:$0xff]
  %v2839 = vld [vmem:[%s1 + $0x5750] sm:$0xff]
  %v2840 = vld [vmem:[%s1 + $0x5758] sm:$0xff]
  %v2841 = vld [vmem:[%s1 + $0x5760] sm:$0xff]
  %v2842 = vld [vmem:[%s1 + $0x5768] sm:$0xff]
  %v2843 = vld [vmem:[%s1 + $0x5770] sm:$0xff]
  %v2844 = vld [vmem:[%s1 + $0x5778] sm:$0xff]
  %v2845 = vld [vmem:[%s1 + $0x5780] sm:$0xff]
  %v2846 = vld [vmem:[%s1 + $0x5788] sm:$0xff]
  %v2847 = vld [vmem:[%s1 + $0x5790] sm:$0xff]
  %v2848 = vld [vmem:[%s1 + $0x5798] sm:$0xff]
  %v2849 = vld [vmem:[%s1 + $0x57a0] sm:$0xff]
  %v2850 = vld [vmem:[%s1 + $0x57a8] sm:$0xff]
  %v2851 = vld [vmem:[%s1 + $0x57b0] sm:$0xff]
  %v2852 = vld [vmem:[%s1 + $0x57b8] sm:$0xff]
  %v2853 = vld [vmem:[%s1 + $0x57c0] sm:$0xff]
  %v2854 = vld [vmem:[%s1 + $0x57c8] sm:$0xff]
  %v2855 = vld [vmem:[%s1 + $0x57d0] sm:$0xff]
  %v2856 = vld [vmem:[%s1 + $0x57d8] sm:$0xff]
  %v2857 = vld [vmem:[%s1 + $0x57e0] sm:$0xff]
  %v2858 = vld [vmem:[%s1 + $0x57e8] sm:$0xff]
  %v2859 = vld [vmem:[%s1 + $0x57f0] sm:$0xff]
  %v2860 = vld [vmem:[%s1 + $0x57f8] sm:$0xff]
  %v2861 = vld [vmem:[%s1 + $0x5800] sm:$0xff]
  %v2862 = vld [vmem:[%s1 + $0x5808] sm:$0xff]
  %v2863 = vld [vmem:[%s1 + $0x5810] sm:$0xff]
  %v2864 = vld [vmem:[%s1 + $0x5818] sm:$0xff]
  %v2865 = vld [vmem:[%s1 + $0x5820] sm:$0xff]
  %v2866 = vld [vmem:[%s1 + $0x5828] sm:$0xff]
  %v2867 = vld [vmem:[%s1 + $0x5830] sm:$0xff]
  %v2868 = vld [vmem:[%s1 + $0x5838] sm:$0xff]
  %v2869 = vld [vmem:[%s1 + $0x5840] sm:$0xff]
  %v2870 = vld [vmem:[%s1 + $0x5848] sm:$0xff]
  %v2871 = vld [vmem:[%s1 + $0x5850] sm:$0xff]
  %v2872 = vld [vmem:[%s1 + $0x5858] sm:$0xff]
  %v2873 = vld [vmem:[%s1 + $0x5860] sm:$0xff]
  %v2874 = vld [vmem:[%s1 + $0x5868] sm:$0xff]
  %v2875 = vld [vmem:[%s1 + $0x5870] sm:$0xff]
  %v2876 = vld [vmem:[%s1 + $0x5878] sm:$0xff]
  %v2877 = vld [vmem:[%s1 + $0x5880] sm:$0xff]
  %v2878 = vld [vmem:[%s1 + $0x5888] sm:$0xff]
  %v2879 = vld [vmem:[%s1 + $0x5890] sm:$0xff]
  %v2880 = vld [vmem:[%s1 + $0x5898] sm:$0xff]
  %v2881 = vld [vmem:[%s1 + $0x58a0] sm:$0xff]
  %v2882 = vld [vmem:[%s1 + $0x58a8] sm:$0xff]
  %v2883 = vld [vmem:[%s1 + $0x58b0] sm:$0xff]
  %v2884 = vld [vmem:[%s1 + $0x58b8] sm:$0xff]
  %v2885 = vld [vmem:[%s1 + $0x58c0] sm:$0xff]
  %v2886 = vld [vmem:[%s1 + $0x58c8] sm:$0xff]
  %v2887 = vld [vmem:[%s1 + $0x58d0] sm:$0xff]
  %v2888 = vld [vmem:[%s1 + $0x58d8] sm:$0xff]
  %v2889 = vld [vmem:[%s1 + $0x58e0] sm:$0xff]
  %v2890 = vld [vmem:[%s1 + $0x58e8] sm:$0xff]
  %v2891 = vld [vmem:[%s1 + $0x58f0] sm:$0xff]
  %v2892 = vld [vmem:[%s1 + $0x58f8] sm:$0xff]
  %v2893 = vld [vmem:[%s1 + $0x5900] sm:$0xff]
  %v2894 = vld [vmem:[%s1 + $0x5908] sm:$0xff]
  %v2895 = vld [vmem:[%s1 + $0x5910] sm:$0xff]
  %v2896 = vld [vmem:[%s1 + $0x5918] sm:$0xff]
  %v2897 = vld [vmem:[%s1 + $0x5920] sm:$0xff]
  %v2898 = vld [vmem:[%s1 + $0x5928] sm:$0xff]
  %v2899 = vld [vmem:[%s1 + $0x5930] sm:$0xff]
  %v2900 = vld [vmem:[%s1 + $0x5938] sm:$0xff]
  %v2901 = vld [vmem:[%s1 + $0x5940] sm:$0xff]
  %v2902 = vld [vmem:[%s1 + $0x5948] sm:$0xff]
  %v2903 = vld [vmem:[%s1 + $0x5950] sm:$0xff]
  %v2904 = vld [vmem:[%s1 + $0x5958] sm:$0xff]
  %v2905 = vld [vmem:[%s1 + $0x5960] sm:$0xff]
  %v2906 = vld [vmem:[%s1 + $0x5968] sm:$0xff]
  %v2907 = vld [vmem:[%s1 + $0x5970] sm:$0xff]
  %v2908 = vld [vmem:[%s1 + $0x5978] sm:$0xff]
  %v2909 = vld [vmem:[%s1 + $0x5980] sm:$0xff]
  %v2910 = vld [vmem:[%s1 + $0x5988] sm:$0xff]
  %v2911 = vld [vmem:[%s1 + $0x5990] sm:$0xff]
  %v2912 = vld [vmem:[%s1 + $0x5998] sm:$0xff]
  %v2913 = vld [vmem:[%s1 + $0x59a0] sm:$0xff]
  %v2914 = vld [vmem:[%s1 + $0x59a8] sm:$0xff]
  %v2915 = vld [vmem:[%s1 + $0x59b0] sm:$0xff]
  %v2916 = vld [vmem:[%s1 + $0x59b8] sm:$0xff]
  %v2917 = vld [vmem:[%s1 + $0x59c0] sm:$0xff]
  %v2918 = vld [vmem:[%s1 + $0x59c8] sm:$0xff]
  %v2919 = vld [vmem:[%s1 + $0x59d0] sm:$0xff]
  %v2920 = vld [vmem:[%s1 + $0x59d8] sm:$0xff]
  %v2921 = vld [vmem:[%s1 + $0x59e0] sm:$0xff]
  %v2922 = vld [vmem:[%s1 + $0x59e8] sm:$0xff]
  %v2923 = vld [vmem:[%s1 + $0x59f0] sm:$0xff]
  %v2924 = vld [vmem:[%s1 + $0x59f8] sm:$0xff]
  %v2925 = vld [vmem:[%s1 + $0x5a00] sm:$0xff]
  %v2926 = vld [vmem:[%s1 + $0x5a08] sm:$0xff]
  %v2927 = vld [vmem:[%s1 + $0x5a10] sm:$0xff]
  %v2928 = vld [vmem:[%s1 + $0x5a18] sm:$0xff]
  %v2929 = vld [vmem:[%s1 + $0x5a20] sm:$0xff]
  %v2930 = vld [vmem:[%s1 + $0x5a28] sm:$0xff]
  %v2931 = vld [vmem:[%s1 + $0x5a30] sm:$0xff]
  %v2932 = vld [vmem:[%s1 + $0x5a38] sm:$0xff]
  %v2933 = vld [vmem:[%s1 + $0x5a40] sm:$0xff]
  %v2934 = vld [vmem:[%s1 + $0x5a48] sm:$0xff]
  %v2935 = vld [vmem:[%s1 + $0x5a50] sm:$0xff]
  %v2936 = vld [vmem:[%s1 + $0x5a58] sm:$0xff]
  %v2937 = vld [vmem:[%s1 + $0x5a60] sm:$0xff]
  %v2938 = vld [vmem:[%s1 + $0x5a68] sm:$0xff]
  %v2939 = vld [vmem:[%s1 + $0x5a70] sm:$0xff]
  %v2940 = vld [vmem:[%s1 + $0x5a78] sm:$0xff]
  %v2941 = vld [vmem:[%s1 + $0x5a80] sm:$0xff]
  %v2942 = vld [vmem:[%s1 + $0x5a88] sm:$0xff]
  %v2943 = vld [vmem:[%s1 + $0x5a90] sm:$0xff]
  %v2944 = vld [vmem:[%s1 + $0x5a98] sm:$0xff]
  %v2945 = vld [vmem:[%s1 + $0x5aa0] sm:$0xff]
  %v2946 = vld [vmem:[%s1 + $0x5aa8] sm:$0xff]
  %v2947 = vld [vmem:[%s1 + $0x5ab0] sm:$0xff]
  %v2948 = vld [vmem:[%s1 + $0x5ab8] sm:$0xff]
  %v2949 = vld [vmem:[%s1 + $0x5ac0] sm:$0xff]
  %v2950 = vld [vmem:[%s1 + $0x5ac8] sm:$0xff]
  %v2951 = vld [vmem:[%s1 + $0x5ad0] sm:$0xff]
  %v2952 = vld [vmem:[%s1 + $0x5ad8] sm:$0xff]
  %v2953 = vld [vmem:[%s1 + $0x5ae0] sm:$0xff]
  %v2954 = vld [vmem:[%s1 + $0x5ae8] sm:$0xff]
  %v2955 = vld [vmem:[%s1 + $0x5af0] sm:$0xff]
  %v2956 = vld [vmem:[%s1 + $0x5af8] sm:$0xff]
  %v2957 = vld [vmem:[%s1 + $0x5b00] sm:$0xff]
  %v2958 = vld [vmem:[%s1 + $0x5b08] sm:$0xff]
  %v2959 = vld [vmem:[%s1 + $0x5b10] sm:$0xff]
  %v2960 = vld [vmem:[%s1 + $0x5b18] sm:$0xff]
  %v2961 = vld [vmem:[%s1 + $0x5b20] sm:$0xff]
  %v2962 = vld [vmem:[%s1 + $0x5b28] sm:$0xff]
  %v2963 = vld [vmem:[%s1 + $0x5b30] sm:$0xff]
  %v2964 = vld [vmem:[%s1 + $0x5b38] sm:$0xff]
  %v2965 = vld [vmem:[%s1 + $0x5b40] sm:$0xff]
  %v2966 = vld [vmem:[%s1 + $0x5b48] sm:$0xff]
  %v2967 = vld [vmem:[%s1 + $0x5b50] sm:$0xff]
  %v2968 = vld [vmem:[%s1 + $0x5b58] sm:$0xff]
  %v2969 = vld [vmem:[%s1 + $0x5b60] sm:$0xff]
  %v2970 = vld [vmem:[%s1 + $0x5b68] sm:$0xff]
  %v2971 = vld [vmem:[%s1 + $0x5b70] sm:$0xff]
  %v2972 = vld [vmem:[%s1 + $0x5b78] sm:$0xff]
  %v2973 = vld [vmem:[%s1 + $0x5b80] sm:$0xff]
  %v2974 = vld [vmem:[%s1 + $0x5b88] sm:$0xff]
  %v2975 = vld [vmem:[%s1 + $0x5b90] sm:$0xff]
  %v2976 = vld [vmem:[%s1 + $0x5b98] sm:$0xff]
  %v2977 = vld [vmem:[%s1 + $0x5ba0] sm:$0xff]
  %v2978 = vld [vmem:[%s1 + $0x5ba8] sm:$0xff]
  %v2979 = vld [vmem:[%s1 + $0x5bb0] sm:$0xff]
  %v2980 = vld [vmem:[%s1 + $0x5bb8] sm:$0xff]
  %v2981 = vld [vmem:[%s1 + $0x5bc0] sm:$0xff]
  %v2982 = vld [vmem:[%s1 + $0x5bc8] sm:$0xff]
  %v2983 = vld [vmem:[%s1 + $0x5bd0] sm:$0xff]
  %v2984 = vld [vmem:[%s1 + $0x5bd8] sm:$0xff]
  %v2985 = vld [vmem:[%s1 + $0x5be0] sm:$0xff]
  %v2986 = vld [vmem:[%s1 + $0x5be8] sm:$0xff]
  %v2987 = vld [vmem:[%s1 + $0x5bf0] sm:$0xff]
  %v2988 = vld [vmem:[%s1 + $0x5bf8] sm:$0xff]
  %v2989 = vld [vmem:[%s1 + $0x5c00] sm:$0xff]
  %v2990 = vld [vmem:[%s1 + $0x5c08] sm:$0xff]
  %v2991 = vld [vmem:[%s1 + $0x5c10] sm:$0xff]
  %v2992 = vld [vmem:[%s1 + $0x5c18] sm:$0xff]
  %v2993 = vld [vmem:[%s1 + $0x5c20] sm:$0xff]
  %v2994 = vld [vmem:[%s1 + $0x5c28] sm:$0xff]
  %v2995 = vld [vmem:[%s1 + $0x5c30] sm:$0xff]
  %v2996 = vld [vmem:[%s1 + $0x5c38] sm:$0xff]
  %v2997 = vld [vmem:[%s1 + $0x5c40] sm:$0xff]
  %v2998 = vld [vmem:[%s1 + $0x5c48] sm:$0xff]
  %v2999 = vld [vmem:[%s1 + $0x5c50] sm:$0xff]
  %v3000 = vld [vmem:[%s1 + $0x5c58] sm:$0xff]
  %v3001 = vld [vmem:[%s1 + $0x5c60] sm:$0xff]
  %v3002 = vld [vmem:[%s1 + $0x5c68] sm:$0xff]
  %v3003 = vld [vmem:[%s1 + $0x5c70] sm:$0xff]
  %v3004 = vld [vmem:[%s1 + $0x5c78] sm:$0xff]
  %v3005 = vld [vmem:[%s1 + $0x5c80] sm:$0xff]
  %v3006 = vld [vmem:[%s1 + $0x5c88] sm:$0xff]
  %v3007 = vld [vmem:[%s1 + $0x5c90] sm:$0xff]
  %v3008 = vld [vmem:[%s1 + $0x5c98] sm:$0xff]
  %v3009 = vld [vmem:[%s1 + $0x5ca0] sm:$0xff]
  %v3010 = vld [vmem:[%s1 + $0x5ca8] sm:$0xff]
  %v3011 = vld [vmem:[%s1 + $0x5cb0] sm:$0xff]
  %v3012 = vld [vmem:[%s1 + $0x5cb8] sm:$0xff]
  %v3013 = vld [vmem:[%s1 + $0x5cc0] sm:$0xff]
  %v3014 = vld [vmem:[%s1 + $0x5cc8] sm:$0xff]
  %v3015 = vld [vmem:[%s1 + $0x5cd0] sm:$0xff]
  %v3016 = vld [vmem:[%s1 + $0x5cd8] sm:$0xff]
  %v3017 = vld [vmem:[%s1 + $0x5ce0] sm:$0xff]
  %v3018 = vld [vmem:[%s1 + $0x5ce8] sm:$0xff]
  %v3019 = vld [vmem:[%s1 + $0x5cf0] sm:$0xff]
  %v3020 = vld [vmem:[%s1 + $0x5cf8] sm:$0xff]
  %v3021 = vld [vmem:[%s1 + $0x5d00] sm:$0xff]
  %v3022 = vld [vmem:[%s1 + $0x5d08] sm:$0xff]
  %v3023 = vld [vmem:[%s1 + $0x5d10] sm:$0xff]
  %v3024 = vld [vmem:[%s1 + $0x5d18] sm:$0xff]
  %v3025 = vld [vmem:[%s1 + $0x5d20] sm:$0xff]
  %v3026 = vld [vmem:[%s1 + $0x5d28] sm:$0xff]
  %v3027 = vld [vmem:[%s1 + $0x5d30] sm:$0xff]
  %v3028 = vld [vmem:[%s1 + $0x5d38] sm:$0xff]
  %v3029 = vld [vmem:[%s1 + $0x5d40] sm:$0xff]
  %v3030 = vld [vmem:[%s1 + $0x5d48] sm:$0xff]
  %v3031 = vld [vmem:[%s1 + $0x5d50] sm:$0xff]
  %v3032 = vld [vmem:[%s1 + $0x5d58] sm:$0xff]
  %v3033 = vld [vmem:[%s1 + $0x5d60] sm:$0xff]
  %v3034 = vld [vmem:[%s1 + $0x5d68] sm:$0xff]
  %v3035 = vld [vmem:[%s1 + $0x5d70] sm:$0xff]
  %v3036 = vld [vmem:[%s1 + $0x5d78] sm:$0xff]
  %v3037 = vld [vmem:[%s1 + $0x5d80] sm:$0xff]
  %v3038 = vld [vmem:[%s1 + $0x5d88] sm:$0xff]
  %v3039 = vld [vmem:[%s1 + $0x5d90] sm:$0xff]
  %v3040 = vld [vmem:[%s1 + $0x5d98] sm:$0xff]
  %v3041 = vld [vmem:[%s1 + $0x5da0] sm:$0xff]
  %v3042 = vld [vmem:[%s1 + $0x5da8] sm:$0xff]
  %v3043 = vld [vmem:[%s1 + $0x5db0] sm:$0xff]
  %v3044 = vld [vmem:[%s1 + $0x5db8] sm:$0xff]
  %v3045 = vld [vmem:[%s1 + $0x5dc0] sm:$0xff]
  %v3046 = vld [vmem:[%s1 + $0x5dc8] sm:$0xff]
  %v3047 = vld [vmem:[%s1 + $0x5dd0] sm:$0xff]
  %v3048 = vld [vmem:[%s1 + $0x5dd8] sm:$0xff]
  %v3049 = vld [vmem:[%s1 + $0x5de0] sm:$0xff]
  %v3050 = vld [vmem:[%s1 + $0x5de8] sm:$0xff]
  %v3051 = vld [vmem:[%s1 + $0x5df0] sm:$0xff]
  %v3052 = vld [vmem:[%s1 + $0x5df8] sm:$0xff]
  %v3053 = vld [vmem:[%s1 + $0x5e00] sm:$0xff]
  %v3054 = vld [vmem:[%s1 + $0x5e08] sm:$0xff]
  %v3055 = vld [vmem:[%s1 + $0x5e10] sm:$0xff]
  %v3056 = vld [vmem:[%s1 + $0x5e18] sm:$0xff]
  %v3057 = vld [vmem:[%s1 + $0x5e20] sm:$0xff]
  %v3058 = vld [vmem:[%s1 + $0x5e28] sm:$0xff]
  %v3059 = vld [vmem:[%s1 + $0x5e30] sm:$0xff]
  %v3060 = vld [vmem:[%s1 + $0x5e38] sm:$0xff]
  %v3061 = vld [vmem:[%s1 + $0x5e40] sm:$0xff]
  %v3062 = vld [vmem:[%s1 + $0x5e48] sm:$0xff]
  %v3063 = vld [vmem:[%s1 + $0x5e50] sm:$0xff]
  %v3064 = vld [vmem:[%s1 + $0x5e58] sm:$0xff]
  %v3065 = vld [vmem:[%s1 + $0x5e60] sm:$0xff]
  %v3066 = vld [vmem:[%s1 + $0x5e68] sm:$0xff]
  %v3067 = vld [vmem:[%s1 + $0x5e70] sm:$0xff]
  %v3068 = vld [vmem:[%s1 + $0x5e78] sm:$0xff]
  %v3069 = vld [vmem:[%s1 + $0x5e80] sm:$0xff]
  %v3070 = vld [vmem:[%s1 + $0x5e88] sm:$0xff]
  %v3071 = vld [vmem:[%s1 + $0x5e90] sm:$0xff]
  %v3072 = vld [vmem:[%s1 + $0x5e98] sm:$0xff]
  %v3073 = vld [vmem:[%s1 + $0x5ea0] sm:$0xff]
  %v3074 = vld [vmem:[%s1 + $0x5ea8] sm:$0xff]
  %v3075 = vld [vmem:[%s1 + $0x5eb0] sm:$0xff]
  %v3076 = vld [vmem:[%s1 + $0x5eb8] sm:$0xff]
  %v3077 = vld [vmem:[%s1 + $0x5ec0] sm:$0xff]
  %v3078 = vld [vmem:[%s1 + $0x5ec8] sm:$0xff]
  %v3079 = vld [vmem:[%s1 + $0x5ed0] sm:$0xff]
  %v3080 = vld [vmem:[%s1 + $0x5ed8] sm:$0xff]
  %v3081 = vld [vmem:[%s1 + $0x5ee0] sm:$0xff]
  %v3082 = vld [vmem:[%s1 + $0x5ee8] sm:$0xff]
  %v3083 = vld [vmem:[%s1 + $0x5ef0] sm:$0xff]
  %v3084 = vld [vmem:[%s1 + $0x5ef8] sm:$0xff]
  %v3085 = vld [vmem:[%s1 + $0x5f00] sm:$0xff]
  %v3086 = vld [vmem:[%s1 + $0x5f08] sm:$0xff]
  %v3087 = vld [vmem:[%s1 + $0x5f10] sm:$0xff]
  %v3088 = vld [vmem:[%s1 + $0x5f18] sm:$0xff]
  %v3089 = vld [vmem:[%s1 + $0x5f20] sm:$0xff]
  %v3090 = vld [vmem:[%s1 + $0x5f28] sm:$0xff]
  %v3091 = vld [vmem:[%s1 + $0x5f30] sm:$0xff]
  %v3092 = vld [vmem:[%s1 + $0x5f38] sm:$0xff]
  %v3093 = vld [vmem:[%s1 + $0x5f40] sm:$0xff]
  %v3094 = vld [vmem:[%s1 + $0x5f48] sm:$0xff]
  %v3095 = vld [vmem:[%s1 + $0x5f50] sm:$0xff]
  %v3096 = vld [vmem:[%s1 + $0x5f58] sm:$0xff]
  %v3097 = vld [vmem:[%s1 + $0x5f60] sm:$0xff]
  %v3098 = vld [vmem:[%s1 + $0x5f68] sm:$0xff]
  %v3099 = vld [vmem:[%s1 + $0x5f70] sm:$0xff]
  %v3100 = vld [vmem:[%s1 + $0x5f78] sm:$0xff]
  %v3101 = vld [vmem:[%s1 + $0x5f80] sm:$0xff]
  %v3102 = vld [vmem:[%s1 + $0x5f88] sm:$0xff]
  %v3103 = vld [vmem:[%s1 + $0x5f90] sm:$0xff]
  %v3104 = vld [vmem:[%s1 + $0x5f98] sm:$0xff]
  %v3105 = vld [vmem:[%s1 + $0x5fa0] sm:$0xff]
  %v3106 = vld [vmem:[%s1 + $0x5fa8] sm:$0xff]
  %v3107 = vld [vmem:[%s1 + $0x5fb0] sm:$0xff]
  %v3108 = vld [vmem:[%s1 + $0x5fb8] sm:$0xff]
  %v3109 = vld [vmem:[%s1 + $0x5fc0] sm:$0xff]
  %v3110 = vld [vmem:[%s1 + $0x5fc8] sm:$0xff]
  %v3111 = vld [vmem:[%s1 + $0x5fd0] sm:$0xff]
  %v3112 = vld [vmem:[%s1 + $0x5fd8] sm:$0xff]
  %v3113 = vld [vmem:[%s1 + $0x5fe0] sm:$0xff]
  %v3114 = vld [vmem:[%s1 + $0x5fe8] sm:$0xff]
  %v3115 = vld [vmem:[%s1 + $0x5ff0] sm:$0xff]
  %v3116 = vld [vmem:[%s1 + $0x5ff8] sm:$0xff]
  %v3117 = vld [vmem:[%s1 + $0x6000] sm:$0xff]
  %v3118 = vld [vmem:[%s1 + $0x6008] sm:$0xff]
  %v3119 = vld [vmem:[%s1 + $0x6010] sm:$0xff]
  %v3120 = vld [vmem:[%s1 + $0x6018] sm:$0xff]
  %v3121 = vld [vmem:[%s1 + $0x6020] sm:$0xff]
  %v3122 = vld [vmem:[%s1 + $0x6028] sm:$0xff]
  %v3123 = vld [vmem:[%s1 + $0x6030] sm:$0xff]
  %v3124 = vld [vmem:[%s1 + $0x6038] sm:$0xff]
  %v3125 = vld [vmem:[%s1 + $0x6040] sm:$0xff]
  %v3126 = vld [vmem:[%s1 + $0x6048] sm:$0xff]
  %v3127 = vld [vmem:[%s1 + $0x6050] sm:$0xff]
  %v3128 = vld [vmem:[%s1 + $0x6058] sm:$0xff]
  %v3129 = vld [vmem:[%s1 + $0x6060] sm:$0xff]
  %v3130 = vld [vmem:[%s1 + $0x6068] sm:$0xff]
  %v3131 = vld [vmem:[%s1 + $0x6070] sm:$0xff]
  %v3132 = vld [vmem:[%s1 + $0x6078] sm:$0xff]
  %v3133 = vld [vmem:[%s1 + $0x6080] sm:$0xff]
  %v3134 = vld [vmem:[%s1 + $0x6088] sm:$0xff]
  %v3135 = vld [vmem:[%s1 + $0x6090] sm:$0xff]
  %v3136 = vld [vmem:[%s1 + $0x6098] sm:$0xff]
  %v3137 = vld [vmem:[%s1 + $0x60a0] sm:$0xff]
  %v3138 = vld [vmem:[%s1 + $0x60a8] sm:$0xff]
  %v3139 = vld [vmem:[%s1 + $0x60b0] sm:$0xff]
  %v3140 = vld [vmem:[%s1 + $0x60b8] sm:$0xff]
  %v3141 = vld [vmem:[%s1 + $0x60c0] sm:$0xff]
  %v3142 = vld [vmem:[%s1 + $0x60c8] sm:$0xff]
  %v3143 = vld [vmem:[%s1 + $0x60d0] sm:$0xff]
  %v3144 = vld [vmem:[%s1 + $0x60d8] sm:$0xff]
  %v3145 = vld [vmem:[%s1 + $0x60e0] sm:$0xff]
  %v3146 = vld [vmem:[%s1 + $0x60e8] sm:$0xff]
  %v3147 = vld [vmem:[%s1 + $0x60f0] sm:$0xff]
  %v3148 = vld [vmem:[%s1 + $0x60f8] sm:$0xff]
  %v3149 = vld [vmem:[%s1 + $0x6100] sm:$0xff]
  %v3150 = vld [vmem:[%s1 + $0x6108] sm:$0xff]
  %v3151 = vld [vmem:[%s1 + $0x6110] sm:$0xff]
  %v3152 = vld [vmem:[%s1 + $0x6118] sm:$0xff]
  %v3153 = vld [vmem:[%s1 + $0x6120] sm:$0xff]
  %v3154 = vld [vmem:[%s1 + $0x6128] sm:$0xff]
  %v3155 = vld [vmem:[%s1 + $0x6130] sm:$0xff]
  %v3156 = vld [vmem:[%s1 + $0x6138] sm:$0xff]
  %v3157 = vld [vmem:[%s1 + $0x6140] sm:$0xff]
  %v3158 = vld [vmem:[%s1 + $0x6148] sm:$0xff]
  %v3159 = vld [vmem:[%s1 + $0x6150] sm:$0xff]
  %v3160 = vld [vmem:[%s1 + $0x6158] sm:$0xff]
  %v3161 = vld [vmem:[%s1 + $0x6160] sm:$0xff]
  %v3162 = vld [vmem:[%s1 + $0x6168] sm:$0xff]
  %v3163 = vld [vmem:[%s1 + $0x6170] sm:$0xff]
  %v3164 = vld [vmem:[%s1 + $0x6178] sm:$0xff]
  %v3165 = vld [vmem:[%s1 + $0x6180] sm:$0xff]
  %v3166 = vld [vmem:[%s1 + $0x6188] sm:$0xff]
  %v3167 = vld [vmem:[%s1 + $0x6190] sm:$0xff]
  %v3168 = vld [vmem:[%s1 + $0x6198] sm:$0xff]
  %v3169 = vld [vmem:[%s1 + $0x61a0] sm:$0xff]
  %v3170 = vld [vmem:[%s1 + $0x61a8] sm:$0xff]
  %v3171 = vld [vmem:[%s1 + $0x61b0] sm:$0xff]
  %v3172 = vld [vmem:[%s1 + $0x61b8] sm:$0xff]
  %v3173 = vld [vmem:[%s1 + $0x61c0] sm:$0xff]
  %v3174 = vld [vmem:[%s1 + $0x61c8] sm:$0xff]
  %v3175 = vld [vmem:[%s1 + $0x61d0] sm:$0xff]
  %v3176 = vld [vmem:[%s1 + $0x61d8] sm:$0xff]
  %v3177 = vld [vmem:[%s1 + $0x61e0] sm:$0xff]
  %v3178 = vld [vmem:[%s1 + $0x61e8] sm:$0xff]
  %v3179 = vld [vmem:[%s1 + $0x61f0] sm:$0xff]
  %v3180 = vld [vmem:[%s1 + $0x61f8] sm:$0xff]
  %v3181 = vld [vmem:[%s2] sm:$0xff]
  %v3183 = vperm.slane %v3181, 0
  %v3184 = vperm.slane %v3181, 1
  %v3185 = vperm.slane %v3181, 2
  %v3186 = vperm.slane %v3181, 3
  %v3187 = vperm.slane %v3181, 4
  %v3188 = vperm.slane %v3181, 5
  %v3189 = vperm.slane %v3181, 6
  %v3190 = vperm.slane %v3181, 7
  %vm3199 = vcmask 523264
  %v3201 = vsel %vm3199, %v44, 0
  %3203 = vmatpush.msra.mxu0 %v165
  %3204 = vmatpush.msra.mxu0 %v157
  %3205 = vmatpush.msra.mxu0 %v149
  %3206 = vmatpush.msra.mxu0 %v141
  %3207 = vmatpush.msra.mxu0 %v133
  %3208 = vmatpush.msra.mxu0 %v125
  %3209 = vmatpush.msra.mxu0 %v117
  %3210 = vmatpush.msra.mxu0 %v109
  %3211 = vmatpush.msra.mxu0 %v101
  %3212 = vmatpush.msra.mxu0 %v93
  %3213 = vmatpush.msra.mxu0 %v85
  %3214 = vmatpush.msra.mxu0 %v77
  %3215 = vmatpush.msra.mxu0 %v69
  %3216 = vmatpush.msra.mxu0 %v61
  %3217 = vmatpush.msra.mxu0 %v53
  %3218 = vmatpush.msra.mxu0 %v45
  %3219 = vmatmul.f32.gmra.mxu0 %v20
  %v3220 = vpop.f32.mrf.mxu0
  %v3221 = vadd.f32 %v3183, %v3220
  %3222 = vdwg.mxu0
  %3223 = vmatpush.msra.mxu0 %v293
  %3224 = vmatpush.msra.mxu0 %v285
  %3225 = vmatpush.msra.mxu0 %v277
  %3226 = vmatpush.msra.mxu0 %v269
  %3227 = vmatpush.msra.mxu0 %v261
  %3228 = vmatpush.msra.mxu0 %v253
  %3229 = vmatpush.msra.mxu0 %v245
  %3230 = vmatpush.msra.mxu0 %v237
  %3231 = vmatpush.msra.mxu0 %v229
  %3232 = vmatpush.msra.mxu0 %v221
  %3233 = vmatpush.msra.mxu0 %v213
  %3234 = vmatpush.msra.mxu0 %v205
  %3235 = vmatpush.msra.mxu0 %v197
  %3236 = vmatpush.msra.mxu0 %v189
  %3237 = vmatpush.msra.mxu0 %v181
  %3238 = vmatpush.msra.mxu0 %v173
  %3239 = vmatmul.f32.gmra.mxu0 %v21
  %v3240 = vpop.f32.mrf.mxu0
  %v3241 = vadd.f32 %v3221, %v3240
  %3242 = vdwg.mxu0
  %3243 = vmatpush.msra.mxu0 %v421
  %3244 = vmatpush.msra.mxu0 %v413
  %3245 = vmatpush.msra.mxu0 %v405
  %3246 = vmatpush.msra.mxu0 %v397
  %3247 = vmatpush.msra.mxu0 %v389
  %3248 = vmatpush.msra.mxu0 %v381
  %3249 = vmatpush.msra.mxu0 %v373
  %3250 = vmatpush.msra.mxu0 %v365
  %3251 = vmatpush.msra.mxu0 %v357
  %3252 = vmatpush.msra.mxu0 %v349
  %3253 = vmatpush.msra.mxu0 %v341
  %3254 = vmatpush.msra.mxu0 %v333
  %3255 = vmatpush.msra.mxu0 %v325
  %3256 = vmatpush.msra.mxu0 %v317
  %3257 = vmatpush.msra.mxu0 %v309
  %3258 = vmatpush.msra.mxu0 %v301
  %3259 = vmatmul.f32.gmra.mxu0 %v22
  %v3260 = vpop.f32.mrf.mxu0
  %v3261 = vadd.f32 %v3241, %v3260
  %3262 = vdwg.mxu0
  %3263 = vmatpush.msra.mxu0 %v549
  %3264 = vmatpush.msra.mxu0 %v541
  %3265 = vmatpush.msra.mxu0 %v533
  %3266 = vmatpush.msra.mxu0 %v525
  %3267 = vmatpush.msra.mxu0 %v517
  %3268 = vmatpush.msra.mxu0 %v509
  %3269 = vmatpush.msra.mxu0 %v501
  %3270 = vmatpush.msra.mxu0 %v493
  %3271 = vmatpush.msra.mxu0 %v485
  %3272 = vmatpush.msra.mxu0 %v477
  %3273 = vmatpush.msra.mxu0 %v469
  %3274 = vmatpush.msra.mxu0 %v461
  %3275 = vmatpush.msra.mxu0 %v453
  %3276 = vmatpush.msra.mxu0 %v445
  %3277 = vmatpush.msra.mxu0 %v437
  %3278 = vmatpush.msra.mxu0 %v429
  %3279 = vmatmul.f32.gmra.mxu0 %v23
  %v3280 = vpop.f32.mrf.mxu0
  %v3281 = vadd.f32 %v3261, %v3280
  %3282 = vdwg.mxu0
  %3283 = vmatpush.msra.mxu0 %v677
  %3284 = vmatpush.msra.mxu0 %v669
  %3285 = vmatpush.msra.mxu0 %v661
  %3286 = vmatpush.msra.mxu0 %v653
  %3287 = vmatpush.msra.mxu0 %v645
  %3288 = vmatpush.msra.mxu0 %v637
  %3289 = vmatpush.msra.mxu0 %v629
  %3290 = vmatpush.msra.mxu0 %v621
  %3291 = vmatpush.msra.mxu0 %v613
  %3292 = vmatpush.msra.mxu0 %v605
  %3293 = vmatpush.msra.mxu0 %v597
  %3294 = vmatpush.msra.mxu0 %v589
  %3295 = vmatpush.msra.mxu0 %v581
  %3296 = vmatpush.msra.mxu0 %v573
  %3297 = vmatpush.msra.mxu0 %v565
  %3298 = vmatpush.msra.mxu0 %v557
  %3299 = vmatmul.f32.gmra.mxu0 %v24
  %v3300 = vpop.f32.mrf.mxu0
  %v3301 = vadd.f32 %v3281, %v3300
  %3302 = vdwg.mxu0
  %3303 = vmatpush.msra.mxu0 %v805
  %3304 = vmatpush.msra.mxu0 %v797
  %3305 = vmatpush.msra.mxu0 %v789
  %3306 = vmatpush.msra.mxu0 %v781
  %3307 = vmatpush.msra.mxu0 %v773
  %3308 = vmatpush.msra.mxu0 %v765
  %3309 = vmatpush.msra.mxu0 %v757
  %3310 = vmatpush.msra.mxu0 %v749
  %3311 = vmatpush.msra.mxu0 %v741
  %3312 = vmatpush.msra.mxu0 %v733
  %3313 = vmatpush.msra.mxu0 %v725
  %3314 = vmatpush.msra.mxu0 %v717
  %3315 = vmatpush.msra.mxu0 %v709
  %3316 = vmatpush.msra.mxu0 %v701
  %3317 = vmatpush.msra.mxu0 %v693
  %3318 = vmatpush.msra.mxu0 %v685
  %3319 = vmatmul.f32.gmra.mxu0 %v25
  %v3320 = vpop.f32.mrf.mxu0
  %v3321 = vadd.f32 %v3301, %v3320
  %3322 = vdwg.mxu0
  %3323 = vmatpush.msra.mxu0 %v933
  %3324 = vmatpush.msra.mxu0 %v925
  %3325 = vmatpush.msra.mxu0 %v917
  %3326 = vmatpush.msra.mxu0 %v909
  %3327 = vmatpush.msra.mxu0 %v901
  %3328 = vmatpush.msra.mxu0 %v893
  %3329 = vmatpush.msra.mxu0 %v885
  %3330 = vmatpush.msra.mxu0 %v877
  %3331 = vmatpush.msra.mxu0 %v869
  %3332 = vmatpush.msra.mxu0 %v861
  %3333 = vmatpush.msra.mxu0 %v853
  %3334 = vmatpush.msra.mxu0 %v845
  %3335 = vmatpush.msra.mxu0 %v837
  %3336 = vmatpush.msra.mxu0 %v829
  %3337 = vmatpush.msra.mxu0 %v821
  %3338 = vmatpush.msra.mxu0 %v813
  %3339 = vmatmul.f32.gmra.mxu0 %v26
  %v3340 = vpop.f32.mrf.mxu0
  %v3341 = vadd.f32 %v3321, %v3340
  %3342 = vdwg.mxu0
  %3343 = vmatpush.msra.mxu0 %v1061
  %3344 = vmatpush.msra.mxu0 %v1053
  %3345 = vmatpush.msra.mxu0 %v1045
  %3346 = vmatpush.msra.mxu0 %v1037
  %3347 = vmatpush.msra.mxu0 %v1029
  %3348 = vmatpush.msra.mxu0 %v1021
  %3349 = vmatpush.msra.mxu0 %v1013
  %3350 = vmatpush.msra.mxu0 %v1005
  %3351 = vmatpush.msra.mxu0 %v997
  %3352 = vmatpush.msra.mxu0 %v989
  %3353 = vmatpush.msra.mxu0 %v981
  %3354 = vmatpush.msra.mxu0 %v973
  %3355 = vmatpush.msra.mxu0 %v965
  %3356 = vmatpush.msra.mxu0 %v957
  %3357 = vmatpush.msra.mxu0 %v949
  %3358 = vmatpush.msra.mxu0 %v941
  %3359 = vmatmul.f32.gmra.mxu0 %v27
  %v3360 = vpop.f32.mrf.mxu0
  %v3361 = vadd.f32 %v3341, %v3360
  %3362 = vdwg.mxu0
  %3363 = vmatpush.msra.mxu0 %v1189
  %3364 = vmatpush.msra.mxu0 %v1181
  %3365 = vmatpush.msra.mxu0 %v1173
  %3366 = vmatpush.msra.mxu0 %v1165
  %3367 = vmatpush.msra.mxu0 %v1157
  %3368 = vmatpush.msra.mxu0 %v1149
  %3369 = vmatpush.msra.mxu0 %v1141
  %3370 = vmatpush.msra.mxu0 %v1133
  %3371 = vmatpush.msra.mxu0 %v1125
  %3372 = vmatpush.msra.mxu0 %v1117
  %3373 = vmatpush.msra.mxu0 %v1109
  %3374 = vmatpush.msra.mxu0 %v1101
  %3375 = vmatpush.msra.mxu0 %v1093
  %3376 = vmatpush.msra.mxu0 %v1085
  %3377 = vmatpush.msra.mxu0 %v1077
  %3378 = vmatpush.msra.mxu0 %v1069
  %3379 = vmatmul.f32.gmra.mxu0 %v28
  %v3380 = vpop.f32.mrf.mxu0
  %v3381 = vadd.f32 %v3361, %v3380
  %3382 = vdwg.mxu0
  %3383 = vmatpush.msra.mxu0 %v1317
  %3384 = vmatpush.msra.mxu0 %v1309
  %3385 = vmatpush.msra.mxu0 %v1301
  %3386 = vmatpush.msra.mxu0 %v1293
  %3387 = vmatpush.msra.mxu0 %v1285
  %3388 = vmatpush.msra.mxu0 %v1277
  %3389 = vmatpush.msra.mxu0 %v1269
  %3390 = vmatpush.msra.mxu0 %v1261
  %3391 = vmatpush.msra.mxu0 %v1253
  %3392 = vmatpush.msra.mxu0 %v1245
  %3393 = vmatpush.msra.mxu0 %v1237
  %3394 = vmatpush.msra.mxu0 %v1229
  %3395 = vmatpush.msra.mxu0 %v1221
  %3396 = vmatpush.msra.mxu0 %v1213
  %3397 = vmatpush.msra.mxu0 %v1205
  %3398 = vmatpush.msra.mxu0 %v1197
  %3399 = vmatmul.f32.gmra.mxu0 %v29
  %v3400 = vpop.f32.mrf.mxu0
  %v3401 = vadd.f32 %v3381, %v3400
  %3402 = vdwg.mxu0
  %3403 = vmatpush.msra.mxu0 %v1445
  %3404 = vmatpush.msra.mxu0 %v1437
  %3405 = vmatpush.msra.mxu0 %v1429
  %3406 = vmatpush.msra.mxu0 %v1421
  %3407 = vmatpush.msra.mxu0 %v1413
  %3408 = vmatpush.msra.mxu0 %v1405
  %3409 = vmatpush.msra.mxu0 %v1397
  %3410 = vmatpush.msra.mxu0 %v1389
  %3411 = vmatpush.msra.mxu0 %v1381
  %3412 = vmatpush.msra.mxu0 %v1373
  %3413 = vmatpush.msra.mxu0 %v1365
  %3414 = vmatpush.msra.mxu0 %v1357
  %3415 = vmatpush.msra.mxu0 %v1349
  %3416 = vmatpush.msra.mxu0 %v1341
  %3417 = vmatpush.msra.mxu0 %v1333
  %3418 = vmatpush.msra.mxu0 %v1325
  %3419 = vmatmul.f32.gmra.mxu0 %v30
  %v3420 = vpop.f32.mrf.mxu0
  %v3421 = vadd.f32 %v3401, %v3420
  %3422 = vdwg.mxu0
  %3423 = vmatpush.msra.mxu0 %v1573
  %3424 = vmatpush.msra.mxu0 %v1565
  %3425 = vmatpush.msra.mxu0 %v1557
  %3426 = vmatpush.msra.mxu0 %v1549
  %3427 = vmatpush.msra.mxu0 %v1541
  %3428 = vmatpush.msra.mxu0 %v1533
  %3429 = vmatpush.msra.mxu0 %v1525
  %3430 = vmatpush.msra.mxu0 %v1517
  %3431 = vmatpush.msra.mxu0 %v1509
  %3432 = vmatpush.msra.mxu0 %v1501
  %3433 = vmatpush.msra.mxu0 %v1493
  %3434 = vmatpush.msra.mxu0 %v1485
  %3435 = vmatpush.msra.mxu0 %v1477
  %3436 = vmatpush.msra.mxu0 %v1469
  %3437 = vmatpush.msra.mxu0 %v1461
  %3438 = vmatpush.msra.mxu0 %v1453
  %3439 = vmatmul.f32.gmra.mxu0 %v31
  %v3440 = vpop.f32.mrf.mxu0
  %v3441 = vadd.f32 %v3421, %v3440
  %3442 = vdwg.mxu0
  %3443 = vmatpush.msra.mxu0 %v1701
  %3444 = vmatpush.msra.mxu0 %v1693
  %3445 = vmatpush.msra.mxu0 %v1685
  %3446 = vmatpush.msra.mxu0 %v1677
  %3447 = vmatpush.msra.mxu0 %v1669
  %3448 = vmatpush.msra.mxu0 %v1661
  %3449 = vmatpush.msra.mxu0 %v1653
  %3450 = vmatpush.msra.mxu0 %v1645
  %3451 = vmatpush.msra.mxu0 %v1637
  %3452 = vmatpush.msra.mxu0 %v1629
  %3453 = vmatpush.msra.mxu0 %v1621
  %3454 = vmatpush.msra.mxu0 %v1613
  %3455 = vmatpush.msra.mxu0 %v1605
  %3456 = vmatpush.msra.mxu0 %v1597
  %3457 = vmatpush.msra.mxu0 %v1589
  %3458 = vmatpush.msra.mxu0 %v1581
  %3459 = vmatmul.f32.gmra.mxu0 %v32
  %v3460 = vpop.f32.mrf.mxu0
  %v3461 = vadd.f32 %v3441, %v3460
  %3462 = vdwg.mxu0
  %3463 = vmatpush.msra.mxu0 %v1829
  %3464 = vmatpush.msra.mxu0 %v1821
  %3465 = vmatpush.msra.mxu0 %v1813
  %3466 = vmatpush.msra.mxu0 %v1805
  %3467 = vmatpush.msra.mxu0 %v1797
  %3468 = vmatpush.msra.mxu0 %v1789
  %3469 = vmatpush.msra.mxu0 %v1781
  %3470 = vmatpush.msra.mxu0 %v1773
  %3471 = vmatpush.msra.mxu0 %v1765
  %3472 = vmatpush.msra.mxu0 %v1757
  %3473 = vmatpush.msra.mxu0 %v1749
  %3474 = vmatpush.msra.mxu0 %v1741
  %3475 = vmatpush.msra.mxu0 %v1733
  %3476 = vmatpush.msra.mxu0 %v1725
  %3477 = vmatpush.msra.mxu0 %v1717
  %3478 = vmatpush.msra.mxu0 %v1709
  %3479 = vmatmul.f32.gmra.mxu0 %v33
  %v3480 = vpop.f32.mrf.mxu0
  %v3481 = vadd.f32 %v3461, %v3480
  %3482 = vdwg.mxu0
  %3483 = vmatpush.msra.mxu0 %v1957
  %3484 = vmatpush.msra.mxu0 %v1949
  %3485 = vmatpush.msra.mxu0 %v1941
  %3486 = vmatpush.msra.mxu0 %v1933
  %3487 = vmatpush.msra.mxu0 %v1925
  %3488 = vmatpush.msra.mxu0 %v1917
  %3489 = vmatpush.msra.mxu0 %v1909
  %3490 = vmatpush.msra.mxu0 %v1901
  %3491 = vmatpush.msra.mxu0 %v1893
  %3492 = vmatpush.msra.mxu0 %v1885
  %3493 = vmatpush.msra.mxu0 %v1877
  %3494 = vmatpush.msra.mxu0 %v1869
  %3495 = vmatpush.msra.mxu0 %v1861
  %3496 = vmatpush.msra.mxu0 %v1853
  %3497 = vmatpush.msra.mxu0 %v1845
  %3498 = vmatpush.msra.mxu0 %v1837
  %3499 = vmatmul.f32.gmra.mxu0 %v34
  %v3500 = vpop.f32.mrf.mxu0
  %v3501 = vadd.f32 %v3481, %v3500
  %3502 = vdwg.mxu0
  %3503 = vmatpush.msra.mxu0 %v2085
  %3504 = vmatpush.msra.mxu0 %v2077
  %3505 = vmatpush.msra.mxu0 %v2069
  %3506 = vmatpush.msra.mxu0 %v2061
  %3507 = vmatpush.msra.mxu0 %v2053
  %3508 = vmatpush.msra.mxu0 %v2045
  %3509 = vmatpush.msra.mxu0 %v2037
  %3510 = vmatpush.msra.mxu0 %v2029
  %3511 = vmatpush.msra.mxu0 %v2021
  %3512 = vmatpush.msra.mxu0 %v2013
  %3513 = vmatpush.msra.mxu0 %v2005
  %3514 = vmatpush.msra.mxu0 %v1997
  %3515 = vmatpush.msra.mxu0 %v1989
  %3516 = vmatpush.msra.mxu0 %v1981
  %3517 = vmatpush.msra.mxu0 %v1973
  %3518 = vmatpush.msra.mxu0 %v1965
  %3519 = vmatmul.f32.gmra.mxu0 %v35
  %v3520 = vpop.f32.mrf.mxu0
  %v3521 = vadd.f32 %v3501, %v3520
  %3522 = vdwg.mxu0
  %3523 = vmatpush.msra.mxu0 %v2213
  %3524 = vmatpush.msra.mxu0 %v2205
  %3525 = vmatpush.msra.mxu0 %v2197
  %3526 = vmatpush.msra.mxu0 %v2189
  %3527 = vmatpush.msra.mxu0 %v2181
  %3528 = vmatpush.msra.mxu0 %v2173
  %3529 = vmatpush.msra.mxu0 %v2165
  %3530 = vmatpush.msra.mxu0 %v2157
  %3531 = vmatpush.msra.mxu0 %v2149
  %3532 = vmatpush.msra.mxu0 %v2141
  %3533 = vmatpush.msra.mxu0 %v2133
  %3534 = vmatpush.msra.mxu0 %v2125
  %3535 = vmatpush.msra.mxu0 %v2117
  %3536 = vmatpush.msra.mxu0 %v2109
  %3537 = vmatpush.msra.mxu0 %v2101
  %3538 = vmatpush.msra.mxu0 %v2093
  %3539 = vmatmul.f32.gmra.mxu0 %v36
  %v3540 = vpop.f32.mrf.mxu0
  %v3541 = vadd.f32 %v3521, %v3540
  %3542 = vdwg.mxu0
  %3543 = vmatpush.msra.mxu0 %v2341
  %3544 = vmatpush.msra.mxu0 %v2333
  %3545 = vmatpush.msra.mxu0 %v2325
  %3546 = vmatpush.msra.mxu0 %v2317
  %3547 = vmatpush.msra.mxu0 %v2309
  %3548 = vmatpush.msra.mxu0 %v2301
  %3549 = vmatpush.msra.mxu0 %v2293
  %3550 = vmatpush.msra.mxu0 %v2285
  %3551 = vmatpush.msra.mxu0 %v2277
  %3552 = vmatpush.msra.mxu0 %v2269
  %3553 = vmatpush.msra.mxu0 %v2261
  %3554 = vmatpush.msra.mxu0 %v2253
  %3555 = vmatpush.msra.mxu0 %v2245
  %3556 = vmatpush.msra.mxu0 %v2237
  %3557 = vmatpush.msra.mxu0 %v2229
  %3558 = vmatpush.msra.mxu0 %v2221
  %3559 = vmatmul.f32.gmra.mxu0 %v37
  %v3560 = vpop.f32.mrf.mxu0
  %v3561 = vadd.f32 %v3541, %v3560
  %3562 = vdwg.mxu0
  %3563 = vmatpush.msra.mxu0 %v2469
  %3564 = vmatpush.msra.mxu0 %v2461
  %3565 = vmatpush.msra.mxu0 %v2453
  %3566 = vmatpush.msra.mxu0 %v2445
  %3567 = vmatpush.msra.mxu0 %v2437
  %3568 = vmatpush.msra.mxu0 %v2429
  %3569 = vmatpush.msra.mxu0 %v2421
  %3570 = vmatpush.msra.mxu0 %v2413
  %3571 = vmatpush.msra.mxu0 %v2405
  %3572 = vmatpush.msra.mxu0 %v2397
  %3573 = vmatpush.msra.mxu0 %v2389
  %3574 = vmatpush.msra.mxu0 %v2381
  %3575 = vmatpush.msra.mxu0 %v2373
  %3576 = vmatpush.msra.mxu0 %v2365
  %3577 = vmatpush.msra.mxu0 %v2357
  %3578 = vmatpush.msra.mxu0 %v2349
  %3579 = vmatmul.f32.gmra.mxu0 %v38
  %v3580 = vpop.f32.mrf.mxu0
  %v3581 = vadd.f32 %v3561, %v3580
  %3582 = vdwg.mxu0
  %3583 = vmatpush.msra.mxu0 %v2597
  %3584 = vmatpush.msra.mxu0 %v2589
  %3585 = vmatpush.msra.mxu0 %v2581
  %3586 = vmatpush.msra.mxu0 %v2573
  %3587 = vmatpush.msra.mxu0 %v2565
  %3588 = vmatpush.msra.mxu0 %v2557
  %3589 = vmatpush.msra.mxu0 %v2549
  %3590 = vmatpush.msra.mxu0 %v2541
  %3591 = vmatpush.msra.mxu0 %v2533
  %3592 = vmatpush.msra.mxu0 %v2525
  %3593 = vmatpush.msra.mxu0 %v2517
  %3594 = vmatpush.msra.mxu0 %v2509
  %3595 = vmatpush.msra.mxu0 %v2501
  %3596 = vmatpush.msra.mxu0 %v2493
  %3597 = vmatpush.msra.mxu0 %v2485
  %3598 = vmatpush.msra.mxu0 %v2477
  %3599 = vmatmul.f32.gmra.mxu0 %v39
  %v3600 = vpop.f32.mrf.mxu0
  %v3601 = vadd.f32 %v3581, %v3600
  %3602 = vdwg.mxu0
  %3603 = vmatpush.msra.mxu0 %v2725
  %3604 = vmatpush.msra.mxu0 %v2717
  %3605 = vmatpush.msra.mxu0 %v2709
  %3606 = vmatpush.msra.mxu0 %v2701
  %3607 = vmatpush.msra.mxu0 %v2693
  %3608 = vmatpush.msra.mxu0 %v2685
  %3609 = vmatpush.msra.mxu0 %v2677
  %3610 = vmatpush.msra.mxu0 %v2669
  %3611 = vmatpush.msra.mxu0 %v2661
  %3612 = vmatpush.msra.mxu0 %v2653
  %3613 = vmatpush.msra.mxu0 %v2645
  %3614 = vmatpush.msra.mxu0 %v2637
  %3615 = vmatpush.msra.mxu0 %v2629
  %3616 = vmatpush.msra.mxu0 %v2621
  %3617 = vmatpush.msra.mxu0 %v2613
  %3618 = vmatpush.msra.mxu0 %v2605
  %3619 = vmatmul.f32.gmra.mxu0 %v40
  %v3620 = vpop.f32.mrf.mxu0
  %v3621 = vadd.f32 %v3601, %v3620
  %3622 = vdwg.mxu0
  %3623 = vmatpush.msra.mxu0 %v2853
  %3624 = vmatpush.msra.mxu0 %v2845
  %3625 = vmatpush.msra.mxu0 %v2837
  %3626 = vmatpush.msra.mxu0 %v2829
  %3627 = vmatpush.msra.mxu0 %v2821
  %3628 = vmatpush.msra.mxu0 %v2813
  %3629 = vmatpush.msra.mxu0 %v2805
  %3630 = vmatpush.msra.mxu0 %v2797
  %3631 = vmatpush.msra.mxu0 %v2789
  %3632 = vmatpush.msra.mxu0 %v2781
  %3633 = vmatpush.msra.mxu0 %v2773
  %3634 = vmatpush.msra.mxu0 %v2765
  %3635 = vmatpush.msra.mxu0 %v2757
  %3636 = vmatpush.msra.mxu0 %v2749
  %3637 = vmatpush.msra.mxu0 %v2741
  %3638 = vmatpush.msra.mxu0 %v2733
  %3639 = vmatmul.f32.gmra.mxu0 %v41
  %v3640 = vpop.f32.mrf.mxu0
  %v3641 = vadd.f32 %v3621, %v3640
  %3642 = vdwg.mxu0
  %3643 = vmatpush.msra.mxu0 %v2981
  %3644 = vmatpush.msra.mxu0 %v2973
  %3645 = vmatpush.msra.mxu0 %v2965
  %3646 = vmatpush.msra.mxu0 %v2957
  %3647 = vmatpush.msra.mxu0 %v2949
  %3648 = vmatpush.msra.mxu0 %v2941
  %3649 = vmatpush.msra.mxu0 %v2933
  %3650 = vmatpush.msra.mxu0 %v2925
  %3651 = vmatpush.msra.mxu0 %v2917
  %3652 = vmatpush.msra.mxu0 %v2909
  %3653 = vmatpush.msra.mxu0 %v2901
  %3654 = vmatpush.msra.mxu0 %v2893
  %3655 = vmatpush.msra.mxu0 %v2885
  %3656 = vmatpush.msra.mxu0 %v2877
  %3657 = vmatpush.msra.mxu0 %v2869
  %3658 = vmatpush.msra.mxu0 %v2861
  %3659 = vmatmul.f32.gmra.mxu0 %v42
  %v3660 = vpop.f32.mrf.mxu0
  %v3661 = vadd.f32 %v3641, %v3660
  %3662 = vdwg.mxu0
  %3663 = vmatpush.msra.mxu0 %v3109
  %3664 = vmatpush.msra.mxu0 %v3101
  %3665 = vmatpush.msra.mxu0 %v3093
  %3666 = vmatpush.msra.mxu0 %v3085
  %3667 = vmatpush.msra.mxu0 %v3077
  %3668 = vmatpush.msra.mxu0 %v3069
  %3669 = vmatpush.msra.mxu0 %v3061
  %3670 = vmatpush.msra.mxu0 %v3053
  %3671 = vmatpush.msra.mxu0 %v3045
  %3672 = vmatpush.msra.mxu0 %v3037
  %3673 = vmatpush.msra.mxu0 %v3029
  %3674 = vmatpush.msra.mxu0 %v3021
  %3675 = vmatpush.msra.mxu0 %v3013
  %3676 = vmatpush.msra.mxu0 %v3005
  %3677 = vmatpush.msra.mxu0 %v2997
  %3678 = vmatpush.msra.mxu0 %v2989
  %3679 = vmatmul.f32.gmra.mxu0 %v43
  %v3680 = vpop.f32.mrf.mxu0
  %v3681 = vadd.f32 %v3661, %v3680
  %3682 = vdwg.mxu0
  %3683 = vmatpush.msra.mxu0 0.0
  %3684 = vmatpush.msra.mxu0 0.0
  %3685 = vmatpush.msra.mxu0 0.0
  %3686 = vmatpush.msra.mxu0 0.0
  %3687 = vmatpush.msra.mxu0 0.0
  %3688 = vmatpush.msra.mxu0 0.0
  %3689 = vmatpush.msra.mxu0 0.0
  %3690 = vmatpush.msra.mxu0 0.0
  %3691 = vmatpush.msra.mxu0 %v3173
  %3692 = vmatpush.msra.mxu0 %v3165
  %3693 = vmatpush.msra.mxu0 %v3157
  %3694 = vmatpush.msra.mxu0 %v3149
  %3695 = vmatpush.msra.mxu0 %v3141
  %3696 = vmatpush.msra.mxu0 %v3133
  %3697 = vmatpush.msra.mxu0 %v3125
  %3698 = vmatpush.msra.mxu0 %v3117
  %3699 = vmatmul.f32.gmra.mxu0 %v3201
  %v3700 = vpop.f32.mrf.mxu0
  %v3701 = vadd.f32 %v3681, %v3700
  %3702 = vdwg.mxu0
  %3703 = vmatpush.msra.mxu0 %v166
  %3704 = vmatpush.msra.mxu0 %v158
  %3705 = vmatpush.msra.mxu0 %v150
  %3706 = vmatpush.msra.mxu0 %v142
  %3707 = vmatpush.msra.mxu0 %v134
  %3708 = vmatpush.msra.mxu0 %v126
  %3709 = vmatpush.msra.mxu0 %v118
  %3710 = vmatpush.msra.mxu0 %v110
  %3711 = vmatpush.msra.mxu0 %v102
  %3712 = vmatpush.msra.mxu0 %v94
  %3713 = vmatpush.msra.mxu0 %v86
  %3714 = vmatpush.msra.mxu0 %v78
  %3715 = vmatpush.msra.mxu0 %v70
  %3716 = vmatpush.msra.mxu0 %v62
  %3717 = vmatpush.msra.mxu0 %v54
  %3718 = vmatpush.msra.mxu0 %v46
  %3719 = vmatmul.f32.gmra.mxu0 %v20
  %v3720 = vpop.f32.mrf.mxu0
  %v3721 = vadd.f32 %v3184, %v3720
  %3722 = vdwg.mxu0
  %3723 = vmatpush.msra.mxu0 %v294
  %3724 = vmatpush.msra.mxu0 %v286
  %3725 = vmatpush.msra.mxu0 %v278
  %3726 = vmatpush.msra.mxu0 %v270
  %3727 = vmatpush.msra.mxu0 %v262
  %3728 = vmatpush.msra.mxu0 %v254
  %3729 = vmatpush.msra.mxu0 %v246
  %3730 = vmatpush.msra.mxu0 %v238
  %3731 = vmatpush.msra.mxu0 %v230
  %3732 = vmatpush.msra.mxu0 %v222
  %3733 = vmatpush.msra.mxu0 %v214
  %3734 = vmatpush.msra.mxu0 %v206
  %3735 = vmatpush.msra.mxu0 %v198
  %3736 = vmatpush.msra.mxu0 %v190
  %3737 = vmatpush.msra.mxu0 %v182
  %3738 = vmatpush.msra.mxu0 %v174
  %3739 = vmatmul.f32.gmra.mxu0 %v21
  %v3740 = vpop.f32.mrf.mxu0
  %v3741 = vadd.f32 %v3721, %v3740
  %3742 = vdwg.mxu0
  %3743 = vmatpush.msra.mxu0 %v422
  %3744 = vmatpush.msra.mxu0 %v414
  %3745 = vmatpush.msra.mxu0 %v406
  %3746 = vmatpush.msra.mxu0 %v398
  %3747 = vmatpush.msra.mxu0 %v390
  %3748 = vmatpush.msra.mxu0 %v382
  %3749 = vmatpush.msra.mxu0 %v374
  %3750 = vmatpush.msra.mxu0 %v366
  %3751 = vmatpush.msra.mxu0 %v358
  %3752 = vmatpush.msra.mxu0 %v350
  %3753 = vmatpush.msra.mxu0 %v342
  %3754 = vmatpush.msra.mxu0 %v334
  %3755 = vmatpush.msra.mxu0 %v326
  %3756 = vmatpush.msra.mxu0 %v318
  %3757 = vmatpush.msra.mxu0 %v310
  %3758 = vmatpush.msra.mxu0 %v302
  %3759 = vmatmul.f32.gmra.mxu0 %v22
  %v3760 = vpop.f32.mrf.mxu0
  %v3761 = vadd.f32 %v3741, %v3760
  %3762 = vdwg.mxu0
  %3763 = vmatpush.msra.mxu0 %v550
  %3764 = vmatpush.msra.mxu0 %v542
  %3765 = vmatpush.msra.mxu0 %v534
  %3766 = vmatpush.msra.mxu0 %v526
  %3767 = vmatpush.msra.mxu0 %v518
  %3768 = vmatpush.msra.mxu0 %v510
  %3769 = vmatpush.msra.mxu0 %v502
  %3770 = vmatpush.msra.mxu0 %v494
  %3771 = vmatpush.msra.mxu0 %v486
  %3772 = vmatpush.msra.mxu0 %v478
  %3773 = vmatpush.msra.mxu0 %v470
  %3774 = vmatpush.msra.mxu0 %v462
  %3775 = vmatpush.msra.mxu0 %v454
  %3776 = vmatpush.msra.mxu0 %v446
  %3777 = vmatpush.msra.mxu0 %v438
  %3778 = vmatpush.msra.mxu0 %v430
  %3779 = vmatmul.f32.gmra.mxu0 %v23
  %v3780 = vpop.f32.mrf.mxu0
  %v3781 = vadd.f32 %v3761, %v3780
  %3782 = vdwg.mxu0
  %3783 = vmatpush.msra.mxu0 %v678
  %3784 = vmatpush.msra.mxu0 %v670
  %3785 = vmatpush.msra.mxu0 %v662
  %3786 = vmatpush.msra.mxu0 %v654
  %3787 = vmatpush.msra.mxu0 %v646
  %3788 = vmatpush.msra.mxu0 %v638
  %3789 = vmatpush.msra.mxu0 %v630
  %3790 = vmatpush.msra.mxu0 %v622
  %3791 = vmatpush.msra.mxu0 %v614
  %3792 = vmatpush.msra.mxu0 %v606
  %3793 = vmatpush.msra.mxu0 %v598
  %3794 = vmatpush.msra.mxu0 %v590
  %3795 = vmatpush.msra.mxu0 %v582
  %3796 = vmatpush.msra.mxu0 %v574
  %3797 = vmatpush.msra.mxu0 %v566
  %3798 = vmatpush.msra.mxu0 %v558
  %3799 = vmatmul.f32.gmra.mxu0 %v24
  %v3800 = vpop.f32.mrf.mxu0
  %v3801 = vadd.f32 %v3781, %v3800
  %3802 = vdwg.mxu0
  %3803 = vmatpush.msra.mxu0 %v806
  %3804 = vmatpush.msra.mxu0 %v798
  %3805 = vmatpush.msra.mxu0 %v790
  %3806 = vmatpush.msra.mxu0 %v782
  %3807 = vmatpush.msra.mxu0 %v774
  %3808 = vmatpush.msra.mxu0 %v766
  %3809 = vmatpush.msra.mxu0 %v758
  %3810 = vmatpush.msra.mxu0 %v750
  %3811 = vmatpush.msra.mxu0 %v742
  %3812 = vmatpush.msra.mxu0 %v734
  %3813 = vmatpush.msra.mxu0 %v726
  %3814 = vmatpush.msra.mxu0 %v718
  %3815 = vmatpush.msra.mxu0 %v710
  %3816 = vmatpush.msra.mxu0 %v702
  %3817 = vmatpush.msra.mxu0 %v694
  %3818 = vmatpush.msra.mxu0 %v686
  %3819 = vmatmul.f32.gmra.mxu0 %v25
  %v3820 = vpop.f32.mrf.mxu0
  %v3821 = vadd.f32 %v3801, %v3820
  %3822 = vdwg.mxu0
  %3823 = vmatpush.msra.mxu0 %v934
  %3824 = vmatpush.msra.mxu0 %v926
  %3825 = vmatpush.msra.mxu0 %v918
  %3826 = vmatpush.msra.mxu0 %v910
  %3827 = vmatpush.msra.mxu0 %v902
  %3828 = vmatpush.msra.mxu0 %v894
  %3829 = vmatpush.msra.mxu0 %v886
  %3830 = vmatpush.msra.mxu0 %v878
  %3831 = vmatpush.msra.mxu0 %v870
  %3832 = vmatpush.msra.mxu0 %v862
  %3833 = vmatpush.msra.mxu0 %v854
  %3834 = vmatpush.msra.mxu0 %v846
  %3835 = vmatpush.msra.mxu0 %v838
  %3836 = vmatpush.msra.mxu0 %v830
  %3837 = vmatpush.msra.mxu0 %v822
  %3838 = vmatpush.msra.mxu0 %v814
  %3839 = vmatmul.f32.gmra.mxu0 %v26
  %v3840 = vpop.f32.mrf.mxu0
  %v3841 = vadd.f32 %v3821, %v3840
  %3842 = vdwg.mxu0
  %3843 = vmatpush.msra.mxu0 %v1062
  %3844 = vmatpush.msra.mxu0 %v1054
  %3845 = vmatpush.msra.mxu0 %v1046
  %3846 = vmatpush.msra.mxu0 %v1038
  %3847 = vmatpush.msra.mxu0 %v1030
  %3848 = vmatpush.msra.mxu0 %v1022
  %3849 = vmatpush.msra.mxu0 %v1014
  %3850 = vmatpush.msra.mxu0 %v1006
  %3851 = vmatpush.msra.mxu0 %v998
  %3852 = vmatpush.msra.mxu0 %v990
  %3853 = vmatpush.msra.mxu0 %v982
  %3854 = vmatpush.msra.mxu0 %v974
  %3855 = vmatpush.msra.mxu0 %v966
  %3856 = vmatpush.msra.mxu0 %v958
  %3857 = vmatpush.msra.mxu0 %v950
  %3858 = vmatpush.msra.mxu0 %v942
  %3859 = vmatmul.f32.gmra.mxu0 %v27
  %v3860 = vpop.f32.mrf.mxu0
  %v3861 = vadd.f32 %v3841, %v3860
  %3862 = vdwg.mxu0
  %3863 = vmatpush.msra.mxu0 %v1190
  %3864 = vmatpush.msra.mxu0 %v1182
  %3865 = vmatpush.msra.mxu0 %v1174
  %3866 = vmatpush.msra.mxu0 %v1166
  %3867 = vmatpush.msra.mxu0 %v1158
  %3868 = vmatpush.msra.mxu0 %v1150
  %3869 = vmatpush.msra.mxu0 %v1142
  %3870 = vmatpush.msra.mxu0 %v1134
  %3871 = vmatpush.msra.mxu0 %v1126
  %3872 = vmatpush.msra.mxu0 %v1118
  %3873 = vmatpush.msra.mxu0 %v1110
  %3874 = vmatpush.msra.mxu0 %v1102
  %3875 = vmatpush.msra.mxu0 %v1094
  %3876 = vmatpush.msra.mxu0 %v1086
  %3877 = vmatpush.msra.mxu0 %v1078
  %3878 = vmatpush.msra.mxu0 %v1070
  %3879 = vmatmul.f32.gmra.mxu0 %v28
  %v3880 = vpop.f32.mrf.mxu0
  %v3881 = vadd.f32 %v3861, %v3880
  %3882 = vdwg.mxu0
  %3883 = vmatpush.msra.mxu0 %v1318
  %3884 = vmatpush.msra.mxu0 %v1310
  %3885 = vmatpush.msra.mxu0 %v1302
  %3886 = vmatpush.msra.mxu0 %v1294
  %3887 = vmatpush.msra.mxu0 %v1286
  %3888 = vmatpush.msra.mxu0 %v1278
  %3889 = vmatpush.msra.mxu0 %v1270
  %3890 = vmatpush.msra.mxu0 %v1262
  %3891 = vmatpush.msra.mxu0 %v1254
  %3892 = vmatpush.msra.mxu0 %v1246
  %3893 = vmatpush.msra.mxu0 %v1238
  %3894 = vmatpush.msra.mxu0 %v1230
  %3895 = vmatpush.msra.mxu0 %v1222
  %3896 = vmatpush.msra.mxu0 %v1214
  %3897 = vmatpush.msra.mxu0 %v1206
  %3898 = vmatpush.msra.mxu0 %v1198
  %3899 = vmatmul.f32.gmra.mxu0 %v29
  %v3900 = vpop.f32.mrf.mxu0
  %v3901 = vadd.f32 %v3881, %v3900
  %3902 = vdwg.mxu0
  %3903 = vmatpush.msra.mxu0 %v1446
  %3904 = vmatpush.msra.mxu0 %v1438
  %3905 = vmatpush.msra.mxu0 %v1430
  %3906 = vmatpush.msra.mxu0 %v1422
  %3907 = vmatpush.msra.mxu0 %v1414
  %3908 = vmatpush.msra.mxu0 %v1406
  %3909 = vmatpush.msra.mxu0 %v1398
  %3910 = vmatpush.msra.mxu0 %v1390
  %3911 = vmatpush.msra.mxu0 %v1382
  %3912 = vmatpush.msra.mxu0 %v1374
  %3913 = vmatpush.msra.mxu0 %v1366
  %3914 = vmatpush.msra.mxu0 %v1358
  %3915 = vmatpush.msra.mxu0 %v1350
  %3916 = vmatpush.msra.mxu0 %v1342
  %3917 = vmatpush.msra.mxu0 %v1334
  %3918 = vmatpush.msra.mxu0 %v1326
  %3919 = vmatmul.f32.gmra.mxu0 %v30
  %v3920 = vpop.f32.mrf.mxu0
  %v3921 = vadd.f32 %v3901, %v3920
  %3922 = vdwg.mxu0
  %3923 = vmatpush.msra.mxu0 %v1574
  %3924 = vmatpush.msra.mxu0 %v1566
  %3925 = vmatpush.msra.mxu0 %v1558
  %3926 = vmatpush.msra.mxu0 %v1550
  %3927 = vmatpush.msra.mxu0 %v1542
  %3928 = vmatpush.msra.mxu0 %v1534
  %3929 = vmatpush.msra.mxu0 %v1526
  %3930 = vmatpush.msra.mxu0 %v1518
  %3931 = vmatpush.msra.mxu0 %v1510
  %3932 = vmatpush.msra.mxu0 %v1502
  %3933 = vmatpush.msra.mxu0 %v1494
  %3934 = vmatpush.msra.mxu0 %v1486
  %3935 = vmatpush.msra.mxu0 %v1478
  %3936 = vmatpush.msra.mxu0 %v1470
  %3937 = vmatpush.msra.mxu0 %v1462
  %3938 = vmatpush.msra.mxu0 %v1454
  %3939 = vmatmul.f32.gmra.mxu0 %v31
  %v3940 = vpop.f32.mrf.mxu0
  %v3941 = vadd.f32 %v3921, %v3940
  %3942 = vdwg.mxu0
  %3943 = vmatpush.msra.mxu0 %v1702
  %3944 = vmatpush.msra.mxu0 %v1694
  %3945 = vmatpush.msra.mxu0 %v1686
  %3946 = vmatpush.msra.mxu0 %v1678
  %3947 = vmatpush.msra.mxu0 %v1670
  %3948 = vmatpush.msra.mxu0 %v1662
  %3949 = vmatpush.msra.mxu0 %v1654
  %3950 = vmatpush.msra.mxu0 %v1646
  %3951 = vmatpush.msra.mxu0 %v1638
  %3952 = vmatpush.msra.mxu0 %v1630
  %3953 = vmatpush.msra.mxu0 %v1622
  %3954 = vmatpush.msra.mxu0 %v1614
  %3955 = vmatpush.msra.mxu0 %v1606
  %3956 = vmatpush.msra.mxu0 %v1598
  %3957 = vmatpush.msra.mxu0 %v1590
  %3958 = vmatpush.msra.mxu0 %v1582
  %3959 = vmatmul.f32.gmra.mxu0 %v32
  %v3960 = vpop.f32.mrf.mxu0
  %v3961 = vadd.f32 %v3941, %v3960
  %3962 = vdwg.mxu0
  %3963 = vmatpush.msra.mxu0 %v1830
  %3964 = vmatpush.msra.mxu0 %v1822
  %3965 = vmatpush.msra.mxu0 %v1814
  %3966 = vmatpush.msra.mxu0 %v1806
  %3967 = vmatpush.msra.mxu0 %v1798
  %3968 = vmatpush.msra.mxu0 %v1790
  %3969 = vmatpush.msra.mxu0 %v1782
  %3970 = vmatpush.msra.mxu0 %v1774
  %3971 = vmatpush.msra.mxu0 %v1766
  %3972 = vmatpush.msra.mxu0 %v1758
  %3973 = vmatpush.msra.mxu0 %v1750
  %3974 = vmatpush.msra.mxu0 %v1742
  %3975 = vmatpush.msra.mxu0 %v1734
  %3976 = vmatpush.msra.mxu0 %v1726
  %3977 = vmatpush.msra.mxu0 %v1718
  %3978 = vmatpush.msra.mxu0 %v1710
  %3979 = vmatmul.f32.gmra.mxu0 %v33
  %v3980 = vpop.f32.mrf.mxu0
  %v3981 = vadd.f32 %v3961, %v3980
  %3982 = vdwg.mxu0
  %3983 = vmatpush.msra.mxu0 %v1958
  %3984 = vmatpush.msra.mxu0 %v1950
  %3985 = vmatpush.msra.mxu0 %v1942
  %3986 = vmatpush.msra.mxu0 %v1934
  %3987 = vmatpush.msra.mxu0 %v1926
  %3988 = vmatpush.msra.mxu0 %v1918
  %3989 = vmatpush.msra.mxu0 %v1910
  %3990 = vmatpush.msra.mxu0 %v1902
  %3991 = vmatpush.msra.mxu0 %v1894
  %3992 = vmatpush.msra.mxu0 %v1886
  %3993 = vmatpush.msra.mxu0 %v1878
  %3994 = vmatpush.msra.mxu0 %v1870
  %3995 = vmatpush.msra.mxu0 %v1862
  %3996 = vmatpush.msra.mxu0 %v1854
  %3997 = vmatpush.msra.mxu0 %v1846
  %3998 = vmatpush.msra.mxu0 %v1838
  %3999 = vmatmul.f32.gmra.mxu0 %v34
  %v4000 = vpop.f32.mrf.mxu0
  %v4001 = vadd.f32 %v3981, %v4000
  %4002 = vdwg.mxu0
  %4003 = vmatpush.msra.mxu0 %v2086
  %4004 = vmatpush.msra.mxu0 %v2078
  %4005 = vmatpush.msra.mxu0 %v2070
  %4006 = vmatpush.msra.mxu0 %v2062
  %4007 = vmatpush.msra.mxu0 %v2054
  %4008 = vmatpush.msra.mxu0 %v2046
  %4009 = vmatpush.msra.mxu0 %v2038
  %4010 = vmatpush.msra.mxu0 %v2030
  %4011 = vmatpush.msra.mxu0 %v2022
  %4012 = vmatpush.msra.mxu0 %v2014
  %4013 = vmatpush.msra.mxu0 %v2006
  %4014 = vmatpush.msra.mxu0 %v1998
  %4015 = vmatpush.msra.mxu0 %v1990
  %4016 = vmatpush.msra.mxu0 %v1982
  %4017 = vmatpush.msra.mxu0 %v1974
  %4018 = vmatpush.msra.mxu0 %v1966
  %4019 = vmatmul.f32.gmra.mxu0 %v35
  %v4020 = vpop.f32.mrf.mxu0
  %v4021 = vadd.f32 %v4001, %v4020
  %4022 = vdwg.mxu0
  %4023 = vmatpush.msra.mxu0 %v2214
  %4024 = vmatpush.msra.mxu0 %v2206
  %4025 = vmatpush.msra.mxu0 %v2198
  %4026 = vmatpush.msra.mxu0 %v2190
  %4027 = vmatpush.msra.mxu0 %v2182
  %4028 = vmatpush.msra.mxu0 %v2174
  %4029 = vmatpush.msra.mxu0 %v2166
  %4030 = vmatpush.msra.mxu0 %v2158
  %4031 = vmatpush.msra.mxu0 %v2150
  %4032 = vmatpush.msra.mxu0 %v2142
  %4033 = vmatpush.msra.mxu0 %v2134
  %4034 = vmatpush.msra.mxu0 %v2126
  %4035 = vmatpush.msra.mxu0 %v2118
  %4036 = vmatpush.msra.mxu0 %v2110
  %4037 = vmatpush.msra.mxu0 %v2102
  %4038 = vmatpush.msra.mxu0 %v2094
  %4039 = vmatmul.f32.gmra.mxu0 %v36
  %v4040 = vpop.f32.mrf.mxu0
  %v4041 = vadd.f32 %v4021, %v4040
  %4042 = vdwg.mxu0
  %4043 = vmatpush.msra.mxu0 %v2342
  %4044 = vmatpush.msra.mxu0 %v2334
  %4045 = vmatpush.msra.mxu0 %v2326
  %4046 = vmatpush.msra.mxu0 %v2318
  %4047 = vmatpush.msra.mxu0 %v2310
  %4048 = vmatpush.msra.mxu0 %v2302
  %4049 = vmatpush.msra.mxu0 %v2294
  %4050 = vmatpush.msra.mxu0 %v2286
  %4051 = vmatpush.msra.mxu0 %v2278
  %4052 = vmatpush.msra.mxu0 %v2270
  %4053 = vmatpush.msra.mxu0 %v2262
  %4054 = vmatpush.msra.mxu0 %v2254
  %4055 = vmatpush.msra.mxu0 %v2246
  %4056 = vmatpush.msra.mxu0 %v2238
  %4057 = vmatpush.msra.mxu0 %v2230
  %4058 = vmatpush.msra.mxu0 %v2222
  %4059 = vmatmul.f32.gmra.mxu0 %v37
  %v4060 = vpop.f32.mrf.mxu0
  %v4061 = vadd.f32 %v4041, %v4060
  %4062 = vdwg.mxu0
  %4063 = vmatpush.msra.mxu0 %v2470
  %4064 = vmatpush.msra.mxu0 %v2462
  %4065 = vmatpush.msra.mxu0 %v2454
  %4066 = vmatpush.msra.mxu0 %v2446
  %4067 = vmatpush.msra.mxu0 %v2438
  %4068 = vmatpush.msra.mxu0 %v2430
  %4069 = vmatpush.msra.mxu0 %v2422
  %4070 = vmatpush.msra.mxu0 %v2414
  %4071 = vmatpush.msra.mxu0 %v2406
  %4072 = vmatpush.msra.mxu0 %v2398
  %4073 = vmatpush.msra.mxu0 %v2390
  %4074 = vmatpush.msra.mxu0 %v2382
  %4075 = vmatpush.msra.mxu0 %v2374
  %4076 = vmatpush.msra.mxu0 %v2366
  %4077 = vmatpush.msra.mxu0 %v2358
  %4078 = vmatpush.msra.mxu0 %v2350
  %4079 = vmatmul.f32.gmra.mxu0 %v38
  %v4080 = vpop.f32.mrf.mxu0
  %v4081 = vadd.f32 %v4061, %v4080
  %4082 = vdwg.mxu0
  %4083 = vmatpush.msra.mxu0 %v2598
  %4084 = vmatpush.msra.mxu0 %v2590
  %4085 = vmatpush.msra.mxu0 %v2582
  %4086 = vmatpush.msra.mxu0 %v2574
  %4087 = vmatpush.msra.mxu0 %v2566
  %4088 = vmatpush.msra.mxu0 %v2558
  %4089 = vmatpush.msra.mxu0 %v2550
  %4090 = vmatpush.msra.mxu0 %v2542
  %4091 = vmatpush.msra.mxu0 %v2534
  %4092 = vmatpush.msra.mxu0 %v2526
  %4093 = vmatpush.msra.mxu0 %v2518
  %4094 = vmatpush.msra.mxu0 %v2510
  %4095 = vmatpush.msra.mxu0 %v2502
  %4096 = vmatpush.msra.mxu0 %v2494
  %4097 = vmatpush.msra.mxu0 %v2486
  %4098 = vmatpush.msra.mxu0 %v2478
  %4099 = vmatmul.f32.gmra.mxu0 %v39
  %v4100 = vpop.f32.mrf.mxu0
  %v4101 = vadd.f32 %v4081, %v4100
  %4102 = vdwg.mxu0
  %4103 = vmatpush.msra.mxu0 %v2726
  %4104 = vmatpush.msra.mxu0 %v2718
  %4105 = vmatpush.msra.mxu0 %v2710
  %4106 = vmatpush.msra.mxu0 %v2702
  %4107 = vmatpush.msra.mxu0 %v2694
  %4108 = vmatpush.msra.mxu0 %v2686
  %4109 = vmatpush.msra.mxu0 %v2678
  %4110 = vmatpush.msra.mxu0 %v2670
  %4111 = vmatpush.msra.mxu0 %v2662
  %4112 = vmatpush.msra.mxu0 %v2654
  %4113 = vmatpush.msra.mxu0 %v2646
  %4114 = vmatpush.msra.mxu0 %v2638
  %4115 = vmatpush.msra.mxu0 %v2630
  %4116 = vmatpush.msra.mxu0 %v2622
  %4117 = vmatpush.msra.mxu0 %v2614
  %4118 = vmatpush.msra.mxu0 %v2606
  %4119 = vmatmul.f32.gmra.mxu0 %v40
  %v4120 = vpop.f32.mrf.mxu0
  %v4121 = vadd.f32 %v4101, %v4120
  %4122 = vdwg.mxu0
  %4123 = vmatpush.msra.mxu0 %v2854
  %4124 = vmatpush.msra.mxu0 %v2846
  %4125 = vmatpush.msra.mxu0 %v2838
  %4126 = vmatpush.msra.mxu0 %v2830
  %4127 = vmatpush.msra.mxu0 %v2822
  %4128 = vmatpush.msra.mxu0 %v2814
  %4129 = vmatpush.msra.mxu0 %v2806
  %4130 = vmatpush.msra.mxu0 %v2798
  %4131 = vmatpush.msra.mxu0 %v2790
  %4132 = vmatpush.msra.mxu0 %v2782
  %4133 = vmatpush.msra.mxu0 %v2774
  %4134 = vmatpush.msra.mxu0 %v2766
  %4135 = vmatpush.msra.mxu0 %v2758
  %4136 = vmatpush.msra.mxu0 %v2750
  %4137 = vmatpush.msra.mxu0 %v2742
  %4138 = vmatpush.msra.mxu0 %v2734
  %4139 = vmatmul.f32.gmra.mxu0 %v41
  %v4140 = vpop.f32.mrf.mxu0
  %v4141 = vadd.f32 %v4121, %v4140
  %4142 = vdwg.mxu0
  %4143 = vmatpush.msra.mxu0 %v2982
  %4144 = vmatpush.msra.mxu0 %v2974
  %4145 = vmatpush.msra.mxu0 %v2966
  %4146 = vmatpush.msra.mxu0 %v2958
  %4147 = vmatpush.msra.mxu0 %v2950
  %4148 = vmatpush.msra.mxu0 %v2942
  %4149 = vmatpush.msra.mxu0 %v2934
  %4150 = vmatpush.msra.mxu0 %v2926
  %4151 = vmatpush.msra.mxu0 %v2918
  %4152 = vmatpush.msra.mxu0 %v2910
  %4153 = vmatpush.msra.mxu0 %v2902
  %4154 = vmatpush.msra.mxu0 %v2894
  %4155 = vmatpush.msra.mxu0 %v2886
  %4156 = vmatpush.msra.mxu0 %v2878
  %4157 = vmatpush.msra.mxu0 %v2870
  %4158 = vmatpush.msra.mxu0 %v2862
  %4159 = vmatmul.f32.gmra.mxu0 %v42
  %v4160 = vpop.f32.mrf.mxu0
  %v4161 = vadd.f32 %v4141, %v4160
  %4162 = vdwg.mxu0
  %4163 = vmatpush.msra.mxu0 %v3110
  %4164 = vmatpush.msra.mxu0 %v3102
  %4165 = vmatpush.msra.mxu0 %v3094
  %4166 = vmatpush.msra.mxu0 %v3086
  %4167 = vmatpush.msra.mxu0 %v3078
  %4168 = vmatpush.msra.mxu0 %v3070
  %4169 = vmatpush.msra.mxu0 %v3062
  %4170 = vmatpush.msra.mxu0 %v3054
  %4171 = vmatpush.msra.mxu0 %v3046
  %4172 = vmatpush.msra.mxu0 %v3038
  %4173 = vmatpush.msra.mxu0 %v3030
  %4174 = vmatpush.msra.mxu0 %v3022
  %4175 = vmatpush.msra.mxu0 %v3014
  %4176 = vmatpush.msra.mxu0 %v3006
  %4177 = vmatpush.msra.mxu0 %v2998
  %4178 = vmatpush.msra.mxu0 %v2990
  %4179 = vmatmul.f32.gmra.mxu0 %v43
  %v4180 = vpop.f32.mrf.mxu0
  %v4181 = vadd.f32 %v4161, %v4180
  %4182 = vdwg.mxu0
  %4183 = vmatpush.msra.mxu0 0.0
  %4184 = vmatpush.msra.mxu0 0.0
  %4185 = vmatpush.msra.mxu0 0.0
  %4186 = vmatpush.msra.mxu0 0.0
  %4187 = vmatpush.msra.mxu0 0.0
  %4188 = vmatpush.msra.mxu0 0.0
  %4189 = vmatpush.msra.mxu0 0.0
  %4190 = vmatpush.msra.mxu0 0.0
  %4191 = vmatpush.msra.mxu0 %v3174
  %4192 = vmatpush.msra.mxu0 %v3166
  %4193 = vmatpush.msra.mxu0 %v3158
  %4194 = vmatpush.msra.mxu0 %v3150
  %4195 = vmatpush.msra.mxu0 %v3142
  %4196 = vmatpush.msra.mxu0 %v3134
  %4197 = vmatpush.msra.mxu0 %v3126
  %4198 = vmatpush.msra.mxu0 %v3118
  %4199 = vmatmul.f32.gmra.mxu0 %v3201
  %v4200 = vpop.f32.mrf.mxu0
  %v4201 = vadd.f32 %v4181, %v4200
  %4202 = vdwg.mxu0
  %4203 = vmatpush.msra.mxu0 %v167
  %4204 = vmatpush.msra.mxu0 %v159
  %4205 = vmatpush.msra.mxu0 %v151
  %4206 = vmatpush.msra.mxu0 %v143
  %4207 = vmatpush.msra.mxu0 %v135
  %4208 = vmatpush.msra.mxu0 %v127
  %4209 = vmatpush.msra.mxu0 %v119
  %4210 = vmatpush.msra.mxu0 %v111
  %4211 = vmatpush.msra.mxu0 %v103
  %4212 = vmatpush.msra.mxu0 %v95
  %4213 = vmatpush.msra.mxu0 %v87
  %4214 = vmatpush.msra.mxu0 %v79
  %4215 = vmatpush.msra.mxu0 %v71
  %4216 = vmatpush.msra.mxu0 %v63
  %4217 = vmatpush.msra.mxu0 %v55
  %4218 = vmatpush.msra.mxu0 %v47
  %4219 = vmatmul.f32.gmra.mxu0 %v20
  %v4220 = vpop.f32.mrf.mxu0
  %v4221 = vadd.f32 %v3185, %v4220
  %4222 = vdwg.mxu0
  %4223 = vmatpush.msra.mxu0 %v295
  %4224 = vmatpush.msra.mxu0 %v287
  %4225 = vmatpush.msra.mxu0 %v279
  %4226 = vmatpush.msra.mxu0 %v271
  %4227 = vmatpush.msra.mxu0 %v263
  %4228 = vmatpush.msra.mxu0 %v255
  %4229 = vmatpush.msra.mxu0 %v247
  %4230 = vmatpush.msra.mxu0 %v239
  %4231 = vmatpush.msra.mxu0 %v231
  %4232 = vmatpush.msra.mxu0 %v223
  %4233 = vmatpush.msra.mxu0 %v215
  %4234 = vmatpush.msra.mxu0 %v207
  %4235 = vmatpush.msra.mxu0 %v199
  %4236 = vmatpush.msra.mxu0 %v191
  %4237 = vmatpush.msra.mxu0 %v183
  %4238 = vmatpush.msra.mxu0 %v175
  %4239 = vmatmul.f32.gmra.mxu0 %v21
  %v4240 = vpop.f32.mrf.mxu0
  %v4241 = vadd.f32 %v4221, %v4240
  %4242 = vdwg.mxu0
  %4243 = vmatpush.msra.mxu0 %v423
  %4244 = vmatpush.msra.mxu0 %v415
  %4245 = vmatpush.msra.mxu0 %v407
  %4246 = vmatpush.msra.mxu0 %v399
  %4247 = vmatpush.msra.mxu0 %v391
  %4248 = vmatpush.msra.mxu0 %v383
  %4249 = vmatpush.msra.mxu0 %v375
  %4250 = vmatpush.msra.mxu0 %v367
  %4251 = vmatpush.msra.mxu0 %v359
  %4252 = vmatpush.msra.mxu0 %v351
  %4253 = vmatpush.msra.mxu0 %v343
  %4254 = vmatpush.msra.mxu0 %v335
  %4255 = vmatpush.msra.mxu0 %v327
  %4256 = vmatpush.msra.mxu0 %v319
  %4257 = vmatpush.msra.mxu0 %v311
  %4258 = vmatpush.msra.mxu0 %v303
  %4259 = vmatmul.f32.gmra.mxu0 %v22
  %v4260 = vpop.f32.mrf.mxu0
  %v4261 = vadd.f32 %v4241, %v4260
  %4262 = vdwg.mxu0
  %4263 = vmatpush.msra.mxu0 %v551
  %4264 = vmatpush.msra.mxu0 %v543
  %4265 = vmatpush.msra.mxu0 %v535
  %4266 = vmatpush.msra.mxu0 %v527
  %4267 = vmatpush.msra.mxu0 %v519
  %4268 = vmatpush.msra.mxu0 %v511
  %4269 = vmatpush.msra.mxu0 %v503
  %4270 = vmatpush.msra.mxu0 %v495
  %4271 = vmatpush.msra.mxu0 %v487
  %4272 = vmatpush.msra.mxu0 %v479
  %4273 = vmatpush.msra.mxu0 %v471
  %4274 = vmatpush.msra.mxu0 %v463
  %4275 = vmatpush.msra.mxu0 %v455
  %4276 = vmatpush.msra.mxu0 %v447
  %4277 = vmatpush.msra.mxu0 %v439
  %4278 = vmatpush.msra.mxu0 %v431
  %4279 = vmatmul.f32.gmra.mxu0 %v23
  %v4280 = vpop.f32.mrf.mxu0
  %v4281 = vadd.f32 %v4261, %v4280
  %4282 = vdwg.mxu0
  %4283 = vmatpush.msra.mxu0 %v679
  %4284 = vmatpush.msra.mxu0 %v671
  %4285 = vmatpush.msra.mxu0 %v663
  %4286 = vmatpush.msra.mxu0 %v655
  %4287 = vmatpush.msra.mxu0 %v647
  %4288 = vmatpush.msra.mxu0 %v639
  %4289 = vmatpush.msra.mxu0 %v631
  %4290 = vmatpush.msra.mxu0 %v623
  %4291 = vmatpush.msra.mxu0 %v615
  %4292 = vmatpush.msra.mxu0 %v607
  %4293 = vmatpush.msra.mxu0 %v599
  %4294 = vmatpush.msra.mxu0 %v591
  %4295 = vmatpush.msra.mxu0 %v583
  %4296 = vmatpush.msra.mxu0 %v575
  %4297 = vmatpush.msra.mxu0 %v567
  %4298 = vmatpush.msra.mxu0 %v559
  %4299 = vmatmul.f32.gmra.mxu0 %v24
  %v4300 = vpop.f32.mrf.mxu0
  %v4301 = vadd.f32 %v4281, %v4300
  %4302 = vdwg.mxu0
  %4303 = vmatpush.msra.mxu0 %v807
  %4304 = vmatpush.msra.mxu0 %v799
  %4305 = vmatpush.msra.mxu0 %v791
  %4306 = vmatpush.msra.mxu0 %v783
  %4307 = vmatpush.msra.mxu0 %v775
  %4308 = vmatpush.msra.mxu0 %v767
  %4309 = vmatpush.msra.mxu0 %v759
  %4310 = vmatpush.msra.mxu0 %v751
  %4311 = vmatpush.msra.mxu0 %v743
  %4312 = vmatpush.msra.mxu0 %v735
  %4313 = vmatpush.msra.mxu0 %v727
  %4314 = vmatpush.msra.mxu0 %v719
  %4315 = vmatpush.msra.mxu0 %v711
  %4316 = vmatpush.msra.mxu0 %v703
  %4317 = vmatpush.msra.mxu0 %v695
  %4318 = vmatpush.msra.mxu0 %v687
  %4319 = vmatmul.f32.gmra.mxu0 %v25
  %v4320 = vpop.f32.mrf.mxu0
  %v4321 = vadd.f32 %v4301, %v4320
  %4322 = vdwg.mxu0
  %4323 = vmatpush.msra.mxu0 %v935
  %4324 = vmatpush.msra.mxu0 %v927
  %4325 = vmatpush.msra.mxu0 %v919
  %4326 = vmatpush.msra.mxu0 %v911
  %4327 = vmatpush.msra.mxu0 %v903
  %4328 = vmatpush.msra.mxu0 %v895
  %4329 = vmatpush.msra.mxu0 %v887
  %4330 = vmatpush.msra.mxu0 %v879
  %4331 = vmatpush.msra.mxu0 %v871
  %4332 = vmatpush.msra.mxu0 %v863
  %4333 = vmatpush.msra.mxu0 %v855
  %4334 = vmatpush.msra.mxu0 %v847
  %4335 = vmatpush.msra.mxu0 %v839
  %4336 = vmatpush.msra.mxu0 %v831
  %4337 = vmatpush.msra.mxu0 %v823
  %4338 = vmatpush.msra.mxu0 %v815
  %4339 = vmatmul.f32.gmra.mxu0 %v26
  %v4340 = vpop.f32.mrf.mxu0
  %v4341 = vadd.f32 %v4321, %v4340
  %4342 = vdwg.mxu0
  %4343 = vmatpush.msra.mxu0 %v1063
  %4344 = vmatpush.msra.mxu0 %v1055
  %4345 = vmatpush.msra.mxu0 %v1047
  %4346 = vmatpush.msra.mxu0 %v1039
  %4347 = vmatpush.msra.mxu0 %v1031
  %4348 = vmatpush.msra.mxu0 %v1023
  %4349 = vmatpush.msra.mxu0 %v1015
  %4350 = vmatpush.msra.mxu0 %v1007
  %4351 = vmatpush.msra.mxu0 %v999
  %4352 = vmatpush.msra.mxu0 %v991
  %4353 = vmatpush.msra.mxu0 %v983
  %4354 = vmatpush.msra.mxu0 %v975
  %4355 = vmatpush.msra.mxu0 %v967
  %4356 = vmatpush.msra.mxu0 %v959
  %4357 = vmatpush.msra.mxu0 %v951
  %4358 = vmatpush.msra.mxu0 %v943
  %4359 = vmatmul.f32.gmra.mxu0 %v27
  %v4360 = vpop.f32.mrf.mxu0
  %v4361 = vadd.f32 %v4341, %v4360
  %4362 = vdwg.mxu0
  %4363 = vmatpush.msra.mxu0 %v1191
  %4364 = vmatpush.msra.mxu0 %v1183
  %4365 = vmatpush.msra.mxu0 %v1175
  %4366 = vmatpush.msra.mxu0 %v1167
  %4367 = vmatpush.msra.mxu0 %v1159
  %4368 = vmatpush.msra.mxu0 %v1151
  %4369 = vmatpush.msra.mxu0 %v1143
  %4370 = vmatpush.msra.mxu0 %v1135
  %4371 = vmatpush.msra.mxu0 %v1127
  %4372 = vmatpush.msra.mxu0 %v1119
  %4373 = vmatpush.msra.mxu0 %v1111
  %4374 = vmatpush.msra.mxu0 %v1103
  %4375 = vmatpush.msra.mxu0 %v1095
  %4376 = vmatpush.msra.mxu0 %v1087
  %4377 = vmatpush.msra.mxu0 %v1079
  %4378 = vmatpush.msra.mxu0 %v1071
  %4379 = vmatmul.f32.gmra.mxu0 %v28
  %v4380 = vpop.f32.mrf.mxu0
  %v4381 = vadd.f32 %v4361, %v4380
  %4382 = vdwg.mxu0
  %4383 = vmatpush.msra.mxu0 %v1319
  %4384 = vmatpush.msra.mxu0 %v1311
  %4385 = vmatpush.msra.mxu0 %v1303
  %4386 = vmatpush.msra.mxu0 %v1295
  %4387 = vmatpush.msra.mxu0 %v1287
  %4388 = vmatpush.msra.mxu0 %v1279
  %4389 = vmatpush.msra.mxu0 %v1271
  %4390 = vmatpush.msra.mxu0 %v1263
  %4391 = vmatpush.msra.mxu0 %v1255
  %4392 = vmatpush.msra.mxu0 %v1247
  %4393 = vmatpush.msra.mxu0 %v1239
  %4394 = vmatpush.msra.mxu0 %v1231
  %4395 = vmatpush.msra.mxu0 %v1223
  %4396 = vmatpush.msra.mxu0 %v1215
  %4397 = vmatpush.msra.mxu0 %v1207
  %4398 = vmatpush.msra.mxu0 %v1199
  %4399 = vmatmul.f32.gmra.mxu0 %v29
  %v4400 = vpop.f32.mrf.mxu0
  %v4401 = vadd.f32 %v4381, %v4400
  %4402 = vdwg.mxu0
  %4403 = vmatpush.msra.mxu0 %v1447
  %4404 = vmatpush.msra.mxu0 %v1439
  %4405 = vmatpush.msra.mxu0 %v1431
  %4406 = vmatpush.msra.mxu0 %v1423
  %4407 = vmatpush.msra.mxu0 %v1415
  %4408 = vmatpush.msra.mxu0 %v1407
  %4409 = vmatpush.msra.mxu0 %v1399
  %4410 = vmatpush.msra.mxu0 %v1391
  %4411 = vmatpush.msra.mxu0 %v1383
  %4412 = vmatpush.msra.mxu0 %v1375
  %4413 = vmatpush.msra.mxu0 %v1367
  %4414 = vmatpush.msra.mxu0 %v1359
  %4415 = vmatpush.msra.mxu0 %v1351
  %4416 = vmatpush.msra.mxu0 %v1343
  %4417 = vmatpush.msra.mxu0 %v1335
  %4418 = vmatpush.msra.mxu0 %v1327
  %4419 = vmatmul.f32.gmra.mxu0 %v30
  %v4420 = vpop.f32.mrf.mxu0
  %v4421 = vadd.f32 %v4401, %v4420
  %4422 = vdwg.mxu0
  %4423 = vmatpush.msra.mxu0 %v1575
  %4424 = vmatpush.msra.mxu0 %v1567
  %4425 = vmatpush.msra.mxu0 %v1559
  %4426 = vmatpush.msra.mxu0 %v1551
  %4427 = vmatpush.msra.mxu0 %v1543
  %4428 = vmatpush.msra.mxu0 %v1535
  %4429 = vmatpush.msra.mxu0 %v1527
  %4430 = vmatpush.msra.mxu0 %v1519
  %4431 = vmatpush.msra.mxu0 %v1511
  %4432 = vmatpush.msra.mxu0 %v1503
  %4433 = vmatpush.msra.mxu0 %v1495
  %4434 = vmatpush.msra.mxu0 %v1487
  %4435 = vmatpush.msra.mxu0 %v1479
  %4436 = vmatpush.msra.mxu0 %v1471
  %4437 = vmatpush.msra.mxu0 %v1463
  %4438 = vmatpush.msra.mxu0 %v1455
  %4439 = vmatmul.f32.gmra.mxu0 %v31
  %v4440 = vpop.f32.mrf.mxu0
  %v4441 = vadd.f32 %v4421, %v4440
  %4442 = vdwg.mxu0
  %4443 = vmatpush.msra.mxu0 %v1703
  %4444 = vmatpush.msra.mxu0 %v1695
  %4445 = vmatpush.msra.mxu0 %v1687
  %4446 = vmatpush.msra.mxu0 %v1679
  %4447 = vmatpush.msra.mxu0 %v1671
  %4448 = vmatpush.msra.mxu0 %v1663
  %4449 = vmatpush.msra.mxu0 %v1655
  %4450 = vmatpush.msra.mxu0 %v1647
  %4451 = vmatpush.msra.mxu0 %v1639
  %4452 = vmatpush.msra.mxu0 %v1631
  %4453 = vmatpush.msra.mxu0 %v1623
  %4454 = vmatpush.msra.mxu0 %v1615
  %4455 = vmatpush.msra.mxu0 %v1607
  %4456 = vmatpush.msra.mxu0 %v1599
  %4457 = vmatpush.msra.mxu0 %v1591
  %4458 = vmatpush.msra.mxu0 %v1583
  %4459 = vmatmul.f32.gmra.mxu0 %v32
  %v4460 = vpop.f32.mrf.mxu0
  %v4461 = vadd.f32 %v4441, %v4460
  %4462 = vdwg.mxu0
  %4463 = vmatpush.msra.mxu0 %v1831
  %4464 = vmatpush.msra.mxu0 %v1823
  %4465 = vmatpush.msra.mxu0 %v1815
  %4466 = vmatpush.msra.mxu0 %v1807
  %4467 = vmatpush.msra.mxu0 %v1799
  %4468 = vmatpush.msra.mxu0 %v1791
  %4469 = vmatpush.msra.mxu0 %v1783
  %4470 = vmatpush.msra.mxu0 %v1775
  %4471 = vmatpush.msra.mxu0 %v1767
  %4472 = vmatpush.msra.mxu0 %v1759
  %4473 = vmatpush.msra.mxu0 %v1751
  %4474 = vmatpush.msra.mxu0 %v1743
  %4475 = vmatpush.msra.mxu0 %v1735
  %4476 = vmatpush.msra.mxu0 %v1727
  %4477 = vmatpush.msra.mxu0 %v1719
  %4478 = vmatpush.msra.mxu0 %v1711
  %4479 = vmatmul.f32.gmra.mxu0 %v33
  %v4480 = vpop.f32.mrf.mxu0
  %v4481 = vadd.f32 %v4461, %v4480
  %4482 = vdwg.mxu0
  %4483 = vmatpush.msra.mxu0 %v1959
  %4484 = vmatpush.msra.mxu0 %v1951
  %4485 = vmatpush.msra.mxu0 %v1943
  %4486 = vmatpush.msra.mxu0 %v1935
  %4487 = vmatpush.msra.mxu0 %v1927
  %4488 = vmatpush.msra.mxu0 %v1919
  %4489 = vmatpush.msra.mxu0 %v1911
  %4490 = vmatpush.msra.mxu0 %v1903
  %4491 = vmatpush.msra.mxu0 %v1895
  %4492 = vmatpush.msra.mxu0 %v1887
  %4493 = vmatpush.msra.mxu0 %v1879
  %4494 = vmatpush.msra.mxu0 %v1871
  %4495 = vmatpush.msra.mxu0 %v1863
  %4496 = vmatpush.msra.mxu0 %v1855
  %4497 = vmatpush.msra.mxu0 %v1847
  %4498 = vmatpush.msra.mxu0 %v1839
  %4499 = vmatmul.f32.gmra.mxu0 %v34
  %v4500 = vpop.f32.mrf.mxu0
  %v4501 = vadd.f32 %v4481, %v4500
  %4502 = vdwg.mxu0
  %4503 = vmatpush.msra.mxu0 %v2087
  %4504 = vmatpush.msra.mxu0 %v2079
  %4505 = vmatpush.msra.mxu0 %v2071
  %4506 = vmatpush.msra.mxu0 %v2063
  %4507 = vmatpush.msra.mxu0 %v2055
  %4508 = vmatpush.msra.mxu0 %v2047
  %4509 = vmatpush.msra.mxu0 %v2039
  %4510 = vmatpush.msra.mxu0 %v2031
  %4511 = vmatpush.msra.mxu0 %v2023
  %4512 = vmatpush.msra.mxu0 %v2015
  %4513 = vmatpush.msra.mxu0 %v2007
  %4514 = vmatpush.msra.mxu0 %v1999
  %4515 = vmatpush.msra.mxu0 %v1991
  %4516 = vmatpush.msra.mxu0 %v1983
  %4517 = vmatpush.msra.mxu0 %v1975
  %4518 = vmatpush.msra.mxu0 %v1967
  %4519 = vmatmul.f32.gmra.mxu0 %v35
  %v4520 = vpop.f32.mrf.mxu0
  %v4521 = vadd.f32 %v4501, %v4520
  %4522 = vdwg.mxu0
  %4523 = vmatpush.msra.mxu0 %v2215
  %4524 = vmatpush.msra.mxu0 %v2207
  %4525 = vmatpush.msra.mxu0 %v2199
  %4526 = vmatpush.msra.mxu0 %v2191
  %4527 = vmatpush.msra.mxu0 %v2183
  %4528 = vmatpush.msra.mxu0 %v2175
  %4529 = vmatpush.msra.mxu0 %v2167
  %4530 = vmatpush.msra.mxu0 %v2159
  %4531 = vmatpush.msra.mxu0 %v2151
  %4532 = vmatpush.msra.mxu0 %v2143
  %4533 = vmatpush.msra.mxu0 %v2135
  %4534 = vmatpush.msra.mxu0 %v2127
  %4535 = vmatpush.msra.mxu0 %v2119
  %4536 = vmatpush.msra.mxu0 %v2111
  %4537 = vmatpush.msra.mxu0 %v2103
  %4538 = vmatpush.msra.mxu0 %v2095
  %4539 = vmatmul.f32.gmra.mxu0 %v36
  %v4540 = vpop.f32.mrf.mxu0
  %v4541 = vadd.f32 %v4521, %v4540
  %4542 = vdwg.mxu0
  %4543 = vmatpush.msra.mxu0 %v2343
  %4544 = vmatpush.msra.mxu0 %v2335
  %4545 = vmatpush.msra.mxu0 %v2327
  %4546 = vmatpush.msra.mxu0 %v2319
  %4547 = vmatpush.msra.mxu0 %v2311
  %4548 = vmatpush.msra.mxu0 %v2303
  %4549 = vmatpush.msra.mxu0 %v2295
  %4550 = vmatpush.msra.mxu0 %v2287
  %4551 = vmatpush.msra.mxu0 %v2279
  %4552 = vmatpush.msra.mxu0 %v2271
  %4553 = vmatpush.msra.mxu0 %v2263
  %4554 = vmatpush.msra.mxu0 %v2255
  %4555 = vmatpush.msra.mxu0 %v2247
  %4556 = vmatpush.msra.mxu0 %v2239
  %4557 = vmatpush.msra.mxu0 %v2231
  %4558 = vmatpush.msra.mxu0 %v2223
  %4559 = vmatmul.f32.gmra.mxu0 %v37
  %v4560 = vpop.f32.mrf.mxu0
  %v4561 = vadd.f32 %v4541, %v4560
  %4562 = vdwg.mxu0
  %4563 = vmatpush.msra.mxu0 %v2471
  %4564 = vmatpush.msra.mxu0 %v2463
  %4565 = vmatpush.msra.mxu0 %v2455
  %4566 = vmatpush.msra.mxu0 %v2447
  %4567 = vmatpush.msra.mxu0 %v2439
  %4568 = vmatpush.msra.mxu0 %v2431
  %4569 = vmatpush.msra.mxu0 %v2423
  %4570 = vmatpush.msra.mxu0 %v2415
  %4571 = vmatpush.msra.mxu0 %v2407
  %4572 = vmatpush.msra.mxu0 %v2399
  %4573 = vmatpush.msra.mxu0 %v2391
  %4574 = vmatpush.msra.mxu0 %v2383
  %4575 = vmatpush.msra.mxu0 %v2375
  %4576 = vmatpush.msra.mxu0 %v2367
  %4577 = vmatpush.msra.mxu0 %v2359
  %4578 = vmatpush.msra.mxu0 %v2351
  %4579 = vmatmul.f32.gmra.mxu0 %v38
  %v4580 = vpop.f32.mrf.mxu0
  %v4581 = vadd.f32 %v4561, %v4580
  %4582 = vdwg.mxu0
  %4583 = vmatpush.msra.mxu0 %v2599
  %4584 = vmatpush.msra.mxu0 %v2591
  %4585 = vmatpush.msra.mxu0 %v2583
  %4586 = vmatpush.msra.mxu0 %v2575
  %4587 = vmatpush.msra.mxu0 %v2567
  %4588 = vmatpush.msra.mxu0 %v2559
  %4589 = vmatpush.msra.mxu0 %v2551
  %4590 = vmatpush.msra.mxu0 %v2543
  %4591 = vmatpush.msra.mxu0 %v2535
  %4592 = vmatpush.msra.mxu0 %v2527
  %4593 = vmatpush.msra.mxu0 %v2519
  %4594 = vmatpush.msra.mxu0 %v2511
  %4595 = vmatpush.msra.mxu0 %v2503
  %4596 = vmatpush.msra.mxu0 %v2495
  %4597 = vmatpush.msra.mxu0 %v2487
  %4598 = vmatpush.msra.mxu0 %v2479
  %4599 = vmatmul.f32.gmra.mxu0 %v39
  %v4600 = vpop.f32.mrf.mxu0
  %v4601 = vadd.f32 %v4581, %v4600
  %4602 = vdwg.mxu0
  %4603 = vmatpush.msra.mxu0 %v2727
  %4604 = vmatpush.msra.mxu0 %v2719
  %4605 = vmatpush.msra.mxu0 %v2711
  %4606 = vmatpush.msra.mxu0 %v2703
  %4607 = vmatpush.msra.mxu0 %v2695
  %4608 = vmatpush.msra.mxu0 %v2687
  %4609 = vmatpush.msra.mxu0 %v2679
  %4610 = vmatpush.msra.mxu0 %v2671
  %4611 = vmatpush.msra.mxu0 %v2663
  %4612 = vmatpush.msra.mxu0 %v2655
  %4613 = vmatpush.msra.mxu0 %v2647
  %4614 = vmatpush.msra.mxu0 %v2639
  %4615 = vmatpush.msra.mxu0 %v2631
  %4616 = vmatpush.msra.mxu0 %v2623
  %4617 = vmatpush.msra.mxu0 %v2615
  %4618 = vmatpush.msra.mxu0 %v2607
  %4619 = vmatmul.f32.gmra.mxu0 %v40
  %v4620 = vpop.f32.mrf.mxu0
  %v4621 = vadd.f32 %v4601, %v4620
  %4622 = vdwg.mxu0
  %4623 = vmatpush.msra.mxu0 %v2855
  %4624 = vmatpush.msra.mxu0 %v2847
  %4625 = vmatpush.msra.mxu0 %v2839
  %4626 = vmatpush.msra.mxu0 %v2831
  %4627 = vmatpush.msra.mxu0 %v2823
  %4628 = vmatpush.msra.mxu0 %v2815
  %4629 = vmatpush.msra.mxu0 %v2807
  %4630 = vmatpush.msra.mxu0 %v2799
  %4631 = vmatpush.msra.mxu0 %v2791
  %4632 = vmatpush.msra.mxu0 %v2783
  %4633 = vmatpush.msra.mxu0 %v2775
  %4634 = vmatpush.msra.mxu0 %v2767
  %4635 = vmatpush.msra.mxu0 %v2759
  %4636 = vmatpush.msra.mxu0 %v2751
  %4637 = vmatpush.msra.mxu0 %v2743
  %4638 = vmatpush.msra.mxu0 %v2735
  %4639 = vmatmul.f32.gmra.mxu0 %v41
  %v4640 = vpop.f32.mrf.mxu0
  %v4641 = vadd.f32 %v4621, %v4640
  %4642 = vdwg.mxu0
  %4643 = vmatpush.msra.mxu0 %v2983
  %4644 = vmatpush.msra.mxu0 %v2975
  %4645 = vmatpush.msra.mxu0 %v2967
  %4646 = vmatpush.msra.mxu0 %v2959
  %4647 = vmatpush.msra.mxu0 %v2951
  %4648 = vmatpush.msra.mxu0 %v2943
  %4649 = vmatpush.msra.mxu0 %v2935
  %4650 = vmatpush.msra.mxu0 %v2927
  %4651 = vmatpush.msra.mxu0 %v2919
  %4652 = vmatpush.msra.mxu0 %v2911
  %4653 = vmatpush.msra.mxu0 %v2903
  %4654 = vmatpush.msra.mxu0 %v2895
  %4655 = vmatpush.msra.mxu0 %v2887
  %4656 = vmatpush.msra.mxu0 %v2879
  %4657 = vmatpush.msra.mxu0 %v2871
  %4658 = vmatpush.msra.mxu0 %v2863
  %4659 = vmatmul.f32.gmra.mxu0 %v42
  %v4660 = vpop.f32.mrf.mxu0
  %v4661 = vadd.f32 %v4641, %v4660
  %4662 = vdwg.mxu0
  %4663 = vmatpush.msra.mxu0 %v3111
  %4664 = vmatpush.msra.mxu0 %v3103
  %4665 = vmatpush.msra.mxu0 %v3095
  %4666 = vmatpush.msra.mxu0 %v3087
  %4667 = vmatpush.msra.mxu0 %v3079
  %4668 = vmatpush.msra.mxu0 %v3071
  %4669 = vmatpush.msra.mxu0 %v3063
  %4670 = vmatpush.msra.mxu0 %v3055
  %4671 = vmatpush.msra.mxu0 %v3047
  %4672 = vmatpush.msra.mxu0 %v3039
  %4673 = vmatpush.msra.mxu0 %v3031
  %4674 = vmatpush.msra.mxu0 %v3023
  %4675 = vmatpush.msra.mxu0 %v3015
  %4676 = vmatpush.msra.mxu0 %v3007
  %4677 = vmatpush.msra.mxu0 %v2999
  %4678 = vmatpush.msra.mxu0 %v2991
  %4679 = vmatmul.f32.gmra.mxu0 %v43
  %v4680 = vpop.f32.mrf.mxu0
  %v4681 = vadd.f32 %v4661, %v4680
  %4682 = vdwg.mxu0
  %4683 = vmatpush.msra.mxu0 0.0
  %4684 = vmatpush.msra.mxu0 0.0
  %4685 = vmatpush.msra.mxu0 0.0
  %4686 = vmatpush.msra.mxu0 0.0
  %4687 = vmatpush.msra.mxu0 0.0
  %4688 = vmatpush.msra.mxu0 0.0
  %4689 = vmatpush.msra.mxu0 0.0
  %4690 = vmatpush.msra.mxu0 0.0
  %4691 = vmatpush.msra.mxu0 %v3175
  %4692 = vmatpush.msra.mxu0 %v3167
  %4693 = vmatpush.msra.mxu0 %v3159
  %4694 = vmatpush.msra.mxu0 %v3151
  %4695 = vmatpush.msra.mxu0 %v3143
  %4696 = vmatpush.msra.mxu0 %v3135
  %4697 = vmatpush.msra.mxu0 %v3127
  %4698 = vmatpush.msra.mxu0 %v3119
  %4699 = vmatmul.f32.gmra.mxu0 %v3201
  %v4700 = vpop.f32.mrf.mxu0
  %v4701 = vadd.f32 %v4681, %v4700
  %4702 = vdwg.mxu0
  %4703 = vmatpush.msra.mxu0 %v168
  %4704 = vmatpush.msra.mxu0 %v160
  %4705 = vmatpush.msra.mxu0 %v152
  %4706 = vmatpush.msra.mxu0 %v144
  %4707 = vmatpush.msra.mxu0 %v136
  %4708 = vmatpush.msra.mxu0 %v128
  %4709 = vmatpush.msra.mxu0 %v120
  %4710 = vmatpush.msra.mxu0 %v112
  %4711 = vmatpush.msra.mxu0 %v104
  %4712 = vmatpush.msra.mxu0 %v96
  %4713 = vmatpush.msra.mxu0 %v88
  %4714 = vmatpush.msra.mxu0 %v80
  %4715 = vmatpush.msra.mxu0 %v72
  %4716 = vmatpush.msra.mxu0 %v64
  %4717 = vmatpush.msra.mxu0 %v56
  %4718 = vmatpush.msra.mxu0 %v48
  %4719 = vmatmul.f32.gmra.mxu0 %v20
  %v4720 = vpop.f32.mrf.mxu0
  %v4721 = vadd.f32 %v3186, %v4720
  %4722 = vdwg.mxu0
  %4723 = vmatpush.msra.mxu0 %v296
  %4724 = vmatpush.msra.mxu0 %v288
  %4725 = vmatpush.msra.mxu0 %v280
  %4726 = vmatpush.msra.mxu0 %v272
  %4727 = vmatpush.msra.mxu0 %v264
  %4728 = vmatpush.msra.mxu0 %v256
  %4729 = vmatpush.msra.mxu0 %v248
  %4730 = vmatpush.msra.mxu0 %v240
  %4731 = vmatpush.msra.mxu0 %v232
  %4732 = vmatpush.msra.mxu0 %v224
  %4733 = vmatpush.msra.mxu0 %v216
  %4734 = vmatpush.msra.mxu0 %v208
  %4735 = vmatpush.msra.mxu0 %v200
  %4736 = vmatpush.msra.mxu0 %v192
  %4737 = vmatpush.msra.mxu0 %v184
  %4738 = vmatpush.msra.mxu0 %v176
  %4739 = vmatmul.f32.gmra.mxu0 %v21
  %v4740 = vpop.f32.mrf.mxu0
  %v4741 = vadd.f32 %v4721, %v4740
  %4742 = vdwg.mxu0
  %4743 = vmatpush.msra.mxu0 %v424
  %4744 = vmatpush.msra.mxu0 %v416
  %4745 = vmatpush.msra.mxu0 %v408
  %4746 = vmatpush.msra.mxu0 %v400
  %4747 = vmatpush.msra.mxu0 %v392
  %4748 = vmatpush.msra.mxu0 %v384
  %4749 = vmatpush.msra.mxu0 %v376
  %4750 = vmatpush.msra.mxu0 %v368
  %4751 = vmatpush.msra.mxu0 %v360
  %4752 = vmatpush.msra.mxu0 %v352
  %4753 = vmatpush.msra.mxu0 %v344
  %4754 = vmatpush.msra.mxu0 %v336
  %4755 = vmatpush.msra.mxu0 %v328
  %4756 = vmatpush.msra.mxu0 %v320
  %4757 = vmatpush.msra.mxu0 %v312
  %4758 = vmatpush.msra.mxu0 %v304
  %4759 = vmatmul.f32.gmra.mxu0 %v22
  %v4760 = vpop.f32.mrf.mxu0
  %v4761 = vadd.f32 %v4741, %v4760
  %4762 = vdwg.mxu0
  %4763 = vmatpush.msra.mxu0 %v552
  %4764 = vmatpush.msra.mxu0 %v544
  %4765 = vmatpush.msra.mxu0 %v536
  %4766 = vmatpush.msra.mxu0 %v528
  %4767 = vmatpush.msra.mxu0 %v520
  %4768 = vmatpush.msra.mxu0 %v512
  %4769 = vmatpush.msra.mxu0 %v504
  %4770 = vmatpush.msra.mxu0 %v496
  %4771 = vmatpush.msra.mxu0 %v488
  %4772 = vmatpush.msra.mxu0 %v480
  %4773 = vmatpush.msra.mxu0 %v472
  %4774 = vmatpush.msra.mxu0 %v464
  %4775 = vmatpush.msra.mxu0 %v456
  %4776 = vmatpush.msra.mxu0 %v448
  %4777 = vmatpush.msra.mxu0 %v440
  %4778 = vmatpush.msra.mxu0 %v432
  %4779 = vmatmul.f32.gmra.mxu0 %v23
  %v4780 = vpop.f32.mrf.mxu0
  %v4781 = vadd.f32 %v4761, %v4780
  %4782 = vdwg.mxu0
  %4783 = vmatpush.msra.mxu0 %v680
  %4784 = vmatpush.msra.mxu0 %v672
  %4785 = vmatpush.msra.mxu0 %v664
  %4786 = vmatpush.msra.mxu0 %v656
  %4787 = vmatpush.msra.mxu0 %v648
  %4788 = vmatpush.msra.mxu0 %v640
  %4789 = vmatpush.msra.mxu0 %v632
  %4790 = vmatpush.msra.mxu0 %v624
  %4791 = vmatpush.msra.mxu0 %v616
  %4792 = vmatpush.msra.mxu0 %v608
  %4793 = vmatpush.msra.mxu0 %v600
  %4794 = vmatpush.msra.mxu0 %v592
  %4795 = vmatpush.msra.mxu0 %v584
  %4796 = vmatpush.msra.mxu0 %v576
  %4797 = vmatpush.msra.mxu0 %v568
  %4798 = vmatpush.msra.mxu0 %v560
  %4799 = vmatmul.f32.gmra.mxu0 %v24
  %v4800 = vpop.f32.mrf.mxu0
  %v4801 = vadd.f32 %v4781, %v4800
  %4802 = vdwg.mxu0
  %4803 = vmatpush.msra.mxu0 %v808
  %4804 = vmatpush.msra.mxu0 %v800
  %4805 = vmatpush.msra.mxu0 %v792
  %4806 = vmatpush.msra.mxu0 %v784
  %4807 = vmatpush.msra.mxu0 %v776
  %4808 = vmatpush.msra.mxu0 %v768
  %4809 = vmatpush.msra.mxu0 %v760
  %4810 = vmatpush.msra.mxu0 %v752
  %4811 = vmatpush.msra.mxu0 %v744
  %4812 = vmatpush.msra.mxu0 %v736
  %4813 = vmatpush.msra.mxu0 %v728
  %4814 = vmatpush.msra.mxu0 %v720
  %4815 = vmatpush.msra.mxu0 %v712
  %4816 = vmatpush.msra.mxu0 %v704
  %4817 = vmatpush.msra.mxu0 %v696
  %4818 = vmatpush.msra.mxu0 %v688
  %4819 = vmatmul.f32.gmra.mxu0 %v25
  %v4820 = vpop.f32.mrf.mxu0
  %v4821 = vadd.f32 %v4801, %v4820
  %4822 = vdwg.mxu0
  %4823 = vmatpush.msra.mxu0 %v936
  %4824 = vmatpush.msra.mxu0 %v928
  %4825 = vmatpush.msra.mxu0 %v920
  %4826 = vmatpush.msra.mxu0 %v912
  %4827 = vmatpush.msra.mxu0 %v904
  %4828 = vmatpush.msra.mxu0 %v896
  %4829 = vmatpush.msra.mxu0 %v888
  %4830 = vmatpush.msra.mxu0 %v880
  %4831 = vmatpush.msra.mxu0 %v872
  %4832 = vmatpush.msra.mxu0 %v864
  %4833 = vmatpush.msra.mxu0 %v856
  %4834 = vmatpush.msra.mxu0 %v848
  %4835 = vmatpush.msra.mxu0 %v840
  %4836 = vmatpush.msra.mxu0 %v832
  %4837 = vmatpush.msra.mxu0 %v824
  %4838 = vmatpush.msra.mxu0 %v816
  %4839 = vmatmul.f32.gmra.mxu0 %v26
  %v4840 = vpop.f32.mrf.mxu0
  %v4841 = vadd.f32 %v4821, %v4840
  %4842 = vdwg.mxu0
  %4843 = vmatpush.msra.mxu0 %v1064
  %4844 = vmatpush.msra.mxu0 %v1056
  %4845 = vmatpush.msra.mxu0 %v1048
  %4846 = vmatpush.msra.mxu0 %v1040
  %4847 = vmatpush.msra.mxu0 %v1032
  %4848 = vmatpush.msra.mxu0 %v1024
  %4849 = vmatpush.msra.mxu0 %v1016
  %4850 = vmatpush.msra.mxu0 %v1008
  %4851 = vmatpush.msra.mxu0 %v1000
  %4852 = vmatpush.msra.mxu0 %v992
  %4853 = vmatpush.msra.mxu0 %v984
  %4854 = vmatpush.msra.mxu0 %v976
  %4855 = vmatpush.msra.mxu0 %v968
  %4856 = vmatpush.msra.mxu0 %v960
  %4857 = vmatpush.msra.mxu0 %v952
  %4858 = vmatpush.msra.mxu0 %v944
  %4859 = vmatmul.f32.gmra.mxu0 %v27
  %v4860 = vpop.f32.mrf.mxu0
  %v4861 = vadd.f32 %v4841, %v4860
  %4862 = vdwg.mxu0
  %4863 = vmatpush.msra.mxu0 %v1192
  %4864 = vmatpush.msra.mxu0 %v1184
  %4865 = vmatpush.msra.mxu0 %v1176
  %4866 = vmatpush.msra.mxu0 %v1168
  %4867 = vmatpush.msra.mxu0 %v1160
  %4868 = vmatpush.msra.mxu0 %v1152
  %4869 = vmatpush.msra.mxu0 %v1144
  %4870 = vmatpush.msra.mxu0 %v1136
  %4871 = vmatpush.msra.mxu0 %v1128
  %4872 = vmatpush.msra.mxu0 %v1120
  %4873 = vmatpush.msra.mxu0 %v1112
  %4874 = vmatpush.msra.mxu0 %v1104
  %4875 = vmatpush.msra.mxu0 %v1096
  %4876 = vmatpush.msra.mxu0 %v1088
  %4877 = vmatpush.msra.mxu0 %v1080
  %4878 = vmatpush.msra.mxu0 %v1072
  %4879 = vmatmul.f32.gmra.mxu0 %v28
  %v4880 = vpop.f32.mrf.mxu0
  %v4881 = vadd.f32 %v4861, %v4880
  %4882 = vdwg.mxu0
  %4883 = vmatpush.msra.mxu0 %v1320
  %4884 = vmatpush.msra.mxu0 %v1312
  %4885 = vmatpush.msra.mxu0 %v1304
  %4886 = vmatpush.msra.mxu0 %v1296
  %4887 = vmatpush.msra.mxu0 %v1288
  %4888 = vmatpush.msra.mxu0 %v1280
  %4889 = vmatpush.msra.mxu0 %v1272
  %4890 = vmatpush.msra.mxu0 %v1264
  %4891 = vmatpush.msra.mxu0 %v1256
  %4892 = vmatpush.msra.mxu0 %v1248
  %4893 = vmatpush.msra.mxu0 %v1240
  %4894 = vmatpush.msra.mxu0 %v1232
  %4895 = vmatpush.msra.mxu0 %v1224
  %4896 = vmatpush.msra.mxu0 %v1216
  %4897 = vmatpush.msra.mxu0 %v1208
  %4898 = vmatpush.msra.mxu0 %v1200
  %4899 = vmatmul.f32.gmra.mxu0 %v29
  %v4900 = vpop.f32.mrf.mxu0
  %v4901 = vadd.f32 %v4881, %v4900
  %4902 = vdwg.mxu0
  %4903 = vmatpush.msra.mxu0 %v1448
  %4904 = vmatpush.msra.mxu0 %v1440
  %4905 = vmatpush.msra.mxu0 %v1432
  %4906 = vmatpush.msra.mxu0 %v1424
  %4907 = vmatpush.msra.mxu0 %v1416
  %4908 = vmatpush.msra.mxu0 %v1408
  %4909 = vmatpush.msra.mxu0 %v1400
  %4910 = vmatpush.msra.mxu0 %v1392
  %4911 = vmatpush.msra.mxu0 %v1384
  %4912 = vmatpush.msra.mxu0 %v1376
  %4913 = vmatpush.msra.mxu0 %v1368
  %4914 = vmatpush.msra.mxu0 %v1360
  %4915 = vmatpush.msra.mxu0 %v1352
  %4916 = vmatpush.msra.mxu0 %v1344
  %4917 = vmatpush.msra.mxu0 %v1336
  %4918 = vmatpush.msra.mxu0 %v1328
  %4919 = vmatmul.f32.gmra.mxu0 %v30
  %v4920 = vpop.f32.mrf.mxu0
  %v4921 = vadd.f32 %v4901, %v4920
  %4922 = vdwg.mxu0
  %4923 = vmatpush.msra.mxu0 %v1576
  %4924 = vmatpush.msra.mxu0 %v1568
  %4925 = vmatpush.msra.mxu0 %v1560
  %4926 = vmatpush.msra.mxu0 %v1552
  %4927 = vmatpush.msra.mxu0 %v1544
  %4928 = vmatpush.msra.mxu0 %v1536
  %4929 = vmatpush.msra.mxu0 %v1528
  %4930 = vmatpush.msra.mxu0 %v1520
  %4931 = vmatpush.msra.mxu0 %v1512
  %4932 = vmatpush.msra.mxu0 %v1504
  %4933 = vmatpush.msra.mxu0 %v1496
  %4934 = vmatpush.msra.mxu0 %v1488
  %4935 = vmatpush.msra.mxu0 %v1480
  %4936 = vmatpush.msra.mxu0 %v1472
  %4937 = vmatpush.msra.mxu0 %v1464
  %4938 = vmatpush.msra.mxu0 %v1456
  %4939 = vmatmul.f32.gmra.mxu0 %v31
  %v4940 = vpop.f32.mrf.mxu0
  %v4941 = vadd.f32 %v4921, %v4940
  %4942 = vdwg.mxu0
  %4943 = vmatpush.msra.mxu0 %v1704
  %4944 = vmatpush.msra.mxu0 %v1696
  %4945 = vmatpush.msra.mxu0 %v1688
  %4946 = vmatpush.msra.mxu0 %v1680
  %4947 = vmatpush.msra.mxu0 %v1672
  %4948 = vmatpush.msra.mxu0 %v1664
  %4949 = vmatpush.msra.mxu0 %v1656
  %4950 = vmatpush.msra.mxu0 %v1648
  %4951 = vmatpush.msra.mxu0 %v1640
  %4952 = vmatpush.msra.mxu0 %v1632
  %4953 = vmatpush.msra.mxu0 %v1624
  %4954 = vmatpush.msra.mxu0 %v1616
  %4955 = vmatpush.msra.mxu0 %v1608
  %4956 = vmatpush.msra.mxu0 %v1600
  %4957 = vmatpush.msra.mxu0 %v1592
  %4958 = vmatpush.msra.mxu0 %v1584
  %4959 = vmatmul.f32.gmra.mxu0 %v32
  %v4960 = vpop.f32.mrf.mxu0
  %v4961 = vadd.f32 %v4941, %v4960
  %4962 = vdwg.mxu0
  %4963 = vmatpush.msra.mxu0 %v1832
  %4964 = vmatpush.msra.mxu0 %v1824
  %4965 = vmatpush.msra.mxu0 %v1816
  %4966 = vmatpush.msra.mxu0 %v1808
  %4967 = vmatpush.msra.mxu0 %v1800
  %4968 = vmatpush.msra.mxu0 %v1792
  %4969 = vmatpush.msra.mxu0 %v1784
  %4970 = vmatpush.msra.mxu0 %v1776
  %4971 = vmatpush.msra.mxu0 %v1768
  %4972 = vmatpush.msra.mxu0 %v1760
  %4973 = vmatpush.msra.mxu0 %v1752
  %4974 = vmatpush.msra.mxu0 %v1744
  %4975 = vmatpush.msra.mxu0 %v1736
  %4976 = vmatpush.msra.mxu0 %v1728
  %4977 = vmatpush.msra.mxu0 %v1720
  %4978 = vmatpush.msra.mxu0 %v1712
  %4979 = vmatmul.f32.gmra.mxu0 %v33
  %v4980 = vpop.f32.mrf.mxu0
  %v4981 = vadd.f32 %v4961, %v4980
  %4982 = vdwg.mxu0
  %4983 = vmatpush.msra.mxu0 %v1960
  %4984 = vmatpush.msra.mxu0 %v1952
  %4985 = vmatpush.msra.mxu0 %v1944
  %4986 = vmatpush.msra.mxu0 %v1936
  %4987 = vmatpush.msra.mxu0 %v1928
  %4988 = vmatpush.msra.mxu0 %v1920
  %4989 = vmatpush.msra.mxu0 %v1912
  %4990 = vmatpush.msra.mxu0 %v1904
  %4991 = vmatpush.msra.mxu0 %v1896
  %4992 = vmatpush.msra.mxu0 %v1888
  %4993 = vmatpush.msra.mxu0 %v1880
  %4994 = vmatpush.msra.mxu0 %v1872
  %4995 = vmatpush.msra.mxu0 %v1864
  %4996 = vmatpush.msra.mxu0 %v1856
  %4997 = vmatpush.msra.mxu0 %v1848
  %4998 = vmatpush.msra.mxu0 %v1840
  %4999 = vmatmul.f32.gmra.mxu0 %v34
  %v5000 = vpop.f32.mrf.mxu0
  %v5001 = vadd.f32 %v4981, %v5000
  %5002 = vdwg.mxu0
  %5003 = vmatpush.msra.mxu0 %v2088
  %5004 = vmatpush.msra.mxu0 %v2080
  %5005 = vmatpush.msra.mxu0 %v2072
  %5006 = vmatpush.msra.mxu0 %v2064
  %5007 = vmatpush.msra.mxu0 %v2056
  %5008 = vmatpush.msra.mxu0 %v2048
  %5009 = vmatpush.msra.mxu0 %v2040
  %5010 = vmatpush.msra.mxu0 %v2032
  %5011 = vmatpush.msra.mxu0 %v2024
  %5012 = vmatpush.msra.mxu0 %v2016
  %5013 = vmatpush.msra.mxu0 %v2008
  %5014 = vmatpush.msra.mxu0 %v2000
  %5015 = vmatpush.msra.mxu0 %v1992
  %5016 = vmatpush.msra.mxu0 %v1984
  %5017 = vmatpush.msra.mxu0 %v1976
  %5018 = vmatpush.msra.mxu0 %v1968
  %5019 = vmatmul.f32.gmra.mxu0 %v35
  %v5020 = vpop.f32.mrf.mxu0
  %v5021 = vadd.f32 %v5001, %v5020
  %5022 = vdwg.mxu0
  %5023 = vmatpush.msra.mxu0 %v2216
  %5024 = vmatpush.msra.mxu0 %v2208
  %5025 = vmatpush.msra.mxu0 %v2200
  %5026 = vmatpush.msra.mxu0 %v2192
  %5027 = vmatpush.msra.mxu0 %v2184
  %5028 = vmatpush.msra.mxu0 %v2176
  %5029 = vmatpush.msra.mxu0 %v2168
  %5030 = vmatpush.msra.mxu0 %v2160
  %5031 = vmatpush.msra.mxu0 %v2152
  %5032 = vmatpush.msra.mxu0 %v2144
  %5033 = vmatpush.msra.mxu0 %v2136
  %5034 = vmatpush.msra.mxu0 %v2128
  %5035 = vmatpush.msra.mxu0 %v2120
  %5036 = vmatpush.msra.mxu0 %v2112
  %5037 = vmatpush.msra.mxu0 %v2104
  %5038 = vmatpush.msra.mxu0 %v2096
  %5039 = vmatmul.f32.gmra.mxu0 %v36
  %v5040 = vpop.f32.mrf.mxu0
  %v5041 = vadd.f32 %v5021, %v5040
  %5042 = vdwg.mxu0
  %5043 = vmatpush.msra.mxu0 %v2344
  %5044 = vmatpush.msra.mxu0 %v2336
  %5045 = vmatpush.msra.mxu0 %v2328
  %5046 = vmatpush.msra.mxu0 %v2320
  %5047 = vmatpush.msra.mxu0 %v2312
  %5048 = vmatpush.msra.mxu0 %v2304
  %5049 = vmatpush.msra.mxu0 %v2296
  %5050 = vmatpush.msra.mxu0 %v2288
  %5051 = vmatpush.msra.mxu0 %v2280
  %5052 = vmatpush.msra.mxu0 %v2272
  %5053 = vmatpush.msra.mxu0 %v2264
  %5054 = vmatpush.msra.mxu0 %v2256
  %5055 = vmatpush.msra.mxu0 %v2248
  %5056 = vmatpush.msra.mxu0 %v2240
  %5057 = vmatpush.msra.mxu0 %v2232
  %5058 = vmatpush.msra.mxu0 %v2224
  %5059 = vmatmul.f32.gmra.mxu0 %v37
  %v5060 = vpop.f32.mrf.mxu0
  %v5061 = vadd.f32 %v5041, %v5060
  %5062 = vdwg.mxu0
  %5063 = vmatpush.msra.mxu0 %v2472
  %5064 = vmatpush.msra.mxu0 %v2464
  %5065 = vmatpush.msra.mxu0 %v2456
  %5066 = vmatpush.msra.mxu0 %v2448
  %5067 = vmatpush.msra.mxu0 %v2440
  %5068 = vmatpush.msra.mxu0 %v2432
  %5069 = vmatpush.msra.mxu0 %v2424
  %5070 = vmatpush.msra.mxu0 %v2416
  %5071 = vmatpush.msra.mxu0 %v2408
  %5072 = vmatpush.msra.mxu0 %v2400
  %5073 = vmatpush.msra.mxu0 %v2392
  %5074 = vmatpush.msra.mxu0 %v2384
  %5075 = vmatpush.msra.mxu0 %v2376
  %5076 = vmatpush.msra.mxu0 %v2368
  %5077 = vmatpush.msra.mxu0 %v2360
  %5078 = vmatpush.msra.mxu0 %v2352
  %5079 = vmatmul.f32.gmra.mxu0 %v38
  %v5080 = vpop.f32.mrf.mxu0
  %v5081 = vadd.f32 %v5061, %v5080
  %5082 = vdwg.mxu0
  %5083 = vmatpush.msra.mxu0 %v2600
  %5084 = vmatpush.msra.mxu0 %v2592
  %5085 = vmatpush.msra.mxu0 %v2584
  %5086 = vmatpush.msra.mxu0 %v2576
  %5087 = vmatpush.msra.mxu0 %v2568
  %5088 = vmatpush.msra.mxu0 %v2560
  %5089 = vmatpush.msra.mxu0 %v2552
  %5090 = vmatpush.msra.mxu0 %v2544
  %5091 = vmatpush.msra.mxu0 %v2536
  %5092 = vmatpush.msra.mxu0 %v2528
  %5093 = vmatpush.msra.mxu0 %v2520
  %5094 = vmatpush.msra.mxu0 %v2512
  %5095 = vmatpush.msra.mxu0 %v2504
  %5096 = vmatpush.msra.mxu0 %v2496
  %5097 = vmatpush.msra.mxu0 %v2488
  %5098 = vmatpush.msra.mxu0 %v2480
  %5099 = vmatmul.f32.gmra.mxu0 %v39
  %v5100 = vpop.f32.mrf.mxu0
  %v5101 = vadd.f32 %v5081, %v5100
  %5102 = vdwg.mxu0
  %5103 = vmatpush.msra.mxu0 %v2728
  %5104 = vmatpush.msra.mxu0 %v2720
  %5105 = vmatpush.msra.mxu0 %v2712
  %5106 = vmatpush.msra.mxu0 %v2704
  %5107 = vmatpush.msra.mxu0 %v2696
  %5108 = vmatpush.msra.mxu0 %v2688
  %5109 = vmatpush.msra.mxu0 %v2680
  %5110 = vmatpush.msra.mxu0 %v2672
  %5111 = vmatpush.msra.mxu0 %v2664
  %5112 = vmatpush.msra.mxu0 %v2656
  %5113 = vmatpush.msra.mxu0 %v2648
  %5114 = vmatpush.msra.mxu0 %v2640
  %5115 = vmatpush.msra.mxu0 %v2632
  %5116 = vmatpush.msra.mxu0 %v2624
  %5117 = vmatpush.msra.mxu0 %v2616
  %5118 = vmatpush.msra.mxu0 %v2608
  %5119 = vmatmul.f32.gmra.mxu0 %v40
  %v5120 = vpop.f32.mrf.mxu0
  %v5121 = vadd.f32 %v5101, %v5120
  %5122 = vdwg.mxu0
  %5123 = vmatpush.msra.mxu0 %v2856
  %5124 = vmatpush.msra.mxu0 %v2848
  %5125 = vmatpush.msra.mxu0 %v2840
  %5126 = vmatpush.msra.mxu0 %v2832
  %5127 = vmatpush.msra.mxu0 %v2824
  %5128 = vmatpush.msra.mxu0 %v2816
  %5129 = vmatpush.msra.mxu0 %v2808
  %5130 = vmatpush.msra.mxu0 %v2800
  %5131 = vmatpush.msra.mxu0 %v2792
  %5132 = vmatpush.msra.mxu0 %v2784
  %5133 = vmatpush.msra.mxu0 %v2776
  %5134 = vmatpush.msra.mxu0 %v2768
  %5135 = vmatpush.msra.mxu0 %v2760
  %5136 = vmatpush.msra.mxu0 %v2752
  %5137 = vmatpush.msra.mxu0 %v2744
  %5138 = vmatpush.msra.mxu0 %v2736
  %5139 = vmatmul.f32.gmra.mxu0 %v41
  %v5140 = vpop.f32.mrf.mxu0
  %v5141 = vadd.f32 %v5121, %v5140
  %5142 = vdwg.mxu0
  %5143 = vmatpush.msra.mxu0 %v2984
  %5144 = vmatpush.msra.mxu0 %v2976
  %5145 = vmatpush.msra.mxu0 %v2968
  %5146 = vmatpush.msra.mxu0 %v2960
  %5147 = vmatpush.msra.mxu0 %v2952
  %5148 = vmatpush.msra.mxu0 %v2944
  %5149 = vmatpush.msra.mxu0 %v2936
  %5150 = vmatpush.msra.mxu0 %v2928
  %5151 = vmatpush.msra.mxu0 %v2920
  %5152 = vmatpush.msra.mxu0 %v2912
  %5153 = vmatpush.msra.mxu0 %v2904
  %5154 = vmatpush.msra.mxu0 %v2896
  %5155 = vmatpush.msra.mxu0 %v2888
  %5156 = vmatpush.msra.mxu0 %v2880
  %5157 = vmatpush.msra.mxu0 %v2872
  %5158 = vmatpush.msra.mxu0 %v2864
  %5159 = vmatmul.f32.gmra.mxu0 %v42
  %v5160 = vpop.f32.mrf.mxu0
  %v5161 = vadd.f32 %v5141, %v5160
  %5162 = vdwg.mxu0
  %5163 = vmatpush.msra.mxu0 %v3112
  %5164 = vmatpush.msra.mxu0 %v3104
  %5165 = vmatpush.msra.mxu0 %v3096
  %5166 = vmatpush.msra.mxu0 %v3088
  %5167 = vmatpush.msra.mxu0 %v3080
  %5168 = vmatpush.msra.mxu0 %v3072
  %5169 = vmatpush.msra.mxu0 %v3064
  %5170 = vmatpush.msra.mxu0 %v3056
  %5171 = vmatpush.msra.mxu0 %v3048
  %5172 = vmatpush.msra.mxu0 %v3040
  %5173 = vmatpush.msra.mxu0 %v3032
  %5174 = vmatpush.msra.mxu0 %v3024
  %5175 = vmatpush.msra.mxu0 %v3016
  %5176 = vmatpush.msra.mxu0 %v3008
  %5177 = vmatpush.msra.mxu0 %v3000
  %5178 = vmatpush.msra.mxu0 %v2992
  %5179 = vmatmul.f32.gmra.mxu0 %v43
  %v5180 = vpop.f32.mrf.mxu0
  %v5181 = vadd.f32 %v5161, %v5180
  %5182 = vdwg.mxu0
  %5183 = vmatpush.msra.mxu0 0.0
  %5184 = vmatpush.msra.mxu0 0.0
  %5185 = vmatpush.msra.mxu0 0.0
  %5186 = vmatpush.msra.mxu0 0.0
  %5187 = vmatpush.msra.mxu0 0.0
  %5188 = vmatpush.msra.mxu0 0.0
  %5189 = vmatpush.msra.mxu0 0.0
  %5190 = vmatpush.msra.mxu0 0.0
  %5191 = vmatpush.msra.mxu0 %v3176
  %5192 = vmatpush.msra.mxu0 %v3168
  %5193 = vmatpush.msra.mxu0 %v3160
  %5194 = vmatpush.msra.mxu0 %v3152
  %5195 = vmatpush.msra.mxu0 %v3144
  %5196 = vmatpush.msra.mxu0 %v3136
  %5197 = vmatpush.msra.mxu0 %v3128
  %5198 = vmatpush.msra.mxu0 %v3120
  %5199 = vmatmul.f32.gmra.mxu0 %v3201
  %v5200 = vpop.f32.mrf.mxu0
  %v5201 = vadd.f32 %v5181, %v5200
  %5202 = vdwg.mxu0
  %5203 = vmatpush.msra.mxu0 %v169
  %5204 = vmatpush.msra.mxu0 %v161
  %5205 = vmatpush.msra.mxu0 %v153
  %5206 = vmatpush.msra.mxu0 %v145
  %5207 = vmatpush.msra.mxu0 %v137
  %5208 = vmatpush.msra.mxu0 %v129
  %5209 = vmatpush.msra.mxu0 %v121
  %5210 = vmatpush.msra.mxu0 %v113
  %5211 = vmatpush.msra.mxu0 %v105
  %5212 = vmatpush.msra.mxu0 %v97
  %5213 = vmatpush.msra.mxu0 %v89
  %5214 = vmatpush.msra.mxu0 %v81
  %5215 = vmatpush.msra.mxu0 %v73
  %5216 = vmatpush.msra.mxu0 %v65
  %5217 = vmatpush.msra.mxu0 %v57
  %5218 = vmatpush.msra.mxu0 %v49
  %5219 = vmatmul.f32.gmra.mxu0 %v20
  %v5220 = vpop.f32.mrf.mxu0
  %v5221 = vadd.f32 %v3187, %v5220
  %5222 = vdwg.mxu0
  %5223 = vmatpush.msra.mxu0 %v297
  %5224 = vmatpush.msra.mxu0 %v289
  %5225 = vmatpush.msra.mxu0 %v281
  %5226 = vmatpush.msra.mxu0 %v273
  %5227 = vmatpush.msra.mxu0 %v265
  %5228 = vmatpush.msra.mxu0 %v257
  %5229 = vmatpush.msra.mxu0 %v249
  %5230 = vmatpush.msra.mxu0 %v241
  %5231 = vmatpush.msra.mxu0 %v233
  %5232 = vmatpush.msra.mxu0 %v225
  %5233 = vmatpush.msra.mxu0 %v217
  %5234 = vmatpush.msra.mxu0 %v209
  %5235 = vmatpush.msra.mxu0 %v201
  %5236 = vmatpush.msra.mxu0 %v193
  %5237 = vmatpush.msra.mxu0 %v185
  %5238 = vmatpush.msra.mxu0 %v177
  %5239 = vmatmul.f32.gmra.mxu0 %v21
  %v5240 = vpop.f32.mrf.mxu0
  %v5241 = vadd.f32 %v5221, %v5240
  %5242 = vdwg.mxu0
  %5243 = vmatpush.msra.mxu0 %v425
  %5244 = vmatpush.msra.mxu0 %v417
  %5245 = vmatpush.msra.mxu0 %v409
  %5246 = vmatpush.msra.mxu0 %v401
  %5247 = vmatpush.msra.mxu0 %v393
  %5248 = vmatpush.msra.mxu0 %v385
  %5249 = vmatpush.msra.mxu0 %v377
  %5250 = vmatpush.msra.mxu0 %v369
  %5251 = vmatpush.msra.mxu0 %v361
  %5252 = vmatpush.msra.mxu0 %v353
  %5253 = vmatpush.msra.mxu0 %v345
  %5254 = vmatpush.msra.mxu0 %v337
  %5255 = vmatpush.msra.mxu0 %v329
  %5256 = vmatpush.msra.mxu0 %v321
  %5257 = vmatpush.msra.mxu0 %v313
  %5258 = vmatpush.msra.mxu0 %v305
  %5259 = vmatmul.f32.gmra.mxu0 %v22
  %v5260 = vpop.f32.mrf.mxu0
  %v5261 = vadd.f32 %v5241, %v5260
  %5262 = vdwg.mxu0
  %5263 = vmatpush.msra.mxu0 %v553
  %5264 = vmatpush.msra.mxu0 %v545
  %5265 = vmatpush.msra.mxu0 %v537
  %5266 = vmatpush.msra.mxu0 %v529
  %5267 = vmatpush.msra.mxu0 %v521
  %5268 = vmatpush.msra.mxu0 %v513
  %5269 = vmatpush.msra.mxu0 %v505
  %5270 = vmatpush.msra.mxu0 %v497
  %5271 = vmatpush.msra.mxu0 %v489
  %5272 = vmatpush.msra.mxu0 %v481
  %5273 = vmatpush.msra.mxu0 %v473
  %5274 = vmatpush.msra.mxu0 %v465
  %5275 = vmatpush.msra.mxu0 %v457
  %5276 = vmatpush.msra.mxu0 %v449
  %5277 = vmatpush.msra.mxu0 %v441
  %5278 = vmatpush.msra.mxu0 %v433
  %5279 = vmatmul.f32.gmra.mxu0 %v23
  %v5280 = vpop.f32.mrf.mxu0
  %v5281 = vadd.f32 %v5261, %v5280
  %5282 = vdwg.mxu0
  %5283 = vmatpush.msra.mxu0 %v681
  %5284 = vmatpush.msra.mxu0 %v673
  %5285 = vmatpush.msra.mxu0 %v665
  %5286 = vmatpush.msra.mxu0 %v657
  %5287 = vmatpush.msra.mxu0 %v649
  %5288 = vmatpush.msra.mxu0 %v641
  %5289 = vmatpush.msra.mxu0 %v633
  %5290 = vmatpush.msra.mxu0 %v625
  %5291 = vmatpush.msra.mxu0 %v617
  %5292 = vmatpush.msra.mxu0 %v609
  %5293 = vmatpush.msra.mxu0 %v601
  %5294 = vmatpush.msra.mxu0 %v593
  %5295 = vmatpush.msra.mxu0 %v585
  %5296 = vmatpush.msra.mxu0 %v577
  %5297 = vmatpush.msra.mxu0 %v569
  %5298 = vmatpush.msra.mxu0 %v561
  %5299 = vmatmul.f32.gmra.mxu0 %v24
  %v5300 = vpop.f32.mrf.mxu0
  %v5301 = vadd.f32 %v5281, %v5300
  %5302 = vdwg.mxu0
  %5303 = vmatpush.msra.mxu0 %v809
  %5304 = vmatpush.msra.mxu0 %v801
  %5305 = vmatpush.msra.mxu0 %v793
  %5306 = vmatpush.msra.mxu0 %v785
  %5307 = vmatpush.msra.mxu0 %v777
  %5308 = vmatpush.msra.mxu0 %v769
  %5309 = vmatpush.msra.mxu0 %v761
  %5310 = vmatpush.msra.mxu0 %v753
  %5311 = vmatpush.msra.mxu0 %v745
  %5312 = vmatpush.msra.mxu0 %v737
  %5313 = vmatpush.msra.mxu0 %v729
  %5314 = vmatpush.msra.mxu0 %v721
  %5315 = vmatpush.msra.mxu0 %v713
  %5316 = vmatpush.msra.mxu0 %v705
  %5317 = vmatpush.msra.mxu0 %v697
  %5318 = vmatpush.msra.mxu0 %v689
  %5319 = vmatmul.f32.gmra.mxu0 %v25
  %v5320 = vpop.f32.mrf.mxu0
  %v5321 = vadd.f32 %v5301, %v5320
  %5322 = vdwg.mxu0
  %5323 = vmatpush.msra.mxu0 %v937
  %5324 = vmatpush.msra.mxu0 %v929
  %5325 = vmatpush.msra.mxu0 %v921
  %5326 = vmatpush.msra.mxu0 %v913
  %5327 = vmatpush.msra.mxu0 %v905
  %5328 = vmatpush.msra.mxu0 %v897
  %5329 = vmatpush.msra.mxu0 %v889
  %5330 = vmatpush.msra.mxu0 %v881
  %5331 = vmatpush.msra.mxu0 %v873
  %5332 = vmatpush.msra.mxu0 %v865
  %5333 = vmatpush.msra.mxu0 %v857
  %5334 = vmatpush.msra.mxu0 %v849
  %5335 = vmatpush.msra.mxu0 %v841
  %5336 = vmatpush.msra.mxu0 %v833
  %5337 = vmatpush.msra.mxu0 %v825
  %5338 = vmatpush.msra.mxu0 %v817
  %5339 = vmatmul.f32.gmra.mxu0 %v26
  %v5340 = vpop.f32.mrf.mxu0
  %v5341 = vadd.f32 %v5321, %v5340
  %5342 = vdwg.mxu0
  %5343 = vmatpush.msra.mxu0 %v1065
  %5344 = vmatpush.msra.mxu0 %v1057
  %5345 = vmatpush.msra.mxu0 %v1049
  %5346 = vmatpush.msra.mxu0 %v1041
  %5347 = vmatpush.msra.mxu0 %v1033
  %5348 = vmatpush.msra.mxu0 %v1025
  %5349 = vmatpush.msra.mxu0 %v1017
  %5350 = vmatpush.msra.mxu0 %v1009
  %5351 = vmatpush.msra.mxu0 %v1001
  %5352 = vmatpush.msra.mxu0 %v993
  %5353 = vmatpush.msra.mxu0 %v985
  %5354 = vmatpush.msra.mxu0 %v977
  %5355 = vmatpush.msra.mxu0 %v969
  %5356 = vmatpush.msra.mxu0 %v961
  %5357 = vmatpush.msra.mxu0 %v953
  %5358 = vmatpush.msra.mxu0 %v945
  %5359 = vmatmul.f32.gmra.mxu0 %v27
  %v5360 = vpop.f32.mrf.mxu0
  %v5361 = vadd.f32 %v5341, %v5360
  %5362 = vdwg.mxu0
  %5363 = vmatpush.msra.mxu0 %v1193
  %5364 = vmatpush.msra.mxu0 %v1185
  %5365 = vmatpush.msra.mxu0 %v1177
  %5366 = vmatpush.msra.mxu0 %v1169
  %5367 = vmatpush.msra.mxu0 %v1161
  %5368 = vmatpush.msra.mxu0 %v1153
  %5369 = vmatpush.msra.mxu0 %v1145
  %5370 = vmatpush.msra.mxu0 %v1137
  %5371 = vmatpush.msra.mxu0 %v1129
  %5372 = vmatpush.msra.mxu0 %v1121
  %5373 = vmatpush.msra.mxu0 %v1113
  %5374 = vmatpush.msra.mxu0 %v1105
  %5375 = vmatpush.msra.mxu0 %v1097
  %5376 = vmatpush.msra.mxu0 %v1089
  %5377 = vmatpush.msra.mxu0 %v1081
  %5378 = vmatpush.msra.mxu0 %v1073
  %5379 = vmatmul.f32.gmra.mxu0 %v28
  %v5380 = vpop.f32.mrf.mxu0
  %v5381 = vadd.f32 %v5361, %v5380
  %5382 = vdwg.mxu0
  %5383 = vmatpush.msra.mxu0 %v1321
  %5384 = vmatpush.msra.mxu0 %v1313
  %5385 = vmatpush.msra.mxu0 %v1305
  %5386 = vmatpush.msra.mxu0 %v1297
  %5387 = vmatpush.msra.mxu0 %v1289
  %5388 = vmatpush.msra.mxu0 %v1281
  %5389 = vmatpush.msra.mxu0 %v1273
  %5390 = vmatpush.msra.mxu0 %v1265
  %5391 = vmatpush.msra.mxu0 %v1257
  %5392 = vmatpush.msra.mxu0 %v1249
  %5393 = vmatpush.msra.mxu0 %v1241
  %5394 = vmatpush.msra.mxu0 %v1233
  %5395 = vmatpush.msra.mxu0 %v1225
  %5396 = vmatpush.msra.mxu0 %v1217
  %5397 = vmatpush.msra.mxu0 %v1209
  %5398 = vmatpush.msra.mxu0 %v1201
  %5399 = vmatmul.f32.gmra.mxu0 %v29
  %v5400 = vpop.f32.mrf.mxu0
  %v5401 = vadd.f32 %v5381, %v5400
  %5402 = vdwg.mxu0
  %5403 = vmatpush.msra.mxu0 %v1449
  %5404 = vmatpush.msra.mxu0 %v1441
  %5405 = vmatpush.msra.mxu0 %v1433
  %5406 = vmatpush.msra.mxu0 %v1425
  %5407 = vmatpush.msra.mxu0 %v1417
  %5408 = vmatpush.msra.mxu0 %v1409
  %5409 = vmatpush.msra.mxu0 %v1401
  %5410 = vmatpush.msra.mxu0 %v1393
  %5411 = vmatpush.msra.mxu0 %v1385
  %5412 = vmatpush.msra.mxu0 %v1377
  %5413 = vmatpush.msra.mxu0 %v1369
  %5414 = vmatpush.msra.mxu0 %v1361
  %5415 = vmatpush.msra.mxu0 %v1353
  %5416 = vmatpush.msra.mxu0 %v1345
  %5417 = vmatpush.msra.mxu0 %v1337
  %5418 = vmatpush.msra.mxu0 %v1329
  %5419 = vmatmul.f32.gmra.mxu0 %v30
  %v5420 = vpop.f32.mrf.mxu0
  %v5421 = vadd.f32 %v5401, %v5420
  %5422 = vdwg.mxu0
  %5423 = vmatpush.msra.mxu0 %v1577
  %5424 = vmatpush.msra.mxu0 %v1569
  %5425 = vmatpush.msra.mxu0 %v1561
  %5426 = vmatpush.msra.mxu0 %v1553
  %5427 = vmatpush.msra.mxu0 %v1545
  %5428 = vmatpush.msra.mxu0 %v1537
  %5429 = vmatpush.msra.mxu0 %v1529
  %5430 = vmatpush.msra.mxu0 %v1521
  %5431 = vmatpush.msra.mxu0 %v1513
  %5432 = vmatpush.msra.mxu0 %v1505
  %5433 = vmatpush.msra.mxu0 %v1497
  %5434 = vmatpush.msra.mxu0 %v1489
  %5435 = vmatpush.msra.mxu0 %v1481
  %5436 = vmatpush.msra.mxu0 %v1473
  %5437 = vmatpush.msra.mxu0 %v1465
  %5438 = vmatpush.msra.mxu0 %v1457
  %5439 = vmatmul.f32.gmra.mxu0 %v31
  %v5440 = vpop.f32.mrf.mxu0
  %v5441 = vadd.f32 %v5421, %v5440
  %5442 = vdwg.mxu0
  %5443 = vmatpush.msra.mxu0 %v1705
  %5444 = vmatpush.msra.mxu0 %v1697
  %5445 = vmatpush.msra.mxu0 %v1689
  %5446 = vmatpush.msra.mxu0 %v1681
  %5447 = vmatpush.msra.mxu0 %v1673
  %5448 = vmatpush.msra.mxu0 %v1665
  %5449 = vmatpush.msra.mxu0 %v1657
  %5450 = vmatpush.msra.mxu0 %v1649
  %5451 = vmatpush.msra.mxu0 %v1641
  %5452 = vmatpush.msra.mxu0 %v1633
  %5453 = vmatpush.msra.mxu0 %v1625
  %5454 = vmatpush.msra.mxu0 %v1617
  %5455 = vmatpush.msra.mxu0 %v1609
  %5456 = vmatpush.msra.mxu0 %v1601
  %5457 = vmatpush.msra.mxu0 %v1593
  %5458 = vmatpush.msra.mxu0 %v1585
  %5459 = vmatmul.f32.gmra.mxu0 %v32
  %v5460 = vpop.f32.mrf.mxu0
  %v5461 = vadd.f32 %v5441, %v5460
  %5462 = vdwg.mxu0
  %5463 = vmatpush.msra.mxu0 %v1833
  %5464 = vmatpush.msra.mxu0 %v1825
  %5465 = vmatpush.msra.mxu0 %v1817
  %5466 = vmatpush.msra.mxu0 %v1809
  %5467 = vmatpush.msra.mxu0 %v1801
  %5468 = vmatpush.msra.mxu0 %v1793
  %5469 = vmatpush.msra.mxu0 %v1785
  %5470 = vmatpush.msra.mxu0 %v1777
  %5471 = vmatpush.msra.mxu0 %v1769
  %5472 = vmatpush.msra.mxu0 %v1761
  %5473 = vmatpush.msra.mxu0 %v1753
  %5474 = vmatpush.msra.mxu0 %v1745
  %5475 = vmatpush.msra.mxu0 %v1737
  %5476 = vmatpush.msra.mxu0 %v1729
  %5477 = vmatpush.msra.mxu0 %v1721
  %5478 = vmatpush.msra.mxu0 %v1713
  %5479 = vmatmul.f32.gmra.mxu0 %v33
  %v5480 = vpop.f32.mrf.mxu0
  %v5481 = vadd.f32 %v5461, %v5480
  %5482 = vdwg.mxu0
  %5483 = vmatpush.msra.mxu0 %v1961
  %5484 = vmatpush.msra.mxu0 %v1953
  %5485 = vmatpush.msra.mxu0 %v1945
  %5486 = vmatpush.msra.mxu0 %v1937
  %5487 = vmatpush.msra.mxu0 %v1929
  %5488 = vmatpush.msra.mxu0 %v1921
  %5489 = vmatpush.msra.mxu0 %v1913
  %5490 = vmatpush.msra.mxu0 %v1905
  %5491 = vmatpush.msra.mxu0 %v1897
  %5492 = vmatpush.msra.mxu0 %v1889
  %5493 = vmatpush.msra.mxu0 %v1881
  %5494 = vmatpush.msra.mxu0 %v1873
  %5495 = vmatpush.msra.mxu0 %v1865
  %5496 = vmatpush.msra.mxu0 %v1857
  %5497 = vmatpush.msra.mxu0 %v1849
  %5498 = vmatpush.msra.mxu0 %v1841
  %5499 = vmatmul.f32.gmra.mxu0 %v34
  %v5500 = vpop.f32.mrf.mxu0
  %v5501 = vadd.f32 %v5481, %v5500
  %5502 = vdwg.mxu0
  %5503 = vmatpush.msra.mxu0 %v2089
  %5504 = vmatpush.msra.mxu0 %v2081
  %5505 = vmatpush.msra.mxu0 %v2073
  %5506 = vmatpush.msra.mxu0 %v2065
  %5507 = vmatpush.msra.mxu0 %v2057
  %5508 = vmatpush.msra.mxu0 %v2049
  %5509 = vmatpush.msra.mxu0 %v2041
  %5510 = vmatpush.msra.mxu0 %v2033
  %5511 = vmatpush.msra.mxu0 %v2025
  %5512 = vmatpush.msra.mxu0 %v2017
  %5513 = vmatpush.msra.mxu0 %v2009
  %5514 = vmatpush.msra.mxu0 %v2001
  %5515 = vmatpush.msra.mxu0 %v1993
  %5516 = vmatpush.msra.mxu0 %v1985
  %5517 = vmatpush.msra.mxu0 %v1977
  %5518 = vmatpush.msra.mxu0 %v1969
  %5519 = vmatmul.f32.gmra.mxu0 %v35
  %v5520 = vpop.f32.mrf.mxu0
  %v5521 = vadd.f32 %v5501, %v5520
  %5522 = vdwg.mxu0
  %5523 = vmatpush.msra.mxu0 %v2217
  %5524 = vmatpush.msra.mxu0 %v2209
  %5525 = vmatpush.msra.mxu0 %v2201
  %5526 = vmatpush.msra.mxu0 %v2193
  %5527 = vmatpush.msra.mxu0 %v2185
  %5528 = vmatpush.msra.mxu0 %v2177
  %5529 = vmatpush.msra.mxu0 %v2169
  %5530 = vmatpush.msra.mxu0 %v2161
  %5531 = vmatpush.msra.mxu0 %v2153
  %5532 = vmatpush.msra.mxu0 %v2145
  %5533 = vmatpush.msra.mxu0 %v2137
  %5534 = vmatpush.msra.mxu0 %v2129
  %5535 = vmatpush.msra.mxu0 %v2121
  %5536 = vmatpush.msra.mxu0 %v2113
  %5537 = vmatpush.msra.mxu0 %v2105
  %5538 = vmatpush.msra.mxu0 %v2097
  %5539 = vmatmul.f32.gmra.mxu0 %v36
  %v5540 = vpop.f32.mrf.mxu0
  %v5541 = vadd.f32 %v5521, %v5540
  %5542 = vdwg.mxu0
  %5543 = vmatpush.msra.mxu0 %v2345
  %5544 = vmatpush.msra.mxu0 %v2337
  %5545 = vmatpush.msra.mxu0 %v2329
  %5546 = vmatpush.msra.mxu0 %v2321
  %5547 = vmatpush.msra.mxu0 %v2313
  %5548 = vmatpush.msra.mxu0 %v2305
  %5549 = vmatpush.msra.mxu0 %v2297
  %5550 = vmatpush.msra.mxu0 %v2289
  %5551 = vmatpush.msra.mxu0 %v2281
  %5552 = vmatpush.msra.mxu0 %v2273
  %5553 = vmatpush.msra.mxu0 %v2265
  %5554 = vmatpush.msra.mxu0 %v2257
  %5555 = vmatpush.msra.mxu0 %v2249
  %5556 = vmatpush.msra.mxu0 %v2241
  %5557 = vmatpush.msra.mxu0 %v2233
  %5558 = vmatpush.msra.mxu0 %v2225
  %5559 = vmatmul.f32.gmra.mxu0 %v37
  %v5560 = vpop.f32.mrf.mxu0
  %v5561 = vadd.f32 %v5541, %v5560
  %5562 = vdwg.mxu0
  %5563 = vmatpush.msra.mxu0 %v2473
  %5564 = vmatpush.msra.mxu0 %v2465
  %5565 = vmatpush.msra.mxu0 %v2457
  %5566 = vmatpush.msra.mxu0 %v2449
  %5567 = vmatpush.msra.mxu0 %v2441
  %5568 = vmatpush.msra.mxu0 %v2433
  %5569 = vmatpush.msra.mxu0 %v2425
  %5570 = vmatpush.msra.mxu0 %v2417
  %5571 = vmatpush.msra.mxu0 %v2409
  %5572 = vmatpush.msra.mxu0 %v2401
  %5573 = vmatpush.msra.mxu0 %v2393
  %5574 = vmatpush.msra.mxu0 %v2385
  %5575 = vmatpush.msra.mxu0 %v2377
  %5576 = vmatpush.msra.mxu0 %v2369
  %5577 = vmatpush.msra.mxu0 %v2361
  %5578 = vmatpush.msra.mxu0 %v2353
  %5579 = vmatmul.f32.gmra.mxu0 %v38
  %v5580 = vpop.f32.mrf.mxu0
  %v5581 = vadd.f32 %v5561, %v5580
  %5582 = vdwg.mxu0
  %5583 = vmatpush.msra.mxu0 %v2601
  %5584 = vmatpush.msra.mxu0 %v2593
  %5585 = vmatpush.msra.mxu0 %v2585
  %5586 = vmatpush.msra.mxu0 %v2577
  %5587 = vmatpush.msra.mxu0 %v2569
  %5588 = vmatpush.msra.mxu0 %v2561
  %5589 = vmatpush.msra.mxu0 %v2553
  %5590 = vmatpush.msra.mxu0 %v2545
  %5591 = vmatpush.msra.mxu0 %v2537
  %5592 = vmatpush.msra.mxu0 %v2529
  %5593 = vmatpush.msra.mxu0 %v2521
  %5594 = vmatpush.msra.mxu0 %v2513
  %5595 = vmatpush.msra.mxu0 %v2505
  %5596 = vmatpush.msra.mxu0 %v2497
  %5597 = vmatpush.msra.mxu0 %v2489
  %5598 = vmatpush.msra.mxu0 %v2481
  %5599 = vmatmul.f32.gmra.mxu0 %v39
  %v5600 = vpop.f32.mrf.mxu0
  %v5601 = vadd.f32 %v5581, %v5600
  %5602 = vdwg.mxu0
  %5603 = vmatpush.msra.mxu0 %v2729
  %5604 = vmatpush.msra.mxu0 %v2721
  %5605 = vmatpush.msra.mxu0 %v2713
  %5606 = vmatpush.msra.mxu0 %v2705
  %5607 = vmatpush.msra.mxu0 %v2697
  %5608 = vmatpush.msra.mxu0 %v2689
  %5609 = vmatpush.msra.mxu0 %v2681
  %5610 = vmatpush.msra.mxu0 %v2673
  %5611 = vmatpush.msra.mxu0 %v2665
  %5612 = vmatpush.msra.mxu0 %v2657
  %5613 = vmatpush.msra.mxu0 %v2649
  %5614 = vmatpush.msra.mxu0 %v2641
  %5615 = vmatpush.msra.mxu0 %v2633
  %5616 = vmatpush.msra.mxu0 %v2625
  %5617 = vmatpush.msra.mxu0 %v2617
  %5618 = vmatpush.msra.mxu0 %v2609
  %5619 = vmatmul.f32.gmra.mxu0 %v40
  %v5620 = vpop.f32.mrf.mxu0
  %v5621 = vadd.f32 %v5601, %v5620
  %5622 = vdwg.mxu0
  %5623 = vmatpush.msra.mxu0 %v2857
  %5624 = vmatpush.msra.mxu0 %v2849
  %5625 = vmatpush.msra.mxu0 %v2841
  %5626 = vmatpush.msra.mxu0 %v2833
  %5627 = vmatpush.msra.mxu0 %v2825
  %5628 = vmatpush.msra.mxu0 %v2817
  %5629 = vmatpush.msra.mxu0 %v2809
  %5630 = vmatpush.msra.mxu0 %v2801
  %5631 = vmatpush.msra.mxu0 %v2793
  %5632 = vmatpush.msra.mxu0 %v2785
  %5633 = vmatpush.msra.mxu0 %v2777
  %5634 = vmatpush.msra.mxu0 %v2769
  %5635 = vmatpush.msra.mxu0 %v2761
  %5636 = vmatpush.msra.mxu0 %v2753
  %5637 = vmatpush.msra.mxu0 %v2745
  %5638 = vmatpush.msra.mxu0 %v2737
  %5639 = vmatmul.f32.gmra.mxu0 %v41
  %v5640 = vpop.f32.mrf.mxu0
  %v5641 = vadd.f32 %v5621, %v5640
  %5642 = vdwg.mxu0
  %5643 = vmatpush.msra.mxu0 %v2985
  %5644 = vmatpush.msra.mxu0 %v2977
  %5645 = vmatpush.msra.mxu0 %v2969
  %5646 = vmatpush.msra.mxu0 %v2961
  %5647 = vmatpush.msra.mxu0 %v2953
  %5648 = vmatpush.msra.mxu0 %v2945
  %5649 = vmatpush.msra.mxu0 %v2937
  %5650 = vmatpush.msra.mxu0 %v2929
  %5651 = vmatpush.msra.mxu0 %v2921
  %5652 = vmatpush.msra.mxu0 %v2913
  %5653 = vmatpush.msra.mxu0 %v2905
  %5654 = vmatpush.msra.mxu0 %v2897
  %5655 = vmatpush.msra.mxu0 %v2889
  %5656 = vmatpush.msra.mxu0 %v2881
  %5657 = vmatpush.msra.mxu0 %v2873
  %5658 = vmatpush.msra.mxu0 %v2865
  %5659 = vmatmul.f32.gmra.mxu0 %v42
  %v5660 = vpop.f32.mrf.mxu0
  %v5661 = vadd.f32 %v5641, %v5660
  %5662 = vdwg.mxu0
  %5663 = vmatpush.msra.mxu0 %v3113
  %5664 = vmatpush.msra.mxu0 %v3105
  %5665 = vmatpush.msra.mxu0 %v3097
  %5666 = vmatpush.msra.mxu0 %v3089
  %5667 = vmatpush.msra.mxu0 %v3081
  %5668 = vmatpush.msra.mxu0 %v3073
  %5669 = vmatpush.msra.mxu0 %v3065
  %5670 = vmatpush.msra.mxu0 %v3057
  %5671 = vmatpush.msra.mxu0 %v3049
  %5672 = vmatpush.msra.mxu0 %v3041
  %5673 = vmatpush.msra.mxu0 %v3033
  %5674 = vmatpush.msra.mxu0 %v3025
  %5675 = vmatpush.msra.mxu0 %v3017
  %5676 = vmatpush.msra.mxu0 %v3009
  %5677 = vmatpush.msra.mxu0 %v3001
  %5678 = vmatpush.msra.mxu0 %v2993
  %5679 = vmatmul.f32.gmra.mxu0 %v43
  %v5680 = vpop.f32.mrf.mxu0
  %v5681 = vadd.f32 %v5661, %v5680
  %5682 = vdwg.mxu0
  %5683 = vmatpush.msra.mxu0 0.0
  %5684 = vmatpush.msra.mxu0 0.0
  %5685 = vmatpush.msra.mxu0 0.0
  %5686 = vmatpush.msra.mxu0 0.0
  %5687 = vmatpush.msra.mxu0 0.0
  %5688 = vmatpush.msra.mxu0 0.0
  %5689 = vmatpush.msra.mxu0 0.0
  %5690 = vmatpush.msra.mxu0 0.0
  %5691 = vmatpush.msra.mxu0 %v3177
  %5692 = vmatpush.msra.mxu0 %v3169
  %5693 = vmatpush.msra.mxu0 %v3161
  %5694 = vmatpush.msra.mxu0 %v3153
  %5695 = vmatpush.msra.mxu0 %v3145
  %5696 = vmatpush.msra.mxu0 %v3137
  %5697 = vmatpush.msra.mxu0 %v3129
  %5698 = vmatpush.msra.mxu0 %v3121
  %5699 = vmatmul.f32.gmra.mxu0 %v3201
  %v5700 = vpop.f32.mrf.mxu0
  %v5701 = vadd.f32 %v5681, %v5700
  %5702 = vdwg.mxu0
  %5703 = vmatpush.msra.mxu0 %v170
  %5704 = vmatpush.msra.mxu0 %v162
  %5705 = vmatpush.msra.mxu0 %v154
  %5706 = vmatpush.msra.mxu0 %v146
  %5707 = vmatpush.msra.mxu0 %v138
  %5708 = vmatpush.msra.mxu0 %v130
  %5709 = vmatpush.msra.mxu0 %v122
  %5710 = vmatpush.msra.mxu0 %v114
  %5711 = vmatpush.msra.mxu0 %v106
  %5712 = vmatpush.msra.mxu0 %v98
  %5713 = vmatpush.msra.mxu0 %v90
  %5714 = vmatpush.msra.mxu0 %v82
  %5715 = vmatpush.msra.mxu0 %v74
  %5716 = vmatpush.msra.mxu0 %v66
  %5717 = vmatpush.msra.mxu0 %v58
  %5718 = vmatpush.msra.mxu0 %v50
  %5719 = vmatmul.f32.gmra.mxu0 %v20
  %v5720 = vpop.f32.mrf.mxu0
  %v5721 = vadd.f32 %v3188, %v5720
  %5722 = vdwg.mxu0
  %5723 = vmatpush.msra.mxu0 %v298
  %5724 = vmatpush.msra.mxu0 %v290
  %5725 = vmatpush.msra.mxu0 %v282
  %5726 = vmatpush.msra.mxu0 %v274
  %5727 = vmatpush.msra.mxu0 %v266
  %5728 = vmatpush.msra.mxu0 %v258
  %5729 = vmatpush.msra.mxu0 %v250
  %5730 = vmatpush.msra.mxu0 %v242
  %5731 = vmatpush.msra.mxu0 %v234
  %5732 = vmatpush.msra.mxu0 %v226
  %5733 = vmatpush.msra.mxu0 %v218
  %5734 = vmatpush.msra.mxu0 %v210
  %5735 = vmatpush.msra.mxu0 %v202
  %5736 = vmatpush.msra.mxu0 %v194
  %5737 = vmatpush.msra.mxu0 %v186
  %5738 = vmatpush.msra.mxu0 %v178
  %5739 = vmatmul.f32.gmra.mxu0 %v21
  %v5740 = vpop.f32.mrf.mxu0
  %v5741 = vadd.f32 %v5721, %v5740
  %5742 = vdwg.mxu0
  %5743 = vmatpush.msra.mxu0 %v426
  %5744 = vmatpush.msra.mxu0 %v418
  %5745 = vmatpush.msra.mxu0 %v410
  %5746 = vmatpush.msra.mxu0 %v402
  %5747 = vmatpush.msra.mxu0 %v394
  %5748 = vmatpush.msra.mxu0 %v386
  %5749 = vmatpush.msra.mxu0 %v378
  %5750 = vmatpush.msra.mxu0 %v370
  %5751 = vmatpush.msra.mxu0 %v362
  %5752 = vmatpush.msra.mxu0 %v354
  %5753 = vmatpush.msra.mxu0 %v346
  %5754 = vmatpush.msra.mxu0 %v338
  %5755 = vmatpush.msra.mxu0 %v330
  %5756 = vmatpush.msra.mxu0 %v322
  %5757 = vmatpush.msra.mxu0 %v314
  %5758 = vmatpush.msra.mxu0 %v306
  %5759 = vmatmul.f32.gmra.mxu0 %v22
  %v5760 = vpop.f32.mrf.mxu0
  %v5761 = vadd.f32 %v5741, %v5760
  %5762 = vdwg.mxu0
  %5763 = vmatpush.msra.mxu0 %v554
  %5764 = vmatpush.msra.mxu0 %v546
  %5765 = vmatpush.msra.mxu0 %v538
  %5766 = vmatpush.msra.mxu0 %v530
  %5767 = vmatpush.msra.mxu0 %v522
  %5768 = vmatpush.msra.mxu0 %v514
  %5769 = vmatpush.msra.mxu0 %v506
  %5770 = vmatpush.msra.mxu0 %v498
  %5771 = vmatpush.msra.mxu0 %v490
  %5772 = vmatpush.msra.mxu0 %v482
  %5773 = vmatpush.msra.mxu0 %v474
  %5774 = vmatpush.msra.mxu0 %v466
  %5775 = vmatpush.msra.mxu0 %v458
  %5776 = vmatpush.msra.mxu0 %v450
  %5777 = vmatpush.msra.mxu0 %v442
  %5778 = vmatpush.msra.mxu0 %v434
  %5779 = vmatmul.f32.gmra.mxu0 %v23
  %v5780 = vpop.f32.mrf.mxu0
  %v5781 = vadd.f32 %v5761, %v5780
  %5782 = vdwg.mxu0
  %5783 = vmatpush.msra.mxu0 %v682
  %5784 = vmatpush.msra.mxu0 %v674
  %5785 = vmatpush.msra.mxu0 %v666
  %5786 = vmatpush.msra.mxu0 %v658
  %5787 = vmatpush.msra.mxu0 %v650
  %5788 = vmatpush.msra.mxu0 %v642
  %5789 = vmatpush.msra.mxu0 %v634
  %5790 = vmatpush.msra.mxu0 %v626
  %5791 = vmatpush.msra.mxu0 %v618
  %5792 = vmatpush.msra.mxu0 %v610
  %5793 = vmatpush.msra.mxu0 %v602
  %5794 = vmatpush.msra.mxu0 %v594
  %5795 = vmatpush.msra.mxu0 %v586
  %5796 = vmatpush.msra.mxu0 %v578
  %5797 = vmatpush.msra.mxu0 %v570
  %5798 = vmatpush.msra.mxu0 %v562
  %5799 = vmatmul.f32.gmra.mxu0 %v24
  %v5800 = vpop.f32.mrf.mxu0
  %v5801 = vadd.f32 %v5781, %v5800
  %5802 = vdwg.mxu0
  %5803 = vmatpush.msra.mxu0 %v810
  %5804 = vmatpush.msra.mxu0 %v802
  %5805 = vmatpush.msra.mxu0 %v794
  %5806 = vmatpush.msra.mxu0 %v786
  %5807 = vmatpush.msra.mxu0 %v778
  %5808 = vmatpush.msra.mxu0 %v770
  %5809 = vmatpush.msra.mxu0 %v762
  %5810 = vmatpush.msra.mxu0 %v754
  %5811 = vmatpush.msra.mxu0 %v746
  %5812 = vmatpush.msra.mxu0 %v738
  %5813 = vmatpush.msra.mxu0 %v730
  %5814 = vmatpush.msra.mxu0 %v722
  %5815 = vmatpush.msra.mxu0 %v714
  %5816 = vmatpush.msra.mxu0 %v706
  %5817 = vmatpush.msra.mxu0 %v698
  %5818 = vmatpush.msra.mxu0 %v690
  %5819 = vmatmul.f32.gmra.mxu0 %v25
  %v5820 = vpop.f32.mrf.mxu0
  %v5821 = vadd.f32 %v5801, %v5820
  %5822 = vdwg.mxu0
  %5823 = vmatpush.msra.mxu0 %v938
  %5824 = vmatpush.msra.mxu0 %v930
  %5825 = vmatpush.msra.mxu0 %v922
  %5826 = vmatpush.msra.mxu0 %v914
  %5827 = vmatpush.msra.mxu0 %v906
  %5828 = vmatpush.msra.mxu0 %v898
  %5829 = vmatpush.msra.mxu0 %v890
  %5830 = vmatpush.msra.mxu0 %v882
  %5831 = vmatpush.msra.mxu0 %v874
  %5832 = vmatpush.msra.mxu0 %v866
  %5833 = vmatpush.msra.mxu0 %v858
  %5834 = vmatpush.msra.mxu0 %v850
  %5835 = vmatpush.msra.mxu0 %v842
  %5836 = vmatpush.msra.mxu0 %v834
  %5837 = vmatpush.msra.mxu0 %v826
  %5838 = vmatpush.msra.mxu0 %v818
  %5839 = vmatmul.f32.gmra.mxu0 %v26
  %v5840 = vpop.f32.mrf.mxu0
  %v5841 = vadd.f32 %v5821, %v5840
  %5842 = vdwg.mxu0
  %5843 = vmatpush.msra.mxu0 %v1066
  %5844 = vmatpush.msra.mxu0 %v1058
  %5845 = vmatpush.msra.mxu0 %v1050
  %5846 = vmatpush.msra.mxu0 %v1042
  %5847 = vmatpush.msra.mxu0 %v1034
  %5848 = vmatpush.msra.mxu0 %v1026
  %5849 = vmatpush.msra.mxu0 %v1018
  %5850 = vmatpush.msra.mxu0 %v1010
  %5851 = vmatpush.msra.mxu0 %v1002
  %5852 = vmatpush.msra.mxu0 %v994
  %5853 = vmatpush.msra.mxu0 %v986
  %5854 = vmatpush.msra.mxu0 %v978
  %5855 = vmatpush.msra.mxu0 %v970
  %5856 = vmatpush.msra.mxu0 %v962
  %5857 = vmatpush.msra.mxu0 %v954
  %5858 = vmatpush.msra.mxu0 %v946
  %5859 = vmatmul.f32.gmra.mxu0 %v27
  %v5860 = vpop.f32.mrf.mxu0
  %v5861 = vadd.f32 %v5841, %v5860
  %5862 = vdwg.mxu0
  %5863 = vmatpush.msra.mxu0 %v1194
  %5864 = vmatpush.msra.mxu0 %v1186
  %5865 = vmatpush.msra.mxu0 %v1178
  %5866 = vmatpush.msra.mxu0 %v1170
  %5867 = vmatpush.msra.mxu0 %v1162
  %5868 = vmatpush.msra.mxu0 %v1154
  %5869 = vmatpush.msra.mxu0 %v1146
  %5870 = vmatpush.msra.mxu0 %v1138
  %5871 = vmatpush.msra.mxu0 %v1130
  %5872 = vmatpush.msra.mxu0 %v1122
  %5873 = vmatpush.msra.mxu0 %v1114
  %5874 = vmatpush.msra.mxu0 %v1106
  %5875 = vmatpush.msra.mxu0 %v1098
  %5876 = vmatpush.msra.mxu0 %v1090
  %5877 = vmatpush.msra.mxu0 %v1082
  %5878 = vmatpush.msra.mxu0 %v1074
  %5879 = vmatmul.f32.gmra.mxu0 %v28
  %v5880 = vpop.f32.mrf.mxu0
  %v5881 = vadd.f32 %v5861, %v5880
  %5882 = vdwg.mxu0
  %5883 = vmatpush.msra.mxu0 %v1322
  %5884 = vmatpush.msra.mxu0 %v1314
  %5885 = vmatpush.msra.mxu0 %v1306
  %5886 = vmatpush.msra.mxu0 %v1298
  %5887 = vmatpush.msra.mxu0 %v1290
  %5888 = vmatpush.msra.mxu0 %v1282
  %5889 = vmatpush.msra.mxu0 %v1274
  %5890 = vmatpush.msra.mxu0 %v1266
  %5891 = vmatpush.msra.mxu0 %v1258
  %5892 = vmatpush.msra.mxu0 %v1250
  %5893 = vmatpush.msra.mxu0 %v1242
  %5894 = vmatpush.msra.mxu0 %v1234
  %5895 = vmatpush.msra.mxu0 %v1226
  %5896 = vmatpush.msra.mxu0 %v1218
  %5897 = vmatpush.msra.mxu0 %v1210
  %5898 = vmatpush.msra.mxu0 %v1202
  %5899 = vmatmul.f32.gmra.mxu0 %v29
  %v5900 = vpop.f32.mrf.mxu0
  %v5901 = vadd.f32 %v5881, %v5900
  %5902 = vdwg.mxu0
  %5903 = vmatpush.msra.mxu0 %v1450
  %5904 = vmatpush.msra.mxu0 %v1442
  %5905 = vmatpush.msra.mxu0 %v1434
  %5906 = vmatpush.msra.mxu0 %v1426
  %5907 = vmatpush.msra.mxu0 %v1418
  %5908 = vmatpush.msra.mxu0 %v1410
  %5909 = vmatpush.msra.mxu0 %v1402
  %5910 = vmatpush.msra.mxu0 %v1394
  %5911 = vmatpush.msra.mxu0 %v1386
  %5912 = vmatpush.msra.mxu0 %v1378
  %5913 = vmatpush.msra.mxu0 %v1370
  %5914 = vmatpush.msra.mxu0 %v1362
  %5915 = vmatpush.msra.mxu0 %v1354
  %5916 = vmatpush.msra.mxu0 %v1346
  %5917 = vmatpush.msra.mxu0 %v1338
  %5918 = vmatpush.msra.mxu0 %v1330
  %5919 = vmatmul.f32.gmra.mxu0 %v30
  %v5920 = vpop.f32.mrf.mxu0
  %v5921 = vadd.f32 %v5901, %v5920
  %5922 = vdwg.mxu0
  %5923 = vmatpush.msra.mxu0 %v1578
  %5924 = vmatpush.msra.mxu0 %v1570
  %5925 = vmatpush.msra.mxu0 %v1562
  %5926 = vmatpush.msra.mxu0 %v1554
  %5927 = vmatpush.msra.mxu0 %v1546
  %5928 = vmatpush.msra.mxu0 %v1538
  %5929 = vmatpush.msra.mxu0 %v1530
  %5930 = vmatpush.msra.mxu0 %v1522
  %5931 = vmatpush.msra.mxu0 %v1514
  %5932 = vmatpush.msra.mxu0 %v1506
  %5933 = vmatpush.msra.mxu0 %v1498
  %5934 = vmatpush.msra.mxu0 %v1490
  %5935 = vmatpush.msra.mxu0 %v1482
  %5936 = vmatpush.msra.mxu0 %v1474
  %5937 = vmatpush.msra.mxu0 %v1466
  %5938 = vmatpush.msra.mxu0 %v1458
  %5939 = vmatmul.f32.gmra.mxu0 %v31
  %v5940 = vpop.f32.mrf.mxu0
  %v5941 = vadd.f32 %v5921, %v5940
  %5942 = vdwg.mxu0
  %5943 = vmatpush.msra.mxu0 %v1706
  %5944 = vmatpush.msra.mxu0 %v1698
  %5945 = vmatpush.msra.mxu0 %v1690
  %5946 = vmatpush.msra.mxu0 %v1682
  %5947 = vmatpush.msra.mxu0 %v1674
  %5948 = vmatpush.msra.mxu0 %v1666
  %5949 = vmatpush.msra.mxu0 %v1658
  %5950 = vmatpush.msra.mxu0 %v1650
  %5951 = vmatpush.msra.mxu0 %v1642
  %5952 = vmatpush.msra.mxu0 %v1634
  %5953 = vmatpush.msra.mxu0 %v1626
  %5954 = vmatpush.msra.mxu0 %v1618
  %5955 = vmatpush.msra.mxu0 %v1610
  %5956 = vmatpush.msra.mxu0 %v1602
  %5957 = vmatpush.msra.mxu0 %v1594
  %5958 = vmatpush.msra.mxu0 %v1586
  %5959 = vmatmul.f32.gmra.mxu0 %v32
  %v5960 = vpop.f32.mrf.mxu0
  %v5961 = vadd.f32 %v5941, %v5960
  %5962 = vdwg.mxu0
  %5963 = vmatpush.msra.mxu0 %v1834
  %5964 = vmatpush.msra.mxu0 %v1826
  %5965 = vmatpush.msra.mxu0 %v1818
  %5966 = vmatpush.msra.mxu0 %v1810
  %5967 = vmatpush.msra.mxu0 %v1802
  %5968 = vmatpush.msra.mxu0 %v1794
  %5969 = vmatpush.msra.mxu0 %v1786
  %5970 = vmatpush.msra.mxu0 %v1778
  %5971 = vmatpush.msra.mxu0 %v1770
  %5972 = vmatpush.msra.mxu0 %v1762
  %5973 = vmatpush.msra.mxu0 %v1754
  %5974 = vmatpush.msra.mxu0 %v1746
  %5975 = vmatpush.msra.mxu0 %v1738
  %5976 = vmatpush.msra.mxu0 %v1730
  %5977 = vmatpush.msra.mxu0 %v1722
  %5978 = vmatpush.msra.mxu0 %v1714
  %5979 = vmatmul.f32.gmra.mxu0 %v33
  %v5980 = vpop.f32.mrf.mxu0
  %v5981 = vadd.f32 %v5961, %v5980
  %5982 = vdwg.mxu0
  %5983 = vmatpush.msra.mxu0 %v1962
  %5984 = vmatpush.msra.mxu0 %v1954
  %5985 = vmatpush.msra.mxu0 %v1946
  %5986 = vmatpush.msra.mxu0 %v1938
  %5987 = vmatpush.msra.mxu0 %v1930
  %5988 = vmatpush.msra.mxu0 %v1922
  %5989 = vmatpush.msra.mxu0 %v1914
  %5990 = vmatpush.msra.mxu0 %v1906
  %5991 = vmatpush.msra.mxu0 %v1898
  %5992 = vmatpush.msra.mxu0 %v1890
  %5993 = vmatpush.msra.mxu0 %v1882
  %5994 = vmatpush.msra.mxu0 %v1874
  %5995 = vmatpush.msra.mxu0 %v1866
  %5996 = vmatpush.msra.mxu0 %v1858
  %5997 = vmatpush.msra.mxu0 %v1850
  %5998 = vmatpush.msra.mxu0 %v1842
  %5999 = vmatmul.f32.gmra.mxu0 %v34
  %v6000 = vpop.f32.mrf.mxu0
  %v6001 = vadd.f32 %v5981, %v6000
  %6002 = vdwg.mxu0
  %6003 = vmatpush.msra.mxu0 %v2090
  %6004 = vmatpush.msra.mxu0 %v2082
  %6005 = vmatpush.msra.mxu0 %v2074
  %6006 = vmatpush.msra.mxu0 %v2066
  %6007 = vmatpush.msra.mxu0 %v2058
  %6008 = vmatpush.msra.mxu0 %v2050
  %6009 = vmatpush.msra.mxu0 %v2042
  %6010 = vmatpush.msra.mxu0 %v2034
  %6011 = vmatpush.msra.mxu0 %v2026
  %6012 = vmatpush.msra.mxu0 %v2018
  %6013 = vmatpush.msra.mxu0 %v2010
  %6014 = vmatpush.msra.mxu0 %v2002
  %6015 = vmatpush.msra.mxu0 %v1994
  %6016 = vmatpush.msra.mxu0 %v1986
  %6017 = vmatpush.msra.mxu0 %v1978
  %6018 = vmatpush.msra.mxu0 %v1970
  %6019 = vmatmul.f32.gmra.mxu0 %v35
  %v6020 = vpop.f32.mrf.mxu0
  %v6021 = vadd.f32 %v6001, %v6020
  %6022 = vdwg.mxu0
  %6023 = vmatpush.msra.mxu0 %v2218
  %6024 = vmatpush.msra.mxu0 %v2210
  %6025 = vmatpush.msra.mxu0 %v2202
  %6026 = vmatpush.msra.mxu0 %v2194
  %6027 = vmatpush.msra.mxu0 %v2186
  %6028 = vmatpush.msra.mxu0 %v2178
  %6029 = vmatpush.msra.mxu0 %v2170
  %6030 = vmatpush.msra.mxu0 %v2162
  %6031 = vmatpush.msra.mxu0 %v2154
  %6032 = vmatpush.msra.mxu0 %v2146
  %6033 = vmatpush.msra.mxu0 %v2138
  %6034 = vmatpush.msra.mxu0 %v2130
  %6035 = vmatpush.msra.mxu0 %v2122
  %6036 = vmatpush.msra.mxu0 %v2114
  %6037 = vmatpush.msra.mxu0 %v2106
  %6038 = vmatpush.msra.mxu0 %v2098
  %6039 = vmatmul.f32.gmra.mxu0 %v36
  %v6040 = vpop.f32.mrf.mxu0
  %v6041 = vadd.f32 %v6021, %v6040
  %6042 = vdwg.mxu0
  %6043 = vmatpush.msra.mxu0 %v2346
  %6044 = vmatpush.msra.mxu0 %v2338
  %6045 = vmatpush.msra.mxu0 %v2330
  %6046 = vmatpush.msra.mxu0 %v2322
  %6047 = vmatpush.msra.mxu0 %v2314
  %6048 = vmatpush.msra.mxu0 %v2306
  %6049 = vmatpush.msra.mxu0 %v2298
  %6050 = vmatpush.msra.mxu0 %v2290
  %6051 = vmatpush.msra.mxu0 %v2282
  %6052 = vmatpush.msra.mxu0 %v2274
  %6053 = vmatpush.msra.mxu0 %v2266
  %6054 = vmatpush.msra.mxu0 %v2258
  %6055 = vmatpush.msra.mxu0 %v2250
  %6056 = vmatpush.msra.mxu0 %v2242
  %6057 = vmatpush.msra.mxu0 %v2234
  %6058 = vmatpush.msra.mxu0 %v2226
  %6059 = vmatmul.f32.gmra.mxu0 %v37
  %v6060 = vpop.f32.mrf.mxu0
  %v6061 = vadd.f32 %v6041, %v6060
  %6062 = vdwg.mxu0
  %6063 = vmatpush.msra.mxu0 %v2474
  %6064 = vmatpush.msra.mxu0 %v2466
  %6065 = vmatpush.msra.mxu0 %v2458
  %6066 = vmatpush.msra.mxu0 %v2450
  %6067 = vmatpush.msra.mxu0 %v2442
  %6068 = vmatpush.msra.mxu0 %v2434
  %6069 = vmatpush.msra.mxu0 %v2426
  %6070 = vmatpush.msra.mxu0 %v2418
  %6071 = vmatpush.msra.mxu0 %v2410
  %6072 = vmatpush.msra.mxu0 %v2402
  %6073 = vmatpush.msra.mxu0 %v2394
  %6074 = vmatpush.msra.mxu0 %v2386
  %6075 = vmatpush.msra.mxu0 %v2378
  %6076 = vmatpush.msra.mxu0 %v2370
  %6077 = vmatpush.msra.mxu0 %v2362
  %6078 = vmatpush.msra.mxu0 %v2354
  %6079 = vmatmul.f32.gmra.mxu0 %v38
  %v6080 = vpop.f32.mrf.mxu0
  %v6081 = vadd.f32 %v6061, %v6080
  %6082 = vdwg.mxu0
  %6083 = vmatpush.msra.mxu0 %v2602
  %6084 = vmatpush.msra.mxu0 %v2594
  %6085 = vmatpush.msra.mxu0 %v2586
  %6086 = vmatpush.msra.mxu0 %v2578
  %6087 = vmatpush.msra.mxu0 %v2570
  %6088 = vmatpush.msra.mxu0 %v2562
  %6089 = vmatpush.msra.mxu0 %v2554
  %6090 = vmatpush.msra.mxu0 %v2546
  %6091 = vmatpush.msra.mxu0 %v2538
  %6092 = vmatpush.msra.mxu0 %v2530
  %6093 = vmatpush.msra.mxu0 %v2522
  %6094 = vmatpush.msra.mxu0 %v2514
  %6095 = vmatpush.msra.mxu0 %v2506
  %6096 = vmatpush.msra.mxu0 %v2498
  %6097 = vmatpush.msra.mxu0 %v2490
  %6098 = vmatpush.msra.mxu0 %v2482
  %6099 = vmatmul.f32.gmra.mxu0 %v39
  %v6100 = vpop.f32.mrf.mxu0
  %v6101 = vadd.f32 %v6081, %v6100
  %6102 = vdwg.mxu0
  %6103 = vmatpush.msra.mxu0 %v2730
  %6104 = vmatpush.msra.mxu0 %v2722
  %6105 = vmatpush.msra.mxu0 %v2714
  %6106 = vmatpush.msra.mxu0 %v2706
  %6107 = vmatpush.msra.mxu0 %v2698
  %6108 = vmatpush.msra.mxu0 %v2690
  %6109 = vmatpush.msra.mxu0 %v2682
  %6110 = vmatpush.msra.mxu0 %v2674
  %6111 = vmatpush.msra.mxu0 %v2666
  %6112 = vmatpush.msra.mxu0 %v2658
  %6113 = vmatpush.msra.mxu0 %v2650
  %6114 = vmatpush.msra.mxu0 %v2642
  %6115 = vmatpush.msra.mxu0 %v2634
  %6116 = vmatpush.msra.mxu0 %v2626
  %6117 = vmatpush.msra.mxu0 %v2618
  %6118 = vmatpush.msra.mxu0 %v2610
  %6119 = vmatmul.f32.gmra.mxu0 %v40
  %v6120 = vpop.f32.mrf.mxu0
  %v6121 = vadd.f32 %v6101, %v6120
  %6122 = vdwg.mxu0
  %6123 = vmatpush.msra.mxu0 %v2858
  %6124 = vmatpush.msra.mxu0 %v2850
  %6125 = vmatpush.msra.mxu0 %v2842
  %6126 = vmatpush.msra.mxu0 %v2834
  %6127 = vmatpush.msra.mxu0 %v2826
  %6128 = vmatpush.msra.mxu0 %v2818
  %6129 = vmatpush.msra.mxu0 %v2810
  %6130 = vmatpush.msra.mxu0 %v2802
  %6131 = vmatpush.msra.mxu0 %v2794
  %6132 = vmatpush.msra.mxu0 %v2786
  %6133 = vmatpush.msra.mxu0 %v2778
  %6134 = vmatpush.msra.mxu0 %v2770
  %6135 = vmatpush.msra.mxu0 %v2762
  %6136 = vmatpush.msra.mxu0 %v2754
  %6137 = vmatpush.msra.mxu0 %v2746
  %6138 = vmatpush.msra.mxu0 %v2738
  %6139 = vmatmul.f32.gmra.mxu0 %v41
  %v6140 = vpop.f32.mrf.mxu0
  %v6141 = vadd.f32 %v6121, %v6140
  %6142 = vdwg.mxu0
  %6143 = vmatpush.msra.mxu0 %v2986
  %6144 = vmatpush.msra.mxu0 %v2978
  %6145 = vmatpush.msra.mxu0 %v2970
  %6146 = vmatpush.msra.mxu0 %v2962
  %6147 = vmatpush.msra.mxu0 %v2954
  %6148 = vmatpush.msra.mxu0 %v2946
  %6149 = vmatpush.msra.mxu0 %v2938
  %6150 = vmatpush.msra.mxu0 %v2930
  %6151 = vmatpush.msra.mxu0 %v2922
  %6152 = vmatpush.msra.mxu0 %v2914
  %6153 = vmatpush.msra.mxu0 %v2906
  %6154 = vmatpush.msra.mxu0 %v2898
  %6155 = vmatpush.msra.mxu0 %v2890
  %6156 = vmatpush.msra.mxu0 %v2882
  %6157 = vmatpush.msra.mxu0 %v2874
  %6158 = vmatpush.msra.mxu0 %v2866
  %6159 = vmatmul.f32.gmra.mxu0 %v42
  %v6160 = vpop.f32.mrf.mxu0
  %v6161 = vadd.f32 %v6141, %v6160
  %6162 = vdwg.mxu0
  %6163 = vmatpush.msra.mxu0 %v3114
  %6164 = vmatpush.msra.mxu0 %v3106
  %6165 = vmatpush.msra.mxu0 %v3098
  %6166 = vmatpush.msra.mxu0 %v3090
  %6167 = vmatpush.msra.mxu0 %v3082
  %6168 = vmatpush.msra.mxu0 %v3074
  %6169 = vmatpush.msra.mxu0 %v3066
  %6170 = vmatpush.msra.mxu0 %v3058
  %6171 = vmatpush.msra.mxu0 %v3050
  %6172 = vmatpush.msra.mxu0 %v3042
  %6173 = vmatpush.msra.mxu0 %v3034
  %6174 = vmatpush.msra.mxu0 %v3026
  %6175 = vmatpush.msra.mxu0 %v3018
  %6176 = vmatpush.msra.mxu0 %v3010
  %6177 = vmatpush.msra.mxu0 %v3002
  %6178 = vmatpush.msra.mxu0 %v2994
  %6179 = vmatmul.f32.gmra.mxu0 %v43
  %v6180 = vpop.f32.mrf.mxu0
  %v6181 = vadd.f32 %v6161, %v6180
  %6182 = vdwg.mxu0
  %6183 = vmatpush.msra.mxu0 0.0
  %6184 = vmatpush.msra.mxu0 0.0
  %6185 = vmatpush.msra.mxu0 0.0
  %6186 = vmatpush.msra.mxu0 0.0
  %6187 = vmatpush.msra.mxu0 0.0
  %6188 = vmatpush.msra.mxu0 0.0
  %6189 = vmatpush.msra.mxu0 0.0
  %6190 = vmatpush.msra.mxu0 0.0
  %6191 = vmatpush.msra.mxu0 %v3178
  %6192 = vmatpush.msra.mxu0 %v3170
  %6193 = vmatpush.msra.mxu0 %v3162
  %6194 = vmatpush.msra.mxu0 %v3154
  %6195 = vmatpush.msra.mxu0 %v3146
  %6196 = vmatpush.msra.mxu0 %v3138
  %6197 = vmatpush.msra.mxu0 %v3130
  %6198 = vmatpush.msra.mxu0 %v3122
  %6199 = vmatmul.f32.gmra.mxu0 %v3201
  %v6200 = vpop.f32.mrf.mxu0
  %v6201 = vadd.f32 %v6181, %v6200
  %6202 = vdwg.mxu0
  %6203 = vmatpush.msra.mxu0 %v171
  %6204 = vmatpush.msra.mxu0 %v163
  %6205 = vmatpush.msra.mxu0 %v155
  %6206 = vmatpush.msra.mxu0 %v147
  %6207 = vmatpush.msra.mxu0 %v139
  %6208 = vmatpush.msra.mxu0 %v131
  %6209 = vmatpush.msra.mxu0 %v123
  %6210 = vmatpush.msra.mxu0 %v115
  %6211 = vmatpush.msra.mxu0 %v107
  %6212 = vmatpush.msra.mxu0 %v99
  %6213 = vmatpush.msra.mxu0 %v91
  %6214 = vmatpush.msra.mxu0 %v83
  %6215 = vmatpush.msra.mxu0 %v75
  %6216 = vmatpush.msra.mxu0 %v67
  %6217 = vmatpush.msra.mxu0 %v59
  %6218 = vmatpush.msra.mxu0 %v51
  %6219 = vmatmul.f32.gmra.mxu0 %v20
  %v6220 = vpop.f32.mrf.mxu0
  %v6221 = vadd.f32 %v3189, %v6220
  %6222 = vdwg.mxu0
  %6223 = vmatpush.msra.mxu0 %v299
  %6224 = vmatpush.msra.mxu0 %v291
  %6225 = vmatpush.msra.mxu0 %v283
  %6226 = vmatpush.msra.mxu0 %v275
  %6227 = vmatpush.msra.mxu0 %v267
  %6228 = vmatpush.msra.mxu0 %v259
  %6229 = vmatpush.msra.mxu0 %v251
  %6230 = vmatpush.msra.mxu0 %v243
  %6231 = vmatpush.msra.mxu0 %v235
  %6232 = vmatpush.msra.mxu0 %v227
  %6233 = vmatpush.msra.mxu0 %v219
  %6234 = vmatpush.msra.mxu0 %v211
  %6235 = vmatpush.msra.mxu0 %v203
  %6236 = vmatpush.msra.mxu0 %v195
  %6237 = vmatpush.msra.mxu0 %v187
  %6238 = vmatpush.msra.mxu0 %v179
  %6239 = vmatmul.f32.gmra.mxu0 %v21
  %v6240 = vpop.f32.mrf.mxu0
  %v6241 = vadd.f32 %v6221, %v6240
  %6242 = vdwg.mxu0
  %6243 = vmatpush.msra.mxu0 %v427
  %6244 = vmatpush.msra.mxu0 %v419
  %6245 = vmatpush.msra.mxu0 %v411
  %6246 = vmatpush.msra.mxu0 %v403
  %6247 = vmatpush.msra.mxu0 %v395
  %6248 = vmatpush.msra.mxu0 %v387
  %6249 = vmatpush.msra.mxu0 %v379
  %6250 = vmatpush.msra.mxu0 %v371
  %6251 = vmatpush.msra.mxu0 %v363
  %6252 = vmatpush.msra.mxu0 %v355
  %6253 = vmatpush.msra.mxu0 %v347
  %6254 = vmatpush.msra.mxu0 %v339
  %6255 = vmatpush.msra.mxu0 %v331
  %6256 = vmatpush.msra.mxu0 %v323
  %6257 = vmatpush.msra.mxu0 %v315
  %6258 = vmatpush.msra.mxu0 %v307
  %6259 = vmatmul.f32.gmra.mxu0 %v22
  %v6260 = vpop.f32.mrf.mxu0
  %v6261 = vadd.f32 %v6241, %v6260
  %6262 = vdwg.mxu0
  %6263 = vmatpush.msra.mxu0 %v555
  %6264 = vmatpush.msra.mxu0 %v547
  %6265 = vmatpush.msra.mxu0 %v539
  %6266 = vmatpush.msra.mxu0 %v531
  %6267 = vmatpush.msra.mxu0 %v523
  %6268 = vmatpush.msra.mxu0 %v515
  %6269 = vmatpush.msra.mxu0 %v507
  %6270 = vmatpush.msra.mxu0 %v499
  %6271 = vmatpush.msra.mxu0 %v491
  %6272 = vmatpush.msra.mxu0 %v483
  %6273 = vmatpush.msra.mxu0 %v475
  %6274 = vmatpush.msra.mxu0 %v467
  %6275 = vmatpush.msra.mxu0 %v459
  %6276 = vmatpush.msra.mxu0 %v451
  %6277 = vmatpush.msra.mxu0 %v443
  %6278 = vmatpush.msra.mxu0 %v435
  %6279 = vmatmul.f32.gmra.mxu0 %v23
  %v6280 = vpop.f32.mrf.mxu0
  %v6281 = vadd.f32 %v6261, %v6280
  %6282 = vdwg.mxu0
  %6283 = vmatpush.msra.mxu0 %v683
  %6284 = vmatpush.msra.mxu0 %v675
  %6285 = vmatpush.msra.mxu0 %v667
  %6286 = vmatpush.msra.mxu0 %v659
  %6287 = vmatpush.msra.mxu0 %v651
  %6288 = vmatpush.msra.mxu0 %v643
  %6289 = vmatpush.msra.mxu0 %v635
  %6290 = vmatpush.msra.mxu0 %v627
  %6291 = vmatpush.msra.mxu0 %v619
  %6292 = vmatpush.msra.mxu0 %v611
  %6293 = vmatpush.msra.mxu0 %v603
  %6294 = vmatpush.msra.mxu0 %v595
  %6295 = vmatpush.msra.mxu0 %v587
  %6296 = vmatpush.msra.mxu0 %v579
  %6297 = vmatpush.msra.mxu0 %v571
  %6298 = vmatpush.msra.mxu0 %v563
  %6299 = vmatmul.f32.gmra.mxu0 %v24
  %v6300 = vpop.f32.mrf.mxu0
  %v6301 = vadd.f32 %v6281, %v6300
  %6302 = vdwg.mxu0
  %6303 = vmatpush.msra.mxu0 %v811
  %6304 = vmatpush.msra.mxu0 %v803
  %6305 = vmatpush.msra.mxu0 %v795
  %6306 = vmatpush.msra.mxu0 %v787
  %6307 = vmatpush.msra.mxu0 %v779
  %6308 = vmatpush.msra.mxu0 %v771
  %6309 = vmatpush.msra.mxu0 %v763
  %6310 = vmatpush.msra.mxu0 %v755
  %6311 = vmatpush.msra.mxu0 %v747
  %6312 = vmatpush.msra.mxu0 %v739
  %6313 = vmatpush.msra.mxu0 %v731
  %6314 = vmatpush.msra.mxu0 %v723
  %6315 = vmatpush.msra.mxu0 %v715
  %6316 = vmatpush.msra.mxu0 %v707
  %6317 = vmatpush.msra.mxu0 %v699
  %6318 = vmatpush.msra.mxu0 %v691
  %6319 = vmatmul.f32.gmra.mxu0 %v25
  %v6320 = vpop.f32.mrf.mxu0
  %v6321 = vadd.f32 %v6301, %v6320
  %6322 = vdwg.mxu0
  %6323 = vmatpush.msra.mxu0 %v939
  %6324 = vmatpush.msra.mxu0 %v931
  %6325 = vmatpush.msra.mxu0 %v923
  %6326 = vmatpush.msra.mxu0 %v915
  %6327 = vmatpush.msra.mxu0 %v907
  %6328 = vmatpush.msra.mxu0 %v899
  %6329 = vmatpush.msra.mxu0 %v891
  %6330 = vmatpush.msra.mxu0 %v883
  %6331 = vmatpush.msra.mxu0 %v875
  %6332 = vmatpush.msra.mxu0 %v867
  %6333 = vmatpush.msra.mxu0 %v859
  %6334 = vmatpush.msra.mxu0 %v851
  %6335 = vmatpush.msra.mxu0 %v843
  %6336 = vmatpush.msra.mxu0 %v835
  %6337 = vmatpush.msra.mxu0 %v827
  %6338 = vmatpush.msra.mxu0 %v819
  %6339 = vmatmul.f32.gmra.mxu0 %v26
  %v6340 = vpop.f32.mrf.mxu0
  %v6341 = vadd.f32 %v6321, %v6340
  %6342 = vdwg.mxu0
  %6343 = vmatpush.msra.mxu0 %v1067
  %6344 = vmatpush.msra.mxu0 %v1059
  %6345 = vmatpush.msra.mxu0 %v1051
  %6346 = vmatpush.msra.mxu0 %v1043
  %6347 = vmatpush.msra.mxu0 %v1035
  %6348 = vmatpush.msra.mxu0 %v1027
  %6349 = vmatpush.msra.mxu0 %v1019
  %6350 = vmatpush.msra.mxu0 %v1011
  %6351 = vmatpush.msra.mxu0 %v1003
  %6352 = vmatpush.msra.mxu0 %v995
  %6353 = vmatpush.msra.mxu0 %v987
  %6354 = vmatpush.msra.mxu0 %v979
  %6355 = vmatpush.msra.mxu0 %v971
  %6356 = vmatpush.msra.mxu0 %v963
  %6357 = vmatpush.msra.mxu0 %v955
  %6358 = vmatpush.msra.mxu0 %v947
  %6359 = vmatmul.f32.gmra.mxu0 %v27
  %v6360 = vpop.f32.mrf.mxu0
  %v6361 = vadd.f32 %v6341, %v6360
  %6362 = vdwg.mxu0
  %6363 = vmatpush.msra.mxu0 %v1195
  %6364 = vmatpush.msra.mxu0 %v1187
  %6365 = vmatpush.msra.mxu0 %v1179
  %6366 = vmatpush.msra.mxu0 %v1171
  %6367 = vmatpush.msra.mxu0 %v1163
  %6368 = vmatpush.msra.mxu0 %v1155
  %6369 = vmatpush.msra.mxu0 %v1147
  %6370 = vmatpush.msra.mxu0 %v1139
  %6371 = vmatpush.msra.mxu0 %v1131
  %6372 = vmatpush.msra.mxu0 %v1123
  %6373 = vmatpush.msra.mxu0 %v1115
  %6374 = vmatpush.msra.mxu0 %v1107
  %6375 = vmatpush.msra.mxu0 %v1099
  %6376 = vmatpush.msra.mxu0 %v1091
  %6377 = vmatpush.msra.mxu0 %v1083
  %6378 = vmatpush.msra.mxu0 %v1075
  %6379 = vmatmul.f32.gmra.mxu0 %v28
  %v6380 = vpop.f32.mrf.mxu0
  %v6381 = vadd.f32 %v6361, %v6380
  %6382 = vdwg.mxu0
  %6383 = vmatpush.msra.mxu0 %v1323
  %6384 = vmatpush.msra.mxu0 %v1315
  %6385 = vmatpush.msra.mxu0 %v1307
  %6386 = vmatpush.msra.mxu0 %v1299
  %6387 = vmatpush.msra.mxu0 %v1291
  %6388 = vmatpush.msra.mxu0 %v1283
  %6389 = vmatpush.msra.mxu0 %v1275
  %6390 = vmatpush.msra.mxu0 %v1267
  %6391 = vmatpush.msra.mxu0 %v1259
  %6392 = vmatpush.msra.mxu0 %v1251
  %6393 = vmatpush.msra.mxu0 %v1243
  %6394 = vmatpush.msra.mxu0 %v1235
  %6395 = vmatpush.msra.mxu0 %v1227
  %6396 = vmatpush.msra.mxu0 %v1219
  %6397 = vmatpush.msra.mxu0 %v1211
  %6398 = vmatpush.msra.mxu0 %v1203
  %6399 = vmatmul.f32.gmra.mxu0 %v29
  %v6400 = vpop.f32.mrf.mxu0
  %v6401 = vadd.f32 %v6381, %v6400
  %6402 = vdwg.mxu0
  %6403 = vmatpush.msra.mxu0 %v1451
  %6404 = vmatpush.msra.mxu0 %v1443
  %6405 = vmatpush.msra.mxu0 %v1435
  %6406 = vmatpush.msra.mxu0 %v1427
  %6407 = vmatpush.msra.mxu0 %v1419
  %6408 = vmatpush.msra.mxu0 %v1411
  %6409 = vmatpush.msra.mxu0 %v1403
  %6410 = vmatpush.msra.mxu0 %v1395
  %6411 = vmatpush.msra.mxu0 %v1387
  %6412 = vmatpush.msra.mxu0 %v1379
  %6413 = vmatpush.msra.mxu0 %v1371
  %6414 = vmatpush.msra.mxu0 %v1363
  %6415 = vmatpush.msra.mxu0 %v1355
  %6416 = vmatpush.msra.mxu0 %v1347
  %6417 = vmatpush.msra.mxu0 %v1339
  %6418 = vmatpush.msra.mxu0 %v1331
  %6419 = vmatmul.f32.gmra.mxu0 %v30
  %v6420 = vpop.f32.mrf.mxu0
  %v6421 = vadd.f32 %v6401, %v6420
  %6422 = vdwg.mxu0
  %6423 = vmatpush.msra.mxu0 %v1579
  %6424 = vmatpush.msra.mxu0 %v1571
  %6425 = vmatpush.msra.mxu0 %v1563
  %6426 = vmatpush.msra.mxu0 %v1555
  %6427 = vmatpush.msra.mxu0 %v1547
  %6428 = vmatpush.msra.mxu0 %v1539
  %6429 = vmatpush.msra.mxu0 %v1531
  %6430 = vmatpush.msra.mxu0 %v1523
  %6431 = vmatpush.msra.mxu0 %v1515
  %6432 = vmatpush.msra.mxu0 %v1507
  %6433 = vmatpush.msra.mxu0 %v1499
  %6434 = vmatpush.msra.mxu0 %v1491
  %6435 = vmatpush.msra.mxu0 %v1483
  %6436 = vmatpush.msra.mxu0 %v1475
  %6437 = vmatpush.msra.mxu0 %v1467
  %6438 = vmatpush.msra.mxu0 %v1459
  %6439 = vmatmul.f32.gmra.mxu0 %v31
  %v6440 = vpop.f32.mrf.mxu0
  %v6441 = vadd.f32 %v6421, %v6440
  %6442 = vdwg.mxu0
  %6443 = vmatpush.msra.mxu0 %v1707
  %6444 = vmatpush.msra.mxu0 %v1699
  %6445 = vmatpush.msra.mxu0 %v1691
  %6446 = vmatpush.msra.mxu0 %v1683
  %6447 = vmatpush.msra.mxu0 %v1675
  %6448 = vmatpush.msra.mxu0 %v1667
  %6449 = vmatpush.msra.mxu0 %v1659
  %6450 = vmatpush.msra.mxu0 %v1651
  %6451 = vmatpush.msra.mxu0 %v1643
  %6452 = vmatpush.msra.mxu0 %v1635
  %6453 = vmatpush.msra.mxu0 %v1627
  %6454 = vmatpush.msra.mxu0 %v1619
  %6455 = vmatpush.msra.mxu0 %v1611
  %6456 = vmatpush.msra.mxu0 %v1603
  %6457 = vmatpush.msra.mxu0 %v1595
  %6458 = vmatpush.msra.mxu0 %v1587
  %6459 = vmatmul.f32.gmra.mxu0 %v32
  %v6460 = vpop.f32.mrf.mxu0
  %v6461 = vadd.f32 %v6441, %v6460
  %6462 = vdwg.mxu0
  %6463 = vmatpush.msra.mxu0 %v1835
  %6464 = vmatpush.msra.mxu0 %v1827
  %6465 = vmatpush.msra.mxu0 %v1819
  %6466 = vmatpush.msra.mxu0 %v1811
  %6467 = vmatpush.msra.mxu0 %v1803
  %6468 = vmatpush.msra.mxu0 %v1795
  %6469 = vmatpush.msra.mxu0 %v1787
  %6470 = vmatpush.msra.mxu0 %v1779
  %6471 = vmatpush.msra.mxu0 %v1771
  %6472 = vmatpush.msra.mxu0 %v1763
  %6473 = vmatpush.msra.mxu0 %v1755
  %6474 = vmatpush.msra.mxu0 %v1747
  %6475 = vmatpush.msra.mxu0 %v1739
  %6476 = vmatpush.msra.mxu0 %v1731
  %6477 = vmatpush.msra.mxu0 %v1723
  %6478 = vmatpush.msra.mxu0 %v1715
  %6479 = vmatmul.f32.gmra.mxu0 %v33
  %v6480 = vpop.f32.mrf.mxu0
  %v6481 = vadd.f32 %v6461, %v6480
  %6482 = vdwg.mxu0
  %6483 = vmatpush.msra.mxu0 %v1963
  %6484 = vmatpush.msra.mxu0 %v1955
  %6485 = vmatpush.msra.mxu0 %v1947
  %6486 = vmatpush.msra.mxu0 %v1939
  %6487 = vmatpush.msra.mxu0 %v1931
  %6488 = vmatpush.msra.mxu0 %v1923
  %6489 = vmatpush.msra.mxu0 %v1915
  %6490 = vmatpush.msra.mxu0 %v1907
  %6491 = vmatpush.msra.mxu0 %v1899
  %6492 = vmatpush.msra.mxu0 %v1891
  %6493 = vmatpush.msra.mxu0 %v1883
  %6494 = vmatpush.msra.mxu0 %v1875
  %6495 = vmatpush.msra.mxu0 %v1867
  %6496 = vmatpush.msra.mxu0 %v1859
  %6497 = vmatpush.msra.mxu0 %v1851
  %6498 = vmatpush.msra.mxu0 %v1843
  %6499 = vmatmul.f32.gmra.mxu0 %v34
  %v6500 = vpop.f32.mrf.mxu0
  %v6501 = vadd.f32 %v6481, %v6500
  %6502 = vdwg.mxu0
  %6503 = vmatpush.msra.mxu0 %v2091
  %6504 = vmatpush.msra.mxu0 %v2083
  %6505 = vmatpush.msra.mxu0 %v2075
  %6506 = vmatpush.msra.mxu0 %v2067
  %6507 = vmatpush.msra.mxu0 %v2059
  %6508 = vmatpush.msra.mxu0 %v2051
  %6509 = vmatpush.msra.mxu0 %v2043
  %6510 = vmatpush.msra.mxu0 %v2035
  %6511 = vmatpush.msra.mxu0 %v2027
  %6512 = vmatpush.msra.mxu0 %v2019
  %6513 = vmatpush.msra.mxu0 %v2011
  %6514 = vmatpush.msra.mxu0 %v2003
  %6515 = vmatpush.msra.mxu0 %v1995
  %6516 = vmatpush.msra.mxu0 %v1987
  %6517 = vmatpush.msra.mxu0 %v1979
  %6518 = vmatpush.msra.mxu0 %v1971
  %6519 = vmatmul.f32.gmra.mxu0 %v35
  %v6520 = vpop.f32.mrf.mxu0
  %v6521 = vadd.f32 %v6501, %v6520
  %6522 = vdwg.mxu0
  %6523 = vmatpush.msra.mxu0 %v2219
  %6524 = vmatpush.msra.mxu0 %v2211
  %6525 = vmatpush.msra.mxu0 %v2203
  %6526 = vmatpush.msra.mxu0 %v2195
  %6527 = vmatpush.msra.mxu0 %v2187
  %6528 = vmatpush.msra.mxu0 %v2179
  %6529 = vmatpush.msra.mxu0 %v2171
  %6530 = vmatpush.msra.mxu0 %v2163
  %6531 = vmatpush.msra.mxu0 %v2155
  %6532 = vmatpush.msra.mxu0 %v2147
  %6533 = vmatpush.msra.mxu0 %v2139
  %6534 = vmatpush.msra.mxu0 %v2131
  %6535 = vmatpush.msra.mxu0 %v2123
  %6536 = vmatpush.msra.mxu0 %v2115
  %6537 = vmatpush.msra.mxu0 %v2107
  %6538 = vmatpush.msra.mxu0 %v2099
  %6539 = vmatmul.f32.gmra.mxu0 %v36
  %v6540 = vpop.f32.mrf.mxu0
  %v6541 = vadd.f32 %v6521, %v6540
  %6542 = vdwg.mxu0
  %6543 = vmatpush.msra.mxu0 %v2347
  %6544 = vmatpush.msra.mxu0 %v2339
  %6545 = vmatpush.msra.mxu0 %v2331
  %6546 = vmatpush.msra.mxu0 %v2323
  %6547 = vmatpush.msra.mxu0 %v2315
  %6548 = vmatpush.msra.mxu0 %v2307
  %6549 = vmatpush.msra.mxu0 %v2299
  %6550 = vmatpush.msra.mxu0 %v2291
  %6551 = vmatpush.msra.mxu0 %v2283
  %6552 = vmatpush.msra.mxu0 %v2275
  %6553 = vmatpush.msra.mxu0 %v2267
  %6554 = vmatpush.msra.mxu0 %v2259
  %6555 = vmatpush.msra.mxu0 %v2251
  %6556 = vmatpush.msra.mxu0 %v2243
  %6557 = vmatpush.msra.mxu0 %v2235
  %6558 = vmatpush.msra.mxu0 %v2227
  %6559 = vmatmul.f32.gmra.mxu0 %v37
  %v6560 = vpop.f32.mrf.mxu0
  %v6561 = vadd.f32 %v6541, %v6560
  %6562 = vdwg.mxu0
  %6563 = vmatpush.msra.mxu0 %v2475
  %6564 = vmatpush.msra.mxu0 %v2467
  %6565 = vmatpush.msra.mxu0 %v2459
  %6566 = vmatpush.msra.mxu0 %v2451
  %6567 = vmatpush.msra.mxu0 %v2443
  %6568 = vmatpush.msra.mxu0 %v2435
  %6569 = vmatpush.msra.mxu0 %v2427
  %6570 = vmatpush.msra.mxu0 %v2419
  %6571 = vmatpush.msra.mxu0 %v2411
  %6572 = vmatpush.msra.mxu0 %v2403
  %6573 = vmatpush.msra.mxu0 %v2395
  %6574 = vmatpush.msra.mxu0 %v2387
  %6575 = vmatpush.msra.mxu0 %v2379
  %6576 = vmatpush.msra.mxu0 %v2371
  %6577 = vmatpush.msra.mxu0 %v2363
  %6578 = vmatpush.msra.mxu0 %v2355
  %6579 = vmatmul.f32.gmra.mxu0 %v38
  %v6580 = vpop.f32.mrf.mxu0
  %v6581 = vadd.f32 %v6561, %v6580
  %6582 = vdwg.mxu0
  %6583 = vmatpush.msra.mxu0 %v2603
  %6584 = vmatpush.msra.mxu0 %v2595
  %6585 = vmatpush.msra.mxu0 %v2587
  %6586 = vmatpush.msra.mxu0 %v2579
  %6587 = vmatpush.msra.mxu0 %v2571
  %6588 = vmatpush.msra.mxu0 %v2563
  %6589 = vmatpush.msra.mxu0 %v2555
  %6590 = vmatpush.msra.mxu0 %v2547
  %6591 = vmatpush.msra.mxu0 %v2539
  %6592 = vmatpush.msra.mxu0 %v2531
  %6593 = vmatpush.msra.mxu0 %v2523
  %6594 = vmatpush.msra.mxu0 %v2515
  %6595 = vmatpush.msra.mxu0 %v2507
  %6596 = vmatpush.msra.mxu0 %v2499
  %6597 = vmatpush.msra.mxu0 %v2491
  %6598 = vmatpush.msra.mxu0 %v2483
  %6599 = vmatmul.f32.gmra.mxu0 %v39
  %v6600 = vpop.f32.mrf.mxu0
  %v6601 = vadd.f32 %v6581, %v6600
  %6602 = vdwg.mxu0
  %6603 = vmatpush.msra.mxu0 %v2731
  %6604 = vmatpush.msra.mxu0 %v2723
  %6605 = vmatpush.msra.mxu0 %v2715
  %6606 = vmatpush.msra.mxu0 %v2707
  %6607 = vmatpush.msra.mxu0 %v2699
  %6608 = vmatpush.msra.mxu0 %v2691
  %6609 = vmatpush.msra.mxu0 %v2683
  %6610 = vmatpush.msra.mxu0 %v2675
  %6611 = vmatpush.msra.mxu0 %v2667
  %6612 = vmatpush.msra.mxu0 %v2659
  %6613 = vmatpush.msra.mxu0 %v2651
  %6614 = vmatpush.msra.mxu0 %v2643
  %6615 = vmatpush.msra.mxu0 %v2635
  %6616 = vmatpush.msra.mxu0 %v2627
  %6617 = vmatpush.msra.mxu0 %v2619
  %6618 = vmatpush.msra.mxu0 %v2611
  %6619 = vmatmul.f32.gmra.mxu0 %v40
  %v6620 = vpop.f32.mrf.mxu0
  %v6621 = vadd.f32 %v6601, %v6620
  %6622 = vdwg.mxu0
  %6623 = vmatpush.msra.mxu0 %v2859
  %6624 = vmatpush.msra.mxu0 %v2851
  %6625 = vmatpush.msra.mxu0 %v2843
  %6626 = vmatpush.msra.mxu0 %v2835
  %6627 = vmatpush.msra.mxu0 %v2827
  %6628 = vmatpush.msra.mxu0 %v2819
  %6629 = vmatpush.msra.mxu0 %v2811
  %6630 = vmatpush.msra.mxu0 %v2803
  %6631 = vmatpush.msra.mxu0 %v2795
  %6632 = vmatpush.msra.mxu0 %v2787
  %6633 = vmatpush.msra.mxu0 %v2779
  %6634 = vmatpush.msra.mxu0 %v2771
  %6635 = vmatpush.msra.mxu0 %v2763
  %6636 = vmatpush.msra.mxu0 %v2755
  %6637 = vmatpush.msra.mxu0 %v2747
  %6638 = vmatpush.msra.mxu0 %v2739
  %6639 = vmatmul.f32.gmra.mxu0 %v41
  %v6640 = vpop.f32.mrf.mxu0
  %v6641 = vadd.f32 %v6621, %v6640
  %6642 = vdwg.mxu0
  %6643 = vmatpush.msra.mxu0 %v2987
  %6644 = vmatpush.msra.mxu0 %v2979
  %6645 = vmatpush.msra.mxu0 %v2971
  %6646 = vmatpush.msra.mxu0 %v2963
  %6647 = vmatpush.msra.mxu0 %v2955
  %6648 = vmatpush.msra.mxu0 %v2947
  %6649 = vmatpush.msra.mxu0 %v2939
  %6650 = vmatpush.msra.mxu0 %v2931
  %6651 = vmatpush.msra.mxu0 %v2923
  %6652 = vmatpush.msra.mxu0 %v2915
  %6653 = vmatpush.msra.mxu0 %v2907
  %6654 = vmatpush.msra.mxu0 %v2899
  %6655 = vmatpush.msra.mxu0 %v2891
  %6656 = vmatpush.msra.mxu0 %v2883
  %6657 = vmatpush.msra.mxu0 %v2875
  %6658 = vmatpush.msra.mxu0 %v2867
  %6659 = vmatmul.f32.gmra.mxu0 %v42
  %v6660 = vpop.f32.mrf.mxu0
  %v6661 = vadd.f32 %v6641, %v6660
  %6662 = vdwg.mxu0
  %6663 = vmatpush.msra.mxu0 %v3115
  %6664 = vmatpush.msra.mxu0 %v3107
  %6665 = vmatpush.msra.mxu0 %v3099
  %6666 = vmatpush.msra.mxu0 %v3091
  %6667 = vmatpush.msra.mxu0 %v3083
  %6668 = vmatpush.msra.mxu0 %v3075
  %6669 = vmatpush.msra.mxu0 %v3067
  %6670 = vmatpush.msra.mxu0 %v3059
  %6671 = vmatpush.msra.mxu0 %v3051
  %6672 = vmatpush.msra.mxu0 %v3043
  %6673 = vmatpush.msra.mxu0 %v3035
  %6674 = vmatpush.msra.mxu0 %v3027
  %6675 = vmatpush.msra.mxu0 %v3019
  %6676 = vmatpush.msra.mxu0 %v3011
  %6677 = vmatpush.msra.mxu0 %v3003
  %6678 = vmatpush.msra.mxu0 %v2995
  %6679 = vmatmul.f32.gmra.mxu0 %v43
  %v6680 = vpop.f32.mrf.mxu0
  %v6681 = vadd.f32 %v6661, %v6680
  %6682 = vdwg.mxu0
  %6683 = vmatpush.msra.mxu0 0.0
  %6684 = vmatpush.msra.mxu0 0.0
  %6685 = vmatpush.msra.mxu0 0.0
  %6686 = vmatpush.msra.mxu0 0.0
  %6687 = vmatpush.msra.mxu0 0.0
  %6688 = vmatpush.msra.mxu0 0.0
  %6689 = vmatpush.msra.mxu0 0.0
  %6690 = vmatpush.msra.mxu0 0.0
  %6691 = vmatpush.msra.mxu0 %v3179
  %6692 = vmatpush.msra.mxu0 %v3171
  %6693 = vmatpush.msra.mxu0 %v3163
  %6694 = vmatpush.msra.mxu0 %v3155
  %6695 = vmatpush.msra.mxu0 %v3147
  %6696 = vmatpush.msra.mxu0 %v3139
  %6697 = vmatpush.msra.mxu0 %v3131
  %6698 = vmatpush.msra.mxu0 %v3123
  %6699 = vmatmul.f32.gmra.mxu0 %v3201
  %v6700 = vpop.f32.mrf.mxu0
  %v6701 = vadd.f32 %v6681, %v6700
  %6702 = vdwg.mxu0
  %6703 = vmatpush.msra.mxu0 %v172
  %6704 = vmatpush.msra.mxu0 %v164
  %6705 = vmatpush.msra.mxu0 %v156
  %6706 = vmatpush.msra.mxu0 %v148
  %6707 = vmatpush.msra.mxu0 %v140
  %6708 = vmatpush.msra.mxu0 %v132
  %6709 = vmatpush.msra.mxu0 %v124
  %6710 = vmatpush.msra.mxu0 %v116
  %6711 = vmatpush.msra.mxu0 %v108
  %6712 = vmatpush.msra.mxu0 %v100
  %6713 = vmatpush.msra.mxu0 %v92
  %6714 = vmatpush.msra.mxu0 %v84
  %6715 = vmatpush.msra.mxu0 %v76
  %6716 = vmatpush.msra.mxu0 %v68
  %6717 = vmatpush.msra.mxu0 %v60
  %6718 = vmatpush.msra.mxu0 %v52
  %6719 = vmatmul.f32.gmra.mxu0 %v20
  %v6720 = vpop.f32.mrf.mxu0
  %v6721 = vadd.f32 %v3190, %v6720
  %6722 = vdwg.mxu0
  %6723 = vmatpush.msra.mxu0 %v300
  %6724 = vmatpush.msra.mxu0 %v292
  %6725 = vmatpush.msra.mxu0 %v284
  %6726 = vmatpush.msra.mxu0 %v276
  %6727 = vmatpush.msra.mxu0 %v268
  %6728 = vmatpush.msra.mxu0 %v260
  %6729 = vmatpush.msra.mxu0 %v252
  %6730 = vmatpush.msra.mxu0 %v244
  %6731 = vmatpush.msra.mxu0 %v236
  %6732 = vmatpush.msra.mxu0 %v228
  %6733 = vmatpush.msra.mxu0 %v220
  %6734 = vmatpush.msra.mxu0 %v212
  %6735 = vmatpush.msra.mxu0 %v204
  %6736 = vmatpush.msra.mxu0 %v196
  %6737 = vmatpush.msra.mxu0 %v188
  %6738 = vmatpush.msra.mxu0 %v180
  %6739 = vmatmul.f32.gmra.mxu0 %v21
  %v6740 = vpop.f32.mrf.mxu0
  %v6741 = vadd.f32 %v6721, %v6740
  %6742 = vdwg.mxu0
  %6743 = vmatpush.msra.mxu0 %v428
  %6744 = vmatpush.msra.mxu0 %v420
  %6745 = vmatpush.msra.mxu0 %v412
  %6746 = vmatpush.msra.mxu0 %v404
  %6747 = vmatpush.msra.mxu0 %v396
  %6748 = vmatpush.msra.mxu0 %v388
  %6749 = vmatpush.msra.mxu0 %v380
  %6750 = vmatpush.msra.mxu0 %v372
  %6751 = vmatpush.msra.mxu0 %v364
  %6752 = vmatpush.msra.mxu0 %v356
  %6753 = vmatpush.msra.mxu0 %v348
  %6754 = vmatpush.msra.mxu0 %v340
  %6755 = vmatpush.msra.mxu0 %v332
  %6756 = vmatpush.msra.mxu0 %v324
  %6757 = vmatpush.msra.mxu0 %v316
  %6758 = vmatpush.msra.mxu0 %v308
  %6759 = vmatmul.f32.gmra.mxu0 %v22
  %v6760 = vpop.f32.mrf.mxu0
  %v6761 = vadd.f32 %v6741, %v6760
  %6762 = vdwg.mxu0
  %6763 = vmatpush.msra.mxu0 %v556
  %6764 = vmatpush.msra.mxu0 %v548
  %6765 = vmatpush.msra.mxu0 %v540
  %6766 = vmatpush.msra.mxu0 %v532
  %6767 = vmatpush.msra.mxu0 %v524
  %6768 = vmatpush.msra.mxu0 %v516
  %6769 = vmatpush.msra.mxu0 %v508
  %6770 = vmatpush.msra.mxu0 %v500
  %6771 = vmatpush.msra.mxu0 %v492
  %6772 = vmatpush.msra.mxu0 %v484
  %6773 = vmatpush.msra.mxu0 %v476
  %6774 = vmatpush.msra.mxu0 %v468
  %6775 = vmatpush.msra.mxu0 %v460
  %6776 = vmatpush.msra.mxu0 %v452
  %6777 = vmatpush.msra.mxu0 %v444
  %6778 = vmatpush.msra.mxu0 %v436
  %6779 = vmatmul.f32.gmra.mxu0 %v23
  %v6780 = vpop.f32.mrf.mxu0
  %v6781 = vadd.f32 %v6761, %v6780
  %6782 = vdwg.mxu0
  %6783 = vmatpush.msra.mxu0 %v684
  %6784 = vmatpush.msra.mxu0 %v676
  %6785 = vmatpush.msra.mxu0 %v668
  %6786 = vmatpush.msra.mxu0 %v660
  %6787 = vmatpush.msra.mxu0 %v652
  %6788 = vmatpush.msra.mxu0 %v644
  %6789 = vmatpush.msra.mxu0 %v636
  %6790 = vmatpush.msra.mxu0 %v628
  %6791 = vmatpush.msra.mxu0 %v620
  %6792 = vmatpush.msra.mxu0 %v612
  %6793 = vmatpush.msra.mxu0 %v604
  %6794 = vmatpush.msra.mxu0 %v596
  %6795 = vmatpush.msra.mxu0 %v588
  %6796 = vmatpush.msra.mxu0 %v580
  %6797 = vmatpush.msra.mxu0 %v572
  %6798 = vmatpush.msra.mxu0 %v564
  %6799 = vmatmul.f32.gmra.mxu0 %v24
  %v6800 = vpop.f32.mrf.mxu0
  %v6801 = vadd.f32 %v6781, %v6800
  %6802 = vdwg.mxu0
  %6803 = vmatpush.msra.mxu0 %v812
  %6804 = vmatpush.msra.mxu0 %v804
  %6805 = vmatpush.msra.mxu0 %v796
  %6806 = vmatpush.msra.mxu0 %v788
  %6807 = vmatpush.msra.mxu0 %v780
  %6808 = vmatpush.msra.mxu0 %v772
  %6809 = vmatpush.msra.mxu0 %v764
  %6810 = vmatpush.msra.mxu0 %v756
  %6811 = vmatpush.msra.mxu0 %v748
  %6812 = vmatpush.msra.mxu0 %v740
  %6813 = vmatpush.msra.mxu0 %v732
  %6814 = vmatpush.msra.mxu0 %v724
  %6815 = vmatpush.msra.mxu0 %v716
  %6816 = vmatpush.msra.mxu0 %v708
  %6817 = vmatpush.msra.mxu0 %v700
  %6818 = vmatpush.msra.mxu0 %v692
  %6819 = vmatmul.f32.gmra.mxu0 %v25
  %v6820 = vpop.f32.mrf.mxu0
  %v6821 = vadd.f32 %v6801, %v6820
  %6822 = vdwg.mxu0
  %6823 = vmatpush.msra.mxu0 %v940
  %6824 = vmatpush.msra.mxu0 %v932
  %6825 = vmatpush.msra.mxu0 %v924
  %6826 = vmatpush.msra.mxu0 %v916
  %6827 = vmatpush.msra.mxu0 %v908
  %6828 = vmatpush.msra.mxu0 %v900
  %6829 = vmatpush.msra.mxu0 %v892
  %6830 = vmatpush.msra.mxu0 %v884
  %6831 = vmatpush.msra.mxu0 %v876
  %6832 = vmatpush.msra.mxu0 %v868
  %6833 = vmatpush.msra.mxu0 %v860
  %6834 = vmatpush.msra.mxu0 %v852
  %6835 = vmatpush.msra.mxu0 %v844
  %6836 = vmatpush.msra.mxu0 %v836
  %6837 = vmatpush.msra.mxu0 %v828
  %6838 = vmatpush.msra.mxu0 %v820
  %6839 = vmatmul.f32.gmra.mxu0 %v26
  %v6840 = vpop.f32.mrf.mxu0
  %v6841 = vadd.f32 %v6821, %v6840
  %6842 = vdwg.mxu0
  %6843 = vmatpush.msra.mxu0 %v1068
  %6844 = vmatpush.msra.mxu0 %v1060
  %6845 = vmatpush.msra.mxu0 %v1052
  %6846 = vmatpush.msra.mxu0 %v1044
  %6847 = vmatpush.msra.mxu0 %v1036
  %6848 = vmatpush.msra.mxu0 %v1028
  %6849 = vmatpush.msra.mxu0 %v1020
  %6850 = vmatpush.msra.mxu0 %v1012
  %6851 = vmatpush.msra.mxu0 %v1004
  %6852 = vmatpush.msra.mxu0 %v996
  %6853 = vmatpush.msra.mxu0 %v988
  %6854 = vmatpush.msra.mxu0 %v980
  %6855 = vmatpush.msra.mxu0 %v972
  %6856 = vmatpush.msra.mxu0 %v964
  %6857 = vmatpush.msra.mxu0 %v956
  %6858 = vmatpush.msra.mxu0 %v948
  %6859 = vmatmul.f32.gmra.mxu0 %v27
  %v6860 = vpop.f32.mrf.mxu0
  %v6861 = vadd.f32 %v6841, %v6860
  %6862 = vdwg.mxu0
  %6863 = vmatpush.msra.mxu0 %v1196
  %6864 = vmatpush.msra.mxu0 %v1188
  %6865 = vmatpush.msra.mxu0 %v1180
  %6866 = vmatpush.msra.mxu0 %v1172
  %6867 = vmatpush.msra.mxu0 %v1164
  %6868 = vmatpush.msra.mxu0 %v1156
  %6869 = vmatpush.msra.mxu0 %v1148
  %6870 = vmatpush.msra.mxu0 %v1140
  %6871 = vmatpush.msra.mxu0 %v1132
  %6872 = vmatpush.msra.mxu0 %v1124
  %6873 = vmatpush.msra.mxu0 %v1116
  %6874 = vmatpush.msra.mxu0 %v1108
  %6875 = vmatpush.msra.mxu0 %v1100
  %6876 = vmatpush.msra.mxu0 %v1092
  %6877 = vmatpush.msra.mxu0 %v1084
  %6878 = vmatpush.msra.mxu0 %v1076
  %6879 = vmatmul.f32.gmra.mxu0 %v28
  %v6880 = vpop.f32.mrf.mxu0
  %v6881 = vadd.f32 %v6861, %v6880
  %6882 = vdwg.mxu0
  %6883 = vmatpush.msra.mxu0 %v1324
  %6884 = vmatpush.msra.mxu0 %v1316
  %6885 = vmatpush.msra.mxu0 %v1308
  %6886 = vmatpush.msra.mxu0 %v1300
  %6887 = vmatpush.msra.mxu0 %v1292
  %6888 = vmatpush.msra.mxu0 %v1284
  %6889 = vmatpush.msra.mxu0 %v1276
  %6890 = vmatpush.msra.mxu0 %v1268
  %6891 = vmatpush.msra.mxu0 %v1260
  %6892 = vmatpush.msra.mxu0 %v1252
  %6893 = vmatpush.msra.mxu0 %v1244
  %6894 = vmatpush.msra.mxu0 %v1236
  %6895 = vmatpush.msra.mxu0 %v1228
  %6896 = vmatpush.msra.mxu0 %v1220
  %6897 = vmatpush.msra.mxu0 %v1212
  %6898 = vmatpush.msra.mxu0 %v1204
  %6899 = vmatmul.f32.gmra.mxu0 %v29
  %v6900 = vpop.f32.mrf.mxu0
  %v6901 = vadd.f32 %v6881, %v6900
  %6902 = vdwg.mxu0
  %6903 = vmatpush.msra.mxu0 %v1452
  %6904 = vmatpush.msra.mxu0 %v1444
  %6905 = vmatpush.msra.mxu0 %v1436
  %6906 = vmatpush.msra.mxu0 %v1428
  %6907 = vmatpush.msra.mxu0 %v1420
  %6908 = vmatpush.msra.mxu0 %v1412
  %6909 = vmatpush.msra.mxu0 %v1404
  %6910 = vmatpush.msra.mxu0 %v1396
  %6911 = vmatpush.msra.mxu0 %v1388
  %6912 = vmatpush.msra.mxu0 %v1380
  %6913 = vmatpush.msra.mxu0 %v1372
  %6914 = vmatpush.msra.mxu0 %v1364
  %6915 = vmatpush.msra.mxu0 %v1356
  %6916 = vmatpush.msra.mxu0 %v1348
  %6917 = vmatpush.msra.mxu0 %v1340
  %6918 = vmatpush.msra.mxu0 %v1332
  %6919 = vmatmul.f32.gmra.mxu0 %v30
  %v6920 = vpop.f32.mrf.mxu0
  %v6921 = vadd.f32 %v6901, %v6920
  %6922 = vdwg.mxu0
  %6923 = vmatpush.msra.mxu0 %v1580
  %6924 = vmatpush.msra.mxu0 %v1572
  %6925 = vmatpush.msra.mxu0 %v1564
  %6926 = vmatpush.msra.mxu0 %v1556
  %6927 = vmatpush.msra.mxu0 %v1548
  %6928 = vmatpush.msra.mxu0 %v1540
  %6929 = vmatpush.msra.mxu0 %v1532
  %6930 = vmatpush.msra.mxu0 %v1524
  %6931 = vmatpush.msra.mxu0 %v1516
  %6932 = vmatpush.msra.mxu0 %v1508
  %6933 = vmatpush.msra.mxu0 %v1500
  %6934 = vmatpush.msra.mxu0 %v1492
  %6935 = vmatpush.msra.mxu0 %v1484
  %6936 = vmatpush.msra.mxu0 %v1476
  %6937 = vmatpush.msra.mxu0 %v1468
  %6938 = vmatpush.msra.mxu0 %v1460
  %6939 = vmatmul.f32.gmra.mxu0 %v31
  %v6940 = vpop.f32.mrf.mxu0
  %v6941 = vadd.f32 %v6921, %v6940
  %6942 = vdwg.mxu0
  %6943 = vmatpush.msra.mxu0 %v1708
  %6944 = vmatpush.msra.mxu0 %v1700
  %6945 = vmatpush.msra.mxu0 %v1692
  %6946 = vmatpush.msra.mxu0 %v1684
  %6947 = vmatpush.msra.mxu0 %v1676
  %6948 = vmatpush.msra.mxu0 %v1668
  %6949 = vmatpush.msra.mxu0 %v1660
  %6950 = vmatpush.msra.mxu0 %v1652
  %6951 = vmatpush.msra.mxu0 %v1644
  %6952 = vmatpush.msra.mxu0 %v1636
  %6953 = vmatpush.msra.mxu0 %v1628
  %6954 = vmatpush.msra.mxu0 %v1620
  %6955 = vmatpush.msra.mxu0 %v1612
  %6956 = vmatpush.msra.mxu0 %v1604
  %6957 = vmatpush.msra.mxu0 %v1596
  %6958 = vmatpush.msra.mxu0 %v1588
  %6959 = vmatmul.f32.gmra.mxu0 %v32
  %v6960 = vpop.f32.mrf.mxu0
  %v6961 = vadd.f32 %v6941, %v6960
  %6962 = vdwg.mxu0
  %6963 = vmatpush.msra.mxu0 %v1836
  %6964 = vmatpush.msra.mxu0 %v1828
  %6965 = vmatpush.msra.mxu0 %v1820
  %6966 = vmatpush.msra.mxu0 %v1812
  %6967 = vmatpush.msra.mxu0 %v1804
  %6968 = vmatpush.msra.mxu0 %v1796
  %6969 = vmatpush.msra.mxu0 %v1788
  %6970 = vmatpush.msra.mxu0 %v1780
  %6971 = vmatpush.msra.mxu0 %v1772
  %6972 = vmatpush.msra.mxu0 %v1764
  %6973 = vmatpush.msra.mxu0 %v1756
  %6974 = vmatpush.msra.mxu0 %v1748
  %6975 = vmatpush.msra.mxu0 %v1740
  %6976 = vmatpush.msra.mxu0 %v1732
  %6977 = vmatpush.msra.mxu0 %v1724
  %6978 = vmatpush.msra.mxu0 %v1716
  %6979 = vmatmul.f32.gmra.mxu0 %v33
  %v6980 = vpop.f32.mrf.mxu0
  %v6981 = vadd.f32 %v6961, %v6980
  %6982 = vdwg.mxu0
  %6983 = vmatpush.msra.mxu0 %v1964
  %6984 = vmatpush.msra.mxu0 %v1956
  %6985 = vmatpush.msra.mxu0 %v1948
  %6986 = vmatpush.msra.mxu0 %v1940
  %6987 = vmatpush.msra.mxu0 %v1932
  %6988 = vmatpush.msra.mxu0 %v1924
  %6989 = vmatpush.msra.mxu0 %v1916
  %6990 = vmatpush.msra.mxu0 %v1908
  %6991 = vmatpush.msra.mxu0 %v1900
  %6992 = vmatpush.msra.mxu0 %v1892
  %6993 = vmatpush.msra.mxu0 %v1884
  %6994 = vmatpush.msra.mxu0 %v1876
  %6995 = vmatpush.msra.mxu0 %v1868
  %6996 = vmatpush.msra.mxu0 %v1860
  %6997 = vmatpush.msra.mxu0 %v1852
  %6998 = vmatpush.msra.mxu0 %v1844
  %6999 = vmatmul.f32.gmra.mxu0 %v34
  %v7000 = vpop.f32.mrf.mxu0
  %v7001 = vadd.f32 %v6981, %v7000
  %7002 = vdwg.mxu0
  %7003 = vmatpush.msra.mxu0 %v2092
  %7004 = vmatpush.msra.mxu0 %v2084
  %7005 = vmatpush.msra.mxu0 %v2076
  %7006 = vmatpush.msra.mxu0 %v2068
  %7007 = vmatpush.msra.mxu0 %v2060
  %7008 = vmatpush.msra.mxu0 %v2052
  %7009 = vmatpush.msra.mxu0 %v2044
  %7010 = vmatpush.msra.mxu0 %v2036
  %7011 = vmatpush.msra.mxu0 %v2028
  %7012 = vmatpush.msra.mxu0 %v2020
  %7013 = vmatpush.msra.mxu0 %v2012
  %7014 = vmatpush.msra.mxu0 %v2004
  %7015 = vmatpush.msra.mxu0 %v1996
  %7016 = vmatpush.msra.mxu0 %v1988
  %7017 = vmatpush.msra.mxu0 %v1980
  %7018 = vmatpush.msra.mxu0 %v1972
  %7019 = vmatmul.f32.gmra.mxu0 %v35
  %v7020 = vpop.f32.mrf.mxu0
  %v7021 = vadd.f32 %v7001, %v7020
  %7022 = vdwg.mxu0
  %7023 = vmatpush.msra.mxu0 %v2220
  %7024 = vmatpush.msra.mxu0 %v2212
  %7025 = vmatpush.msra.mxu0 %v2204
  %7026 = vmatpush.msra.mxu0 %v2196
  %7027 = vmatpush.msra.mxu0 %v2188
  %7028 = vmatpush.msra.mxu0 %v2180
  %7029 = vmatpush.msra.mxu0 %v2172
  %7030 = vmatpush.msra.mxu0 %v2164
  %7031 = vmatpush.msra.mxu0 %v2156
  %7032 = vmatpush.msra.mxu0 %v2148
  %7033 = vmatpush.msra.mxu0 %v2140
  %7034 = vmatpush.msra.mxu0 %v2132
  %7035 = vmatpush.msra.mxu0 %v2124
  %7036 = vmatpush.msra.mxu0 %v2116
  %7037 = vmatpush.msra.mxu0 %v2108
  %7038 = vmatpush.msra.mxu0 %v2100
  %7039 = vmatmul.f32.gmra.mxu0 %v36
  %v7040 = vpop.f32.mrf.mxu0
  %v7041 = vadd.f32 %v7021, %v7040
  %7042 = vdwg.mxu0
  %7043 = vmatpush.msra.mxu0 %v2348
  %7044 = vmatpush.msra.mxu0 %v2340
  %7045 = vmatpush.msra.mxu0 %v2332
  %7046 = vmatpush.msra.mxu0 %v2324
  %7047 = vmatpush.msra.mxu0 %v2316
  %7048 = vmatpush.msra.mxu0 %v2308
  %7049 = vmatpush.msra.mxu0 %v2300
  %7050 = vmatpush.msra.mxu0 %v2292
  %7051 = vmatpush.msra.mxu0 %v2284
  %7052 = vmatpush.msra.mxu0 %v2276
  %7053 = vmatpush.msra.mxu0 %v2268
  %7054 = vmatpush.msra.mxu0 %v2260
  %7055 = vmatpush.msra.mxu0 %v2252
  %7056 = vmatpush.msra.mxu0 %v2244
  %7057 = vmatpush.msra.mxu0 %v2236
  %7058 = vmatpush.msra.mxu0 %v2228
  %7059 = vmatmul.f32.gmra.mxu0 %v37
  %v7060 = vpop.f32.mrf.mxu0
  %v7061 = vadd.f32 %v7041, %v7060
  %7062 = vdwg.mxu0
  %7063 = vmatpush.msra.mxu0 %v2476
  %7064 = vmatpush.msra.mxu0 %v2468
  %7065 = vmatpush.msra.mxu0 %v2460
  %7066 = vmatpush.msra.mxu0 %v2452
  %7067 = vmatpush.msra.mxu0 %v2444
  %7068 = vmatpush.msra.mxu0 %v2436
  %7069 = vmatpush.msra.mxu0 %v2428
  %7070 = vmatpush.msra.mxu0 %v2420
  %7071 = vmatpush.msra.mxu0 %v2412
  %7072 = vmatpush.msra.mxu0 %v2404
  %7073 = vmatpush.msra.mxu0 %v2396
  %7074 = vmatpush.msra.mxu0 %v2388
  %7075 = vmatpush.msra.mxu0 %v2380
  %7076 = vmatpush.msra.mxu0 %v2372
  %7077 = vmatpush.msra.mxu0 %v2364
  %7078 = vmatpush.msra.mxu0 %v2356
  %7079 = vmatmul.f32.gmra.mxu0 %v38
  %v7080 = vpop.f32.mrf.mxu0
  %v7081 = vadd.f32 %v7061, %v7080
  %7082 = vdwg.mxu0
  %7083 = vmatpush.msra.mxu0 %v2604
  %7084 = vmatpush.msra.mxu0 %v2596
  %7085 = vmatpush.msra.mxu0 %v2588
  %7086 = vmatpush.msra.mxu0 %v2580
  %7087 = vmatpush.msra.mxu0 %v2572
  %7088 = vmatpush.msra.mxu0 %v2564
  %7089 = vmatpush.msra.mxu0 %v2556
  %7090 = vmatpush.msra.mxu0 %v2548
  %7091 = vmatpush.msra.mxu0 %v2540
  %7092 = vmatpush.msra.mxu0 %v2532
  %7093 = vmatpush.msra.mxu0 %v2524
  %7094 = vmatpush.msra.mxu0 %v2516
  %7095 = vmatpush.msra.mxu0 %v2508
  %7096 = vmatpush.msra.mxu0 %v2500
  %7097 = vmatpush.msra.mxu0 %v2492
  %7098 = vmatpush.msra.mxu0 %v2484
  %7099 = vmatmul.f32.gmra.mxu0 %v39
  %v7100 = vpop.f32.mrf.mxu0
  %v7101 = vadd.f32 %v7081, %v7100
  %7102 = vdwg.mxu0
  %7103 = vmatpush.msra.mxu0 %v2732
  %7104 = vmatpush.msra.mxu0 %v2724
  %7105 = vmatpush.msra.mxu0 %v2716
  %7106 = vmatpush.msra.mxu0 %v2708
  %7107 = vmatpush.msra.mxu0 %v2700
  %7108 = vmatpush.msra.mxu0 %v2692
  %7109 = vmatpush.msra.mxu0 %v2684
  %7110 = vmatpush.msra.mxu0 %v2676
  %7111 = vmatpush.msra.mxu0 %v2668
  %7112 = vmatpush.msra.mxu0 %v2660
  %7113 = vmatpush.msra.mxu0 %v2652
  %7114 = vmatpush.msra.mxu0 %v2644
  %7115 = vmatpush.msra.mxu0 %v2636
  %7116 = vmatpush.msra.mxu0 %v2628
  %7117 = vmatpush.msra.mxu0 %v2620
  %7118 = vmatpush.msra.mxu0 %v2612
  %7119 = vmatmul.f32.gmra.mxu0 %v40
  %v7120 = vpop.f32.mrf.mxu0
  %v7121 = vadd.f32 %v7101, %v7120
  %7122 = vdwg.mxu0
  %7123 = vmatpush.msra.mxu0 %v2860
  %7124 = vmatpush.msra.mxu0 %v2852
  %7125 = vmatpush.msra.mxu0 %v2844
  %7126 = vmatpush.msra.mxu0 %v2836
  %7127 = vmatpush.msra.mxu0 %v2828
  %7128 = vmatpush.msra.mxu0 %v2820
  %7129 = vmatpush.msra.mxu0 %v2812
  %7130 = vmatpush.msra.mxu0 %v2804
  %7131 = vmatpush.msra.mxu0 %v2796
  %7132 = vmatpush.msra.mxu0 %v2788
  %7133 = vmatpush.msra.mxu0 %v2780
  %7134 = vmatpush.msra.mxu0 %v2772
  %7135 = vmatpush.msra.mxu0 %v2764
  %7136 = vmatpush.msra.mxu0 %v2756
  %7137 = vmatpush.msra.mxu0 %v2748
  %7138 = vmatpush.msra.mxu0 %v2740
  %7139 = vmatmul.f32.gmra.mxu0 %v41
  %v7140 = vpop.f32.mrf.mxu0
  %v7141 = vadd.f32 %v7121, %v7140
  %7142 = vdwg.mxu0
  %7143 = vmatpush.msra.mxu0 %v2988
  %7144 = vmatpush.msra.mxu0 %v2980
  %7145 = vmatpush.msra.mxu0 %v2972
  %7146 = vmatpush.msra.mxu0 %v2964
  %7147 = vmatpush.msra.mxu0 %v2956
  %7148 = vmatpush.msra.mxu0 %v2948
  %7149 = vmatpush.msra.mxu0 %v2940
  %7150 = vmatpush.msra.mxu0 %v2932
  %7151 = vmatpush.msra.mxu0 %v2924
  %7152 = vmatpush.msra.mxu0 %v2916
  %7153 = vmatpush.msra.mxu0 %v2908
  %7154 = vmatpush.msra.mxu0 %v2900
  %7155 = vmatpush.msra.mxu0 %v2892
  %7156 = vmatpush.msra.mxu0 %v2884
  %7157 = vmatpush.msra.mxu0 %v2876
  %7158 = vmatpush.msra.mxu0 %v2868
  %7159 = vmatmul.f32.gmra.mxu0 %v42
  %v7160 = vpop.f32.mrf.mxu0
  %v7161 = vadd.f32 %v7141, %v7160
  %7162 = vdwg.mxu0
  %7163 = vmatpush.msra.mxu0 %v3116
  %7164 = vmatpush.msra.mxu0 %v3108
  %7165 = vmatpush.msra.mxu0 %v3100
  %7166 = vmatpush.msra.mxu0 %v3092
  %7167 = vmatpush.msra.mxu0 %v3084
  %7168 = vmatpush.msra.mxu0 %v3076
  %7169 = vmatpush.msra.mxu0 %v3068
  %7170 = vmatpush.msra.mxu0 %v3060
  %7171 = vmatpush.msra.mxu0 %v3052
  %7172 = vmatpush.msra.mxu0 %v3044
  %7173 = vmatpush.msra.mxu0 %v3036
  %7174 = vmatpush.msra.mxu0 %v3028
  %7175 = vmatpush.msra.mxu0 %v3020
  %7176 = vmatpush.msra.mxu0 %v3012
  %7177 = vmatpush.msra.mxu0 %v3004
  %7178 = vmatpush.msra.mxu0 %v2996
  %7179 = vmatmul.f32.gmra.mxu0 %v43
  %v7180 = vpop.f32.mrf.mxu0
  %v7181 = vadd.f32 %v7161, %v7180
  %7182 = vdwg.mxu0
  %7183 = vmatpush.msra.mxu0 0.0
  %7184 = vmatpush.msra.mxu0 0.0
  %7185 = vmatpush.msra.mxu0 0.0
  %7186 = vmatpush.msra.mxu0 0.0
  %7187 = vmatpush.msra.mxu0 0.0
  %7188 = vmatpush.msra.mxu0 0.0
  %7189 = vmatpush.msra.mxu0 0.0
  %7190 = vmatpush.msra.mxu0 0.0
  %7191 = vmatpush.msra.mxu0 %v3180
  %7192 = vmatpush.msra.mxu0 %v3172
  %7193 = vmatpush.msra.mxu0 %v3164
  %7194 = vmatpush.msra.mxu0 %v3156
  %7195 = vmatpush.msra.mxu0 %v3148
  %7196 = vmatpush.msra.mxu0 %v3140
  %7197 = vmatpush.msra.mxu0 %v3132
  %7198 = vmatpush.msra.mxu0 %v3124
  %7199 = vmatmul.f32.gmra.mxu0 %v3201
  %v7200 = vpop.f32.mrf.mxu0
  %v7201 = vadd.f32 %v7181, %v7200
  %7202 = vdwg.mxu0
  %vm7203 = vcmp.gt.f32.partialorder %v3701, 0.0
  %vm7204 = vcmp.gt.f32.partialorder %v4201, 0.0
  %vm7205 = vcmp.gt.f32.partialorder %v4701, 0.0
  %vm7206 = vcmp.gt.f32.partialorder %v5201, 0.0
  %vm7207 = vcmp.gt.f32.partialorder %v5701, 0.0
  %vm7208 = vcmp.gt.f32.partialorder %v6201, 0.0
  %vm7209 = vcmp.gt.f32.partialorder %v6701, 0.0
  %vm7210 = vcmp.gt.f32.partialorder %v7201, 0.0
  %v7211 = vmul.f32 %v3701, 0.01
  %v7212 = vmul.f32 %v4201, 0.01
  %v7213 = vmul.f32 %v4701, 0.01
  %v7214 = vmul.f32 %v5201, 0.01
  %v7215 = vmul.f32 %v5701, 0.01
  %v7216 = vmul.f32 %v6201, 0.01
  %v7217 = vmul.f32 %v6701, 0.01
  %v7218 = vmul.f32 %v7201, 0.01
  %v7219 = vsel %vm7203, %v3701, %v7211
  %v7220 = vsel %vm7204, %v4201, %v7212
  %v7221 = vsel %vm7205, %v4701, %v7213
  %v7222 = vsel %vm7206, %v5201, %v7214
  %v7223 = vsel %vm7207, %v5701, %v7215
  %v7224 = vsel %vm7208, %v6201, %v7216
  %v7225 = vsel %vm7209, %v6701, %v7217
  %v7226 = vsel %vm7210, %v7201, %v7218
  %v7227 = vld [vmem:[%s3] sm:$0xff]
  %v7228 = vld [vmem:[%s3 + $0x8] sm:$0xff]
  %v7229 = vld [vmem:[%s3 + $0x10] sm:$0xff]
  %v7230 = vld [vmem:[%s3 + $0x18] sm:$0xff]
  %v7231 = vld [vmem:[%s3 + $0x20] sm:$0xff]
  %v7232 = vld [vmem:[%s3 + $0x28] sm:$0xff]
  %v7233 = vld [vmem:[%s3 + $0x30] sm:$0xff]
  %v7234 = vld [vmem:[%s3 + $0x38] sm:$0xff]
  %v7235 = vld [vmem:[%s3 + $0x40] sm:$0xff]
  %v7236 = vld [vmem:[%s3 + $0x48] sm:$0xff]
  %v7237 = vld [vmem:[%s3 + $0x50] sm:$0xff]
  %v7238 = vld [vmem:[%s3 + $0x58] sm:$0xff]
  %v7239 = vld [vmem:[%s3 + $0x60] sm:$0xff]
  %v7240 = vld [vmem:[%s3 + $0x68] sm:$0xff]
  %v7241 = vld [vmem:[%s3 + $0x70] sm:$0xff]
  %v7242 = vld [vmem:[%s3 + $0x78] sm:$0xff]
  %v7243 = vld [vmem:[%s3 + $0x80] sm:$0xff]
  %v7244 = vld [vmem:[%s3 + $0x88] sm:$0xff]
  %v7245 = vld [vmem:[%s3 + $0x90] sm:$0xff]
  %v7246 = vld [vmem:[%s3 + $0x98] sm:$0xff]
  %v7247 = vld [vmem:[%s3 + $0xa0] sm:$0xff]
  %v7248 = vld [vmem:[%s3 + $0xa8] sm:$0xff]
  %v7249 = vld [vmem:[%s3 + $0xb0] sm:$0xff]
  %v7250 = vld [vmem:[%s3 + $0xb8] sm:$0xff]
  %v7251 = vld [vmem:[%s3 + $0xc0] sm:$0xff]
  %v7252 = vld [vmem:[%s3 + $0xc8] sm:$0xff]
  %v7253 = vld [vmem:[%s3 + $0xd0] sm:$0xff]
  %v7254 = vld [vmem:[%s3 + $0xd8] sm:$0xff]
  %v7255 = vld [vmem:[%s3 + $0xe0] sm:$0xff]
  %v7256 = vld [vmem:[%s3 + $0xe8] sm:$0xff]
  %v7257 = vld [vmem:[%s3 + $0xf0] sm:$0xff]
  %v7258 = vld [vmem:[%s3 + $0xf8] sm:$0xff]
  %v7259 = vld [vmem:[%s3 + $0x100] sm:$0xff]
  %v7260 = vld [vmem:[%s3 + $0x108] sm:$0xff]
  %v7261 = vld [vmem:[%s3 + $0x110] sm:$0xff]
  %v7262 = vld [vmem:[%s3 + $0x118] sm:$0xff]
  %v7263 = vld [vmem:[%s3 + $0x120] sm:$0xff]
  %v7264 = vld [vmem:[%s3 + $0x128] sm:$0xff]
  %v7265 = vld [vmem:[%s3 + $0x130] sm:$0xff]
  %v7266 = vld [vmem:[%s3 + $0x138] sm:$0xff]
  %v7267 = vld [vmem:[%s3 + $0x140] sm:$0xff]
  %v7268 = vld [vmem:[%s3 + $0x148] sm:$0xff]
  %v7269 = vld [vmem:[%s3 + $0x150] sm:$0xff]
  %v7270 = vld [vmem:[%s3 + $0x158] sm:$0xff]
  %v7271 = vld [vmem:[%s3 + $0x160] sm:$0xff]
  %v7272 = vld [vmem:[%s3 + $0x168] sm:$0xff]
  %v7273 = vld [vmem:[%s3 + $0x170] sm:$0xff]
  %v7274 = vld [vmem:[%s3 + $0x178] sm:$0xff]
  %v7275 = vld [vmem:[%s3 + $0x180] sm:$0xff]
  %v7276 = vld [vmem:[%s3 + $0x188] sm:$0xff]
  %v7277 = vld [vmem:[%s3 + $0x190] sm:$0xff]
  %v7278 = vld [vmem:[%s3 + $0x198] sm:$0xff]
  %v7279 = vld [vmem:[%s3 + $0x1a0] sm:$0xff]
  %v7280 = vld [vmem:[%s3 + $0x1a8] sm:$0xff]
  %v7281 = vld [vmem:[%s3 + $0x1b0] sm:$0xff]
  %v7282 = vld [vmem:[%s3 + $0x1b8] sm:$0xff]
  %v7283 = vld [vmem:[%s3 + $0x1c0] sm:$0xff]
  %v7284 = vld [vmem:[%s3 + $0x1c8] sm:$0xff]
  %v7285 = vld [vmem:[%s3 + $0x1d0] sm:$0xff]
  %v7286 = vld [vmem:[%s3 + $0x1d8] sm:$0xff]
  %v7287 = vld [vmem:[%s3 + $0x1e0] sm:$0xff]
  %v7288 = vld [vmem:[%s3 + $0x1e8] sm:$0xff]
  %v7289 = vld [vmem:[%s3 + $0x1f0] sm:$0xff]
  %v7290 = vld [vmem:[%s3 + $0x1f8] sm:$0xff]
  %v7291 = vld [vmem:[%s3 + $0x200] sm:$0xff]
  %v7292 = vld [vmem:[%s3 + $0x208] sm:$0xff]
  %v7293 = vld [vmem:[%s3 + $0x210] sm:$0xff]
  %v7294 = vld [vmem:[%s3 + $0x218] sm:$0xff]
  %v7295 = vld [vmem:[%s3 + $0x220] sm:$0xff]
  %v7296 = vld [vmem:[%s3 + $0x228] sm:$0xff]
  %v7297 = vld [vmem:[%s3 + $0x230] sm:$0xff]
  %v7298 = vld [vmem:[%s3 + $0x238] sm:$0xff]
  %v7299 = vld [vmem:[%s3 + $0x240] sm:$0xff]
  %v7300 = vld [vmem:[%s3 + $0x248] sm:$0xff]
  %v7301 = vld [vmem:[%s3 + $0x250] sm:$0xff]
  %v7302 = vld [vmem:[%s3 + $0x258] sm:$0xff]
  %v7303 = vld [vmem:[%s3 + $0x260] sm:$0xff]
  %v7304 = vld [vmem:[%s3 + $0x268] sm:$0xff]
  %v7305 = vld [vmem:[%s3 + $0x270] sm:$0xff]
  %v7306 = vld [vmem:[%s3 + $0x278] sm:$0xff]
  %v7307 = vld [vmem:[%s3 + $0x280] sm:$0xff]
  %v7308 = vld [vmem:[%s3 + $0x288] sm:$0xff]
  %v7309 = vld [vmem:[%s3 + $0x290] sm:$0xff]
  %v7310 = vld [vmem:[%s3 + $0x298] sm:$0xff]
  %v7311 = vld [vmem:[%s3 + $0x2a0] sm:$0xff]
  %v7312 = vld [vmem:[%s3 + $0x2a8] sm:$0xff]
  %v7313 = vld [vmem:[%s3 + $0x2b0] sm:$0xff]
  %v7314 = vld [vmem:[%s3 + $0x2b8] sm:$0xff]
  %v7315 = vld [vmem:[%s3 + $0x2c0] sm:$0xff]
  %v7316 = vld [vmem:[%s3 + $0x2c8] sm:$0xff]
  %v7317 = vld [vmem:[%s3 + $0x2d0] sm:$0xff]
  %v7318 = vld [vmem:[%s3 + $0x2d8] sm:$0xff]
  %v7319 = vld [vmem:[%s3 + $0x2e0] sm:$0xff]
  %v7320 = vld [vmem:[%s3 + $0x2e8] sm:$0xff]
  %v7321 = vld [vmem:[%s3 + $0x2f0] sm:$0xff]
  %v7322 = vld [vmem:[%s3 + $0x2f8] sm:$0xff]
  %v7323 = vld [vmem:[%s3 + $0x300] sm:$0xff]
  %v7324 = vld [vmem:[%s3 + $0x308] sm:$0xff]
  %v7325 = vld [vmem:[%s3 + $0x310] sm:$0xff]
  %v7326 = vld [vmem:[%s3 + $0x318] sm:$0xff]
  %v7327 = vld [vmem:[%s3 + $0x320] sm:$0xff]
  %v7328 = vld [vmem:[%s3 + $0x328] sm:$0xff]
  %v7329 = vld [vmem:[%s3 + $0x330] sm:$0xff]
  %v7330 = vld [vmem:[%s3 + $0x338] sm:$0xff]
  %v7331 = vld [vmem:[%s3 + $0x340] sm:$0xff]
  %v7332 = vld [vmem:[%s3 + $0x348] sm:$0xff]
  %v7333 = vld [vmem:[%s3 + $0x350] sm:$0xff]
  %v7334 = vld [vmem:[%s3 + $0x358] sm:$0xff]
  %v7335 = vld [vmem:[%s3 + $0x360] sm:$0xff]
  %v7336 = vld [vmem:[%s3 + $0x368] sm:$0xff]
  %v7337 = vld [vmem:[%s3 + $0x370] sm:$0xff]
  %v7338 = vld [vmem:[%s3 + $0x378] sm:$0xff]
  %v7339 = vld [vmem:[%s3 + $0x380] sm:$0xff]
  %v7340 = vld [vmem:[%s3 + $0x388] sm:$0xff]
  %v7341 = vld [vmem:[%s3 + $0x390] sm:$0xff]
  %v7342 = vld [vmem:[%s3 + $0x398] sm:$0xff]
  %v7343 = vld [vmem:[%s3 + $0x3a0] sm:$0xff]
  %v7344 = vld [vmem:[%s3 + $0x3a8] sm:$0xff]
  %v7345 = vld [vmem:[%s3 + $0x3b0] sm:$0xff]
  %v7346 = vld [vmem:[%s3 + $0x3b8] sm:$0xff]
  %v7347 = vld [vmem:[%s3 + $0x3c0] sm:$0xff]
  %v7348 = vld [vmem:[%s3 + $0x3c8] sm:$0xff]
  %v7349 = vld [vmem:[%s3 + $0x3d0] sm:$0xff]
  %v7350 = vld [vmem:[%s3 + $0x3d8] sm:$0xff]
  %v7351 = vld [vmem:[%s3 + $0x3e0] sm:$0xff]
  %v7352 = vld [vmem:[%s3 + $0x3e8] sm:$0xff]
  %v7353 = vld [vmem:[%s3 + $0x3f0] sm:$0xff]
  %v7354 = vld [vmem:[%s3 + $0x3f8] sm:$0xff]
  %v7355 = vld [vmem:[%s4] sm:$0x1]
  %v7357 = vperm.slane %v7355, 0
  %7359 = vmatpush.msra.mxu0 %v7242
  %7360 = vmatpush.msra.mxu0 %v7241
  %7361 = vmatpush.msra.mxu0 %v7240
  %7362 = vmatpush.msra.mxu0 %v7239
  %7363 = vmatpush.msra.mxu0 %v7238
  %7364 = vmatpush.msra.mxu0 %v7237
  %7365 = vmatpush.msra.mxu0 %v7236
  %7366 = vmatpush.msra.mxu0 %v7235
  %7367 = vmatpush.msra.mxu0 %v7234
  %7368 = vmatpush.msra.mxu0 %v7233
  %7369 = vmatpush.msra.mxu0 %v7232
  %7370 = vmatpush.msra.mxu0 %v7231
  %7371 = vmatpush.msra.mxu0 %v7230
  %7372 = vmatpush.msra.mxu0 %v7229
  %7373 = vmatpush.msra.mxu0 %v7228
  %7374 = vmatpush.msra.mxu0 %v7227
  %7375 = vmatmul.f32.gmra.mxu0 %v7219
  %v7376 = vpop.f32.mrf.mxu0
  %v7377 = vadd.f32 %v7357, %v7376
  %7378 = vdwg.mxu0
  %7379 = vmatpush.msra.mxu0 %v7258
  %7380 = vmatpush.msra.mxu0 %v7257
  %7381 = vmatpush.msra.mxu0 %v7256
  %7382 = vmatpush.msra.mxu0 %v7255
  %7383 = vmatpush.msra.mxu0 %v7254
  %7384 = vmatpush.msra.mxu0 %v7253
  %7385 = vmatpush.msra.mxu0 %v7252
  %7386 = vmatpush.msra.mxu0 %v7251
  %7387 = vmatpush.msra.mxu0 %v7250
  %7388 = vmatpush.msra.mxu0 %v7249
  %7389 = vmatpush.msra.mxu0 %v7248
  %7390 = vmatpush.msra.mxu0 %v7247
  %7391 = vmatpush.msra.mxu0 %v7246
  %7392 = vmatpush.msra.mxu0 %v7245
  %7393 = vmatpush.msra.mxu0 %v7244
  %7394 = vmatpush.msra.mxu0 %v7243
  %7395 = vmatmul.f32.gmra.mxu0 %v7220
  %v7396 = vpop.f32.mrf.mxu0
  %v7397 = vadd.f32 %v7377, %v7396
  %7398 = vdwg.mxu0
  %7399 = vmatpush.msra.mxu0 %v7274
  %7400 = vmatpush.msra.mxu0 %v7273
  %7401 = vmatpush.msra.mxu0 %v7272
  %7402 = vmatpush.msra.mxu0 %v7271
  %7403 = vmatpush.msra.mxu0 %v7270
  %7404 = vmatpush.msra.mxu0 %v7269
  %7405 = vmatpush.msra.mxu0 %v7268
  %7406 = vmatpush.msra.mxu0 %v7267
  %7407 = vmatpush.msra.mxu0 %v7266
  %7408 = vmatpush.msra.mxu0 %v7265
  %7409 = vmatpush.msra.mxu0 %v7264
  %7410 = vmatpush.msra.mxu0 %v7263
  %7411 = vmatpush.msra.mxu0 %v7262
  %7412 = vmatpush.msra.mxu0 %v7261
  %7413 = vmatpush.msra.mxu0 %v7260
  %7414 = vmatpush.msra.mxu0 %v7259
  %7415 = vmatmul.f32.gmra.mxu0 %v7221
  %v7416 = vpop.f32.mrf.mxu0
  %v7417 = vadd.f32 %v7397, %v7416
  %7418 = vdwg.mxu0
  %7419 = vmatpush.msra.mxu0 %v7290
  %7420 = vmatpush.msra.mxu0 %v7289
  %7421 = vmatpush.msra.mxu0 %v7288
  %7422 = vmatpush.msra.mxu0 %v7287
  %7423 = vmatpush.msra.mxu0 %v7286
  %7424 = vmatpush.msra.mxu0 %v7285
  %7425 = vmatpush.msra.mxu0 %v7284
  %7426 = vmatpush.msra.mxu0 %v7283
  %7427 = vmatpush.msra.mxu0 %v7282
  %7428 = vmatpush.msra.mxu0 %v7281
  %7429 = vmatpush.msra.mxu0 %v7280
  %7430 = vmatpush.msra.mxu0 %v7279
  %7431 = vmatpush.msra.mxu0 %v7278
  %7432 = vmatpush.msra.mxu0 %v7277
  %7433 = vmatpush.msra.mxu0 %v7276
  %7434 = vmatpush.msra.mxu0 %v7275
  %7435 = vmatmul.f32.gmra.mxu0 %v7222
  %v7436 = vpop.f32.mrf.mxu0
  %v7437 = vadd.f32 %v7417, %v7436
  %7438 = vdwg.mxu0
  %7439 = vmatpush.msra.mxu0 %v7306
  %7440 = vmatpush.msra.mxu0 %v7305
  %7441 = vmatpush.msra.mxu0 %v7304
  %7442 = vmatpush.msra.mxu0 %v7303
  %7443 = vmatpush.msra.mxu0 %v7302
  %7444 = vmatpush.msra.mxu0 %v7301
  %7445 = vmatpush.msra.mxu0 %v7300
  %7446 = vmatpush.msra.mxu0 %v7299
  %7447 = vmatpush.msra.mxu0 %v7298
  %7448 = vmatpush.msra.mxu0 %v7297
  %7449 = vmatpush.msra.mxu0 %v7296
  %7450 = vmatpush.msra.mxu0 %v7295
  %7451 = vmatpush.msra.mxu0 %v7294
  %7452 = vmatpush.msra.mxu0 %v7293
  %7453 = vmatpush.msra.mxu0 %v7292
  %7454 = vmatpush.msra.mxu0 %v7291
  %7455 = vmatmul.f32.gmra.mxu0 %v7223
  %v7456 = vpop.f32.mrf.mxu0
  %v7457 = vadd.f32 %v7437, %v7456
  %7458 = vdwg.mxu0
  %7459 = vmatpush.msra.mxu0 %v7322
  %7460 = vmatpush.msra.mxu0 %v7321
  %7461 = vmatpush.msra.mxu0 %v7320
  %7462 = vmatpush.msra.mxu0 %v7319
  %7463 = vmatpush.msra.mxu0 %v7318
  %7464 = vmatpush.msra.mxu0 %v7317
  %7465 = vmatpush.msra.mxu0 %v7316
  %7466 = vmatpush.msra.mxu0 %v7315
  %7467 = vmatpush.msra.mxu0 %v7314
  %7468 = vmatpush.msra.mxu0 %v7313
  %7469 = vmatpush.msra.mxu0 %v7312
  %7470 = vmatpush.msra.mxu0 %v7311
  %7471 = vmatpush.msra.mxu0 %v7310
  %7472 = vmatpush.msra.mxu0 %v7309
  %7473 = vmatpush.msra.mxu0 %v7308
  %7474 = vmatpush.msra.mxu0 %v7307
  %7475 = vmatmul.f32.gmra.mxu0 %v7224
  %v7476 = vpop.f32.mrf.mxu0
  %v7477 = vadd.f32 %v7457, %v7476
  %7478 = vdwg.mxu0
  %7479 = vmatpush.msra.mxu0 %v7338
  %7480 = vmatpush.msra.mxu0 %v7337
  %7481 = vmatpush.msra.mxu0 %v7336
  %7482 = vmatpush.msra.mxu0 %v7335
  %7483 = vmatpush.msra.mxu0 %v7334
  %7484 = vmatpush.msra.mxu0 %v7333
  %7485 = vmatpush.msra.mxu0 %v7332
  %7486 = vmatpush.msra.mxu0 %v7331
  %7487 = vmatpush.msra.mxu0 %v7330
  %7488 = vmatpush.msra.mxu0 %v7329
  %7489 = vmatpush.msra.mxu0 %v7328
  %7490 = vmatpush.msra.mxu0 %v7327
  %7491 = vmatpush.msra.mxu0 %v7326
  %7492 = vmatpush.msra.mxu0 %v7325
  %7493 = vmatpush.msra.mxu0 %v7324
  %7494 = vmatpush.msra.mxu0 %v7323
  %7495 = vmatmul.f32.gmra.mxu0 %v7225
  %v7496 = vpop.f32.mrf.mxu0
  %v7497 = vadd.f32 %v7477, %v7496
  %7498 = vdwg.mxu0
  %7499 = vmatpush.msra.mxu0 %v7354
  %7500 = vmatpush.msra.mxu0 %v7353
  %7501 = vmatpush.msra.mxu0 %v7352
  %7502 = vmatpush.msra.mxu0 %v7351
  %7503 = vmatpush.msra.mxu0 %v7350
  %7504 = vmatpush.msra.mxu0 %v7349
  %7505 = vmatpush.msra.mxu0 %v7348
  %7506 = vmatpush.msra.mxu0 %v7347
  %7507 = vmatpush.msra.mxu0 %v7346
  %7508 = vmatpush.msra.mxu0 %v7345
  %7509 = vmatpush.msra.mxu0 %v7344
  %7510 = vmatpush.msra.mxu0 %v7343
  %7511 = vmatpush.msra.mxu0 %v7342
  %7512 = vmatpush.msra.mxu0 %v7341
  %7513 = vmatpush.msra.mxu0 %v7340
  %7514 = vmatpush.msra.mxu0 %v7339
  %7515 = vmatmul.f32.gmra.mxu0 %v7226
  %v7516 = vpop.f32.mrf.mxu0
  %v7517 = vadd.f32 %v7497, %v7516
  %7518 = vdwg.mxu0
  %7520 = vset.pattern.permute.xlu0 6
  %7521 = vperm.xlu0 %7520, %v7517
  %v7522 = vpop.permute.xlu0 %7521
  %v7524 = vadd.f32 %v7522, %v7517
  %7525 = vset.pattern.permute.xlu0 7
  %7526 = vperm.xlu0 %7525, %v7517
  %v7527 = vpop.permute.xlu0 %7526
  %v7529 = vsub.f32 %v7524, %v7527
  %vm7530 = vcmask 48128
  %7531 = vst.msk [vmem:[%s5] sm:$0xff] %vm7530, %v7529
  // Predicated region
  $region22: #{duelnet_forward.7} parent=0 // pred_check
    _
  $region23: #{duelnet_forward.7} parent=0 // pred_check_branch
    %7533 = sbr.rel (0) target = $region25
  $region24: #{duelnet_forward.7} parent=0 // pred_region
    _
  $region25: #{duelnet_forward.7} parent=0 // pred_fallthru
    _
  // Predicated region
  $region26: #{duelnet_forward.7} parent=0 // pred_check
    _
  $region27: #{duelnet_forward.7} parent=0 // pred_check_branch
    %7535 = sbr.rel (0) target = $region29
  $region28: #{duelnet_forward.7} parent=0 // pred_region
    _
  $region29: #{duelnet_forward.7} parent=0 // pred_fallthru
    _

</llo_original>
